<compile_context>
chip_gen: v6e
topology: v6e:2x2x1
jax: 0.10.0
libtpu: 0.0.40
codegen_flags: <defaults>
</compile_context>

<pallas_src>
import functools
import math

import jax
import jax.numpy as jnp
from jax.experimental import pallas as pl
from jax.experimental.pallas import tpu as pltpu

EPS = 1e-6          # LayerNorm eps (added to std, exactly as in the PyTorch code)
NEG_INF = -1e9      # masked_fill value


def _layernorm(v, a, b):
    # Exactly the PyTorch LayerNorm-as-written:
    # unbiased std (ddof=1), eps added to std (not variance).
    d = v.shape[-1]
    mean = jnp.mean(v, axis=-1, keepdims=True)
    c = v - mean
    std = jnp.sqrt(jnp.sum(c * c, axis=-1, keepdims=True) * (1.0 / (d - 1)))
    inv = pl.reciprocal(std + EPS, approx=True)   # EUP slot, frees the VALU divide
    return a * c * inv + b


# ---------------------------------------------------------------------------
# Pallas kernel: one grid step == one (batch, query-tile).
# ---------------------------------------------------------------------------
def encoder_layer_kernel(x_ref, A_ref, mask_ref,
                         ln1_a_ref, ln1_b_ref,
                         wqkv_ref, bqkv_ref,
                         wo_ref, bo_ref,
                         ln2_a_ref, ln2_b_ref,
                         w1_ref, b1_ref, w2_ref, b2_ref,
                         out_ref, loss_ref,
                         q_sc, k_sc, v_sc,
                         *, num_heads, tq, loss_smem):
    qi = pl.program_id(1)
    S, D = k_sc.shape
    dh = D // num_heads

    # ---- once per batch element: LN1 + fused QKV projection into scratch ----
    @pl.when(qi == 0)
    def _():
        n1 = _layernorm(x_ref[0], ln1_a_ref[...], ln1_b_ref[...])
        qkv = jnp.dot(n1.astype(jnp.bfloat16), wqkv_ref[...],
                      preferred_element_type=jnp.float32) + bqkv_ref[...]
        q_sc[...] = qkv[:, :D].astype(jnp.bfloat16)        # 1/sqrt(dh) pre-folded
        k_sc[...] = qkv[:, D:2 * D].astype(jnp.bfloat16)
        v_sc[...] = qkv[:, 2 * D:].astype(jnp.bfloat16)

    # ---- per query tile ----
    row0 = pl.multiple_of(qi * tq, tq)
    x_t = x_ref[0, pl.ds(row0, tq), :]        # (tq, D) f32 residual input
    A_t = A_ref[0]                            # (tq, S) f32 bias / loss target
    keep = mask_ref[0] != 0.0                 # (1, S) bool, broadcasts over queries
    q_t = q_sc[pl.ds(row0, tq), :]            # (tq, D) bf16 (pre-scaled)
    k_all = k_sc[...]                         # (S, D) bf16
    v_all = v_sc[...]                         # (S, D) bf16

    attn = jnp.zeros((tq, D), jnp.float32)
    loss_sum = jnp.float32(0.0)
    # NOTE: dh=32 keeps the per-head MXU contraction narrow; the per-head
    # matmuls interleave with the softmax VPU/EUP work under the unrolled loop.
    for h in range(num_heads):                # static unroll over heads
        qh = q_t[:, h * dh:(h + 1) * dh]      # (tq, dh) bf16
        kh = k_all[:, h * dh:(h + 1) * dh]    # (S, dh)  bf16
        vh = v_all[:, h * dh:(h + 1) * dh]    # (S, dh)  bf16

        s = jax.lax.dot_general(qh, kh, (((1,), (1,)), ((), ())),
                                preferred_element_type=jnp.float32) + A_t
        s = jnp.where(keep, s, NEG_INF)                        # masked_fill
        s = s - jnp.max(s, axis=-1, keepdims=True)             # stable softmax
        e = jnp.exp(s)
        # exact reciprocal: the probabilities feed the (p - A)^2 loss directly
        p = e * (1.0 / jnp.sum(e, axis=-1, keepdims=True))

        d = p - A_t
        loss_sum = loss_sum + jnp.sum(d * d)                   # raw SSE

        ctx = jnp.dot(p.astype(jnp.bfloat16), vh,
                      preferred_element_type=jnp.float32)      # (tq, dh)
        # lane-dense per-head output projection (no concat along lanes)
        attn = attn + jnp.dot(ctx.astype(jnp.bfloat16),
                              wo_ref[h * dh:(h + 1) * dh, :],
                              preferred_element_type=jnp.float32)

    x1 = x_t + attn + bo_ref[...]             # residual 1 (dropout = identity)

    # ---- sublayer[1]: norm -> feed-forward -> residual ----
    n2 = _layernorm(x1, ln2_a_ref[...], ln2_b_ref[...])
    h1 = jnp.maximum(
        jnp.dot(n2.astype(jnp.bfloat16), w1_ref[...],
                preferred_element_type=jnp.float32) + b1_ref[...],
        0.0).astype(jnp.bfloat16)             # bf16 hidden: halves the live temp
    ff = jnp.dot(h1, w2_ref[...], preferred_element_type=jnp.float32) + b2_ref[...]

    out_ref[0] = (x1 + ff).astype(out_ref.dtype)
    if loss_smem:
        loss_ref[0, 0] = loss_sum             # SMEM scalar: no padded masked vst
    else:
        loss_ref[...] = jnp.full((1, 1, 1, 1), loss_sum, dtype=loss_ref.dtype)


# ---------------------------------------------------------------------------
# Wrapper: parameter fusion, specs, grid, cost estimate, generation-aware VMEM.
# ---------------------------------------------------------------------------
def _vmem_limit_bytes():
    cap = 128 * 1024 * 1024
    try:
        cap = int(getattr(pltpu.get_tpu_info(), "vmem_capacity_bytes", cap))
    except Exception:
        pass
    # leave ~25% headroom for Mosaic scratch: 48 MiB on v7x, 96 MiB on v5e/v6e
    return int(min(cap - cap // 4, 112 * 1024 * 1024))


def encoder_layer(x, A, mask, params, num_heads, tq=None):
    B, S, D = x.shape
    d_ff = params["w1"].shape[1]
    dh = D // num_heads
    if tq is None:
        # default 256 targets the 2x256 MXUs on v6e/v7x; smaller tiles only to
        # keep S % tq == 0 or to expose more grid programs.
        tq = next((t for t in (256, 128) if S % t == 0), S)
    assert S % tq == 0 and D % num_heads == 0
    nq = S // tq
    cdt = jnp.bfloat16
    scale = 1.0 / math.sqrt(dh)

    # ---- one-time parameter fusion (head-major), scale folded into Wq/bq ----
    def fuse_w(w):       # (H, D, dh) -> (D, H*dh)
        return jnp.transpose(w, (1, 0, 2)).reshape(D, D)

    wqkv = jnp.concatenate([fuse_w(params["wq"]) * scale,
                            fuse_w(params["wk"]),
                            fuse_w(params["wv"])], axis=-1).astype(cdt)   # (D, 3D)
    bqkv = jnp.concatenate([params["bq"].reshape(1, D) * scale,
                            params["bk"].reshape(1, D),
                            params["bv"].reshape(1, D)], axis=-1)          # (1, 3D) f32
    wo = params["wo"].reshape(D, D).astype(cdt)   # (H*dh, D), head-major rows
    w1 = params["w1"].astype(cdt)
    w2 = params["w2"].astype(cdt)

    # Constant blocks never change across the grid -> single-buffer them.
    def const_spec(shape):
        n = len(shape)
        return pl.BlockSpec(shape, lambda b, qi, n=n: (0,) * n,
                            pipeline_mode=pl.Buffered(1))

    in_specs = [
        pl.BlockSpec((1, S, D), lambda b, qi: (b, 0, 0)),     # x (fetched once per b)
        pl.BlockSpec((1, tq, S), lambda b, qi: (b, qi, 0)),   # A query tile
        pl.BlockSpec((1, 1, S), lambda b, qi: (b, 0, 0)),     # mask
        const_spec((1, D)), const_spec((1, D)),               # ln1 a, b
        const_spec((D, 3 * D)), const_spec((1, 3 * D)),       # fused Wqkv (bf16), bqkv
        const_spec((D, D)), const_spec((1, D)),               # fused Wo (bf16), bo
        const_spec((1, D)), const_spec((1, D)),               # ln2 a, b
        const_spec((D, d_ff)), const_spec((1, d_ff)),         # FF w1 (bf16), b1
        const_spec((d_ff, D)), const_spec((1, D)),            # FF w2 (bf16), b2
    ]

    flops = B * (2 * S * D * 3 * D        # fused QKV projection
                 + 4 * S * S * D          # QK^T + PV over all heads
                 + 2 * S * D * D          # output projection
                 + 4 * S * D * d_ff)      # feed-forward
    transcendentals = B * num_heads * S * S
    bytes_accessed = (B * (2 * S * D * 4 + S * S * 4 + S * 4)
                      + 2 * (3 * D * D + D * D + 2 * D * d_ff)
                      + 4 * (9 * D + d_ff))
    cost = pl.CostEstimate(flops=int(flops),
                           transcendentals=int(transcendentals),
                           bytes_accessed=int(bytes_accessed))

    cparams = pltpu.CompilerParams(
        dimension_semantics=("parallel", "arbitrary"),
        vmem_limit_bytes=_vmem_limit_bytes())

    args = (x, A, mask,
            params["ln1_a"], params["ln1_b"],
            wqkv, bqkv, wo, params["bo"],
            params["ln2_a"], params["ln2_b"],
            w1, params["b1"], w2, params["b2"])

    def build(loss_smem):
        kernel = functools.partial(encoder_layer_kernel, num_heads=num_heads,
                                   tq=tq, loss_smem=loss_smem)
        if loss_smem:
            loss_shape = jax.ShapeDtypeStruct((B, nq), jnp.float32)
            loss_spec = pl.BlockSpec((1, 1), lambda b, qi: (b, qi),
                                     memory_space=pltpu.MemorySpace.SMEM)
        else:
            loss_shape = jax.ShapeDtypeStruct((B, nq, 1, 1), jnp.float32)
            loss_spec = pl.BlockSpec((1, 1, 1, 1), lambda b, qi: (b, qi, 0, 0))
        return pl.pallas_call(
            kernel,
            out_shape=(jax.ShapeDtypeStruct((B, S, D), x.dtype), loss_shape),
            grid=(B, nq),
            in_specs=in_specs,
            out_specs=(pl.BlockSpec((1, tq, D), lambda b, qi: (b, qi, 0)),
                       loss_spec),
            scratch_shapes=[pltpu.VMEM((S, D), jnp.bfloat16) for _ in range(3)],
            compiler_params=cparams,
            cost_estimate=cost,
        )

    try:
        out, loss_raw = build(True)(*args)          # SMEM scalar loss (preferred)
        out = jax.block_until_ready(out)
    except Exception:
        # TODO(synk): blocked SMEM outputs unsupported on this Pallas build;
        # fall back to a tiny VMEM block (one masked store per program).
        out, loss_raw = build(False)(*args)

    # reference semantics: per-batch loss = SSE / (H*S*S), then mean over batch
    loss = jnp.sum(loss_raw) / (num_heads * S * S * B)
    return out, loss


# ---------------------------------------------------------------------------
# Pure-JAX f32 reference (mirrors the PyTorch forward in eval mode).
# ---------------------------------------------------------------------------
def encoder_layer_reference(x, A, mask, params, num_heads):
    B, S, D = x.shape
    dh = D // num_heads
    scale = 1.0 / math.sqrt(dh)

    def layernorm(v, a, b):
        mean = jnp.mean(v, axis=-1, keepdims=True)
        c = v - mean
        std = jnp.sqrt(jnp.sum(c * c, axis=-1, keepdims=True) / (D - 1))
        return a * c / (std + EPS) + b

    n1 = layernorm(x, params["ln1_a"][0], params["ln1_b"][0])
    attn_out = jnp.zeros((B, S, D), jnp.float32)
    loss = jnp.zeros((B,), jnp.float32)
    for h in range(num_heads):
        q = n1 @ params["wq"][h] + params["bq"][h]
        k = n1 @ params["wk"][h] + params["bk"][h]
        v = n1 @ params["wv"][h] + params["bv"][h]
        s = jnp.einsum("bqd,bkd->bqk", q, k) * scale + A
        s = jnp.where(mask == 0.0, NEG_INF, s)
        p = jax.nn.softmax(s, axis=-1)
        loss = loss + jnp.mean((p - A) ** 2, axis=(1, 2))
        attn_out = attn_out + jnp.einsum("bqk,bkd->bqd", p, v) @ params["wo"][h]
    attn_out = attn_out + params["bo"][0]
    loss = loss / num_heads

    x1 = x + attn_out
    n2 = layernorm(x1, params["ln2_a"][0], params["ln2_b"][0])
    ff = jnp.maximum(n2 @ params["w1"] + params["b1"][0], 0.0) @ params["w2"] + params["b2"][0]
    return x1 + ff, jnp.mean(loss)


# ---------------------------------------------------------------------------
if __name__ == "__main__":
    # (8,128)-aligned small shapes; S=256 with tq=128 exercises the query-tiled
    # path (grid = (2, 2)) and the pl.when-gated per-batch QKV projection.
    B, S, D, H, d_ff = 2, 256, 128, 4, 256
    dh = D // H

    key = jax.random.PRNGKey(0)
    ks = jax.random.split(key, 16)
    sc = 0.1

    params = {
        "ln1_a": jnp.ones((1, D), jnp.float32),
        "ln1_b": jnp.zeros((1, D), jnp.float32),
        "wq": sc * jax.random.normal(ks[0], (H, D, dh), jnp.float32),
        "bq": sc * jax.random.normal(ks[1], (H, 1, dh), jnp.float32),
        "wk": sc * jax.random.normal(ks[2], (H, D, dh), jnp.float32),
        "bk": sc * jax.random.normal(ks[3], (H, 1, dh), jnp.float32),
        "wv": sc * jax.random.normal(ks[4], (H, D, dh), jnp.float32),
        "bv": sc * jax.random.normal(ks[5], (H, 1, dh), jnp.float32),
        "wo": sc * jax.random.normal(ks[6], (H, dh, D), jnp.float32),
        "bo": sc * jax.random.normal(ks[7], (1, D), jnp.float32),
        "ln2_a": jnp.ones((1, D), jnp.float32),
        "ln2_b": jnp.zeros((1, D), jnp.float32),
        "w1": sc * jax.random.normal(ks[8], (D, d_ff), jnp.float32),
        "b1": sc * jax.random.normal(ks[9], (1, d_ff), jnp.float32),
        "w2": sc * jax.random.normal(ks[10], (d_ff, D), jnp.float32),
        "b2": sc * jax.random.normal(ks[11], (1, D), jnp.float32),
    }

    x = jax.random.normal(ks[12], (B, S, D), jnp.float32)
    A = jax.nn.softmax(jax.random.normal(ks[13], (B, S, S), jnp.float32), axis=-1)
    # mask: attend to everything except the last key position
    mask = jnp.ones((B, 1, S), jnp.float32).at[:, :, -1].set(0.0)

    out, loss = encoder_layer(x, A, mask, params, num_heads=H, tq=128)
    out = jax.block_until_ready(out)
    loss = jax.block_until_ready(loss)

    ref_out, ref_loss = encoder_layer_reference(x, A, mask, params, num_heads=H)
    # Tolerances baselined for bf16 matmul operands / bf16 weights (f32 accum):
    # measured elementwise error sd ~1.5e-2 on O(1) outputs -> 1e-1 atol is >6 sigma.
    assert jnp.allclose(out, ref_out, atol=1e-1, rtol=5e-2), "output mismatch"
    assert jnp.allclose(loss, ref_loss, atol=2e-5, rtol=5e-2), "loss mismatch"

    print("KERNEL_OK")
</pallas_src>

<mosaic_0001>
module attributes {stable_mosaic.version = 11 : i64} {
  func.func @encoder_layer_kernel(%arg0: i32, %arg1: i32, %arg2: memref<1x256x128xf32, #tpu.memory_space<vmem>>, %arg3: memref<1x128x256xf32, #tpu.memory_space<vmem>>, %arg4: memref<1x1x256xf32, #tpu.memory_space<vmem>>, %arg5: memref<1x128xf32, #tpu.memory_space<vmem>>, %arg6: memref<1x128xf32, #tpu.memory_space<vmem>>, %arg7: memref<128x384xbf16, #tpu.memory_space<vmem>>, %arg8: memref<1x384xf32, #tpu.memory_space<vmem>>, %arg9: memref<128x128xbf16, #tpu.memory_space<vmem>>, %arg10: memref<1x128xf32, #tpu.memory_space<vmem>>, %arg11: memref<1x128xf32, #tpu.memory_space<vmem>>, %arg12: memref<1x128xf32, #tpu.memory_space<vmem>>, %arg13: memref<128x256xbf16, #tpu.memory_space<vmem>>, %arg14: memref<1x256xf32, #tpu.memory_space<vmem>>, %arg15: memref<256x128xbf16, #tpu.memory_space<vmem>>, %arg16: memref<1x128xf32, #tpu.memory_space<vmem>>, %arg17: memref<1x128x128xf32, #tpu.memory_space<vmem>>, %arg18: memref<1x1x1x1xf32, #tpu.memory_space<vmem>>, %arg19: memref<256x128xbf16, #tpu.memory_space<vmem>>, %arg20: memref<256x128xbf16, #tpu.memory_space<vmem>>, %arg21: memref<256x128xbf16, #tpu.memory_space<vmem>>) attributes {dimension_semantics = [#tpu.dimension_semantics<parallel>, #tpu.dimension_semantics<arbitrary>], iteration_bounds = array<i64: 2, 2>, scalar_prefetch = 0 : i64, scratch_operands = 3 : i64, tpu.core_type = #tpu.core_type<tc>, window_params = [{transform_indices = @transform_0, window_bounds = array<i64: 1, 256, 128>}, {transform_indices = @transform_1, window_bounds = array<i64: 1, 128, 256>}, {transform_indices = @transform_2, window_bounds = array<i64: 1, 1, 256>}, {pipeline_mode = #tpu.pipeline_mode<synchronous>, transform_indices = @transform_3, window_bounds = array<i64: 1, 128>}, {pipeline_mode = #tpu.pipeline_mode<synchronous>, transform_indices = @transform_4, window_bounds = array<i64: 1, 128>}, {pipeline_mode = #tpu.pipeline_mode<synchronous>, transform_indices = @transform_5, window_bounds = array<i64: 128, 384>}, {pipeline_mode = #tpu.pipeline_mode<synchronous>, transform_indices = @transform_6, window_bounds = array<i64: 1, 384>}, {pipeline_mode = #tpu.pipeline_mode<synchronous>, transform_indices = @transform_7, window_bounds = array<i64: 128, 128>}, {pipeline_mode = #tpu.pipeline_mode<synchronous>, transform_indices = @transform_8, window_bounds = array<i64: 1, 128>}, {pipeline_mode = #tpu.pipeline_mode<synchronous>, transform_indices = @transform_9, window_bounds = array<i64: 1, 128>}, {pipeline_mode = #tpu.pipeline_mode<synchronous>, transform_indices = @transform_10, window_bounds = array<i64: 1, 128>}, {pipeline_mode = #tpu.pipeline_mode<synchronous>, transform_indices = @transform_11, window_bounds = array<i64: 128, 256>}, {pipeline_mode = #tpu.pipeline_mode<synchronous>, transform_indices = @transform_12, window_bounds = array<i64: 1, 256>}, {pipeline_mode = #tpu.pipeline_mode<synchronous>, transform_indices = @transform_13, window_bounds = array<i64: 256, 128>}, {pipeline_mode = #tpu.pipeline_mode<synchronous>, transform_indices = @transform_14, window_bounds = array<i64: 1, 128>}, {transform_indices = @transform_15, window_bounds = array<i64: 1, 128, 128>}, {transform_indices = @transform_16, window_bounds = array<i64: 1, 1, 1, 1>}]} {
    %c0_i32 = arith.constant 0 : i32
    %0 = arith.cmpi eq, %arg1, %c0_i32 : i32
    %1 = arith.extui %0 : i1 to i32
    %c0_i32_0 = arith.constant 0 : i32
    %2 = arith.cmpi ne, %1, %c0_i32_0 : i32
    scf.if %2 {
      %c0_81 = arith.constant 0 : index
      %c0_82 = arith.constant 0 : index
      %c0_83 = arith.constant 0 : index
      %198 = vector.load %arg2[%c0_81, %c0_82, %c0_83] : memref<1x256x128xf32, #tpu.memory_space<vmem>>, vector<1x256x128xf32>
      %199 = vector.shape_cast %198 : vector<1x256x128xf32> to vector<256x128xf32>
      %c0_84 = arith.constant 0 : index
      %c0_85 = arith.constant 0 : index
      %200 = vector.load %arg5[%c0_84, %c0_85] : memref<1x128xf32, #tpu.memory_space<vmem>>, vector<1x128xf32>
      %c0_86 = arith.constant 0 : index
      %c0_87 = arith.constant 0 : index
      %201 = vector.load %arg6[%c0_86, %c0_87] : memref<1x128xf32, #tpu.memory_space<vmem>>, vector<1x128xf32>
      %cst_88 = arith.constant dense<0.000000e+00> : vector<256xf32>
      %202 = vector.multi_reduction <add>, %199, %cst_88 [1] : vector<256x128xf32> to vector<256xf32>
      %203 = vector.shape_cast %202 : vector<256xf32> to vector<256x1xf32>
      %cst_89 = arith.constant 1.280000e+02 : f32
      %204 = vector.broadcast %cst_89 : f32 to vector<256x1xf32>
      %205 = arith.divf %203, %204 : vector<256x1xf32>
      %206 = vector.broadcast %205 : vector<256x1xf32> to vector<256x128xf32>
      %207 = arith.subf %199, %206 : vector<256x128xf32>
      %208 = arith.mulf %207, %207 : vector<256x128xf32>
      %cst_90 = arith.constant dense<0.000000e+00> : vector<256xf32>
      %209 = vector.multi_reduction <add>, %208, %cst_90 [1] : vector<256x128xf32> to vector<256xf32>
      %210 = vector.shape_cast %209 : vector<256xf32> to vector<256x1xf32>
      %cst_91 = arith.constant 0.00787401571 : f32
      %211 = vector.broadcast %cst_91 : f32 to vector<256x1xf32>
      %212 = arith.mulf %210, %211 : vector<256x1xf32>
      %213 = math.sqrt %212 : vector<256x1xf32>
      %cst_92 = arith.constant 9.99999997E-7 : f32
      %214 = vector.broadcast %cst_92 : f32 to vector<256x1xf32>
      %215 = arith.addf %213, %214 : vector<256x1xf32>
      %216 = tpu.reciprocal %215 {approx = true} : vector<256x1xf32> -> vector<256x1xf32>
      %217 = vector.broadcast %200 : vector<1x128xf32> to vector<256x128xf32>
      %218 = arith.mulf %217, %207 : vector<256x128xf32>
      %219 = vector.broadcast %216 : vector<256x1xf32> to vector<256x128xf32>
      %220 = arith.mulf %218, %219 : vector<256x128xf32>
      %221 = vector.broadcast %201 : vector<1x128xf32> to vector<256x128xf32>
      %222 = arith.addf %220, %221 : vector<256x128xf32>
      %223 = arith.truncf %222 : vector<256x128xf32> to vector<256x128xbf16>
      %c0_93 = arith.constant 0 : index
      %c0_94 = arith.constant 0 : index
      %224 = vector.load %arg7[%c0_93, %c0_94] : memref<128x384xbf16, #tpu.memory_space<vmem>>, vector<128x384xbf16>
      %cst_95 = arith.constant dense<0.000000e+00> : vector<256x384xf32>
      %225 = tpu.matmul %223, %224, %cst_95 {dimension_numbers = #tpu.dot_dimension_numbers<[1], [0], [0], [1], [0, 0, 1, 1], [], []>} : vector<256x128xbf16>, vector<128x384xbf16>, vector<256x384xf32> -> vector<256x384xf32>
      %c0_96 = arith.constant 0 : index
      %c0_97 = arith.constant 0 : index
      %226 = vector.load %arg8[%c0_96, %c0_97] : memref<1x384xf32, #tpu.memory_space<vmem>>, vector<1x384xf32>
      %227 = vector.broadcast %226 : vector<1x384xf32> to vector<256x384xf32>
      %228 = arith.addf %225, %227 : vector<256x384xf32>
      %229 = vector.extract_strided_slice %228 {offsets = [0, 0], sizes = [256, 128], strides = [1, 1]} : vector<256x384xf32> to vector<256x128xf32>
      %230 = arith.truncf %229 : vector<256x128xf32> to vector<256x128xbf16>
      %c0_98 = arith.constant 0 : index
      %c0_99 = arith.constant 0 : index
      %231 = vector.load %arg19[%c0_98, %c0_99] : memref<256x128xbf16, #tpu.memory_space<vmem>>, vector<256x128xbf16>
      tpu.vector_store %arg19[%c0_98, %c0_99], %230 {strides = array<i32>} : memref<256x128xbf16, #tpu.memory_space<vmem>>, vector<256x128xbf16>,
      %232 = vector.extract_strided_slice %228 {offsets = [0, 128], sizes = [256, 128], strides = [1, 1]} : vector<256x384xf32> to vector<256x128xf32>
      %233 = arith.truncf %232 : vector<256x128xf32> to vector<256x128xbf16>
      %c0_100 = arith.constant 0 : index
      %c0_101 = arith.constant 0 : index
      %234 = vector.load %arg20[%c0_100, %c0_101] : memref<256x128xbf16, #tpu.memory_space<vmem>>, vector<256x128xbf16>
      tpu.vector_store %arg20[%c0_100, %c0_101], %233 {strides = array<i32>} : memref<256x128xbf16, #tpu.memory_space<vmem>>, vector<256x128xbf16>,
      %235 = vector.extract_strided_slice %228 {offsets = [0, 256], sizes = [256, 128], strides = [1, 1]} : vector<256x384xf32> to vector<256x128xf32>
      %236 = arith.truncf %235 : vector<256x128xf32> to vector<256x128xbf16>
      %c0_102 = arith.constant 0 : index
      %c0_103 = arith.constant 0 : index
      %237 = vector.load %arg21[%c0_102, %c0_103] : memref<256x128xbf16, #tpu.memory_space<vmem>>, vector<256x128xbf16>
      tpu.vector_store %arg21[%c0_102, %c0_103], %236 {strides = array<i32>} : memref<256x128xbf16, #tpu.memory_space<vmem>>, vector<256x128xbf16>,
    } else {
    }
    %c128_i32 = arith.constant 128 : i32
    %3 = arith.muli %arg1, %c128_i32 : i32
    %4 = tpu.assume_multiple %3, 128 : i32
    %c0 = arith.constant 0 : index
    %5 = arith.index_cast %4 : i32 to index
    %c0_1 = arith.constant 0 : index
    %6 = vector.load %arg2[%c0, %5, %c0_1] : memref<1x256x128xf32, #tpu.memory_space<vmem>>, vector<1x128x128xf32>
    %7 = vector.shape_cast %6 : vector<1x128x128xf32> to vector<128x128xf32>
    %c0_2 = arith.constant 0 : index
    %c0_3 = arith.constant 0 : index
    %c0_4 = arith.constant 0 : index
    %8 = vector.load %arg3[%c0_2, %c0_3, %c0_4] : memref<1x128x256xf32, #tpu.memory_space<vmem>>, vector<1x128x256xf32>
    %9 = vector.shape_cast %8 : vector<1x128x256xf32> to vector<128x256xf32>
    %c0_5 = arith.constant 0 : index
    %c0_6 = arith.constant 0 : index
    %c0_7 = arith.constant 0 : index
    %10 = vector.load %arg4[%c0_5, %c0_6, %c0_7] : memref<1x1x256xf32, #tpu.memory_space<vmem>>, vector<1x1x256xf32>
    %11 = vector.shape_cast %10 : vector<1x1x256xf32> to vector<1x256xf32>
    %cst = arith.constant 0.000000e+00 : f32
    %12 = vector.broadcast %cst : f32 to vector<1x256xf32>
    %13 = arith.cmpf one, %11, %12 : vector<1x256xf32>
    %14 = arith.index_cast %4 : i32 to index
    %c0_8 = arith.constant 0 : index
    %15 = vector.load %arg19[%14, %c0_8] : memref<256x128xbf16, #tpu.memory_space<vmem>>, vector<128x128xbf16>
    %c0_9 = arith.constant 0 : index
    %c0_10 = arith.constant 0 : index
    %16 = vector.load %arg20[%c0_9, %c0_10] : memref<256x128xbf16, #tpu.memory_space<vmem>>, vector<256x128xbf16>
    %c0_11 = arith.constant 0 : index
    %c0_12 = arith.constant 0 : index
    %17 = vector.load %arg21[%c0_11, %c0_12] : memref<256x128xbf16, #tpu.memory_space<vmem>>, vector<256x128xbf16>
    %cst_13 = arith.constant 0.000000e+00 : f32
    %18 = vector.broadcast %cst_13 : f32 to vector<128x128xf32>
    %19 = vector.extract_strided_slice %15 {offsets = [0, 0], sizes = [128, 32], strides = [1, 1]} : vector<128x128xbf16> to vector<128x32xbf16>
    %20 = vector.extract_strided_slice %16 {offsets = [0, 0], sizes = [256, 32], strides = [1, 1]} : vector<256x128xbf16> to vector<256x32xbf16>
    %21 = vector.extract_strided_slice %17 {offsets = [0, 0], sizes = [256, 32], strides = [1, 1]} : vector<256x128xbf16> to vector<256x32xbf16>
    %cst_14 = arith.constant dense<0.000000e+00> : vector<128x256xf32>
    %22 = tpu.matmul %19, %20, %cst_14 {dimension_numbers = #tpu.dot_dimension_numbers<[1], [1], [0], [0], [0, 0, 1, 0], [], []>} : vector<128x32xbf16>, vector<256x32xbf16>, vector<128x256xf32> -> vector<128x256xf32>
    %23 = arith.addf %22, %9 : vector<128x256xf32>
    %cst_15 = arith.constant -1.000000e+09 : f32
    %24 = vector.shape_cast %13 : vector<1x256xi1> to vector<1x256xi1>
    %25 = vector.broadcast %24 : vector<1x256xi1> to vector<128x256xi1>
    %26 = vector.broadcast %cst_15 : f32 to vector<128x256xf32>
    %27 = arith.select %25, %23, %26 : vector<128x256xi1>, vector<128x256xf32>
    %cst_16 = arith.constant dense<0xFF800000> : vector<128xf32>
    %28 = vector.multi_reduction <maximumf>, %27, %cst_16 [1] : vector<128x256xf32> to vector<128xf32>
    %29 = vector.shape_cast %28 : vector<128xf32> to vector<128x1xf32>
    %30 = vector.broadcast %29 : vector<128x1xf32> to vector<128x256xf32>
    %31 = arith.subf %27, %30 : vector<128x256xf32>
    %32 = math.exp %31 : vector<128x256xf32>
    %cst_17 = arith.constant dense<0.000000e+00> : vector<128xf32>
    %33 = vector.multi_reduction <add>, %32, %cst_17 [1] : vector<128x256xf32> to vector<128xf32>
    %34 = vector.shape_cast %33 : vector<128xf32> to vector<128x1xf32>
    %cst_18 = arith.constant 1.000000e+00 : f32
    %35 = vector.broadcast %cst_18 : f32 to vector<128x1xf32>
    %36 = arith.divf %35, %34 : vector<128x1xf32>
    %37 = vector.broadcast %36 : vector<128x1xf32> to vector<128x256xf32>
    %38 = arith.mulf %32, %37 : vector<128x256xf32>
    %39 = arith.subf %38, %9 : vector<128x256xf32>
    %40 = arith.mulf %39, %39 : vector<128x256xf32>
    %41 = vector.shape_cast %40 : vector<128x256xf32> to vector<1x128x256xf32>
    %cst_19 = arith.constant dense<0.000000e+00> : vector<1xf32>
    %42 = vector.multi_reduction <add>, %41, %cst_19 [1, 2] : vector<1x128x256xf32> to vector<1xf32>
    %43 = vector.shape_cast %42 : vector<1xf32> to vector<1x1x1xf32>
    %44 = vector.extract %43[0, 0, 0] : f32 from vector<1x1x1xf32>
    %cst_20 = arith.constant 0.000000e+00 : f32
    %45 = arith.addf %cst_20, %44 : f32
    %46 = arith.truncf %38 : vector<128x256xf32> to vector<128x256xbf16>
    %cst_21 = arith.constant dense<0.000000e+00> : vector<128x32xf32>
    %47 = tpu.matmul %46, %21, %cst_21 {dimension_numbers = #tpu.dot_dimension_numbers<[1], [0], [0], [1], [0, 0, 1, 1], [], []>} : vector<128x256xbf16>, vector<256x32xbf16>, vector<128x32xf32> -> vector<128x32xf32>
    %48 = arith.truncf %47 : vector<128x32xf32> to vector<128x32xbf16>
    %c0_22 = arith.constant 0 : index
    %c0_23 = arith.constant 0 : index
    %49 = vector.load %arg9[%c0_22, %c0_23] : memref<128x128xbf16, #tpu.memory_space<vmem>>, vector<32x128xbf16>
    %cst_24 = arith.constant dense<0.000000e+00> : vector<128x128xf32>
    %50 = tpu.matmul %48, %49, %cst_24 {dimension_numbers = #tpu.dot_dimension_numbers<[1], [0], [0], [1], [0, 0, 1, 1], [], []>} : vector<128x32xbf16>, vector<32x128xbf16>, vector<128x128xf32> -> vector<128x128xf32>
    %51 = arith.addf %18, %50 : vector<128x128xf32>
    %52 = vector.extract_strided_slice %15 {offsets = [0, 32], sizes = [128, 32], strides = [1, 1]} : vector<128x128xbf16> to vector<128x32xbf16>
    %53 = vector.extract_strided_slice %16 {offsets = [0, 32], sizes = [256, 32], strides = [1, 1]} : vector<256x128xbf16> to vector<256x32xbf16>
    %54 = vector.extract_strided_slice %17 {offsets = [0, 32], sizes = [256, 32], strides = [1, 1]} : vector<256x128xbf16> to vector<256x32xbf16>
    %cst_25 = arith.constant dense<0.000000e+00> : vector<128x256xf32>
    %55 = tpu.matmul %52, %53, %cst_25 {dimension_numbers = #tpu.dot_dimension_numbers<[1], [1], [0], [0], [0, 0, 1, 0], [], []>} : vector<128x32xbf16>, vector<256x32xbf16>, vector<128x256xf32> -> vector<128x256xf32>
    %56 = arith.addf %55, %9 : vector<128x256xf32>
    %cst_26 = arith.constant -1.000000e+09 : f32
    %57 = vector.shape_cast %13 : vector<1x256xi1> to vector<1x256xi1>
    %58 = vector.broadcast %57 : vector<1x256xi1> to vector<128x256xi1>
    %59 = vector.broadcast %cst_26 : f32 to vector<128x256xf32>
    %60 = arith.select %58, %56, %59 : vector<128x256xi1>, vector<128x256xf32>
    %cst_27 = arith.constant dense<0xFF800000> : vector<128xf32>
    %61 = vector.multi_reduction <maximumf>, %60, %cst_27 [1] : vector<128x256xf32> to vector<128xf32>
    %62 = vector.shape_cast %61 : vector<128xf32> to vector<128x1xf32>
    %63 = vector.broadcast %62 : vector<128x1xf32> to vector<128x256xf32>
    %64 = arith.subf %60, %63 : vector<128x256xf32>
    %65 = math.exp %64 : vector<128x256xf32>
    %cst_28 = arith.constant dense<0.000000e+00> : vector<128xf32>
    %66 = vector.multi_reduction <add>, %65, %cst_28 [1] : vector<128x256xf32> to vector<128xf32>
    %67 = vector.shape_cast %66 : vector<128xf32> to vector<128x1xf32>
    %cst_29 = arith.constant 1.000000e+00 : f32
    %68 = vector.broadcast %cst_29 : f32 to vector<128x1xf32>
    %69 = arith.divf %68, %67 : vector<128x1xf32>
    %70 = vector.broadcast %69 : vector<128x1xf32> to vector<128x256xf32>
    %71 = arith.mulf %65, %70 : vector<128x256xf32>
    %72 = arith.subf %71, %9 : vector<128x256xf32>
    %73 = arith.mulf %72, %72 : vector<128x256xf32>
    %74 = vector.shape_cast %73 : vector<128x256xf32> to vector<1x128x256xf32>
    %cst_30 = arith.constant dense<0.000000e+00> : vector<1xf32>
    %75 = vector.multi_reduction <add>, %74, %cst_30 [1, 2] : vector<1x128x256xf32> to vector<1xf32>
    %76 = vector.shape_cast %75 : vector<1xf32> to vector<1x1x1xf32>
    %77 = vector.extract %76[0, 0, 0] : f32 from vector<1x1x1xf32>
    %78 = arith.addf %45, %77 : f32
    %79 = arith.truncf %71 : vector<128x256xf32> to vector<128x256xbf16>
    %cst_31 = arith.constant dense<0.000000e+00> : vector<128x32xf32>
    %80 = tpu.matmul %79, %54, %cst_31 {dimension_numbers = #tpu.dot_dimension_numbers<[1], [0], [0], [1], [0, 0, 1, 1], [], []>} : vector<128x256xbf16>, vector<256x32xbf16>, vector<128x32xf32> -> vector<128x32xf32>
    %81 = arith.truncf %80 : vector<128x32xf32> to vector<128x32xbf16>
    %c32 = arith.constant 32 : index
    %c0_32 = arith.constant 0 : index
    %82 = vector.load %arg9[%c32, %c0_32] : memref<128x128xbf16, #tpu.memory_space<vmem>>, vector<32x128xbf16>
    %cst_33 = arith.constant dense<0.000000e+00> : vector<128x128xf32>
    %83 = tpu.matmul %81, %82, %cst_33 {dimension_numbers = #tpu.dot_dimension_numbers<[1], [0], [0], [1], [0, 0, 1, 1], [], []>} : vector<128x32xbf16>, vector<32x128xbf16>, vector<128x128xf32> -> vector<128x128xf32>
    %84 = arith.addf %51, %83 : vector<128x128xf32>
    %85 = vector.extract_strided_slice %15 {offsets = [0, 64], sizes = [128, 32], strides = [1, 1]} : vector<128x128xbf16> to vector<128x32xbf16>
    %86 = vector.extract_strided_slice %16 {offsets = [0, 64], sizes = [256, 32], strides = [1, 1]} : vector<256x128xbf16> to vector<256x32xbf16>
    %87 = vector.extract_strided_slice %17 {offsets = [0, 64], sizes = [256, 32], strides = [1, 1]} : vector<256x128xbf16> to vector<256x32xbf16>
    %cst_34 = arith.constant dense<0.000000e+00> : vector<128x256xf32>
    %88 = tpu.matmul %85, %86, %cst_34 {dimension_numbers = #tpu.dot_dimension_numbers<[1], [1], [0], [0], [0, 0, 1, 0], [], []>} : vector<128x32xbf16>, vector<256x32xbf16>, vector<128x256xf32> -> vector<128x256xf32>
    %89 = arith.addf %88, %9 : vector<128x256xf32>
    %cst_35 = arith.constant -1.000000e+09 : f32
    %90 = vector.shape_cast %13 : vector<1x256xi1> to vector<1x256xi1>
    %91 = vector.broadcast %90 : vector<1x256xi1> to vector<128x256xi1>
    %92 = vector.broadcast %cst_35 : f32 to vector<128x256xf32>
    %93 = arith.select %91, %89, %92 : vector<128x256xi1>, vector<128x256xf32>
    %cst_36 = arith.constant dense<0xFF800000> : vector<128xf32>
    %94 = vector.multi_reduction <maximumf>, %93, %cst_36 [1] : vector<128x256xf32> to vector<128xf32>
    %95 = vector.shape_cast %94 : vector<128xf32> to vector<128x1xf32>
    %96 = vector.broadcast %95 : vector<128x1xf32> to vector<128x256xf32>
    %97 = arith.subf %93, %96 : vector<128x256xf32>
    %98 = math.exp %97 : vector<128x256xf32>
    %cst_37 = arith.constant dense<0.000000e+00> : vector<128xf32>
    %99 = vector.multi_reduction <add>, %98, %cst_37 [1] : vector<128x256xf32> to vector<128xf32>
    %100 = vector.shape_cast %99 : vector<128xf32> to vector<128x1xf32>
    %cst_38 = arith.constant 1.000000e+00 : f32
    %101 = vector.broadcast %cst_38 : f32 to vector<128x1xf32>
    %102 = arith.divf %101, %100 : vector<128x1xf32>
    %103 = vector.broadcast %102 : vector<128x1xf32> to vector<128x256xf32>
    %104 = arith.mulf %98, %103 : vector<128x256xf32>
    %105 = arith.subf %104, %9 : vector<128x256xf32>
    %106 = arith.mulf %105, %105 : vector<128x256xf32>
    %107 = vector.shape_cast %106 : vector<128x256xf32> to vector<1x128x256xf32>
    %cst_39 = arith.constant dense<0.000000e+00> : vector<1xf32>
    %108 = vector.multi_reduction <add>, %107, %cst_39 [1, 2] : vector<1x128x256xf32> to vector<1xf32>
    %109 = vector.shape_cast %108 : vector<1xf32> to vector<1x1x1xf32>
    %110 = vector.extract %109[0, 0, 0] : f32 from vector<1x1x1xf32>
    %111 = arith.addf %78, %110 : f32
    %112 = arith.truncf %104 : vector<128x256xf32> to vector<128x256xbf16>
    %cst_40 = arith.constant dense<0.000000e+00> : vector<128x32xf32>
    %113 = tpu.matmul %112, %87, %cst_40 {dimension_numbers = #tpu.dot_dimension_numbers<[1], [0], [0], [1], [0, 0, 1, 1], [], []>} : vector<128x256xbf16>, vector<256x32xbf16>, vector<128x32xf32> -> vector<128x32xf32>
    %114 = arith.truncf %113 : vector<128x32xf32> to vector<128x32xbf16>
    %c64 = arith.constant 64 : index
    %c0_41 = arith.constant 0 : index
    %115 = vector.load %arg9[%c64, %c0_41] : memref<128x128xbf16, #tpu.memory_space<vmem>>, vector<32x128xbf16>
    %cst_42 = arith.constant dense<0.000000e+00> : vector<128x128xf32>
    %116 = tpu.matmul %114, %115, %cst_42 {dimension_numbers = #tpu.dot_dimension_numbers<[1], [0], [0], [1], [0, 0, 1, 1], [], []>} : vector<128x32xbf16>, vector<32x128xbf16>, vector<128x128xf32> -> vector<128x128xf32>
    %117 = arith.addf %84, %116 : vector<128x128xf32>
    %118 = vector.extract_strided_slice %15 {offsets = [0, 96], sizes = [128, 32], strides = [1, 1]} : vector<128x128xbf16> to vector<128x32xbf16>
    %119 = vector.extract_strided_slice %16 {offsets = [0, 96], sizes = [256, 32], strides = [1, 1]} : vector<256x128xbf16> to vector<256x32xbf16>
    %120 = vector.extract_strided_slice %17 {offsets = [0, 96], sizes = [256, 32], strides = [1, 1]} : vector<256x128xbf16> to vector<256x32xbf16>
    %cst_43 = arith.constant dense<0.000000e+00> : vector<128x256xf32>
    %121 = tpu.matmul %118, %119, %cst_43 {dimension_numbers = #tpu.dot_dimension_numbers<[1], [1], [0], [0], [0, 0, 1, 0], [], []>} : vector<128x32xbf16>, vector<256x32xbf16>, vector<128x256xf32> -> vector<128x256xf32>
    %122 = arith.addf %121, %9 : vector<128x256xf32>
    %cst_44 = arith.constant -1.000000e+09 : f32
    %123 = vector.shape_cast %13 : vector<1x256xi1> to vector<1x256xi1>
    %124 = vector.broadcast %123 : vector<1x256xi1> to vector<128x256xi1>
    %125 = vector.broadcast %cst_44 : f32 to vector<128x256xf32>
    %126 = arith.select %124, %122, %125 : vector<128x256xi1>, vector<128x256xf32>
    %cst_45 = arith.constant dense<0xFF800000> : vector<128xf32>
    %127 = vector.multi_reduction <maximumf>, %126, %cst_45 [1] : vector<128x256xf32> to vector<128xf32>
    %128 = vector.shape_cast %127 : vector<128xf32> to vector<128x1xf32>
    %129 = vector.broadcast %128 : vector<128x1xf32> to vector<128x256xf32>
    %130 = arith.subf %126, %129 : vector<128x256xf32>
    %131 = math.exp %130 : vector<128x256xf32>
    %cst_46 = arith.constant dense<0.000000e+00> : vector<128xf32>
    %132 = vector.multi_reduction <add>, %131, %cst_46 [1] : vector<128x256xf32> to vector<128xf32>
    %133 = vector.shape_cast %132 : vector<128xf32> to vector<128x1xf32>
    %cst_47 = arith.constant 1.000000e+00 : f32
    %134 = vector.broadcast %cst_47 : f32 to vector<128x1xf32>
    %135 = arith.divf %134, %133 : vector<128x1xf32>
    %136 = vector.broadcast %135 : vector<128x1xf32> to vector<128x256xf32>
    %137 = arith.mulf %131, %136 : vector<128x256xf32>
    %138 = arith.subf %137, %9 : vector<128x256xf32>
    %139 = arith.mulf %138, %138 : vector<128x256xf32>
    %140 = vector.shape_cast %139 : vector<128x256xf32> to vector<1x128x256xf32>
    %cst_48 = arith.constant dense<0.000000e+00> : vector<1xf32>
    %141 = vector.multi_reduction <add>, %140, %cst_48 [1, 2] : vector<1x128x256xf32> to vector<1xf32>
    %142 = vector.shape_cast %141 : vector<1xf32> to vector<1x1x1xf32>
    %143 = vector.extract %142[0, 0, 0] : f32 from vector<1x1x1xf32>
    %144 = arith.addf %111, %143 : f32
    %145 = arith.truncf %137 : vector<128x256xf32> to vector<128x256xbf16>
    %cst_49 = arith.constant dense<0.000000e+00> : vector<128x32xf32>
    %146 = tpu.matmul %145, %120, %cst_49 {dimension_numbers = #tpu.dot_dimension_numbers<[1], [0], [0], [1], [0, 0, 1, 1], [], []>} : vector<128x256xbf16>, vector<256x32xbf16>, vector<128x32xf32> -> vector<128x32xf32>
    %147 = arith.truncf %146 : vector<128x32xf32> to vector<128x32xbf16>
    %c96 = arith.constant 96 : index
    %c0_50 = arith.constant 0 : index
    %148 = vector.load %arg9[%c96, %c0_50] : memref<128x128xbf16, #tpu.memory_space<vmem>>, vector<32x128xbf16>
    %cst_51 = arith.constant dense<0.000000e+00> : vector<128x128xf32>
    %149 = tpu.matmul %147, %148, %cst_51 {dimension_numbers = #tpu.dot_dimension_numbers<[1], [0], [0], [1], [0, 0, 1, 1], [], []>} : vector<128x32xbf16>, vector<32x128xbf16>, vector<128x128xf32> -> vector<128x128xf32>
    %150 = arith.addf %117, %149 : vector<128x128xf32>
    %151 = arith.addf %7, %150 : vector<128x128xf32>
    %c0_52 = arith.constant 0 : index
    %c0_53 = arith.constant 0 : index
    %152 = vector.load %arg10[%c0_52, %c0_53] : memref<1x128xf32, #tpu.memory_space<vmem>>, vector<1x128xf32>
    %153 = vector.broadcast %152 : vector<1x128xf32> to vector<128x128xf32>
    %154 = arith.addf %151, %153 : vector<128x128xf32>
    %c0_54 = arith.constant 0 : index
    %c0_55 = arith.constant 0 : index
    %155 = vector.load %arg11[%c0_54, %c0_55] : memref<1x128xf32, #tpu.memory_space<vmem>>, vector<1x128xf32>
    %c0_56 = arith.constant 0 : index
    %c0_57 = arith.constant 0 : index
    %156 = vector.load %arg12[%c0_56, %c0_57] : memref<1x128xf32, #tpu.memory_space<vmem>>, vector<1x128xf32>
    %cst_58 = arith.constant dense<0.000000e+00> : vector<128xf32>
    %157 = vector.multi_reduction <add>, %154, %cst_58 [1] : vector<128x128xf32> to vector<128xf32>
    %158 = vector.shape_cast %157 : vector<128xf32> to vector<128x1xf32>
    %cst_59 = arith.constant 1.280000e+02 : f32
    %159 = vector.broadcast %cst_59 : f32 to vector<128x1xf32>
    %160 = arith.divf %158, %159 : vector<128x1xf32>
    %161 = vector.broadcast %160 : vector<128x1xf32> to vector<128x128xf32>
    %162 = arith.subf %154, %161 : vector<128x128xf32>
    %163 = arith.mulf %162, %162 : vector<128x128xf32>
    %cst_60 = arith.constant dense<0.000000e+00> : vector<128xf32>
    %164 = vector.multi_reduction <add>, %163, %cst_60 [1] : vector<128x128xf32> to vector<128xf32>
    %165 = vector.shape_cast %164 : vector<128xf32> to vector<128x1xf32>
    %cst_61 = arith.constant 0.00787401571 : f32
    %166 = vector.broadcast %cst_61 : f32 to vector<128x1xf32>
    %167 = arith.mulf %165, %166 : vector<128x1xf32>
    %168 = math.sqrt %167 : vector<128x1xf32>
    %cst_62 = arith.constant 9.99999997E-7 : f32
    %169 = vector.broadcast %cst_62 : f32 to vector<128x1xf32>
    %170 = arith.addf %168, %169 : vector<128x1xf32>
    %171 = tpu.reciprocal %170 {approx = true} : vector<128x1xf32> -> vector<128x1xf32>
    %172 = vector.broadcast %155 : vector<1x128xf32> to vector<128x128xf32>
    %173 = arith.mulf %172, %162 : vector<128x128xf32>
    %174 = vector.broadcast %171 : vector<128x1xf32> to vector<128x128xf32>
    %175 = arith.mulf %173, %174 : vector<128x128xf32>
    %176 = vector.broadcast %156 : vector<1x128xf32> to vector<128x128xf32>
    %177 = arith.addf %175, %176 : vector<128x128xf32>
    %178 = arith.truncf %177 : vector<128x128xf32> to vector<128x128xbf16>
    %c0_63 = arith.constant 0 : index
    %c0_64 = arith.constant 0 : index
    %179 = vector.load %arg13[%c0_63, %c0_64] : memref<128x256xbf16, #tpu.memory_space<vmem>>, vector<128x256xbf16>
    %cst_65 = arith.constant dense<0.000000e+00> : vector<128x256xf32>
    %180 = tpu.matmul %178, %179, %cst_65 {dimension_numbers = #tpu.dot_dimension_numbers<[1], [0], [0], [1], [0, 0, 1, 1], [], []>} : vector<128x128xbf16>, vector<128x256xbf16>, vector<128x256xf32> -> vector<128x256xf32>
    %c0_66 = arith.constant 0 : index
    %c0_67 = arith.constant 0 : index
    %181 = vector.load %arg14[%c0_66, %c0_67] : memref<1x256xf32, #tpu.memory_space<vmem>>, vector<1x256xf32>
    %182 = vector.broadcast %181 : vector<1x256xf32> to vector<128x256xf32>
    %183 = arith.addf %180, %182 : vector<128x256xf32>
    %cst_68 = arith.constant 0.000000e+00 : f32
    %184 = vector.broadcast %cst_68 : f32 to vector<128x256xf32>
    %185 = arith.maximumf %183, %184 : vector<128x256xf32>
    %186 = arith.truncf %185 : vector<128x256xf32> to vector<128x256xbf16>
    %c0_69 = arith.constant 0 : index
    %c0_70 = arith.constant 0 : index
    %187 = vector.load %arg15[%c0_69, %c0_70] : memref<256x128xbf16, #tpu.memory_space<vmem>>, vector<256x128xbf16>
    %cst_71 = arith.constant dense<0.000000e+00> : vector<128x128xf32>
    %188 = tpu.matmul %186, %187, %cst_71 {dimension_numbers = #tpu.dot_dimension_numbers<[1], [0], [0], [1], [0, 0, 1, 1], [], []>} : vector<128x256xbf16>, vector<256x128xbf16>, vector<128x128xf32> -> vector<128x128xf32>
    %c0_72 = arith.constant 0 : index
    %c0_73 = arith.constant 0 : index
    %189 = vector.load %arg16[%c0_72, %c0_73] : memref<1x128xf32, #tpu.memory_space<vmem>>, vector<1x128xf32>
    %190 = vector.broadcast %189 : vector<1x128xf32> to vector<128x128xf32>
    %191 = arith.addf %188, %190 : vector<128x128xf32>
    %192 = arith.addf %154, %191 : vector<128x128xf32>
    %c0_74 = arith.constant 0 : index
    %c0_75 = arith.constant 0 : index
    %c0_76 = arith.constant 0 : index
    %193 = vector.load %arg17[%c0_74, %c0_75, %c0_76] : memref<1x128x128xf32, #tpu.memory_space<vmem>>, vector<1x128x128xf32>
    %194 = vector.shape_cast %193 : vector<1x128x128xf32> to vector<128x128xf32>
    %195 = vector.shape_cast %192 : vector<128x128xf32> to vector<1x128x128xf32>
    tpu.vector_store %arg17[%c0_74, %c0_75, %c0_76], %195 {strides = array<i32>} : memref<1x128x128xf32, #tpu.memory_space<vmem>>, vector<1x128x128xf32>,
    %196 = vector.broadcast %144 : f32 to vector<1x1x1x1xf32>
    %c0_77 = arith.constant 0 : index
    %c0_78 = arith.constant 0 : index
    %c0_79 = arith.constant 0 : index
    %c0_80 = arith.constant 0 : index
    %197 = vector.load %arg18[%c0_77, %c0_78, %c0_79, %c0_80] : memref<1x1x1x1xf32, #tpu.memory_space<vmem>>, vector<1x1x1x1xf32>
    tpu.vector_store %arg18[%c0_77, %c0_78, %c0_79, %c0_80], %196 {strides = array<i32>} : memref<1x1x1x1xf32, #tpu.memory_space<vmem>>, vector<1x1x1x1xf32>,
    return
  }
  func.func @transform_0(%arg0: i32, %arg1: i32) -> (i32, i32, i32) {
    %c0_i32 = arith.constant 0 : i32
    %c0_i32_0 = arith.constant 0 : i32
    %c0_i32_1 = arith.constant 0 : i32
    return %arg0, %c0_i32, %c0_i32_0 : i32, i32, i32
  }
  func.func @transform_1(%arg0: i32, %arg1: i32) -> (i32, i32, i32) {
    %c0_i32 = arith.constant 0 : i32
    %c0_i32_0 = arith.constant 0 : i32
    return %arg0, %arg1, %c0_i32 : i32, i32, i32
  }
  func.func @transform_2(%arg0: i32, %arg1: i32) -> (i32, i32, i32) {
    %c0_i32 = arith.constant 0 : i32
    %c0_i32_0 = arith.constant 0 : i32
    %c0_i32_1 = arith.constant 0 : i32
    return %arg0, %c0_i32, %c0_i32_0 : i32, i32, i32
  }
  func.func @transform_3(%arg0: i32, %arg1: i32) -> (i32, i32) {
    %c0_i32 = arith.constant 0 : i32
    %c0_i32_0 = arith.constant 0 : i32
    %c0_i32_1 = arith.constant 0 : i32
    return %c0_i32, %c0_i32_0 : i32, i32
  }
  func.func @transform_4(%arg0: i32, %arg1: i32) -> (i32, i32) {
    %c0_i32 = arith.constant 0 : i32
    %c0_i32_0 = arith.constant 0 : i32
    %c0_i32_1 = arith.constant 0 : i32
    return %c0_i32, %c0_i32_0 : i32, i32
  }
  func.func @transform_5(%arg0: i32, %arg1: i32) -> (i32, i32) {
    %c0_i32 = arith.constant 0 : i32
    %c0_i32_0 = arith.constant 0 : i32
    %c0_i32_1 = arith.constant 0 : i32
    return %c0_i32, %c0_i32_0 : i32, i32
  }
  func.func @transform_6(%arg0: i32, %arg1: i32) -> (i32, i32) {
    %c0_i32 = arith.constant 0 : i32
    %c0_i32_0 = arith.constant 0 : i32
    %c0_i32_1 = arith.constant 0 : i32
    return %c0_i32, %c0_i32_0 : i32, i32
  }
  func.func @transform_7(%arg0: i32, %arg1: i32) -> (i32, i32) {
    %c0_i32 = arith.constant 0 : i32
    %c0_i32_0 = arith.constant 0 : i32
    %c0_i32_1 = arith.constant 0 : i32
    return %c0_i32, %c0_i32_0 : i32, i32
  }
  func.func @transform_8(%arg0: i32, %arg1: i32) -> (i32, i32) {
    %c0_i32 = arith.constant 0 : i32
    %c0_i32_0 = arith.constant 0 : i32
    %c0_i32_1 = arith.constant 0 : i32
    return %c0_i32, %c0_i32_0 : i32, i32
  }
  func.func @transform_9(%arg0: i32, %arg1: i32) -> (i32, i32) {
    %c0_i32 = arith.constant 0 : i32
    %c0_i32_0 = arith.constant 0 : i32
    %c0_i32_1 = arith.constant 0 : i32
    return %c0_i32, %c0_i32_0 : i32, i32
  }
  func.func @transform_10(%arg0: i32, %arg1: i32) -> (i32, i32) {
    %c0_i32 = arith.constant 0 : i32
    %c0_i32_0 = arith.constant 0 : i32
    %c0_i32_1 = arith.constant 0 : i32
    return %c0_i32, %c0_i32_0 : i32, i32
  }
  func.func @transform_11(%arg0: i32, %arg1: i32) -> (i32, i32) {
    %c0_i32 = arith.constant 0 : i32
    %c0_i32_0 = arith.constant 0 : i32
    %c0_i32_1 = arith.constant 0 : i32
    return %c0_i32, %c0_i32_0 : i32, i32
  }
  func.func @transform_12(%arg0: i32, %arg1: i32) -> (i32, i32) {
    %c0_i32 = arith.constant 0 : i32
    %c0_i32_0 = arith.constant 0 : i32
    %c0_i32_1 = arith.constant 0 : i32
    return %c0_i32, %c0_i32_0 : i32, i32
  }
  func.func @transform_13(%arg0: i32, %arg1: i32) -> (i32, i32) {
    %c0_i32 = arith.constant 0 : i32
    %c0_i32_0 = arith.constant 0 : i32
    %c0_i32_1 = arith.constant 0 : i32
    return %c0_i32, %c0_i32_0 : i32, i32
  }
  func.func @transform_14(%arg0: i32, %arg1: i32) -> (i32, i32) {
    %c0_i32 = arith.constant 0 : i32
    %c0_i32_0 = arith.constant 0 : i32
    %c0_i32_1 = arith.constant 0 : i32
    return %c0_i32, %c0_i32_0 : i32, i32
  }
  func.func @transform_15(%arg0: i32, %arg1: i32) -> (i32, i32, i32) {
    %c0_i32 = arith.constant 0 : i32
    %c0_i32_0 = arith.constant 0 : i32
    return %arg0, %arg1, %c0_i32 : i32, i32, i32
  }
  func.func @transform_16(%arg0: i32, %arg1: i32) -> (i32, i32, i32, i32) {
    %c0_i32 = arith.constant 0 : i32
    %c0_i32_0 = arith.constant 0 : i32
    %c0_i32_1 = arith.constant 0 : i32
    return %arg0, %arg1, %c0_i32, %c0_i32_0 : i32, i32, i32, i32
  }
}

</mosaic_0001>

<llo_original>
// kernel: tpu_custom_call.1
$region0: #{tpu_custom_call.1}
  #allocation0 [shape = 'u32[]', space=smem, size = 0x4, offset = 0x4, fixed_abs, tag = 'smem constant byte address 0x4 - core index']
  #allocation1 [shape = 'u32[144,128]{1,0:T(1,128)}', space=vmem, size = 0x12000, scoped, tag = 'internal scratch']
  #allocation2 [shape = 'bf16[256,128]{1,0:T(8,128)(2,1)}', space=vmem, size = 0x10000, scoped, tag = 'scratch operand']
  #allocation3 [shape = 'bf16[256,128]{1,0:T(8,128)(2,1)}', space=vmem, size = 0x10000, scoped, tag = 'scratch operand']
  #allocation4 [shape = 'bf16[256,128]{1,0:T(8,128)(2,1)}', space=vmem, size = 0x10000, scoped, tag = 'scratch operand']
  %s0 = inlined_call_operand.hbm [shape: f32[2,256,128], index: 0, kind: input, shape index: {}]
  %s1 = inlined_call_operand.hbm [shape: f32[2,256,256], index: 1, kind: input, shape index: {}]
  %s2 = inlined_call_operand.hbm [shape: f32[2,1,256], index: 2, kind: input, shape index: {}]
  %s3 = inlined_call_operand.hbm [shape: f32[1,128], index: 3, kind: input, shape index: {}]
  %s4 = inlined_call_operand.vmem [shape: f32[1,128], index: 4, kind: input, shape index: {}]
  %s5 = inlined_call_operand.hbm [shape: bf16[128,384], index: 5, kind: input, shape index: {}]
  %s6 = inlined_call_operand.vmem [shape: f32[1,384], index: 6, kind: input, shape index: {}]
  %s7 = inlined_call_operand.hbm [shape: bf16[128,128], index: 7, kind: input, shape index: {}]
  %s8 = inlined_call_operand.vmem [shape: f32[1,128], index: 8, kind: input, shape index: {}]
  %s9 = inlined_call_operand.vmem [shape: f32[1,128], index: 9, kind: input, shape index: {}]
  %s10 = inlined_call_operand.vmem [shape: f32[1,128], index: 10, kind: input, shape index: {}]
  %s11 = inlined_call_operand.hbm [shape: bf16[128,256], index: 11, kind: input, shape index: {}]
  %s12 = inlined_call_operand.vmem [shape: f32[1,256], index: 12, kind: input, shape index: {}]
  %s13 = inlined_call_operand.hbm [shape: bf16[256,128], index: 13, kind: input, shape index: {}]
  %s14 = inlined_call_operand.vmem [shape: f32[1,128], index: 14, kind: input, shape index: {}]
  %s15 = inlined_call_operand.hbm [shape: f32[2,256,128], index: 15, kind: output, shape index: {0}]
  %s16 = inlined_call_operand.vmem [shape: f32[2,2,1,1], index: 16, kind: output, shape index: {1}]
  %17 = xla_tuple %s15, %s16
  %s18 = sld [smem:[#allocation0]]
  $region137: #{tpu_custom_call.1} parent=0
    _
  %s20 = ssub.s32 1, %s18
  %s21 = scalar_select 0, %s20, %s18
  $region1: #{tpu_custom_call.1} parent=0
    #allocation5 [shape = 'u8[262144]{0}', space=vmem, size = 0x40000, scoped, tag = 'input window, operand 0']
    #allocation6 [shape = 's32[2]{0}', space=sflag, size = 0x8, scoped, tag = 'scoped memory for tpu_custom_call.1']
    #allocation7 [shape = 's32[2]{0}', space=sflag, size = 0x8, scoped, tag = 'scoped memory for tpu_custom_call.1']
    #allocation8 [shape = 'u8[262144]{0}', space=vmem, size = 0x40000, scoped, tag = 'input window, operand 1']
    #allocation9 [shape = 's32[2]{0}', space=sflag, size = 0x8, scoped, tag = 'scoped memory for tpu_custom_call.1']
    #allocation10 [shape = 'u8[2048]{0}', space=vmem, size = 0x800, scoped, tag = 'input window, operand 2']
    #allocation11 [shape = 'u8[512]{0}', space=vmem, size = 0x400, scoped, tag = 'input window, operand 3, single buffered']
    #allocation12 [shape = 's32[1]{0}', space=sflag, size = 0x4, scoped, tag = 'scoped memory for tpu_custom_call.1']
    #allocation13 [shape = 'u8[98304]{0}', space=vmem, size = 0x18000, scoped, tag = 'input window, operand 5, single buffered']
    #allocation14 [shape = 'u8[32768]{0}', space=vmem, size = 0x8000, scoped, tag = 'input window, operand 7, single buffered']
    #allocation15 [shape = 's32[1]{0}', space=sflag, size = 0x4, scoped, tag = 'scoped memory for tpu_custom_call.1']
    #allocation16 [shape = 'u8[65536]{0}', space=vmem, size = 0x10000, scoped, tag = 'input window, operand 11, single buffered']
    #allocation17 [shape = 'u8[65536]{0}', space=vmem, size = 0x10000, scoped, tag = 'input window, operand 13, single buffered']
    #allocation18 [shape = 's32[1]{0}', space=sflag, size = 0x4, scoped, tag = 'scoped memory for tpu_custom_call.1']
    #allocation19 [shape = 'u8[131072]{0}', space=vmem, size = 0x20000, scoped, tag = 'output window, operand 0']
    %22 = vsyncpa [#allocation6], 0
    %s23 = scalar_lea.sflag [#allocation6], 1
    %24 = vsyncpa %s23, 0
    %25 = vsyncpa [#allocation9], 0
    %s26 = scalar_lea.sflag [#allocation9], 1
    %27 = vsyncpa %s26, 0
    %28 = vsyncpa [#allocation12], 0
    %29 = vsyncpa [#allocation15], 0
    %30 = vsyncpa [#allocation18], 0
    %31 = vsyncpa [#allocation7], 0
    %s32 = scalar_lea.sflag [#allocation7], 1
    %33 = vsyncpa %s32, 0
    loop: start=0, step=1, limit=6
    $region2: #{tpu_custom_call.1} parent=1 // loop_pre_header
      _
    $region3: #{tpu_custom_call.1} parent=1 // loop_header
      %s35 = sphi 0, %s39
      %p36 = scmp.ge.s32.totalorder %s35, 6
      %s42 = sphi 0, %s54
      %s43 = sphi 0, %s50
      %s44 = sphi 0, %s42
      %s45 = sphi 0, %s43
      %s46 = sphi 0, %s44
      %s47 = sphi 0, %s45
      %s57 = sphi 0, %s59
      %s60 = sphi 0, %s57
      %s61 = sphi 0, %s60
      %s77 = sphi 0, %s61
      %s85 = sphi 0, %s87
      %s88 = sphi 0, %s85
      %s89 = sphi 0, %s88
      %s105 = sphi 0, %s89
      %s111 = sphi 0, %s113
      %s114 = sphi 0, %s111
      %s115 = sphi 0, %s114
      %s131 = sphi 0, %s115
      %s135 = sphi 0, %s135
      %s137 = sphi 0, %s135
      %s138 = sphi 0, %s137
      %s152 = sphi 0, %s138
      %s156 = sphi 0, %s156
      %s158 = sphi 0, %s156
      %s159 = sphi 0, %s158
      %s173 = sphi 0, %s159
      %s177 = sphi 0, %s177
      %s179 = sphi 0, %s177
      %s180 = sphi 0, %s179
      %s194 = sphi 0, %s180
      %s198 = sphi 0, %s198
      %s200 = sphi 0, %s198
      %s201 = sphi 0, %s200
      %s215 = sphi 0, %s201
      %s219 = sphi 0, %s219
      %s221 = sphi 0, %s219
      %s222 = sphi 0, %s221
      %s236 = sphi 0, %s222
      %s240 = sphi 0, %s240
      %s242 = sphi 0, %s240
      %s243 = sphi 0, %s242
      %s257 = sphi 0, %s243
      %s261 = sphi 0, %s261
      %s263 = sphi 0, %s261
      %s264 = sphi 0, %s263
      %s278 = sphi 0, %s264
      %s282 = sphi 0, %s282
      %s284 = sphi 0, %s282
      %s285 = sphi 0, %s284
      %s299 = sphi 0, %s285
      %s303 = sphi 0, %s303
      %s305 = sphi 0, %s303
      %s306 = sphi 0, %s305
      %s320 = sphi 0, %s306
      %s324 = sphi 0, %s324
      %s326 = sphi 0, %s324
      %s327 = sphi 0, %s326
      %s341 = sphi 0, %s327
      %s345 = sphi 0, %s345
      %s347 = sphi 0, %s345
      %s348 = sphi 0, %s347
      %s362 = sphi 0, %s348
      %s366 = sphi 0, %s366
      %s368 = sphi 0, %s366
      %s369 = sphi 0, %s368
      %s383 = sphi 0, %s369
      %s391 = sphi 0, %s393
      %s394 = sphi 0, %s391
      %s395 = sphi 0, %s394
      %s411 = sphi 0, %s395
      %s419 = sphi 0, %s421
      %s422 = sphi 0, %s419
      %s423 = sphi 0, %s422
      %s439 = sphi 0, %s423
    $region4: #{tpu_custom_call.1} parent=1 // loop_header_branch
      %38 = sbr.rel (%p36) target = $region8
    $region5: #{tpu_custom_call.1} parent=1 // loop_body
      %s40 = ssub.s32 %s35, 1
      %s41 = ssub.s32 %s35, 2
      %s48 = sadd.s32 1, %s43
      %p49 = scmp.ge.s32.totalorder %s48, 2
      %s50 = scalar_select %p49, 0, %s48
      %s51 = sadd.s32 1, %s42
      %s52 = scalar_select %p49, %s51, %s42
      %p53 = scmp.ge.s32.totalorder %s52, 2
      %s54 = scalar_select %p53, 0, %s52
      %s55 = ssub.s32 %s42, %s54
      %p56 = scmp.eq.s32.totalorder %s55, 0
      %s58 = sadd.s32 %s57, 1
      %s59 = scalar_select %p56, %s57, %s58
      %p62 = pneg %p56
      %p63 = scmp.eq.s32.totalorder %s35, 3
      %p64 = por %p62, %p63
      %p65 = scmp.ne.s32.totalorder %s57, %s60
      %p66 = scmp.eq.s32.totalorder %s35, 0
      %p67 = por %p65, %p66
      %p68 = scmp.ne.s32.totalorder %s57, %s60
      %p69 = scmp.eq.s32.totalorder %s40, 3
      %p70 = por %p68, %p69
      %p71 = scmp.ne.s32.totalorder %s60, %s61
      %p72 = scmp.eq.s32.totalorder %s40, 0
      %p73 = por %p71, %p72
      %p74 = scmp.ne.s32.totalorder %s60, %s61
      %p75 = scmp.eq.s32.totalorder %s41, 3
      %p76 = por %p74, %p75
      %p78 = scmp.ne.s32.totalorder %s61, %s77
      %p79 = scmp.eq.s32.totalorder %s41, 0
      %p80 = por %p78, %p79
      %s81 = ssub.s32 %s42, %s54
      %s82 = ssub.s32 %s43, %s50
      %s83 = sor.u32 %s81, %s82
      %p84 = scmp.eq.s32.totalorder %s83, 0
      %s86 = sadd.s32 %s85, 1
      %s87 = scalar_select %p84, %s85, %s86
      %p90 = pneg %p84
      %p91 = scmp.eq.s32.totalorder %s35, 3
      %p92 = por %p90, %p91
      %p93 = scmp.ne.s32.totalorder %s85, %s88
      %p94 = scmp.eq.s32.totalorder %s35, 0
      %p95 = por %p93, %p94
      %p96 = scmp.ne.s32.totalorder %s85, %s88
      %p97 = scmp.eq.s32.totalorder %s40, 3
      %p98 = por %p96, %p97
      %p99 = scmp.ne.s32.totalorder %s88, %s89
      %p100 = scmp.eq.s32.totalorder %s40, 0
      %p101 = por %p99, %p100
      %p102 = scmp.ne.s32.totalorder %s88, %s89
      %p103 = scmp.eq.s32.totalorder %s41, 3
      %p104 = por %p102, %p103
      %p106 = scmp.ne.s32.totalorder %s89, %s105
      %p107 = scmp.eq.s32.totalorder %s41, 0
      %p108 = por %p106, %p107
      %s109 = ssub.s32 %s42, %s54
      %p110 = scmp.eq.s32.totalorder %s109, 0
      %s112 = sadd.s32 %s111, 1
      %s113 = scalar_select %p110, %s111, %s112
      %p116 = pneg %p110
      %p117 = scmp.eq.s32.totalorder %s35, 3
      %p118 = por %p116, %p117
      %p119 = scmp.ne.s32.totalorder %s111, %s114
      %p120 = scmp.eq.s32.totalorder %s35, 0
      %p121 = por %p119, %p120
      %p122 = scmp.ne.s32.totalorder %s111, %s114
      %p123 = scmp.eq.s32.totalorder %s40, 3
      %p124 = por %p122, %p123
      %p125 = scmp.ne.s32.totalorder %s114, %s115
      %p126 = scmp.eq.s32.totalorder %s40, 0
      %p127 = por %p125, %p126
      %p128 = scmp.ne.s32.totalorder %s114, %s115
      %p129 = scmp.eq.s32.totalorder %s41, 3
      %p130 = por %p128, %p129
      %p132 = scmp.ne.s32.totalorder %s115, %s131
      %p133 = scmp.eq.s32.totalorder %s41, 0
      %p134 = por %p132, %p133
      %s136 = sadd.s32 %s135, 1
      %p139 = scmp.eq.s32.totalorder %s35, 3
      %p140 = scmp.ne.s32.totalorder %s135, %s137
      %p141 = scmp.eq.s32.totalorder %s35, 0
      %p142 = por %p140, %p141
      %p143 = scmp.ne.s32.totalorder %s135, %s137
      %p144 = scmp.eq.s32.totalorder %s40, 3
      %p145 = por %p143, %p144
      %p146 = scmp.ne.s32.totalorder %s137, %s138
      %p147 = scmp.eq.s32.totalorder %s40, 0
      %p148 = por %p146, %p147
      %p149 = scmp.ne.s32.totalorder %s137, %s138
      %p150 = scmp.eq.s32.totalorder %s41, 3
      %p151 = por %p149, %p150
      %p153 = scmp.ne.s32.totalorder %s138, %s152
      %p154 = scmp.eq.s32.totalorder %s41, 0
      %p155 = por %p153, %p154
      %s157 = sadd.s32 %s156, 1
      %p160 = scmp.eq.s32.totalorder %s35, 3
      %p161 = scmp.ne.s32.totalorder %s156, %s158
      %p162 = scmp.eq.s32.totalorder %s35, 0
      %p163 = por %p161, %p162
      %p164 = scmp.ne.s32.totalorder %s156, %s158
      %p165 = scmp.eq.s32.totalorder %s40, 3
      %p166 = por %p164, %p165
      %p167 = scmp.ne.s32.totalorder %s158, %s159
      %p168 = scmp.eq.s32.totalorder %s40, 0
      %p169 = por %p167, %p168
      %p170 = scmp.ne.s32.totalorder %s158, %s159
      %p171 = scmp.eq.s32.totalorder %s41, 3
      %p172 = por %p170, %p171
      %p174 = scmp.ne.s32.totalorder %s159, %s173
      %p175 = scmp.eq.s32.totalorder %s41, 0
      %p176 = por %p174, %p175
      %s178 = sadd.s32 %s177, 1
      %p181 = scmp.eq.s32.totalorder %s35, 3
      %p182 = scmp.ne.s32.totalorder %s177, %s179
      %p183 = scmp.eq.s32.totalorder %s35, 0
      %p184 = por %p182, %p183
      %p185 = scmp.ne.s32.totalorder %s177, %s179
      %p186 = scmp.eq.s32.totalorder %s40, 3
      %p187 = por %p185, %p186
      %p188 = scmp.ne.s32.totalorder %s179, %s180
      %p189 = scmp.eq.s32.totalorder %s40, 0
      %p190 = por %p188, %p189
      %p191 = scmp.ne.s32.totalorder %s179, %s180
      %p192 = scmp.eq.s32.totalorder %s41, 3
      %p193 = por %p191, %p192
      %p195 = scmp.ne.s32.totalorder %s180, %s194
      %p196 = scmp.eq.s32.totalorder %s41, 0
      %p197 = por %p195, %p196
      %s199 = sadd.s32 %s198, 1
      %p202 = scmp.eq.s32.totalorder %s35, 3
      %p203 = scmp.ne.s32.totalorder %s198, %s200
      %p204 = scmp.eq.s32.totalorder %s35, 0
      %p205 = por %p203, %p204
      %p206 = scmp.ne.s32.totalorder %s198, %s200
      %p207 = scmp.eq.s32.totalorder %s40, 3
      %p208 = por %p206, %p207
      %p209 = scmp.ne.s32.totalorder %s200, %s201
      %p210 = scmp.eq.s32.totalorder %s40, 0
      %p211 = por %p209, %p210
      %p212 = scmp.ne.s32.totalorder %s200, %s201
      %p213 = scmp.eq.s32.totalorder %s41, 3
      %p214 = por %p212, %p213
      %p216 = scmp.ne.s32.totalorder %s201, %s215
      %p217 = scmp.eq.s32.totalorder %s41, 0
      %p218 = por %p216, %p217
      %s220 = sadd.s32 %s219, 1
      %p223 = scmp.eq.s32.totalorder %s35, 3
      %p224 = scmp.ne.s32.totalorder %s219, %s221
      %p225 = scmp.eq.s32.totalorder %s35, 0
      %p226 = por %p224, %p225
      %p227 = scmp.ne.s32.totalorder %s219, %s221
      %p228 = scmp.eq.s32.totalorder %s40, 3
      %p229 = por %p227, %p228
      %p230 = scmp.ne.s32.totalorder %s221, %s222
      %p231 = scmp.eq.s32.totalorder %s40, 0
      %p232 = por %p230, %p231
      %p233 = scmp.ne.s32.totalorder %s221, %s222
      %p234 = scmp.eq.s32.totalorder %s41, 3
      %p235 = por %p233, %p234
      %p237 = scmp.ne.s32.totalorder %s222, %s236
      %p238 = scmp.eq.s32.totalorder %s41, 0
      %p239 = por %p237, %p238
      %s241 = sadd.s32 %s240, 1
      %p244 = scmp.eq.s32.totalorder %s35, 3
      %p245 = scmp.ne.s32.totalorder %s240, %s242
      %p246 = scmp.eq.s32.totalorder %s35, 0
      %p247 = por %p245, %p246
      %p248 = scmp.ne.s32.totalorder %s240, %s242
      %p249 = scmp.eq.s32.totalorder %s40, 3
      %p250 = por %p248, %p249
      %p251 = scmp.ne.s32.totalorder %s242, %s243
      %p252 = scmp.eq.s32.totalorder %s40, 0
      %p253 = por %p251, %p252
      %p254 = scmp.ne.s32.totalorder %s242, %s243
      %p255 = scmp.eq.s32.totalorder %s41, 3
      %p256 = por %p254, %p255
      %p258 = scmp.ne.s32.totalorder %s243, %s257
      %p259 = scmp.eq.s32.totalorder %s41, 0
      %p260 = por %p258, %p259
      %s262 = sadd.s32 %s261, 1
      %p265 = scmp.eq.s32.totalorder %s35, 3
      %p266 = scmp.ne.s32.totalorder %s261, %s263
      %p267 = scmp.eq.s32.totalorder %s35, 0
      %p268 = por %p266, %p267
      %p269 = scmp.ne.s32.totalorder %s261, %s263
      %p270 = scmp.eq.s32.totalorder %s40, 3
      %p271 = por %p269, %p270
      %p272 = scmp.ne.s32.totalorder %s263, %s264
      %p273 = scmp.eq.s32.totalorder %s40, 0
      %p274 = por %p272, %p273
      %p275 = scmp.ne.s32.totalorder %s263, %s264
      %p276 = scmp.eq.s32.totalorder %s41, 3
      %p277 = por %p275, %p276
      %p279 = scmp.ne.s32.totalorder %s264, %s278
      %p280 = scmp.eq.s32.totalorder %s41, 0
      %p281 = por %p279, %p280
      %s283 = sadd.s32 %s282, 1
      %p286 = scmp.eq.s32.totalorder %s35, 3
      %p287 = scmp.ne.s32.totalorder %s282, %s284
      %p288 = scmp.eq.s32.totalorder %s35, 0
      %p289 = por %p287, %p288
      %p290 = scmp.ne.s32.totalorder %s282, %s284
      %p291 = scmp.eq.s32.totalorder %s40, 3
      %p292 = por %p290, %p291
      %p293 = scmp.ne.s32.totalorder %s284, %s285
      %p294 = scmp.eq.s32.totalorder %s40, 0
      %p295 = por %p293, %p294
      %p296 = scmp.ne.s32.totalorder %s284, %s285
      %p297 = scmp.eq.s32.totalorder %s41, 3
      %p298 = por %p296, %p297
      %p300 = scmp.ne.s32.totalorder %s285, %s299
      %p301 = scmp.eq.s32.totalorder %s41, 0
      %p302 = por %p300, %p301
      %s304 = sadd.s32 %s303, 1
      %p307 = scmp.eq.s32.totalorder %s35, 3
      %p308 = scmp.ne.s32.totalorder %s303, %s305
      %p309 = scmp.eq.s32.totalorder %s35, 0
      %p310 = por %p308, %p309
      %p311 = scmp.ne.s32.totalorder %s303, %s305
      %p312 = scmp.eq.s32.totalorder %s40, 3
      %p313 = por %p311, %p312
      %p314 = scmp.ne.s32.totalorder %s305, %s306
      %p315 = scmp.eq.s32.totalorder %s40, 0
      %p316 = por %p314, %p315
      %p317 = scmp.ne.s32.totalorder %s305, %s306
      %p318 = scmp.eq.s32.totalorder %s41, 3
      %p319 = por %p317, %p318
      %p321 = scmp.ne.s32.totalorder %s306, %s320
      %p322 = scmp.eq.s32.totalorder %s41, 0
      %p323 = por %p321, %p322
      %s325 = sadd.s32 %s324, 1
      %p328 = scmp.eq.s32.totalorder %s35, 3
      %p329 = scmp.ne.s32.totalorder %s324, %s326
      %p330 = scmp.eq.s32.totalorder %s35, 0
      %p331 = por %p329, %p330
      %p332 = scmp.ne.s32.totalorder %s324, %s326
      %p333 = scmp.eq.s32.totalorder %s40, 3
      %p334 = por %p332, %p333
      %p335 = scmp.ne.s32.totalorder %s326, %s327
      %p336 = scmp.eq.s32.totalorder %s40, 0
      %p337 = por %p335, %p336
      %p338 = scmp.ne.s32.totalorder %s326, %s327
      %p339 = scmp.eq.s32.totalorder %s41, 3
      %p340 = por %p338, %p339
      %p342 = scmp.ne.s32.totalorder %s327, %s341
      %p343 = scmp.eq.s32.totalorder %s41, 0
      %p344 = por %p342, %p343
      %s346 = sadd.s32 %s345, 1
      %p349 = scmp.eq.s32.totalorder %s35, 3
      %p350 = scmp.ne.s32.totalorder %s345, %s347
      %p351 = scmp.eq.s32.totalorder %s35, 0
      %p352 = por %p350, %p351
      %p353 = scmp.ne.s32.totalorder %s345, %s347
      %p354 = scmp.eq.s32.totalorder %s40, 3
      %p355 = por %p353, %p354
      %p356 = scmp.ne.s32.totalorder %s347, %s348
      %p357 = scmp.eq.s32.totalorder %s40, 0
      %p358 = por %p356, %p357
      %p359 = scmp.ne.s32.totalorder %s347, %s348
      %p360 = scmp.eq.s32.totalorder %s41, 3
      %p361 = por %p359, %p360
      %p363 = scmp.ne.s32.totalorder %s348, %s362
      %p364 = scmp.eq.s32.totalorder %s41, 0
      %p365 = por %p363, %p364
      %s367 = sadd.s32 %s366, 1
      %p370 = scmp.eq.s32.totalorder %s35, 3
      %p371 = scmp.ne.s32.totalorder %s366, %s368
      %p372 = scmp.eq.s32.totalorder %s35, 0
      %p373 = por %p371, %p372
      %p374 = scmp.ne.s32.totalorder %s366, %s368
      %p375 = scmp.eq.s32.totalorder %s40, 3
      %p376 = por %p374, %p375
      %p377 = scmp.ne.s32.totalorder %s368, %s369
      %p378 = scmp.eq.s32.totalorder %s40, 0
      %p379 = por %p377, %p378
      %p380 = scmp.ne.s32.totalorder %s368, %s369
      %p381 = scmp.eq.s32.totalorder %s41, 3
      %p382 = por %p380, %p381
      %p384 = scmp.ne.s32.totalorder %s369, %s383
      %p385 = scmp.eq.s32.totalorder %s41, 0
      %p386 = por %p384, %p385
      %s387 = ssub.s32 %s42, %s54
      %s388 = ssub.s32 %s43, %s50
      %s389 = sor.u32 %s387, %s388
      %p390 = scmp.eq.s32.totalorder %s389, 0
      %s392 = sadd.s32 %s391, 1
      %s393 = scalar_select %p390, %s391, %s392
      %p396 = pneg %p390
      %p397 = scmp.eq.s32.totalorder %s35, 3
      %p398 = por %p396, %p397
      %p399 = scmp.ne.s32.totalorder %s391, %s394
      %p400 = scmp.eq.s32.totalorder %s35, 0
      %p401 = por %p399, %p400
      %p402 = scmp.ne.s32.totalorder %s391, %s394
      %p403 = scmp.eq.s32.totalorder %s40, 3
      %p404 = por %p402, %p403
      %p405 = scmp.ne.s32.totalorder %s394, %s395
      %p406 = scmp.eq.s32.totalorder %s40, 0
      %p407 = por %p405, %p406
      %p408 = scmp.ne.s32.totalorder %s394, %s395
      %p409 = scmp.eq.s32.totalorder %s41, 3
      %p410 = por %p408, %p409
      %p412 = scmp.ne.s32.totalorder %s395, %s411
      %p413 = scmp.eq.s32.totalorder %s41, 0
      %p414 = por %p412, %p413
      %s415 = ssub.s32 %s42, %s54
      %s416 = ssub.s32 %s43, %s50
      %s417 = sor.u32 %s415, %s416
      %p418 = scmp.eq.s32.totalorder %s417, 0
      %s420 = sadd.s32 %s419, 1
      %s421 = scalar_select %p418, %s419, %s420
      %p424 = pneg %p418
      %p425 = scmp.eq.s32.totalorder %s35, 3
      %p426 = por %p424, %p425
      %p427 = scmp.ne.s32.totalorder %s419, %s422
      %p428 = scmp.eq.s32.totalorder %s35, 0
      %p429 = por %p427, %p428
      %p430 = scmp.ne.s32.totalorder %s419, %s422
      %p431 = scmp.eq.s32.totalorder %s40, 3
      %p432 = por %p430, %p431
      %p433 = scmp.ne.s32.totalorder %s422, %s423
      %p434 = scmp.eq.s32.totalorder %s40, 0
      %p435 = por %p433, %p434
      %p436 = scmp.ne.s32.totalorder %s422, %s423
      %p437 = scmp.eq.s32.totalorder %s41, 3
      %p438 = por %p436, %p437
      %p440 = scmp.ne.s32.totalorder %s423, %s439
      %p441 = scmp.eq.s32.totalorder %s41, 0
      %p442 = por %p440, %p441
      %p443 = scmp.le.s32.totalorder 1, %s35
      %p444 = scmp.lt.s32.totalorder %s35, 5
      %p445 = pnand %p443, %p444
      %p446 = pneg %p445
      // Predicated region
      $region9: #{tpu_custom_call.1} parent=5 // pred_check
        _
      $region10: #{tpu_custom_call.1} parent=5 // pred_check_branch
        %448 = sbr.rel (%p445) target = $region12
      $region11: #{tpu_custom_call.1} parent=5 // pred_region
        %s449 = ssub.s32 %s35, 1
        // Predicated region
        $region13: #{tpu_custom_call.1} parent=11 // pred_check
          %p450 = pneg %p148
        $region14: #{tpu_custom_call.1} parent=11 // pred_check_branch
          %452 = sbr.rel (%p450) target = $region16
        $region15: #{tpu_custom_call.1} parent=11 // pred_region
          %s454 = ssub.s32 16, 16
          %455 = vsyncadd [#allocation12], %s454
          %s457 = sshll.u32 [#allocation11], 4
          %s458 = int_to_ptr.vmem [resolvable:$true] %s457
          %460 = dma.hbm_to_vmem [thread:$0]  %s3, 16, %s458, [#allocation12]
        $region16: #{tpu_custom_call.1} parent=11 // pred_fallthru
          _
        // Predicated region
        $region17: #{tpu_custom_call.1} parent=11 // pred_check
          %p461 = pneg %p169
        $region18: #{tpu_custom_call.1} parent=11 // pred_check_branch
          %463 = sbr.rel (%p461) target = $region20
        $region19: #{tpu_custom_call.1} parent=11 // pred_region
          _
        $region20: #{tpu_custom_call.1} parent=11 // pred_fallthru
          _
        // Predicated region
        $region21: #{tpu_custom_call.1} parent=11 // pred_check
          %p464 = pneg %p190
        $region22: #{tpu_custom_call.1} parent=11 // pred_check_branch
          %466 = sbr.rel (%p464) target = $region24
        $region23: #{tpu_custom_call.1} parent=11 // pred_region
          %s468 = ssub.s32 3072, 3072
          %469 = vsyncadd [#allocation12], %s468
          %s470 = sshll.u32 [#allocation13], 4
          %s471 = int_to_ptr.vmem [resolvable:$true] %s470
          %476 = dma.hbm_to_vmem [thread:$0]  %s5, 3072, %s471, [#allocation12], 192, 192, 12
        $region24: #{tpu_custom_call.1} parent=11 // pred_fallthru
          _
        // Predicated region
        $region25: #{tpu_custom_call.1} parent=11 // pred_check
          %p477 = pneg %p211
        $region26: #{tpu_custom_call.1} parent=11 // pred_check_branch
          %479 = sbr.rel (%p477) target = $region28
        $region27: #{tpu_custom_call.1} parent=11 // pred_region
          _
        $region28: #{tpu_custom_call.1} parent=11 // pred_fallthru
          _
        // Predicated region
        $region29: #{tpu_custom_call.1} parent=11 // pred_check
          %p480 = pneg %p232
        $region30: #{tpu_custom_call.1} parent=11 // pred_check_branch
          %482 = sbr.rel (%p480) target = $region32
        $region31: #{tpu_custom_call.1} parent=11 // pred_region
          %s484 = ssub.s32 1024, 1024
          %485 = vsyncadd [#allocation15], %s484
          %s486 = sshll.u32 [#allocation14], 4
          %s487 = int_to_ptr.vmem [resolvable:$true] %s486
          %492 = dma.hbm_to_vmem [thread:$0]  %s7, 1024, %s487, [#allocation15], 64, 64, 4
        $region32: #{tpu_custom_call.1} parent=11 // pred_fallthru
          _
        // Predicated region
        $region33: #{tpu_custom_call.1} parent=11 // pred_check
          %p493 = pneg %p253
        $region34: #{tpu_custom_call.1} parent=11 // pred_check_branch
          %495 = sbr.rel (%p493) target = $region36
        $region35: #{tpu_custom_call.1} parent=11 // pred_region
          _
        $region36: #{tpu_custom_call.1} parent=11 // pred_fallthru
          _
        // Predicated region
        $region37: #{tpu_custom_call.1} parent=11 // pred_check
          %p496 = pneg %p274
        $region38: #{tpu_custom_call.1} parent=11 // pred_check_branch
          %498 = sbr.rel (%p496) target = $region40
        $region39: #{tpu_custom_call.1} parent=11 // pred_region
          _
        $region40: #{tpu_custom_call.1} parent=11 // pred_fallthru
          _
        // Predicated region
        $region41: #{tpu_custom_call.1} parent=11 // pred_check
          %p499 = pneg %p295
        $region42: #{tpu_custom_call.1} parent=11 // pred_check_branch
          %501 = sbr.rel (%p499) target = $region44
        $region43: #{tpu_custom_call.1} parent=11 // pred_region
          _
        $region44: #{tpu_custom_call.1} parent=11 // pred_fallthru
          _
        // Predicated region
        $region45: #{tpu_custom_call.1} parent=11 // pred_check
          %p502 = pneg %p316
        $region46: #{tpu_custom_call.1} parent=11 // pred_check_branch
          %504 = sbr.rel (%p502) target = $region48
        $region47: #{tpu_custom_call.1} parent=11 // pred_region
          %s506 = ssub.s32 2048, 2048
          %507 = vsyncadd [#allocation15], %s506
          %s508 = sshll.u32 [#allocation16], 4
          %s509 = int_to_ptr.vmem [resolvable:$true] %s508
          %514 = dma.hbm_to_vmem [thread:$0]  %s11, 2048, %s509, [#allocation15], 128, 128, 8
        $region48: #{tpu_custom_call.1} parent=11 // pred_fallthru
          _
        // Predicated region
        $region49: #{tpu_custom_call.1} parent=11 // pred_check
          %p515 = pneg %p337
        $region50: #{tpu_custom_call.1} parent=11 // pred_check_branch
          %517 = sbr.rel (%p515) target = $region52
        $region51: #{tpu_custom_call.1} parent=11 // pred_region
          _
        $region52: #{tpu_custom_call.1} parent=11 // pred_fallthru
          _
        // Predicated region
        $region53: #{tpu_custom_call.1} parent=11 // pred_check
          %p518 = pneg %p358
        $region54: #{tpu_custom_call.1} parent=11 // pred_check_branch
          %520 = sbr.rel (%p518) target = $region56
        $region55: #{tpu_custom_call.1} parent=11 // pred_region
          %s522 = ssub.s32 2048, 2048
          %523 = vsyncadd [#allocation18], %s522
          %s524 = sshll.u32 [#allocation17], 4
          %s525 = int_to_ptr.vmem [resolvable:$true] %s524
          %530 = dma.hbm_to_vmem [thread:$0]  %s13, 2048, %s525, [#allocation18], 64, 64, 4
        $region56: #{tpu_custom_call.1} parent=11 // pred_fallthru
          _
        // Predicated region
        $region57: #{tpu_custom_call.1} parent=11 // pred_check
          %p531 = pneg %p379
        $region58: #{tpu_custom_call.1} parent=11 // pred_check_branch
          %533 = sbr.rel (%p531) target = $region60
        $region59: #{tpu_custom_call.1} parent=11 // pred_region
          _
        $region60: #{tpu_custom_call.1} parent=11 // pred_fallthru
          _
      $region12: #{tpu_custom_call.1} parent=5 // pred_fallthru
        _
      %p534 = scmp.lt.s32.totalorder %s35, 4
      // Predicated region
      $region61: #{tpu_custom_call.1} parent=5 // pred_check
        %p535 = pneg %p534
      $region62: #{tpu_custom_call.1} parent=5 // pred_check_branch
        %537 = sbr.rel (%p535) target = $region64
      $region63: #{tpu_custom_call.1} parent=5 // pred_region
        // Predicated region
        $region65: #{tpu_custom_call.1} parent=63 // pred_check
          %p538 = pneg %p67
        $region66: #{tpu_custom_call.1} parent=63 // pred_check_branch
          %540 = sbr.rel (%p538) target = $region68
        $region67: #{tpu_custom_call.1} parent=63 // pred_region
          %s541 = sand.u32 %s57, 1
          %s542 = scalar_lea.sflag [#allocation6], %s541
          %s543 = sand.u32 %s57, 1
          %s544 = smul.addr %s543, 256
          %s545 = scalar_lea.vmem [#allocation5], %s544
          %s547 = ssub.s32 4096, 4096
          %548 = vsyncadd %s542, %s547
          %s549 = smul.addr %s42, 32
          %s550 = smul.addr %s549, 128
          %s551 = scalar_lea.hbm %s0, %s550
          %s552 = sshll.u32 %s545, 4
          %s553 = int_to_ptr.vmem [resolvable:$true] %s552
          %558 = dma.hbm_to_vmem [thread:$0]  %s551, 4096, %s553, %s542, 128, 128, 8
        $region68: #{tpu_custom_call.1} parent=63 // pred_fallthru
          _
        // Predicated region
        $region69: #{tpu_custom_call.1} parent=63 // pred_check
          %p559 = pneg %p95
        $region70: #{tpu_custom_call.1} parent=63 // pred_check_branch
          %561 = sbr.rel (%p559) target = $region72
        $region71: #{tpu_custom_call.1} parent=63 // pred_region
          %s562 = sand.u32 %s35, 1
          %s563 = scalar_lea.sflag [#allocation9], %s562
          %s564 = sand.u32 %s85, 1
          %s565 = smul.addr %s564, 256
          %s566 = scalar_lea.vmem [#allocation8], %s565
          %s567 = smul.u32 16, %s43
          %s569 = ssub.s32 4096, 4096
          %570 = vsyncadd %s563, %s569
          %s571 = smul.addr %s567, 2
          %s572 = smul.addr %s42, 64
          %s573 = sadd.s32 %s571, %s572
          %s574 = smul.addr %s573, 128
          %s575 = scalar_lea.hbm %s1, %s574
          %s576 = sshll.u32 %s566, 4
          %s577 = int_to_ptr.vmem [resolvable:$true] %s576
          %582 = dma.hbm_to_vmem [thread:$0]  %s575, 4096, %s577, %s563, 256, 256, 16
        $region72: #{tpu_custom_call.1} parent=63 // pred_fallthru
          _
        // Predicated region
        $region73: #{tpu_custom_call.1} parent=63 // pred_check
          %p583 = pneg %p121
        $region74: #{tpu_custom_call.1} parent=63 // pred_check_branch
          %585 = sbr.rel (%p583) target = $region76
        $region75: #{tpu_custom_call.1} parent=63 // pred_region
          %s586 = sand.u32 %s35, 1
          %s587 = scalar_lea.sflag [#allocation9], %s586
          %s588 = sand.u32 %s111, 1
          %s589 = smul.addr %s588, 2
          %s590 = scalar_lea.vmem [#allocation10], %s589
          %s592 = ssub.s32 32, 32
          %593 = vsyncadd %s587, %s592
          %s594 = smul.addr %s42, 2
          %s595 = smul.addr %s594, 16
          %s596 = scalar_lea.hbm %s2, %s595
          %s598 = sshll.u32 %s590, 4
          %s599 = int_to_ptr.vmem [resolvable:$true] %s598
          %601 = dma.hbm_to_vmem [thread:$0]  %s596, 32, %s599, %s587
        $region76: #{tpu_custom_call.1} parent=63 // pred_fallthru
          _
      $region64: #{tpu_custom_call.1} parent=5 // pred_fallthru
        _
      %p602 = scmp.le.s32.totalorder 1, %s35
      %p603 = scmp.lt.s32.totalorder %s35, 5
      %p604 = pnand %p602, %p603
      %p605 = pneg %p604
      // Predicated region
      $region77: #{tpu_custom_call.1} parent=5 // pred_check
        _
      $region78: #{tpu_custom_call.1} parent=5 // pred_check_branch
        %607 = sbr.rel (%p604) target = $region80
      $region79: #{tpu_custom_call.1} parent=5 // pred_region
        %s608 = ssub.s32 %s35, 1
        %s609 = sand.u32 %s60, 1
        %s610 = scalar_lea.sflag [#allocation6], %s609
        %s611 = sand.u32 %s60, 1
        %s612 = smul.addr %s611, 256
        %s613 = scalar_lea.vmem [#allocation5], %s612
        // Predicated region
        $region81: #{tpu_custom_call.1} parent=79 // pred_check
          %p614 = pneg %p73
        $region82: #{tpu_custom_call.1} parent=79 // pred_check_branch
          %616 = sbr.rel (%p614) target = $region84
        $region83: #{tpu_custom_call.1} parent=79 // pred_region
          %617 = dma.done %s610, 4096
        $region84: #{tpu_custom_call.1} parent=79 // pred_fallthru
          _
        %s618 = sand.u32 %s40, 1
        %s619 = scalar_lea.sflag [#allocation9], %s618
        %s620 = sand.u32 %s88, 1
        %s621 = smul.addr %s620, 256
        %s622 = scalar_lea.vmem [#allocation8], %s621
        // Predicated region
        $region85: #{tpu_custom_call.1} parent=79 // pred_check
          %p623 = pneg %p101
        $region86: #{tpu_custom_call.1} parent=79 // pred_check_branch
          %625 = sbr.rel (%p623) target = $region88
        $region87: #{tpu_custom_call.1} parent=79 // pred_region
          %626 = dma.done %s619, 4096
        $region88: #{tpu_custom_call.1} parent=79 // pred_fallthru
          _
        %s627 = sand.u32 %s40, 1
        %s628 = scalar_lea.sflag [#allocation9], %s627
        %s629 = sand.u32 %s114, 1
        %s630 = smul.addr %s629, 2
        %s631 = scalar_lea.vmem [#allocation10], %s630
        // Predicated region
        $region89: #{tpu_custom_call.1} parent=79 // pred_check
          %p632 = pneg %p127
        $region90: #{tpu_custom_call.1} parent=79 // pred_check_branch
          %634 = sbr.rel (%p632) target = $region92
        $region91: #{tpu_custom_call.1} parent=79 // pred_region
          %635 = dma.done %s628, 32
        $region92: #{tpu_custom_call.1} parent=79 // pred_fallthru
          _
        // Predicated region
        $region93: #{tpu_custom_call.1} parent=79 // pred_check
          %p636 = pneg %p148
        $region94: #{tpu_custom_call.1} parent=79 // pred_check_branch
          %638 = sbr.rel (%p636) target = $region96
        $region95: #{tpu_custom_call.1} parent=79 // pred_region
          %639 = dma.done [#allocation12], 16
        $region96: #{tpu_custom_call.1} parent=79 // pred_fallthru
          _
        // Predicated region
        $region97: #{tpu_custom_call.1} parent=79 // pred_check
          %p640 = pneg %p190
        $region98: #{tpu_custom_call.1} parent=79 // pred_check_branch
          %642 = sbr.rel (%p640) target = $region100
        $region99: #{tpu_custom_call.1} parent=79 // pred_region
          %643 = dma.done [#allocation12], 3072
        $region100: #{tpu_custom_call.1} parent=79 // pred_fallthru
          _
        // Predicated region
        $region101: #{tpu_custom_call.1} parent=79 // pred_check
          %p644 = pneg %p232
        $region102: #{tpu_custom_call.1} parent=79 // pred_check_branch
          %646 = sbr.rel (%p644) target = $region104
        $region103: #{tpu_custom_call.1} parent=79 // pred_region
          %647 = dma.done [#allocation15], 1024
        $region104: #{tpu_custom_call.1} parent=79 // pred_fallthru
          _
        // Predicated region
        $region105: #{tpu_custom_call.1} parent=79 // pred_check
          %p648 = pneg %p316
        $region106: #{tpu_custom_call.1} parent=79 // pred_check_branch
          %650 = sbr.rel (%p648) target = $region108
        $region107: #{tpu_custom_call.1} parent=79 // pred_region
          %651 = dma.done [#allocation15], 2048
        $region108: #{tpu_custom_call.1} parent=79 // pred_fallthru
          _
        // Predicated region
        $region109: #{tpu_custom_call.1} parent=79 // pred_check
          %p652 = pneg %p358
        $region110: #{tpu_custom_call.1} parent=79 // pred_check_branch
          %654 = sbr.rel (%p652) target = $region112
        $region111: #{tpu_custom_call.1} parent=79 // pred_region
          %655 = dma.done [#allocation18], 2048
        $region112: #{tpu_custom_call.1} parent=79 // pred_fallthru
          _
        %s656 = sand.u32 %s60, 1
        %s657 = scalar_lea.sflag [#allocation6], %s656
        %s658 = sand.u32 %s60, 1
        %s659 = smul.addr %s658, 256
        %s660 = scalar_lea.vmem [#allocation5], %s659
        %p661 = pneg %p73
        %p662 = pneg %p70
        %s663 = sand.u32 %s40, 1
        %s664 = scalar_lea.sflag [#allocation9], %s663
        %s665 = sand.u32 %s88, 1
        %s666 = smul.addr %s665, 256
        %s667 = scalar_lea.vmem [#allocation8], %s666
        %p668 = pneg %p101
        %p669 = pneg %p98
        %s670 = sand.u32 %s40, 1
        %s671 = scalar_lea.sflag [#allocation9], %s670
        %s672 = sand.u32 %s114, 1
        %s673 = smul.addr %s672, 2
        %s674 = scalar_lea.vmem [#allocation10], %s673
        %p675 = pneg %p127
        %p676 = pneg %p124
        %p677 = pneg %p148
        %p678 = pneg %p145
        %p679 = pneg %p169
        %p680 = pneg %p166
        %p681 = pneg %p190
        %p682 = pneg %p187
        %p683 = pneg %p211
        %p684 = pneg %p208
        %p685 = pneg %p232
        %p686 = pneg %p229
        %p687 = pneg %p253
        %p688 = pneg %p250
        %p689 = pneg %p274
        %p690 = pneg %p271
        %p691 = pneg %p295
        %p692 = pneg %p292
        %p693 = pneg %p316
        %p694 = pneg %p313
        %p695 = pneg %p337
        %p696 = pneg %p334
        %p697 = pneg %p358
        %p698 = pneg %p355
        %p699 = pneg %p379
        %p700 = pneg %p376
        %p701 = pneg %p407
        %p702 = pneg %p404
        %s703 = sand.u32 %s394, 1
        %s704 = scalar_lea.sflag [#allocation7], %s703
        %s705 = sand.u32 %s394, 1
        %s706 = smul.addr %s705, 128
        %s707 = scalar_lea.vmem [#allocation19], %s706
        %p708 = pneg %p435
        %p709 = pneg %p432
        %p710 = scmp.lt.s32.totalorder %s44, 1
        %s711 = scalar_select %p710, %s44, 1
        %p712 = scmp.lt.s32.totalorder %s45, 1
        %s713 = scalar_select %p712, %s45, 1
        %s714 = smul.addr %s711, 2
        %s715 = sadd.s32 %s713, %s714
        %s716 = scalar_lea.vmem %s16, %s715
        %s717 = smul.u32 16, %s45
        %s718 = smul.u32 16, %s45
        %p719 = scmp.lt.s32.totalorder %s44, 1
        %s720 = scalar_select %p719, %s44, 1
        %p721 = scmp.lt.s32.totalorder %s45, 1
        %s722 = scalar_select %p721, %s45, 1
        %s723 = smul.addr %s720, 2
        %s724 = sadd.s32 %s722, %s723
        %s725 = scalar_lea.vmem %s16, %s724
        %p727 = scmp.eq.s32.totalorder %s45, 0
        // Predicated region
        $region113: #{tpu_custom_call.1} parent=79 // pred_check
          %p728 = pneg %p727
        $region114: #{tpu_custom_call.1} parent=79 // pred_check_branch
          %730 = sbr.rel (%p728) target = $region116
        $region115: #{tpu_custom_call.1} parent=79 // pred_region
          %v731 = vld [vmem:[%s613] sm:$0xff]
          %v732 = vld [vmem:[%s613 + $0x8] sm:$0xff]
          %v733 = vld [vmem:[%s613 + $0x10] sm:$0xff]
          %v734 = vld [vmem:[%s613 + $0x18] sm:$0xff]
          %v735 = vld [vmem:[%s613 + $0x20] sm:$0xff]
          %v736 = vld [vmem:[%s613 + $0x28] sm:$0xff]
          %v737 = vld [vmem:[%s613 + $0x30] sm:$0xff]
          %v738 = vld [vmem:[%s613 + $0x38] sm:$0xff]
          %v739 = vld [vmem:[%s613 + $0x40] sm:$0xff]
          %v740 = vld [vmem:[%s613 + $0x48] sm:$0xff]
          %v741 = vld [vmem:[%s613 + $0x50] sm:$0xff]
          %v742 = vld [vmem:[%s613 + $0x58] sm:$0xff]
          %v743 = vld [vmem:[%s613 + $0x60] sm:$0xff]
          %v744 = vld [vmem:[%s613 + $0x68] sm:$0xff]
          %v745 = vld [vmem:[%s613 + $0x70] sm:$0xff]
          %v746 = vld [vmem:[%s613 + $0x78] sm:$0xff]
          %v747 = vld [vmem:[%s613 + $0x80] sm:$0xff]
          %v748 = vld [vmem:[%s613 + $0x88] sm:$0xff]
          %v749 = vld [vmem:[%s613 + $0x90] sm:$0xff]
          %v750 = vld [vmem:[%s613 + $0x98] sm:$0xff]
          %v751 = vld [vmem:[%s613 + $0xa0] sm:$0xff]
          %v752 = vld [vmem:[%s613 + $0xa8] sm:$0xff]
          %v753 = vld [vmem:[%s613 + $0xb0] sm:$0xff]
          %v754 = vld [vmem:[%s613 + $0xb8] sm:$0xff]
          %v755 = vld [vmem:[%s613 + $0xc0] sm:$0xff]
          %v756 = vld [vmem:[%s613 + $0xc8] sm:$0xff]
          %v757 = vld [vmem:[%s613 + $0xd0] sm:$0xff]
          %v758 = vld [vmem:[%s613 + $0xd8] sm:$0xff]
          %v759 = vld [vmem:[%s613 + $0xe0] sm:$0xff]
          %v760 = vld [vmem:[%s613 + $0xe8] sm:$0xff]
          %v761 = vld [vmem:[%s613 + $0xf0] sm:$0xff]
          %v762 = vld [vmem:[%s613 + $0xf8] sm:$0xff]
          %v763 = vld [vmem:[#allocation11] sm:$0x1]
          %v764 = vld [vmem:[%s4] sm:$0x1]
          %765 = vadd.xlane.f32.xlu0 %v731
          %v766 = vpop.xlane.xlu0 %765
          %767 = vadd.xlane.f32.xlu0 %v732
          %v768 = vpop.xlane.xlu0 %767
          %769 = vadd.xlane.f32.xlu0 %v733
          %v770 = vpop.xlane.xlu0 %769
          %771 = vadd.xlane.f32.xlu0 %v734
          %v772 = vpop.xlane.xlu0 %771
          %773 = vadd.xlane.f32.xlu0 %v735
          %v774 = vpop.xlane.xlu0 %773
          %775 = vadd.xlane.f32.xlu0 %v736
          %v776 = vpop.xlane.xlu0 %775
          %777 = vadd.xlane.f32.xlu0 %v737
          %v778 = vpop.xlane.xlu0 %777
          %779 = vadd.xlane.f32.xlu0 %v738
          %v780 = vpop.xlane.xlu0 %779
          %781 = vadd.xlane.f32.xlu0 %v739
          %v782 = vpop.xlane.xlu0 %781
          %783 = vadd.xlane.f32.xlu0 %v740
          %v784 = vpop.xlane.xlu0 %783
          %785 = vadd.xlane.f32.xlu0 %v741
          %v786 = vpop.xlane.xlu0 %785
          %787 = vadd.xlane.f32.xlu0 %v742
          %v788 = vpop.xlane.xlu0 %787
          %789 = vadd.xlane.f32.xlu0 %v743
          %v790 = vpop.xlane.xlu0 %789
          %791 = vadd.xlane.f32.xlu0 %v744
          %v792 = vpop.xlane.xlu0 %791
          %793 = vadd.xlane.f32.xlu0 %v745
          %v794 = vpop.xlane.xlu0 %793
          %795 = vadd.xlane.f32.xlu0 %v746
          %v796 = vpop.xlane.xlu0 %795
          %797 = vadd.xlane.f32.xlu0 %v747
          %v798 = vpop.xlane.xlu0 %797
          %799 = vadd.xlane.f32.xlu0 %v748
          %v800 = vpop.xlane.xlu0 %799
          %801 = vadd.xlane.f32.xlu0 %v749
          %v802 = vpop.xlane.xlu0 %801
          %803 = vadd.xlane.f32.xlu0 %v750
          %v804 = vpop.xlane.xlu0 %803
          %805 = vadd.xlane.f32.xlu0 %v751
          %v806 = vpop.xlane.xlu0 %805
          %807 = vadd.xlane.f32.xlu0 %v752
          %v808 = vpop.xlane.xlu0 %807
          %809 = vadd.xlane.f32.xlu0 %v753
          %v810 = vpop.xlane.xlu0 %809
          %811 = vadd.xlane.f32.xlu0 %v754
          %v812 = vpop.xlane.xlu0 %811
          %813 = vadd.xlane.f32.xlu0 %v755
          %v814 = vpop.xlane.xlu0 %813
          %815 = vadd.xlane.f32.xlu0 %v756
          %v816 = vpop.xlane.xlu0 %815
          %817 = vadd.xlane.f32.xlu0 %v757
          %v818 = vpop.xlane.xlu0 %817
          %819 = vadd.xlane.f32.xlu0 %v758
          %v820 = vpop.xlane.xlu0 %819
          %821 = vadd.xlane.f32.xlu0 %v759
          %v822 = vpop.xlane.xlu0 %821
          %823 = vadd.xlane.f32.xlu0 %v760
          %v824 = vpop.xlane.xlu0 %823
          %825 = vadd.xlane.f32.xlu0 %v761
          %v826 = vpop.xlane.xlu0 %825
          %827 = vadd.xlane.f32.xlu0 %v762
          %v828 = vpop.xlane.xlu0 %827
          %v829 = vrcp.pop 128.0
          %v830 = vmul.f32 %v766, %v829
          %v831 = vmul.f32 %v768, %v829
          %v832 = vmul.f32 %v770, %v829
          %v833 = vmul.f32 %v772, %v829
          %v834 = vmul.f32 %v774, %v829
          %v835 = vmul.f32 %v776, %v829
          %v836 = vmul.f32 %v778, %v829
          %v837 = vmul.f32 %v780, %v829
          %v838 = vmul.f32 %v782, %v829
          %v839 = vmul.f32 %v784, %v829
          %v840 = vmul.f32 %v786, %v829
          %v841 = vmul.f32 %v788, %v829
          %v842 = vmul.f32 %v790, %v829
          %v843 = vmul.f32 %v792, %v829
          %v844 = vmul.f32 %v794, %v829
          %v845 = vmul.f32 %v796, %v829
          %v846 = vmul.f32 %v798, %v829
          %v847 = vmul.f32 %v800, %v829
          %v848 = vmul.f32 %v802, %v829
          %v849 = vmul.f32 %v804, %v829
          %v850 = vmul.f32 %v806, %v829
          %v851 = vmul.f32 %v808, %v829
          %v852 = vmul.f32 %v810, %v829
          %v853 = vmul.f32 %v812, %v829
          %v854 = vmul.f32 %v814, %v829
          %v855 = vmul.f32 %v816, %v829
          %v856 = vmul.f32 %v818, %v829
          %v857 = vmul.f32 %v820, %v829
          %v858 = vmul.f32 %v822, %v829
          %v859 = vmul.f32 %v824, %v829
          %v860 = vmul.f32 %v826, %v829
          %v861 = vmul.f32 %v828, %v829
          %v862 = vsub.f32 %v731, %v830
          %v863 = vsub.f32 %v732, %v831
          %v864 = vsub.f32 %v733, %v832
          %v865 = vsub.f32 %v734, %v833
          %v866 = vsub.f32 %v735, %v834
          %v867 = vsub.f32 %v736, %v835
          %v868 = vsub.f32 %v737, %v836
          %v869 = vsub.f32 %v738, %v837
          %v870 = vsub.f32 %v739, %v838
          %v871 = vsub.f32 %v740, %v839
          %v872 = vsub.f32 %v741, %v840
          %v873 = vsub.f32 %v742, %v841
          %v874 = vsub.f32 %v743, %v842
          %v875 = vsub.f32 %v744, %v843
          %v876 = vsub.f32 %v745, %v844
          %v877 = vsub.f32 %v746, %v845
          %v878 = vsub.f32 %v747, %v846
          %v879 = vsub.f32 %v748, %v847
          %v880 = vsub.f32 %v749, %v848
          %v881 = vsub.f32 %v750, %v849
          %v882 = vsub.f32 %v751, %v850
          %v883 = vsub.f32 %v752, %v851
          %v884 = vsub.f32 %v753, %v852
          %v885 = vsub.f32 %v754, %v853
          %v886 = vsub.f32 %v755, %v854
          %v887 = vsub.f32 %v756, %v855
          %v888 = vsub.f32 %v757, %v856
          %v889 = vsub.f32 %v758, %v857
          %v890 = vsub.f32 %v759, %v858
          %v891 = vsub.f32 %v760, %v859
          %v892 = vsub.f32 %v761, %v860
          %v893 = vsub.f32 %v762, %v861
          %v894 = vmul.f32 %v862, %v862
          %v895 = vmul.f32 %v863, %v863
          %v896 = vmul.f32 %v864, %v864
          %v897 = vmul.f32 %v865, %v865
          %v898 = vmul.f32 %v866, %v866
          %v899 = vmul.f32 %v867, %v867
          %v900 = vmul.f32 %v868, %v868
          %v901 = vmul.f32 %v869, %v869
          %v902 = vmul.f32 %v870, %v870
          %v903 = vmul.f32 %v871, %v871
          %v904 = vmul.f32 %v872, %v872
          %v905 = vmul.f32 %v873, %v873
          %v906 = vmul.f32 %v874, %v874
          %v907 = vmul.f32 %v875, %v875
          %v908 = vmul.f32 %v876, %v876
          %v909 = vmul.f32 %v877, %v877
          %v910 = vmul.f32 %v878, %v878
          %v911 = vmul.f32 %v879, %v879
          %v912 = vmul.f32 %v880, %v880
          %v913 = vmul.f32 %v881, %v881
          %v914 = vmul.f32 %v882, %v882
          %v915 = vmul.f32 %v883, %v883
          %v916 = vmul.f32 %v884, %v884
          %v917 = vmul.f32 %v885, %v885
          %v918 = vmul.f32 %v886, %v886
          %v919 = vmul.f32 %v887, %v887
          %v920 = vmul.f32 %v888, %v888
          %v921 = vmul.f32 %v889, %v889
          %v922 = vmul.f32 %v890, %v890
          %v923 = vmul.f32 %v891, %v891
          %v924 = vmul.f32 %v892, %v892
          %v925 = vmul.f32 %v893, %v893
          %926 = vadd.xlane.f32.xlu0 %v894
          %v927 = vpop.xlane.xlu0 %926
          %928 = vadd.xlane.f32.xlu0 %v895
          %v929 = vpop.xlane.xlu0 %928
          %930 = vadd.xlane.f32.xlu0 %v896
          %v931 = vpop.xlane.xlu0 %930
          %932 = vadd.xlane.f32.xlu0 %v897
          %v933 = vpop.xlane.xlu0 %932
          %934 = vadd.xlane.f32.xlu0 %v898
          %v935 = vpop.xlane.xlu0 %934
          %936 = vadd.xlane.f32.xlu0 %v899
          %v937 = vpop.xlane.xlu0 %936
          %938 = vadd.xlane.f32.xlu0 %v900
          %v939 = vpop.xlane.xlu0 %938
          %940 = vadd.xlane.f32.xlu0 %v901
          %v941 = vpop.xlane.xlu0 %940
          %942 = vadd.xlane.f32.xlu0 %v902
          %v943 = vpop.xlane.xlu0 %942
          %944 = vadd.xlane.f32.xlu0 %v903
          %v945 = vpop.xlane.xlu0 %944
          %946 = vadd.xlane.f32.xlu0 %v904
          %v947 = vpop.xlane.xlu0 %946
          %948 = vadd.xlane.f32.xlu0 %v905
          %v949 = vpop.xlane.xlu0 %948
          %950 = vadd.xlane.f32.xlu0 %v906
          %v951 = vpop.xlane.xlu0 %950
          %952 = vadd.xlane.f32.xlu0 %v907
          %v953 = vpop.xlane.xlu0 %952
          %954 = vadd.xlane.f32.xlu0 %v908
          %v955 = vpop.xlane.xlu0 %954
          %956 = vadd.xlane.f32.xlu0 %v909
          %v957 = vpop.xlane.xlu0 %956
          %958 = vadd.xlane.f32.xlu0 %v910
          %v959 = vpop.xlane.xlu0 %958
          %960 = vadd.xlane.f32.xlu0 %v911
          %v961 = vpop.xlane.xlu0 %960
          %962 = vadd.xlane.f32.xlu0 %v912
          %v963 = vpop.xlane.xlu0 %962
          %964 = vadd.xlane.f32.xlu0 %v913
          %v965 = vpop.xlane.xlu0 %964
          %966 = vadd.xlane.f32.xlu0 %v914
          %v967 = vpop.xlane.xlu0 %966
          %968 = vadd.xlane.f32.xlu0 %v915
          %v969 = vpop.xlane.xlu0 %968
          %970 = vadd.xlane.f32.xlu0 %v916
          %v971 = vpop.xlane.xlu0 %970
          %972 = vadd.xlane.f32.xlu0 %v917
          %v973 = vpop.xlane.xlu0 %972
          %974 = vadd.xlane.f32.xlu0 %v918
          %v975 = vpop.xlane.xlu0 %974
          %976 = vadd.xlane.f32.xlu0 %v919
          %v977 = vpop.xlane.xlu0 %976
          %978 = vadd.xlane.f32.xlu0 %v920
          %v979 = vpop.xlane.xlu0 %978
          %980 = vadd.xlane.f32.xlu0 %v921
          %v981 = vpop.xlane.xlu0 %980
          %982 = vadd.xlane.f32.xlu0 %v922
          %v983 = vpop.xlane.xlu0 %982
          %984 = vadd.xlane.f32.xlu0 %v923
          %v985 = vpop.xlane.xlu0 %984
          %986 = vadd.xlane.f32.xlu0 %v924
          %v987 = vpop.xlane.xlu0 %986
          %988 = vadd.xlane.f32.xlu0 %v925
          %v989 = vpop.xlane.xlu0 %988
          %v990 = vmul.f32 %v927, 0.007874016
          %v991 = vmul.f32 %v929, 0.007874016
          %v992 = vmul.f32 %v931, 0.007874016
          %v993 = vmul.f32 %v933, 0.007874016
          %v994 = vmul.f32 %v935, 0.007874016
          %v995 = vmul.f32 %v937, 0.007874016
          %v996 = vmul.f32 %v939, 0.007874016
          %v997 = vmul.f32 %v941, 0.007874016
          %v998 = vmul.f32 %v943, 0.007874016
          %v999 = vmul.f32 %v945, 0.007874016
          %v1000 = vmul.f32 %v947, 0.007874016
          %v1001 = vmul.f32 %v949, 0.007874016
          %v1002 = vmul.f32 %v951, 0.007874016
          %v1003 = vmul.f32 %v953, 0.007874016
          %v1004 = vmul.f32 %v955, 0.007874016
          %v1005 = vmul.f32 %v957, 0.007874016
          %v1006 = vmul.f32 %v959, 0.007874016
          %v1007 = vmul.f32 %v961, 0.007874016
          %v1008 = vmul.f32 %v963, 0.007874016
          %v1009 = vmul.f32 %v965, 0.007874016
          %v1010 = vmul.f32 %v967, 0.007874016
          %v1011 = vmul.f32 %v969, 0.007874016
          %v1012 = vmul.f32 %v971, 0.007874016
          %v1013 = vmul.f32 %v973, 0.007874016
          %v1014 = vmul.f32 %v975, 0.007874016
          %v1015 = vmul.f32 %v977, 0.007874016
          %v1016 = vmul.f32 %v979, 0.007874016
          %v1017 = vmul.f32 %v981, 0.007874016
          %v1018 = vmul.f32 %v983, 0.007874016
          %v1019 = vmul.f32 %v985, 0.007874016
          %v1020 = vmul.f32 %v987, 0.007874016
          %v1021 = vmul.f32 %v989, 0.007874016
          %v1022 = vrsqrt.pop %v990
          %v1023 = vmul.f32 %v990, %v1022
          %vm1024 = vcmp.eq.f32.partialorder %v990, inf
          %v1025 = vsel %vm1024, %v990, %v1023
          %vm1026 = vcmp.eq.f32.partialorder %v990, 0.0
          %v1027 = vand.u32 %v990, 2147483648
          %v1028 = vsel %vm1026, %v1027, %v1025
          %v1029 = vrsqrt.pop %v991
          %v1030 = vmul.f32 %v991, %v1029
          %vm1031 = vcmp.eq.f32.partialorder %v991, inf
          %v1032 = vsel %vm1031, %v991, %v1030
          %vm1033 = vcmp.eq.f32.partialorder %v991, 0.0
          %v1034 = vand.u32 %v991, 2147483648
          %v1035 = vsel %vm1033, %v1034, %v1032
          %v1036 = vrsqrt.pop %v992
          %v1037 = vmul.f32 %v992, %v1036
          %vm1038 = vcmp.eq.f32.partialorder %v992, inf
          %v1039 = vsel %vm1038, %v992, %v1037
          %vm1040 = vcmp.eq.f32.partialorder %v992, 0.0
          %v1041 = vand.u32 %v992, 2147483648
          %v1042 = vsel %vm1040, %v1041, %v1039
          %v1043 = vrsqrt.pop %v993
          %v1044 = vmul.f32 %v993, %v1043
          %vm1045 = vcmp.eq.f32.partialorder %v993, inf
          %v1046 = vsel %vm1045, %v993, %v1044
          %vm1047 = vcmp.eq.f32.partialorder %v993, 0.0
          %v1048 = vand.u32 %v993, 2147483648
          %v1049 = vsel %vm1047, %v1048, %v1046
          %v1050 = vrsqrt.pop %v994
          %v1051 = vmul.f32 %v994, %v1050
          %vm1052 = vcmp.eq.f32.partialorder %v994, inf
          %v1053 = vsel %vm1052, %v994, %v1051
          %vm1054 = vcmp.eq.f32.partialorder %v994, 0.0
          %v1055 = vand.u32 %v994, 2147483648
          %v1056 = vsel %vm1054, %v1055, %v1053
          %v1057 = vrsqrt.pop %v995
          %v1058 = vmul.f32 %v995, %v1057
          %vm1059 = vcmp.eq.f32.partialorder %v995, inf
          %v1060 = vsel %vm1059, %v995, %v1058
          %vm1061 = vcmp.eq.f32.partialorder %v995, 0.0
          %v1062 = vand.u32 %v995, 2147483648
          %v1063 = vsel %vm1061, %v1062, %v1060
          %v1064 = vrsqrt.pop %v996
          %v1065 = vmul.f32 %v996, %v1064
          %vm1066 = vcmp.eq.f32.partialorder %v996, inf
          %v1067 = vsel %vm1066, %v996, %v1065
          %vm1068 = vcmp.eq.f32.partialorder %v996, 0.0
          %v1069 = vand.u32 %v996, 2147483648
          %v1070 = vsel %vm1068, %v1069, %v1067
          %v1071 = vrsqrt.pop %v997
          %v1072 = vmul.f32 %v997, %v1071
          %vm1073 = vcmp.eq.f32.partialorder %v997, inf
          %v1074 = vsel %vm1073, %v997, %v1072
          %vm1075 = vcmp.eq.f32.partialorder %v997, 0.0
          %v1076 = vand.u32 %v997, 2147483648
          %v1077 = vsel %vm1075, %v1076, %v1074
          %v1078 = vrsqrt.pop %v998
          %v1079 = vmul.f32 %v998, %v1078
          %vm1080 = vcmp.eq.f32.partialorder %v998, inf
          %v1081 = vsel %vm1080, %v998, %v1079
          %vm1082 = vcmp.eq.f32.partialorder %v998, 0.0
          %v1083 = vand.u32 %v998, 2147483648
          %v1084 = vsel %vm1082, %v1083, %v1081
          %v1085 = vrsqrt.pop %v999
          %v1086 = vmul.f32 %v999, %v1085
          %vm1087 = vcmp.eq.f32.partialorder %v999, inf
          %v1088 = vsel %vm1087, %v999, %v1086
          %vm1089 = vcmp.eq.f32.partialorder %v999, 0.0
          %v1090 = vand.u32 %v999, 2147483648
          %v1091 = vsel %vm1089, %v1090, %v1088
          %v1092 = vrsqrt.pop %v1000
          %v1093 = vmul.f32 %v1000, %v1092
          %vm1094 = vcmp.eq.f32.partialorder %v1000, inf
          %v1095 = vsel %vm1094, %v1000, %v1093
          %vm1096 = vcmp.eq.f32.partialorder %v1000, 0.0
          %v1097 = vand.u32 %v1000, 2147483648
          %v1098 = vsel %vm1096, %v1097, %v1095
          %v1099 = vrsqrt.pop %v1001
          %v1100 = vmul.f32 %v1001, %v1099
          %vm1101 = vcmp.eq.f32.partialorder %v1001, inf
          %v1102 = vsel %vm1101, %v1001, %v1100
          %vm1103 = vcmp.eq.f32.partialorder %v1001, 0.0
          %v1104 = vand.u32 %v1001, 2147483648
          %v1105 = vsel %vm1103, %v1104, %v1102
          %v1106 = vrsqrt.pop %v1002
          %v1107 = vmul.f32 %v1002, %v1106
          %vm1108 = vcmp.eq.f32.partialorder %v1002, inf
          %v1109 = vsel %vm1108, %v1002, %v1107
          %vm1110 = vcmp.eq.f32.partialorder %v1002, 0.0
          %v1111 = vand.u32 %v1002, 2147483648
          %v1112 = vsel %vm1110, %v1111, %v1109
          %v1113 = vrsqrt.pop %v1003
          %v1114 = vmul.f32 %v1003, %v1113
          %vm1115 = vcmp.eq.f32.partialorder %v1003, inf
          %v1116 = vsel %vm1115, %v1003, %v1114
          %vm1117 = vcmp.eq.f32.partialorder %v1003, 0.0
          %v1118 = vand.u32 %v1003, 2147483648
          %v1119 = vsel %vm1117, %v1118, %v1116
          %v1120 = vrsqrt.pop %v1004
          %v1121 = vmul.f32 %v1004, %v1120
          %vm1122 = vcmp.eq.f32.partialorder %v1004, inf
          %v1123 = vsel %vm1122, %v1004, %v1121
          %vm1124 = vcmp.eq.f32.partialorder %v1004, 0.0
          %v1125 = vand.u32 %v1004, 2147483648
          %v1126 = vsel %vm1124, %v1125, %v1123
          %v1127 = vrsqrt.pop %v1005
          %v1128 = vmul.f32 %v1005, %v1127
          %vm1129 = vcmp.eq.f32.partialorder %v1005, inf
          %v1130 = vsel %vm1129, %v1005, %v1128
          %vm1131 = vcmp.eq.f32.partialorder %v1005, 0.0
          %v1132 = vand.u32 %v1005, 2147483648
          %v1133 = vsel %vm1131, %v1132, %v1130
          %v1134 = vrsqrt.pop %v1006
          %v1135 = vmul.f32 %v1006, %v1134
          %vm1136 = vcmp.eq.f32.partialorder %v1006, inf
          %v1137 = vsel %vm1136, %v1006, %v1135
          %vm1138 = vcmp.eq.f32.partialorder %v1006, 0.0
          %v1139 = vand.u32 %v1006, 2147483648
          %v1140 = vsel %vm1138, %v1139, %v1137
          %v1141 = vrsqrt.pop %v1007
          %v1142 = vmul.f32 %v1007, %v1141
          %vm1143 = vcmp.eq.f32.partialorder %v1007, inf
          %v1144 = vsel %vm1143, %v1007, %v1142
          %vm1145 = vcmp.eq.f32.partialorder %v1007, 0.0
          %v1146 = vand.u32 %v1007, 2147483648
          %v1147 = vsel %vm1145, %v1146, %v1144
          %v1148 = vrsqrt.pop %v1008
          %v1149 = vmul.f32 %v1008, %v1148
          %vm1150 = vcmp.eq.f32.partialorder %v1008, inf
          %v1151 = vsel %vm1150, %v1008, %v1149
          %vm1152 = vcmp.eq.f32.partialorder %v1008, 0.0
          %v1153 = vand.u32 %v1008, 2147483648
          %v1154 = vsel %vm1152, %v1153, %v1151
          %v1155 = vrsqrt.pop %v1009
          %v1156 = vmul.f32 %v1009, %v1155
          %vm1157 = vcmp.eq.f32.partialorder %v1009, inf
          %v1158 = vsel %vm1157, %v1009, %v1156
          %vm1159 = vcmp.eq.f32.partialorder %v1009, 0.0
          %v1160 = vand.u32 %v1009, 2147483648
          %v1161 = vsel %vm1159, %v1160, %v1158
          %v1162 = vrsqrt.pop %v1010
          %v1163 = vmul.f32 %v1010, %v1162
          %vm1164 = vcmp.eq.f32.partialorder %v1010, inf
          %v1165 = vsel %vm1164, %v1010, %v1163
          %vm1166 = vcmp.eq.f32.partialorder %v1010, 0.0
          %v1167 = vand.u32 %v1010, 2147483648
          %v1168 = vsel %vm1166, %v1167, %v1165
          %v1169 = vrsqrt.pop %v1011
          %v1170 = vmul.f32 %v1011, %v1169
          %vm1171 = vcmp.eq.f32.partialorder %v1011, inf
          %v1172 = vsel %vm1171, %v1011, %v1170
          %vm1173 = vcmp.eq.f32.partialorder %v1011, 0.0
          %v1174 = vand.u32 %v1011, 2147483648
          %v1175 = vsel %vm1173, %v1174, %v1172
          %v1176 = vrsqrt.pop %v1012
          %v1177 = vmul.f32 %v1012, %v1176
          %vm1178 = vcmp.eq.f32.partialorder %v1012, inf
          %v1179 = vsel %vm1178, %v1012, %v1177
          %vm1180 = vcmp.eq.f32.partialorder %v1012, 0.0
          %v1181 = vand.u32 %v1012, 2147483648
          %v1182 = vsel %vm1180, %v1181, %v1179
          %v1183 = vrsqrt.pop %v1013
          %v1184 = vmul.f32 %v1013, %v1183
          %vm1185 = vcmp.eq.f32.partialorder %v1013, inf
          %v1186 = vsel %vm1185, %v1013, %v1184
          %vm1187 = vcmp.eq.f32.partialorder %v1013, 0.0
          %v1188 = vand.u32 %v1013, 2147483648
          %v1189 = vsel %vm1187, %v1188, %v1186
          %v1190 = vrsqrt.pop %v1014
          %v1191 = vmul.f32 %v1014, %v1190
          %vm1192 = vcmp.eq.f32.partialorder %v1014, inf
          %v1193 = vsel %vm1192, %v1014, %v1191
          %vm1194 = vcmp.eq.f32.partialorder %v1014, 0.0
          %v1195 = vand.u32 %v1014, 2147483648
          %v1196 = vsel %vm1194, %v1195, %v1193
          %v1197 = vrsqrt.pop %v1015
          %v1198 = vmul.f32 %v1015, %v1197
          %vm1199 = vcmp.eq.f32.partialorder %v1015, inf
          %v1200 = vsel %vm1199, %v1015, %v1198
          %vm1201 = vcmp.eq.f32.partialorder %v1015, 0.0
          %v1202 = vand.u32 %v1015, 2147483648
          %v1203 = vsel %vm1201, %v1202, %v1200
          %v1204 = vrsqrt.pop %v1016
          %v1205 = vmul.f32 %v1016, %v1204
          %vm1206 = vcmp.eq.f32.partialorder %v1016, inf
          %v1207 = vsel %vm1206, %v1016, %v1205
          %vm1208 = vcmp.eq.f32.partialorder %v1016, 0.0
          %v1209 = vand.u32 %v1016, 2147483648
          %v1210 = vsel %vm1208, %v1209, %v1207
          %v1211 = vrsqrt.pop %v1017
          %v1212 = vmul.f32 %v1017, %v1211
          %vm1213 = vcmp.eq.f32.partialorder %v1017, inf
          %v1214 = vsel %vm1213, %v1017, %v1212
          %vm1215 = vcmp.eq.f32.partialorder %v1017, 0.0
          %v1216 = vand.u32 %v1017, 2147483648
          %v1217 = vsel %vm1215, %v1216, %v1214
          %v1218 = vrsqrt.pop %v1018
          %v1219 = vmul.f32 %v1018, %v1218
          %vm1220 = vcmp.eq.f32.partialorder %v1018, inf
          %v1221 = vsel %vm1220, %v1018, %v1219
          %vm1222 = vcmp.eq.f32.partialorder %v1018, 0.0
          %v1223 = vand.u32 %v1018, 2147483648
          %v1224 = vsel %vm1222, %v1223, %v1221
          %v1225 = vrsqrt.pop %v1019
          %v1226 = vmul.f32 %v1019, %v1225
          %vm1227 = vcmp.eq.f32.partialorder %v1019, inf
          %v1228 = vsel %vm1227, %v1019, %v1226
          %vm1229 = vcmp.eq.f32.partialorder %v1019, 0.0
          %v1230 = vand.u32 %v1019, 2147483648
          %v1231 = vsel %vm1229, %v1230, %v1228
          %v1232 = vrsqrt.pop %v1020
          %v1233 = vmul.f32 %v1020, %v1232
          %vm1234 = vcmp.eq.f32.partialorder %v1020, inf
          %v1235 = vsel %vm1234, %v1020, %v1233
          %vm1236 = vcmp.eq.f32.partialorder %v1020, 0.0
          %v1237 = vand.u32 %v1020, 2147483648
          %v1238 = vsel %vm1236, %v1237, %v1235
          %v1239 = vrsqrt.pop %v1021
          %v1240 = vmul.f32 %v1021, %v1239
          %vm1241 = vcmp.eq.f32.partialorder %v1021, inf
          %v1242 = vsel %vm1241, %v1021, %v1240
          %vm1243 = vcmp.eq.f32.partialorder %v1021, 0.0
          %v1244 = vand.u32 %v1021, 2147483648
          %v1245 = vsel %vm1243, %v1244, %v1242
          %v1246 = vadd.f32 %v1028, 1e-06
          %v1247 = vadd.f32 %v1035, 1e-06
          %v1248 = vadd.f32 %v1042, 1e-06
          %v1249 = vadd.f32 %v1049, 1e-06
          %v1250 = vadd.f32 %v1056, 1e-06
          %v1251 = vadd.f32 %v1063, 1e-06
          %v1252 = vadd.f32 %v1070, 1e-06
          %v1253 = vadd.f32 %v1077, 1e-06
          %v1254 = vadd.f32 %v1084, 1e-06
          %v1255 = vadd.f32 %v1091, 1e-06
          %v1256 = vadd.f32 %v1098, 1e-06
          %v1257 = vadd.f32 %v1105, 1e-06
          %v1258 = vadd.f32 %v1112, 1e-06
          %v1259 = vadd.f32 %v1119, 1e-06
          %v1260 = vadd.f32 %v1126, 1e-06
          %v1261 = vadd.f32 %v1133, 1e-06
          %v1262 = vadd.f32 %v1140, 1e-06
          %v1263 = vadd.f32 %v1147, 1e-06
          %v1264 = vadd.f32 %v1154, 1e-06
          %v1265 = vadd.f32 %v1161, 1e-06
          %v1266 = vadd.f32 %v1168, 1e-06
          %v1267 = vadd.f32 %v1175, 1e-06
          %v1268 = vadd.f32 %v1182, 1e-06
          %v1269 = vadd.f32 %v1189, 1e-06
          %v1270 = vadd.f32 %v1196, 1e-06
          %v1271 = vadd.f32 %v1203, 1e-06
          %v1272 = vadd.f32 %v1210, 1e-06
          %v1273 = vadd.f32 %v1217, 1e-06
          %v1274 = vadd.f32 %v1224, 1e-06
          %v1275 = vadd.f32 %v1231, 1e-06
          %v1276 = vadd.f32 %v1238, 1e-06
          %v1277 = vadd.f32 %v1245, 1e-06
          %v1278 = vrcp.pop %v1246
          %v1279 = vrcp.pop %v1247
          %v1280 = vrcp.pop %v1248
          %v1281 = vrcp.pop %v1249
          %v1282 = vrcp.pop %v1250
          %v1283 = vrcp.pop %v1251
          %v1284 = vrcp.pop %v1252
          %v1285 = vrcp.pop %v1253
          %v1286 = vrcp.pop %v1254
          %v1287 = vrcp.pop %v1255
          %v1288 = vrcp.pop %v1256
          %v1289 = vrcp.pop %v1257
          %v1290 = vrcp.pop %v1258
          %v1291 = vrcp.pop %v1259
          %v1292 = vrcp.pop %v1260
          %v1293 = vrcp.pop %v1261
          %v1294 = vrcp.pop %v1262
          %v1295 = vrcp.pop %v1263
          %v1296 = vrcp.pop %v1264
          %v1297 = vrcp.pop %v1265
          %v1298 = vrcp.pop %v1266
          %v1299 = vrcp.pop %v1267
          %v1300 = vrcp.pop %v1268
          %v1301 = vrcp.pop %v1269
          %v1302 = vrcp.pop %v1270
          %v1303 = vrcp.pop %v1271
          %v1304 = vrcp.pop %v1272
          %v1305 = vrcp.pop %v1273
          %v1306 = vrcp.pop %v1274
          %v1307 = vrcp.pop %v1275
          %v1308 = vrcp.pop %v1276
          %v1309 = vrcp.pop %v1277
          %v1311 = vlaneseq
          %v1312 = vshrl.u32 %v1311, 7
          %v1313 = vsub.s32 0, %v1312
          %v1314 = vrot.slane %v763, %v1313
          %v1316 = vmul.f32 %v1314, %v862
          %v1317 = vmul.f32 %v1314, %v863
          %v1318 = vmul.f32 %v1314, %v864
          %v1319 = vmul.f32 %v1314, %v865
          %v1320 = vmul.f32 %v1314, %v866
          %v1321 = vmul.f32 %v1314, %v867
          %v1322 = vmul.f32 %v1314, %v868
          %v1323 = vmul.f32 %v1314, %v869
          %v1324 = vmul.f32 %v1314, %v870
          %v1325 = vmul.f32 %v1314, %v871
          %v1326 = vmul.f32 %v1314, %v872
          %v1327 = vmul.f32 %v1314, %v873
          %v1328 = vmul.f32 %v1314, %v874
          %v1329 = vmul.f32 %v1314, %v875
          %v1330 = vmul.f32 %v1314, %v876
          %v1331 = vmul.f32 %v1314, %v877
          %v1332 = vmul.f32 %v1314, %v878
          %v1333 = vmul.f32 %v1314, %v879
          %v1334 = vmul.f32 %v1314, %v880
          %v1335 = vmul.f32 %v1314, %v881
          %v1336 = vmul.f32 %v1314, %v882
          %v1337 = vmul.f32 %v1314, %v883
          %v1338 = vmul.f32 %v1314, %v884
          %v1339 = vmul.f32 %v1314, %v885
          %v1340 = vmul.f32 %v1314, %v886
          %v1341 = vmul.f32 %v1314, %v887
          %v1342 = vmul.f32 %v1314, %v888
          %v1343 = vmul.f32 %v1314, %v889
          %v1344 = vmul.f32 %v1314, %v890
          %v1345 = vmul.f32 %v1314, %v891
          %v1346 = vmul.f32 %v1314, %v892
          %v1347 = vmul.f32 %v1314, %v893
          %v1348 = vmul.f32 %v1316, %v1278
          %v1349 = vmul.f32 %v1317, %v1279
          %v1350 = vmul.f32 %v1318, %v1280
          %v1351 = vmul.f32 %v1319, %v1281
          %v1352 = vmul.f32 %v1320, %v1282
          %v1353 = vmul.f32 %v1321, %v1283
          %v1354 = vmul.f32 %v1322, %v1284
          %v1355 = vmul.f32 %v1323, %v1285
          %v1356 = vmul.f32 %v1324, %v1286
          %v1357 = vmul.f32 %v1325, %v1287
          %v1358 = vmul.f32 %v1326, %v1288
          %v1359 = vmul.f32 %v1327, %v1289
          %v1360 = vmul.f32 %v1328, %v1290
          %v1361 = vmul.f32 %v1329, %v1291
          %v1362 = vmul.f32 %v1330, %v1292
          %v1363 = vmul.f32 %v1331, %v1293
          %v1364 = vmul.f32 %v1332, %v1294
          %v1365 = vmul.f32 %v1333, %v1295
          %v1366 = vmul.f32 %v1334, %v1296
          %v1367 = vmul.f32 %v1335, %v1297
          %v1368 = vmul.f32 %v1336, %v1298
          %v1369 = vmul.f32 %v1337, %v1299
          %v1370 = vmul.f32 %v1338, %v1300
          %v1371 = vmul.f32 %v1339, %v1301
          %v1372 = vmul.f32 %v1340, %v1302
          %v1373 = vmul.f32 %v1341, %v1303
          %v1374 = vmul.f32 %v1342, %v1304
          %v1375 = vmul.f32 %v1343, %v1305
          %v1376 = vmul.f32 %v1344, %v1306
          %v1377 = vmul.f32 %v1345, %v1307
          %v1378 = vmul.f32 %v1346, %v1308
          %v1379 = vmul.f32 %v1347, %v1309
          %v1381 = vlaneseq
          %v1382 = vshrl.u32 %v1381, 7
          %v1383 = vsub.s32 0, %v1382
          %v1384 = vrot.slane %v764, %v1383
          %v1386 = vadd.f32 %v1348, %v1384
          %v1387 = vadd.f32 %v1349, %v1384
          %v1388 = vadd.f32 %v1350, %v1384
          %v1389 = vadd.f32 %v1351, %v1384
          %v1390 = vadd.f32 %v1352, %v1384
          %v1391 = vadd.f32 %v1353, %v1384
          %v1392 = vadd.f32 %v1354, %v1384
          %v1393 = vadd.f32 %v1355, %v1384
          %v1394 = vadd.f32 %v1356, %v1384
          %v1395 = vadd.f32 %v1357, %v1384
          %v1396 = vadd.f32 %v1358, %v1384
          %v1397 = vadd.f32 %v1359, %v1384
          %v1398 = vadd.f32 %v1360, %v1384
          %v1399 = vadd.f32 %v1361, %v1384
          %v1400 = vadd.f32 %v1362, %v1384
          %v1401 = vadd.f32 %v1363, %v1384
          %v1402 = vadd.f32 %v1364, %v1384
          %v1403 = vadd.f32 %v1365, %v1384
          %v1404 = vadd.f32 %v1366, %v1384
          %v1405 = vadd.f32 %v1367, %v1384
          %v1406 = vadd.f32 %v1368, %v1384
          %v1407 = vadd.f32 %v1369, %v1384
          %v1408 = vadd.f32 %v1370, %v1384
          %v1409 = vadd.f32 %v1371, %v1384
          %v1410 = vadd.f32 %v1372, %v1384
          %v1411 = vadd.f32 %v1373, %v1384
          %v1412 = vadd.f32 %v1374, %v1384
          %v1413 = vadd.f32 %v1375, %v1384
          %v1414 = vadd.f32 %v1376, %v1384
          %v1415 = vadd.f32 %v1377, %v1384
          %v1416 = vadd.f32 %v1378, %v1384
          %v1417 = vadd.f32 %v1379, %v1384
          %v1418 = vpack.c.bf16 %v1387, %v1386
          %v1419 = vpack.c.bf16 %v1389, %v1388
          %v1420 = vpack.c.bf16 %v1391, %v1390
          %v1421 = vpack.c.bf16 %v1393, %v1392
          %v1422 = vpack.c.bf16 %v1395, %v1394
          %v1423 = vpack.c.bf16 %v1397, %v1396
          %v1424 = vpack.c.bf16 %v1399, %v1398
          %v1425 = vpack.c.bf16 %v1401, %v1400
          %v1426 = vpack.c.bf16 %v1403, %v1402
          %v1427 = vpack.c.bf16 %v1405, %v1404
          %v1428 = vpack.c.bf16 %v1407, %v1406
          %v1429 = vpack.c.bf16 %v1409, %v1408
          %v1430 = vpack.c.bf16 %v1411, %v1410
          %v1431 = vpack.c.bf16 %v1413, %v1412
          %v1432 = vpack.c.bf16 %v1415, %v1414
          %v1433 = vpack.c.bf16 %v1417, %v1416
          %v1434 = vld [vmem:[#allocation13] sm:$0xff]
          %v1435 = vld [vmem:[#allocation13 + $0x8] sm:$0xf]
          %v1436 = vld [vmem:[#allocation13 + $0xc] sm:$0xff]
          %v1437 = vld [vmem:[#allocation13 + $0x14] sm:$0xf]
          %v1438 = vld [vmem:[#allocation13 + $0x18] sm:$0xff]
          %v1439 = vld [vmem:[#allocation13 + $0x20] sm:$0xf]
          %v1440 = vld [vmem:[#allocation13 + $0x24] sm:$0xff]
          %v1441 = vld [vmem:[#allocation13 + $0x2c] sm:$0xf]
          %v1442 = vld [vmem:[#allocation13 + $0x30] sm:$0xff]
          %v1443 = vld [vmem:[#allocation13 + $0x38] sm:$0xf]
          %v1444 = vld [vmem:[#allocation13 + $0x3c] sm:$0xff]
          %v1445 = vld [vmem:[#allocation13 + $0x44] sm:$0xf]
          %v1446 = vld [vmem:[#allocation13 + $0x48] sm:$0xff]
          %v1447 = vld [vmem:[#allocation13 + $0x50] sm:$0xf]
          %v1448 = vld [vmem:[#allocation13 + $0x54] sm:$0xff]
          %v1449 = vld [vmem:[#allocation13 + $0x5c] sm:$0xf]
          %v1450 = vld [vmem:[#allocation13 + $0x60] sm:$0xff]
          %v1451 = vld [vmem:[#allocation13 + $0x68] sm:$0xf]
          %v1452 = vld [vmem:[#allocation13 + $0x6c] sm:$0xff]
          %v1453 = vld [vmem:[#allocation13 + $0x74] sm:$0xf]
          %v1454 = vld [vmem:[#allocation13 + $0x78] sm:$0xff]
          %v1455 = vld [vmem:[#allocation13 + $0x80] sm:$0xf]
          %v1456 = vld [vmem:[#allocation13 + $0x84] sm:$0xff]
          %v1457 = vld [vmem:[#allocation13 + $0x8c] sm:$0xf]
          %v1458 = vld [vmem:[#allocation13 + $0x90] sm:$0xff]
          %v1459 = vld [vmem:[#allocation13 + $0x98] sm:$0xf]
          %v1460 = vld [vmem:[#allocation13 + $0x9c] sm:$0xff]
          %v1461 = vld [vmem:[#allocation13 + $0xa4] sm:$0xf]
          %v1462 = vld [vmem:[#allocation13 + $0xa8] sm:$0xff]
          %v1463 = vld [vmem:[#allocation13 + $0xb0] sm:$0xf]
          %v1464 = vld [vmem:[#allocation13 + $0xb4] sm:$0xff]
          %v1465 = vld [vmem:[#allocation13 + $0xbc] sm:$0xf]
          %v1466 = vld [vmem:[%s6] sm:$0x7]
          %v1468 = vlaneseq
          %v1469 = vshrl.u32 %v1468, 7
          %v1470 = vsub.s32 0, %v1469
          %v1471 = vrot.slane %v1466, %v1470
          %v1472 = vlaneseq
          %v1473 = vshrl.u32 %v1472, 7
          %v1474 = vsub.s32 1, %v1473
          %v1475 = vrot.slane %v1466, %v1474
          %v1476 = vlaneseq
          %v1477 = vshrl.u32 %v1476, 7
          %v1478 = vsub.s32 2, %v1477
          %v1479 = vrot.slane %v1466, %v1478
          %v1515 = vunpack.c.l.b16 %v1434
          %v1516 = vunpack.c.h.b16 %v1434
          %v1517 = vunpack.c.l.b16 %v1435
          %v1518 = vunpack.c.l.b16 %v1436
          %v1519 = vunpack.c.h.b16 %v1436
          %v1520 = vunpack.c.l.b16 %v1437
          %v1521 = vunpack.c.l.b16 %v1438
          %v1522 = vunpack.c.h.b16 %v1438
          %v1523 = vunpack.c.l.b16 %v1439
          %v1524 = vunpack.c.l.b16 %v1440
          %v1525 = vunpack.c.h.b16 %v1440
          %v1526 = vunpack.c.l.b16 %v1441
          %v1527 = vunpack.c.l.b16 %v1442
          %v1528 = vunpack.c.h.b16 %v1442
          %v1529 = vunpack.c.l.b16 %v1443
          %v1530 = vunpack.c.l.b16 %v1444
          %v1531 = vunpack.c.h.b16 %v1444
          %v1532 = vunpack.c.l.b16 %v1445
          %v1533 = vunpack.c.l.b16 %v1446
          %v1534 = vunpack.c.h.b16 %v1446
          %v1535 = vunpack.c.l.b16 %v1447
          %v1536 = vunpack.c.l.b16 %v1448
          %v1537 = vunpack.c.h.b16 %v1448
          %v1538 = vunpack.c.l.b16 %v1449
          %v1539 = vunpack.c.l.b16 %v1450
          %v1540 = vunpack.c.h.b16 %v1450
          %v1541 = vunpack.c.l.b16 %v1451
          %v1542 = vunpack.c.l.b16 %v1452
          %v1543 = vunpack.c.h.b16 %v1452
          %v1544 = vunpack.c.l.b16 %v1453
          %v1545 = vunpack.c.l.b16 %v1454
          %v1546 = vunpack.c.h.b16 %v1454
          %v1547 = vunpack.c.l.b16 %v1455
          %v1548 = vunpack.c.l.b16 %v1456
          %v1549 = vunpack.c.h.b16 %v1456
          %v1550 = vunpack.c.l.b16 %v1457
          %v1551 = vunpack.c.l.b16 %v1458
          %v1552 = vunpack.c.h.b16 %v1458
          %v1553 = vunpack.c.l.b16 %v1459
          %v1554 = vunpack.c.l.b16 %v1460
          %v1555 = vunpack.c.h.b16 %v1460
          %v1556 = vunpack.c.l.b16 %v1461
          %v1557 = vunpack.c.l.b16 %v1462
          %v1558 = vunpack.c.h.b16 %v1462
          %v1559 = vunpack.c.l.b16 %v1463
          %v1560 = vunpack.c.l.b16 %v1464
          %v1561 = vunpack.c.h.b16 %v1464
          %v1562 = vunpack.c.l.b16 %v1465
          %v1563 = vpack.c.b16 %v1518, %v1515
          %v1564 = vpack.c.b16 %v1519, %v1516
          %v1565 = vpack.c.b16 %v1520, %v1517
          %v1566 = vpack.c.b16 %v1524, %v1521
          %v1567 = vpack.c.b16 %v1525, %v1522
          %v1568 = vpack.c.b16 %v1526, %v1523
          %v1569 = vpack.c.b16 %v1530, %v1527
          %v1570 = vpack.c.b16 %v1531, %v1528
          %v1571 = vpack.c.b16 %v1532, %v1529
          %v1572 = vpack.c.b16 %v1536, %v1533
          %v1573 = vpack.c.b16 %v1537, %v1534
          %v1574 = vpack.c.b16 %v1538, %v1535
          %v1575 = vpack.c.b16 %v1542, %v1539
          %v1576 = vpack.c.b16 %v1543, %v1540
          %v1577 = vpack.c.b16 %v1544, %v1541
          %v1578 = vpack.c.b16 %v1548, %v1545
          %v1579 = vpack.c.b16 %v1549, %v1546
          %v1580 = vpack.c.b16 %v1550, %v1547
          %v1581 = vpack.c.b16 %v1554, %v1551
          %v1582 = vpack.c.b16 %v1555, %v1552
          %v1583 = vpack.c.b16 %v1556, %v1553
          %v1584 = vpack.c.b16 %v1560, %v1557
          %v1585 = vpack.c.b16 %v1561, %v1558
          %v1586 = vpack.c.b16 %v1562, %v1559
          %1611 = vmatprep.subr.bf16.mxu0 %v1585
          %1612 = vmatpush1.bf16.msra.mxu0 %v1584
          %1613 = vmatprep.subr.bf16.mxu0 %v1582
          %1614 = vmatpush1.bf16.msra.mxu0 %v1581
          %1615 = vmatprep.subr.bf16.mxu0 %v1579
          %1616 = vmatpush1.bf16.msra.mxu0 %v1578
          %1617 = vmatprep.subr.bf16.mxu0 %v1576
          %1618 = vmatpush1.bf16.msra.mxu0 %v1575
          %1619 = vmatprep.subr.bf16.mxu0 %v1573
          %1620 = vmatpush1.bf16.msra.mxu0 %v1572
          %1621 = vmatprep.subr.bf16.mxu0 %v1570
          %1622 = vmatpush1.bf16.msra.mxu0 %v1569
          %1623 = vmatprep.subr.bf16.mxu0 %v1567
          %1624 = vmatpush1.bf16.msra.mxu0 %v1566
          %1625 = vmatprep.subr.bf16.mxu0 %v1564
          %1626 = vmatpush1.bf16.msra.mxu0 %v1563
          %1627 = vmatprep.subr.bf16.mxu0 0
          %1628 = vmatpush2.bf16.msra.mxu0 0
          %1629 = vmatprep.subr.bf16.mxu0 0
          %1630 = vmatpush2.bf16.msra.mxu0 0
          %1631 = vmatprep.subr.bf16.mxu0 0
          %1632 = vmatpush2.bf16.msra.mxu0 0
          %1633 = vmatprep.subr.bf16.mxu0 0
          %1634 = vmatpush2.bf16.msra.mxu0 0
          %1635 = vmatprep.subr.bf16.mxu0 0
          %1636 = vmatpush2.bf16.msra.mxu0 0
          %1637 = vmatprep.subr.bf16.mxu0 0
          %1638 = vmatpush2.bf16.msra.mxu0 0
          %1639 = vmatprep.subr.bf16.mxu0 0
          %1640 = vmatpush2.bf16.msra.mxu0 0
          %1641 = vmatprep.subr.bf16.mxu0 0
          %1642 = vmatpush2.bf16.msra.mxu0 0
          %1643 = vmatprep.mubr.bf16.mxu0 0
          %1644 = vmatmul.mubr.bf16.gmra.mxu0 %v1418
          %v1645 = vpop.f32.mrf.mxu0
          %v1646 = vadd.f32 %v1471, %v1645
          %v1647 = vpop.f32.mrf.mxu0
          %v1648 = vadd.f32 %v1475, %v1647
          %v1649 = vpop.f32.mrf.mxu0
          %v1650 = vadd.f32 %v1471, %v1649
          %v1651 = vpop.f32.mrf.mxu0
          %v1652 = vadd.f32 %v1475, %v1651
          %1653 = vmatprep.mubr.bf16.mxu0 0
          %1654 = vmatmul.mubr.bf16.gmra.mxu0 %v1419
          %v1655 = vpop.f32.mrf.mxu0
          %v1656 = vadd.f32 %v1471, %v1655
          %v1657 = vpop.f32.mrf.mxu0
          %v1658 = vadd.f32 %v1475, %v1657
          %v1659 = vpop.f32.mrf.mxu0
          %v1660 = vadd.f32 %v1471, %v1659
          %v1661 = vpop.f32.mrf.mxu0
          %v1662 = vadd.f32 %v1475, %v1661
          %1663 = vmatprep.mubr.bf16.mxu0 0
          %1664 = vmatmul.mubr.bf16.gmra.mxu0 %v1420
          %v1665 = vpop.f32.mrf.mxu0
          %v1666 = vadd.f32 %v1471, %v1665
          %v1667 = vpop.f32.mrf.mxu0
          %v1668 = vadd.f32 %v1475, %v1667
          %v1669 = vpop.f32.mrf.mxu0
          %v1670 = vadd.f32 %v1471, %v1669
          %v1671 = vpop.f32.mrf.mxu0
          %v1672 = vadd.f32 %v1475, %v1671
          %1673 = vmatprep.mubr.bf16.mxu0 0
          %1674 = vmatmul.mubr.bf16.gmra.mxu0 %v1421
          %v1675 = vpop.f32.mrf.mxu0
          %v1676 = vadd.f32 %v1471, %v1675
          %v1677 = vpop.f32.mrf.mxu0
          %v1678 = vadd.f32 %v1475, %v1677
          %v1679 = vpop.f32.mrf.mxu0
          %v1680 = vadd.f32 %v1471, %v1679
          %v1681 = vpop.f32.mrf.mxu0
          %v1682 = vadd.f32 %v1475, %v1681
          %1683 = vmatprep.mubr.bf16.mxu0 0
          %1684 = vmatmul.mubr.bf16.gmra.mxu0 %v1422
          %v1685 = vpop.f32.mrf.mxu0
          %v1686 = vadd.f32 %v1471, %v1685
          %v1687 = vpop.f32.mrf.mxu0
          %v1688 = vadd.f32 %v1475, %v1687
          %v1689 = vpop.f32.mrf.mxu0
          %v1690 = vadd.f32 %v1471, %v1689
          %v1691 = vpop.f32.mrf.mxu0
          %v1692 = vadd.f32 %v1475, %v1691
          %1693 = vmatprep.mubr.bf16.mxu0 0
          %1694 = vmatmul.mubr.bf16.gmra.mxu0 %v1423
          %v1695 = vpop.f32.mrf.mxu0
          %v1696 = vadd.f32 %v1471, %v1695
          %v1697 = vpop.f32.mrf.mxu0
          %v1698 = vadd.f32 %v1475, %v1697
          %v1699 = vpop.f32.mrf.mxu0
          %v1700 = vadd.f32 %v1471, %v1699
          %v1701 = vpop.f32.mrf.mxu0
          %v1702 = vadd.f32 %v1475, %v1701
          %1703 = vmatprep.mubr.bf16.mxu0 0
          %1704 = vmatmul.mubr.bf16.gmra.mxu0 %v1424
          %v1705 = vpop.f32.mrf.mxu0
          %v1706 = vadd.f32 %v1471, %v1705
          %v1707 = vpop.f32.mrf.mxu0
          %v1708 = vadd.f32 %v1475, %v1707
          %v1709 = vpop.f32.mrf.mxu0
          %v1710 = vadd.f32 %v1471, %v1709
          %v1711 = vpop.f32.mrf.mxu0
          %v1712 = vadd.f32 %v1475, %v1711
          %1713 = vmatprep.mubr.bf16.mxu0 0
          %1714 = vmatmul.mubr.bf16.gmra.mxu0 %v1425
          %v1715 = vpop.f32.mrf.mxu0
          %v1716 = vadd.f32 %v1471, %v1715
          %v1717 = vpop.f32.mrf.mxu0
          %v1718 = vadd.f32 %v1475, %v1717
          %v1719 = vpop.f32.mrf.mxu0
          %v1720 = vadd.f32 %v1471, %v1719
          %v1721 = vpop.f32.mrf.mxu0
          %v1722 = vadd.f32 %v1475, %v1721
          %1723 = vmatprep.mubr.bf16.mxu0 0
          %1724 = vmatmul.mubr.bf16.gmra.mxu0 %v1426
          %v1725 = vpop.f32.mrf.mxu0
          %v1726 = vadd.f32 %v1471, %v1725
          %v1727 = vpop.f32.mrf.mxu0
          %v1728 = vadd.f32 %v1475, %v1727
          %v1729 = vpop.f32.mrf.mxu0
          %v1730 = vadd.f32 %v1471, %v1729
          %v1731 = vpop.f32.mrf.mxu0
          %v1732 = vadd.f32 %v1475, %v1731
          %1733 = vmatprep.mubr.bf16.mxu0 0
          %1734 = vmatmul.mubr.bf16.gmra.mxu0 %v1427
          %v1735 = vpop.f32.mrf.mxu0
          %v1736 = vadd.f32 %v1471, %v1735
          %v1737 = vpop.f32.mrf.mxu0
          %v1738 = vadd.f32 %v1475, %v1737
          %v1739 = vpop.f32.mrf.mxu0
          %v1740 = vadd.f32 %v1471, %v1739
          %v1741 = vpop.f32.mrf.mxu0
          %v1742 = vadd.f32 %v1475, %v1741
          %1743 = vmatprep.mubr.bf16.mxu0 0
          %1744 = vmatmul.mubr.bf16.gmra.mxu0 %v1428
          %v1745 = vpop.f32.mrf.mxu0
          %v1746 = vadd.f32 %v1471, %v1745
          %v1747 = vpop.f32.mrf.mxu0
          %v1748 = vadd.f32 %v1475, %v1747
          %v1749 = vpop.f32.mrf.mxu0
          %v1750 = vadd.f32 %v1471, %v1749
          %v1751 = vpop.f32.mrf.mxu0
          %v1752 = vadd.f32 %v1475, %v1751
          %1753 = vmatprep.mubr.bf16.mxu0 0
          %1754 = vmatmul.mubr.bf16.gmra.mxu0 %v1429
          %v1755 = vpop.f32.mrf.mxu0
          %v1756 = vadd.f32 %v1471, %v1755
          %v1757 = vpop.f32.mrf.mxu0
          %v1758 = vadd.f32 %v1475, %v1757
          %v1759 = vpop.f32.mrf.mxu0
          %v1760 = vadd.f32 %v1471, %v1759
          %v1761 = vpop.f32.mrf.mxu0
          %v1762 = vadd.f32 %v1475, %v1761
          %1763 = vmatprep.mubr.bf16.mxu0 0
          %1764 = vmatmul.mubr.bf16.gmra.mxu0 %v1430
          %v1765 = vpop.f32.mrf.mxu0
          %v1766 = vadd.f32 %v1471, %v1765
          %v1767 = vpop.f32.mrf.mxu0
          %v1768 = vadd.f32 %v1475, %v1767
          %v1769 = vpop.f32.mrf.mxu0
          %v1770 = vadd.f32 %v1471, %v1769
          %v1771 = vpop.f32.mrf.mxu0
          %v1772 = vadd.f32 %v1475, %v1771
          %1773 = vmatprep.mubr.bf16.mxu0 0
          %1774 = vmatmul.mubr.bf16.gmra.mxu0 %v1431
          %v1775 = vpop.f32.mrf.mxu0
          %v1776 = vadd.f32 %v1471, %v1775
          %v1777 = vpop.f32.mrf.mxu0
          %v1778 = vadd.f32 %v1475, %v1777
          %v1779 = vpop.f32.mrf.mxu0
          %v1780 = vadd.f32 %v1471, %v1779
          %v1781 = vpop.f32.mrf.mxu0
          %v1782 = vadd.f32 %v1475, %v1781
          %1783 = vmatprep.mubr.bf16.mxu0 0
          %1784 = vmatmul.mubr.bf16.gmra.mxu0 %v1432
          %v1785 = vpop.f32.mrf.mxu0
          %v1786 = vadd.f32 %v1471, %v1785
          %v1787 = vpop.f32.mrf.mxu0
          %v1788 = vadd.f32 %v1475, %v1787
          %v1789 = vpop.f32.mrf.mxu0
          %v1790 = vadd.f32 %v1471, %v1789
          %v1791 = vpop.f32.mrf.mxu0
          %v1792 = vadd.f32 %v1475, %v1791
          %1793 = vmatprep.mubr.bf16.mxu0 0
          %1794 = vmatmul.mubr.bf16.gmra.mxu0 %v1433
          %v1795 = vpop.f32.mrf.mxu0
          %v1796 = vadd.f32 %v1471, %v1795
          %v1797 = vpop.f32.mrf.mxu0
          %v1798 = vadd.f32 %v1475, %v1797
          %v1799 = vpop.f32.mrf.mxu0
          %v1800 = vadd.f32 %v1471, %v1799
          %v1801 = vpop.f32.mrf.mxu0
          %v1802 = vadd.f32 %v1475, %v1801
          %1803 = vdwg.mxu0
          %1804 = vmatprep.subr.bf16.mxu0 0
          %1805 = vmatpush1.bf16.msra.mxu0 %v1586
          %1806 = vmatprep.subr.bf16.mxu0 0
          %1807 = vmatpush1.bf16.msra.mxu0 %v1583
          %1808 = vmatprep.subr.bf16.mxu0 0
          %1809 = vmatpush1.bf16.msra.mxu0 %v1580
          %1810 = vmatprep.subr.bf16.mxu0 0
          %1811 = vmatpush1.bf16.msra.mxu0 %v1577
          %1812 = vmatprep.subr.bf16.mxu0 0
          %1813 = vmatpush1.bf16.msra.mxu0 %v1574
          %1814 = vmatprep.subr.bf16.mxu0 0
          %1815 = vmatpush1.bf16.msra.mxu0 %v1571
          %1816 = vmatprep.subr.bf16.mxu0 0
          %1817 = vmatpush1.bf16.msra.mxu0 %v1568
          %1818 = vmatprep.subr.bf16.mxu0 0
          %1819 = vmatpush1.bf16.msra.mxu0 %v1565
          %1820 = vmatprep.subr.bf16.mxu0 0
          %1821 = vmatpush2.bf16.msra.mxu0 0
          %1822 = vmatprep.subr.bf16.mxu0 0
          %1823 = vmatpush2.bf16.msra.mxu0 0
          %1824 = vmatprep.subr.bf16.mxu0 0
          %1825 = vmatpush2.bf16.msra.mxu0 0
          %1826 = vmatprep.subr.bf16.mxu0 0
          %1827 = vmatpush2.bf16.msra.mxu0 0
          %1828 = vmatprep.subr.bf16.mxu0 0
          %1829 = vmatpush2.bf16.msra.mxu0 0
          %1830 = vmatprep.subr.bf16.mxu0 0
          %1831 = vmatpush2.bf16.msra.mxu0 0
          %1832 = vmatprep.subr.bf16.mxu0 0
          %1833 = vmatpush2.bf16.msra.mxu0 0
          %1834 = vmatprep.subr.bf16.mxu0 0
          %1835 = vmatpush2.bf16.msra.mxu0 0
          %1836 = vmatprep.mubr.bf16.mxu0 0
          %1837 = vmatmul.mubr.bf16.gmra.mxu0 %v1418
          %v1838 = vpop.f32.mrf.mxu0
          %v1839 = vadd.f32 %v1479, %v1838
          %v1840 = vpop.f32.mrf.mxu0
          %v1841 = vpop.f32.mrf.mxu0
          %v1842 = vadd.f32 %v1479, %v1841
          %v1843 = vpop.f32.mrf.mxu0
          %1844 = vmatprep.mubr.bf16.mxu0 0
          %1845 = vmatmul.mubr.bf16.gmra.mxu0 %v1419
          %v1846 = vpop.f32.mrf.mxu0
          %v1847 = vadd.f32 %v1479, %v1846
          %v1848 = vpop.f32.mrf.mxu0
          %v1849 = vpop.f32.mrf.mxu0
          %v1850 = vadd.f32 %v1479, %v1849
          %v1851 = vpop.f32.mrf.mxu0
          %1852 = vmatprep.mubr.bf16.mxu0 0
          %1853 = vmatmul.mubr.bf16.gmra.mxu0 %v1420
          %v1854 = vpop.f32.mrf.mxu0
          %v1855 = vadd.f32 %v1479, %v1854
          %v1856 = vpop.f32.mrf.mxu0
          %v1857 = vpop.f32.mrf.mxu0
          %v1858 = vadd.f32 %v1479, %v1857
          %v1859 = vpop.f32.mrf.mxu0
          %1860 = vmatprep.mubr.bf16.mxu0 0
          %1861 = vmatmul.mubr.bf16.gmra.mxu0 %v1421
          %v1862 = vpop.f32.mrf.mxu0
          %v1863 = vadd.f32 %v1479, %v1862
          %v1864 = vpop.f32.mrf.mxu0
          %v1865 = vpop.f32.mrf.mxu0
          %v1866 = vadd.f32 %v1479, %v1865
          %v1867 = vpop.f32.mrf.mxu0
          %1868 = vmatprep.mubr.bf16.mxu0 0
          %1869 = vmatmul.mubr.bf16.gmra.mxu0 %v1422
          %v1870 = vpop.f32.mrf.mxu0
          %v1871 = vadd.f32 %v1479, %v1870
          %v1872 = vpop.f32.mrf.mxu0
          %v1873 = vpop.f32.mrf.mxu0
          %v1874 = vadd.f32 %v1479, %v1873
          %v1875 = vpop.f32.mrf.mxu0
          %1876 = vmatprep.mubr.bf16.mxu0 0
          %1877 = vmatmul.mubr.bf16.gmra.mxu0 %v1423
          %v1878 = vpop.f32.mrf.mxu0
          %v1879 = vadd.f32 %v1479, %v1878
          %v1880 = vpop.f32.mrf.mxu0
          %v1881 = vpop.f32.mrf.mxu0
          %v1882 = vadd.f32 %v1479, %v1881
          %v1883 = vpop.f32.mrf.mxu0
          %1884 = vmatprep.mubr.bf16.mxu0 0
          %1885 = vmatmul.mubr.bf16.gmra.mxu0 %v1424
          %v1886 = vpop.f32.mrf.mxu0
          %v1887 = vadd.f32 %v1479, %v1886
          %v1888 = vpop.f32.mrf.mxu0
          %v1889 = vpop.f32.mrf.mxu0
          %v1890 = vadd.f32 %v1479, %v1889
          %v1891 = vpop.f32.mrf.mxu0
          %1892 = vmatprep.mubr.bf16.mxu0 0
          %1893 = vmatmul.mubr.bf16.gmra.mxu0 %v1425
          %v1894 = vpop.f32.mrf.mxu0
          %v1895 = vadd.f32 %v1479, %v1894
          %v1896 = vpop.f32.mrf.mxu0
          %v1897 = vpop.f32.mrf.mxu0
          %v1898 = vadd.f32 %v1479, %v1897
          %v1899 = vpop.f32.mrf.mxu0
          %1900 = vmatprep.mubr.bf16.mxu0 0
          %1901 = vmatmul.mubr.bf16.gmra.mxu0 %v1426
          %v1902 = vpop.f32.mrf.mxu0
          %v1903 = vadd.f32 %v1479, %v1902
          %v1904 = vpop.f32.mrf.mxu0
          %v1905 = vpop.f32.mrf.mxu0
          %v1906 = vadd.f32 %v1479, %v1905
          %v1907 = vpop.f32.mrf.mxu0
          %1908 = vmatprep.mubr.bf16.mxu0 0
          %1909 = vmatmul.mubr.bf16.gmra.mxu0 %v1427
          %v1910 = vpop.f32.mrf.mxu0
          %v1911 = vadd.f32 %v1479, %v1910
          %v1912 = vpop.f32.mrf.mxu0
          %v1913 = vpop.f32.mrf.mxu0
          %v1914 = vadd.f32 %v1479, %v1913
          %v1915 = vpop.f32.mrf.mxu0
          %1916 = vmatprep.mubr.bf16.mxu0 0
          %1917 = vmatmul.mubr.bf16.gmra.mxu0 %v1428
          %v1918 = vpop.f32.mrf.mxu0
          %v1919 = vadd.f32 %v1479, %v1918
          %v1920 = vpop.f32.mrf.mxu0
          %v1921 = vpop.f32.mrf.mxu0
          %v1922 = vadd.f32 %v1479, %v1921
          %v1923 = vpop.f32.mrf.mxu0
          %1924 = vmatprep.mubr.bf16.mxu0 0
          %1925 = vmatmul.mubr.bf16.gmra.mxu0 %v1429
          %v1926 = vpop.f32.mrf.mxu0
          %v1927 = vadd.f32 %v1479, %v1926
          %v1928 = vpop.f32.mrf.mxu0
          %v1929 = vpop.f32.mrf.mxu0
          %v1930 = vadd.f32 %v1479, %v1929
          %v1931 = vpop.f32.mrf.mxu0
          %1932 = vmatprep.mubr.bf16.mxu0 0
          %1933 = vmatmul.mubr.bf16.gmra.mxu0 %v1430
          %v1934 = vpop.f32.mrf.mxu0
          %v1935 = vadd.f32 %v1479, %v1934
          %v1936 = vpop.f32.mrf.mxu0
          %v1937 = vpop.f32.mrf.mxu0
          %v1938 = vadd.f32 %v1479, %v1937
          %v1939 = vpop.f32.mrf.mxu0
          %1940 = vmatprep.mubr.bf16.mxu0 0
          %1941 = vmatmul.mubr.bf16.gmra.mxu0 %v1431
          %v1942 = vpop.f32.mrf.mxu0
          %v1943 = vadd.f32 %v1479, %v1942
          %v1944 = vpop.f32.mrf.mxu0
          %v1945 = vpop.f32.mrf.mxu0
          %v1946 = vadd.f32 %v1479, %v1945
          %v1947 = vpop.f32.mrf.mxu0
          %1948 = vmatprep.mubr.bf16.mxu0 0
          %1949 = vmatmul.mubr.bf16.gmra.mxu0 %v1432
          %v1950 = vpop.f32.mrf.mxu0
          %v1951 = vadd.f32 %v1479, %v1950
          %v1952 = vpop.f32.mrf.mxu0
          %v1953 = vpop.f32.mrf.mxu0
          %v1954 = vadd.f32 %v1479, %v1953
          %v1955 = vpop.f32.mrf.mxu0
          %1956 = vmatprep.mubr.bf16.mxu0 0
          %1957 = vmatmul.mubr.bf16.gmra.mxu0 %v1433
          %v1958 = vpop.f32.mrf.mxu0
          %v1959 = vadd.f32 %v1479, %v1958
          %v1960 = vpop.f32.mrf.mxu0
          %v1961 = vpop.f32.mrf.mxu0
          %v1962 = vadd.f32 %v1479, %v1961
          %v1963 = vpop.f32.mrf.mxu0
          %1964 = vdwg.mxu0
          %v1965 = vpack.c.bf16 %v1650, %v1646
          %v1966 = vpack.c.bf16 %v1660, %v1656
          %v1967 = vpack.c.bf16 %v1670, %v1666
          %v1968 = vpack.c.bf16 %v1680, %v1676
          %v1969 = vpack.c.bf16 %v1690, %v1686
          %v1970 = vpack.c.bf16 %v1700, %v1696
          %v1971 = vpack.c.bf16 %v1710, %v1706
          %v1972 = vpack.c.bf16 %v1720, %v1716
          %v1973 = vpack.c.bf16 %v1730, %v1726
          %v1974 = vpack.c.bf16 %v1740, %v1736
          %v1975 = vpack.c.bf16 %v1750, %v1746
          %v1976 = vpack.c.bf16 %v1760, %v1756
          %v1977 = vpack.c.bf16 %v1770, %v1766
          %v1978 = vpack.c.bf16 %v1780, %v1776
          %v1979 = vpack.c.bf16 %v1790, %v1786
          %v1980 = vpack.c.bf16 %v1800, %v1796
          %v1997 = vunpack.c.l.b16 %v1965
          %v1998 = vunpack.c.h.b16 %v1965
          %v1999 = vunpack.c.l.b16 %v1966
          %v2000 = vunpack.c.h.b16 %v1966
          %v2001 = vunpack.c.l.b16 %v1967
          %v2002 = vunpack.c.h.b16 %v1967
          %v2003 = vunpack.c.l.b16 %v1968
          %v2004 = vunpack.c.h.b16 %v1968
          %v2005 = vunpack.c.l.b16 %v1969
          %v2006 = vunpack.c.h.b16 %v1969
          %v2007 = vunpack.c.l.b16 %v1970
          %v2008 = vunpack.c.h.b16 %v1970
          %v2009 = vunpack.c.l.b16 %v1971
          %v2010 = vunpack.c.h.b16 %v1971
          %v2011 = vunpack.c.l.b16 %v1972
          %v2012 = vunpack.c.h.b16 %v1972
          %v2013 = vunpack.c.l.b16 %v1973
          %v2014 = vunpack.c.h.b16 %v1973
          %v2015 = vunpack.c.l.b16 %v1974
          %v2016 = vunpack.c.h.b16 %v1974
          %v2017 = vunpack.c.l.b16 %v1975
          %v2018 = vunpack.c.h.b16 %v1975
          %v2019 = vunpack.c.l.b16 %v1976
          %v2020 = vunpack.c.h.b16 %v1976
          %v2021 = vunpack.c.l.b16 %v1977
          %v2022 = vunpack.c.h.b16 %v1977
          %v2023 = vunpack.c.l.b16 %v1978
          %v2024 = vunpack.c.h.b16 %v1978
          %v2025 = vunpack.c.l.b16 %v1979
          %v2026 = vunpack.c.h.b16 %v1979
          %v2027 = vunpack.c.l.b16 %v1980
          %v2028 = vunpack.c.h.b16 %v1980
          %v2029 = vpack.c.b16 %v1997, %v1997
          %v2030 = vpack.c.b16 %v1998, %v1998
          %v2031 = vpack.c.b16 %v1999, %v1999
          %v2032 = vpack.c.b16 %v2000, %v2000
          %v2033 = vpack.c.b16 %v2001, %v2001
          %v2034 = vpack.c.b16 %v2002, %v2002
          %v2035 = vpack.c.b16 %v2003, %v2003
          %v2036 = vpack.c.b16 %v2004, %v2004
          %v2037 = vpack.c.b16 %v2005, %v2005
          %v2038 = vpack.c.b16 %v2006, %v2006
          %v2039 = vpack.c.b16 %v2007, %v2007
          %v2040 = vpack.c.b16 %v2008, %v2008
          %v2041 = vpack.c.b16 %v2009, %v2009
          %v2042 = vpack.c.b16 %v2010, %v2010
          %v2043 = vpack.c.b16 %v2011, %v2011
          %v2044 = vpack.c.b16 %v2012, %v2012
          %v2045 = vpack.c.b16 %v2013, %v2013
          %v2046 = vpack.c.b16 %v2014, %v2014
          %v2047 = vpack.c.b16 %v2015, %v2015
          %v2048 = vpack.c.b16 %v2016, %v2016
          %v2049 = vpack.c.b16 %v2017, %v2017
          %v2050 = vpack.c.b16 %v2018, %v2018
          %v2051 = vpack.c.b16 %v2019, %v2019
          %v2052 = vpack.c.b16 %v2020, %v2020
          %v2053 = vpack.c.b16 %v2021, %v2021
          %v2054 = vpack.c.b16 %v2022, %v2022
          %v2055 = vpack.c.b16 %v2023, %v2023
          %v2056 = vpack.c.b16 %v2024, %v2024
          %v2057 = vpack.c.b16 %v2025, %v2025
          %v2058 = vpack.c.b16 %v2026, %v2026
          %v2059 = vpack.c.b16 %v2027, %v2027
          %v2060 = vpack.c.b16 %v2028, %v2028
          %2093 = vst [vmem:[#allocation2] sm:$0xf] %v2029
          %2094 = vst [vmem:[#allocation2 + $0x4] sm:$0xf] %v2030
          %2095 = vst [vmem:[#allocation2 + $0x8] sm:$0xf] %v2031
          %2096 = vst [vmem:[#allocation2 + $0xc] sm:$0xf] %v2032
          %2097 = vst [vmem:[#allocation2 + $0x10] sm:$0xf] %v2033
          %2098 = vst [vmem:[#allocation2 + $0x14] sm:$0xf] %v2034
          %2099 = vst [vmem:[#allocation2 + $0x18] sm:$0xf] %v2035
          %2100 = vst [vmem:[#allocation2 + $0x1c] sm:$0xf] %v2036
          %2101 = vst [vmem:[#allocation2 + $0x20] sm:$0xf] %v2037
          %2102 = vst [vmem:[#allocation2 + $0x24] sm:$0xf] %v2038
          %2103 = vst [vmem:[#allocation2 + $0x28] sm:$0xf] %v2039
          %2104 = vst [vmem:[#allocation2 + $0x2c] sm:$0xf] %v2040
          %2105 = vst [vmem:[#allocation2 + $0x30] sm:$0xf] %v2041
          %2106 = vst [vmem:[#allocation2 + $0x34] sm:$0xf] %v2042
          %2107 = vst [vmem:[#allocation2 + $0x38] sm:$0xf] %v2043
          %2108 = vst [vmem:[#allocation2 + $0x3c] sm:$0xf] %v2044
          %2109 = vst [vmem:[#allocation2 + $0x40] sm:$0xf] %v2045
          %2110 = vst [vmem:[#allocation2 + $0x44] sm:$0xf] %v2046
          %2111 = vst [vmem:[#allocation2 + $0x48] sm:$0xf] %v2047
          %2112 = vst [vmem:[#allocation2 + $0x4c] sm:$0xf] %v2048
          %2113 = vst [vmem:[#allocation2 + $0x50] sm:$0xf] %v2049
          %2114 = vst [vmem:[#allocation2 + $0x54] sm:$0xf] %v2050
          %2115 = vst [vmem:[#allocation2 + $0x58] sm:$0xf] %v2051
          %2116 = vst [vmem:[#allocation2 + $0x5c] sm:$0xf] %v2052
          %2117 = vst [vmem:[#allocation2 + $0x60] sm:$0xf] %v2053
          %2118 = vst [vmem:[#allocation2 + $0x64] sm:$0xf] %v2054
          %2119 = vst [vmem:[#allocation2 + $0x68] sm:$0xf] %v2055
          %2120 = vst [vmem:[#allocation2 + $0x6c] sm:$0xf] %v2056
          %2121 = vst [vmem:[#allocation2 + $0x70] sm:$0xf] %v2057
          %2122 = vst [vmem:[#allocation2 + $0x74] sm:$0xf] %v2058
          %2123 = vst [vmem:[#allocation2 + $0x78] sm:$0xf] %v2059
          %2124 = vst [vmem:[#allocation2 + $0x7c] sm:$0xf] %v2060
          %v2125 = vpack.c.bf16 %v1652, %v1648
          %v2126 = vpack.c.bf16 %v1662, %v1658
          %v2127 = vpack.c.bf16 %v1672, %v1668
          %v2128 = vpack.c.bf16 %v1682, %v1678
          %v2129 = vpack.c.bf16 %v1692, %v1688
          %v2130 = vpack.c.bf16 %v1702, %v1698
          %v2131 = vpack.c.bf16 %v1712, %v1708
          %v2132 = vpack.c.bf16 %v1722, %v1718
          %v2133 = vpack.c.bf16 %v1732, %v1728
          %v2134 = vpack.c.bf16 %v1742, %v1738
          %v2135 = vpack.c.bf16 %v1752, %v1748
          %v2136 = vpack.c.bf16 %v1762, %v1758
          %v2137 = vpack.c.bf16 %v1772, %v1768
          %v2138 = vpack.c.bf16 %v1782, %v1778
          %v2139 = vpack.c.bf16 %v1792, %v1788
          %v2140 = vpack.c.bf16 %v1802, %v1798
          %v2157 = vunpack.c.l.b16 %v2125
          %v2158 = vunpack.c.h.b16 %v2125
          %v2159 = vunpack.c.l.b16 %v2126
          %v2160 = vunpack.c.h.b16 %v2126
          %v2161 = vunpack.c.l.b16 %v2127
          %v2162 = vunpack.c.h.b16 %v2127
          %v2163 = vunpack.c.l.b16 %v2128
          %v2164 = vunpack.c.h.b16 %v2128
          %v2165 = vunpack.c.l.b16 %v2129
          %v2166 = vunpack.c.h.b16 %v2129
          %v2167 = vunpack.c.l.b16 %v2130
          %v2168 = vunpack.c.h.b16 %v2130
          %v2169 = vunpack.c.l.b16 %v2131
          %v2170 = vunpack.c.h.b16 %v2131
          %v2171 = vunpack.c.l.b16 %v2132
          %v2172 = vunpack.c.h.b16 %v2132
          %v2173 = vunpack.c.l.b16 %v2133
          %v2174 = vunpack.c.h.b16 %v2133
          %v2175 = vunpack.c.l.b16 %v2134
          %v2176 = vunpack.c.h.b16 %v2134
          %v2177 = vunpack.c.l.b16 %v2135
          %v2178 = vunpack.c.h.b16 %v2135
          %v2179 = vunpack.c.l.b16 %v2136
          %v2180 = vunpack.c.h.b16 %v2136
          %v2181 = vunpack.c.l.b16 %v2137
          %v2182 = vunpack.c.h.b16 %v2137
          %v2183 = vunpack.c.l.b16 %v2138
          %v2184 = vunpack.c.h.b16 %v2138
          %v2185 = vunpack.c.l.b16 %v2139
          %v2186 = vunpack.c.h.b16 %v2139
          %v2187 = vunpack.c.l.b16 %v2140
          %v2188 = vunpack.c.h.b16 %v2140
          %v2189 = vpack.c.b16 %v2157, %v2157
          %v2190 = vpack.c.b16 %v2158, %v2158
          %v2191 = vpack.c.b16 %v2159, %v2159
          %v2192 = vpack.c.b16 %v2160, %v2160
          %v2193 = vpack.c.b16 %v2161, %v2161
          %v2194 = vpack.c.b16 %v2162, %v2162
          %v2195 = vpack.c.b16 %v2163, %v2163
          %v2196 = vpack.c.b16 %v2164, %v2164
          %v2197 = vpack.c.b16 %v2165, %v2165
          %v2198 = vpack.c.b16 %v2166, %v2166
          %v2199 = vpack.c.b16 %v2167, %v2167
          %v2200 = vpack.c.b16 %v2168, %v2168
          %v2201 = vpack.c.b16 %v2169, %v2169
          %v2202 = vpack.c.b16 %v2170, %v2170
          %v2203 = vpack.c.b16 %v2171, %v2171
          %v2204 = vpack.c.b16 %v2172, %v2172
          %v2205 = vpack.c.b16 %v2173, %v2173
          %v2206 = vpack.c.b16 %v2174, %v2174
          %v2207 = vpack.c.b16 %v2175, %v2175
          %v2208 = vpack.c.b16 %v2176, %v2176
          %v2209 = vpack.c.b16 %v2177, %v2177
          %v2210 = vpack.c.b16 %v2178, %v2178
          %v2211 = vpack.c.b16 %v2179, %v2179
          %v2212 = vpack.c.b16 %v2180, %v2180
          %v2213 = vpack.c.b16 %v2181, %v2181
          %v2214 = vpack.c.b16 %v2182, %v2182
          %v2215 = vpack.c.b16 %v2183, %v2183
          %v2216 = vpack.c.b16 %v2184, %v2184
          %v2217 = vpack.c.b16 %v2185, %v2185
          %v2218 = vpack.c.b16 %v2186, %v2186
          %v2219 = vpack.c.b16 %v2187, %v2187
          %v2220 = vpack.c.b16 %v2188, %v2188
          %2253 = vst [vmem:[#allocation3] sm:$0xf] %v2189
          %2254 = vst [vmem:[#allocation3 + $0x4] sm:$0xf] %v2190
          %2255 = vst [vmem:[#allocation3 + $0x8] sm:$0xf] %v2191
          %2256 = vst [vmem:[#allocation3 + $0xc] sm:$0xf] %v2192
          %2257 = vst [vmem:[#allocation3 + $0x10] sm:$0xf] %v2193
          %2258 = vst [vmem:[#allocation3 + $0x14] sm:$0xf] %v2194
          %2259 = vst [vmem:[#allocation3 + $0x18] sm:$0xf] %v2195
          %2260 = vst [vmem:[#allocation3 + $0x1c] sm:$0xf] %v2196
          %2261 = vst [vmem:[#allocation3 + $0x20] sm:$0xf] %v2197
          %2262 = vst [vmem:[#allocation3 + $0x24] sm:$0xf] %v2198
          %2263 = vst [vmem:[#allocation3 + $0x28] sm:$0xf] %v2199
          %2264 = vst [vmem:[#allocation3 + $0x2c] sm:$0xf] %v2200
          %2265 = vst [vmem:[#allocation3 + $0x30] sm:$0xf] %v2201
          %2266 = vst [vmem:[#allocation3 + $0x34] sm:$0xf] %v2202
          %2267 = vst [vmem:[#allocation3 + $0x38] sm:$0xf] %v2203
          %2268 = vst [vmem:[#allocation3 + $0x3c] sm:$0xf] %v2204
          %2269 = vst [vmem:[#allocation3 + $0x40] sm:$0xf] %v2205
          %2270 = vst [vmem:[#allocation3 + $0x44] sm:$0xf] %v2206
          %2271 = vst [vmem:[#allocation3 + $0x48] sm:$0xf] %v2207
          %2272 = vst [vmem:[#allocation3 + $0x4c] sm:$0xf] %v2208
          %2273 = vst [vmem:[#allocation3 + $0x50] sm:$0xf] %v2209
          %2274 = vst [vmem:[#allocation3 + $0x54] sm:$0xf] %v2210
          %2275 = vst [vmem:[#allocation3 + $0x58] sm:$0xf] %v2211
          %2276 = vst [vmem:[#allocation3 + $0x5c] sm:$0xf] %v2212
          %2277 = vst [vmem:[#allocation3 + $0x60] sm:$0xf] %v2213
          %2278 = vst [vmem:[#allocation3 + $0x64] sm:$0xf] %v2214
          %2279 = vst [vmem:[#allocation3 + $0x68] sm:$0xf] %v2215
          %2280 = vst [vmem:[#allocation3 + $0x6c] sm:$0xf] %v2216
          %2281 = vst [vmem:[#allocation3 + $0x70] sm:$0xf] %v2217
          %2282 = vst [vmem:[#allocation3 + $0x74] sm:$0xf] %v2218
          %2283 = vst [vmem:[#allocation3 + $0x78] sm:$0xf] %v2219
          %2284 = vst [vmem:[#allocation3 + $0x7c] sm:$0xf] %v2220
          %v2285 = vpack.c.bf16 %v1842, %v1839
          %v2286 = vpack.c.bf16 %v1850, %v1847
          %v2287 = vpack.c.bf16 %v1858, %v1855
          %v2288 = vpack.c.bf16 %v1866, %v1863
          %v2289 = vpack.c.bf16 %v1874, %v1871
          %v2290 = vpack.c.bf16 %v1882, %v1879
          %v2291 = vpack.c.bf16 %v1890, %v1887
          %v2292 = vpack.c.bf16 %v1898, %v1895
          %v2293 = vpack.c.bf16 %v1906, %v1903
          %v2294 = vpack.c.bf16 %v1914, %v1911
          %v2295 = vpack.c.bf16 %v1922, %v1919
          %v2296 = vpack.c.bf16 %v1930, %v1927
          %v2297 = vpack.c.bf16 %v1938, %v1935
          %v2298 = vpack.c.bf16 %v1946, %v1943
          %v2299 = vpack.c.bf16 %v1954, %v1951
          %v2300 = vpack.c.bf16 %v1962, %v1959
          %v2317 = vunpack.c.l.b16 %v2285
          %v2318 = vunpack.c.h.b16 %v2285
          %v2319 = vunpack.c.l.b16 %v2286
          %v2320 = vunpack.c.h.b16 %v2286
          %v2321 = vunpack.c.l.b16 %v2287
          %v2322 = vunpack.c.h.b16 %v2287
          %v2323 = vunpack.c.l.b16 %v2288
          %v2324 = vunpack.c.h.b16 %v2288
          %v2325 = vunpack.c.l.b16 %v2289
          %v2326 = vunpack.c.h.b16 %v2289
          %v2327 = vunpack.c.l.b16 %v2290
          %v2328 = vunpack.c.h.b16 %v2290
          %v2329 = vunpack.c.l.b16 %v2291
          %v2330 = vunpack.c.h.b16 %v2291
          %v2331 = vunpack.c.l.b16 %v2292
          %v2332 = vunpack.c.h.b16 %v2292
          %v2333 = vunpack.c.l.b16 %v2293
          %v2334 = vunpack.c.h.b16 %v2293
          %v2335 = vunpack.c.l.b16 %v2294
          %v2336 = vunpack.c.h.b16 %v2294
          %v2337 = vunpack.c.l.b16 %v2295
          %v2338 = vunpack.c.h.b16 %v2295
          %v2339 = vunpack.c.l.b16 %v2296
          %v2340 = vunpack.c.h.b16 %v2296
          %v2341 = vunpack.c.l.b16 %v2297
          %v2342 = vunpack.c.h.b16 %v2297
          %v2343 = vunpack.c.l.b16 %v2298
          %v2344 = vunpack.c.h.b16 %v2298
          %v2345 = vunpack.c.l.b16 %v2299
          %v2346 = vunpack.c.h.b16 %v2299
          %v2347 = vunpack.c.l.b16 %v2300
          %v2348 = vunpack.c.h.b16 %v2300
          %v2349 = vpack.c.b16 %v2317, %v2317
          %v2350 = vpack.c.b16 %v2318, %v2318
          %v2351 = vpack.c.b16 %v2319, %v2319
          %v2352 = vpack.c.b16 %v2320, %v2320
          %v2353 = vpack.c.b16 %v2321, %v2321
          %v2354 = vpack.c.b16 %v2322, %v2322
          %v2355 = vpack.c.b16 %v2323, %v2323
          %v2356 = vpack.c.b16 %v2324, %v2324
          %v2357 = vpack.c.b16 %v2325, %v2325
          %v2358 = vpack.c.b16 %v2326, %v2326
          %v2359 = vpack.c.b16 %v2327, %v2327
          %v2360 = vpack.c.b16 %v2328, %v2328
          %v2361 = vpack.c.b16 %v2329, %v2329
          %v2362 = vpack.c.b16 %v2330, %v2330
          %v2363 = vpack.c.b16 %v2331, %v2331
          %v2364 = vpack.c.b16 %v2332, %v2332
          %v2365 = vpack.c.b16 %v2333, %v2333
          %v2366 = vpack.c.b16 %v2334, %v2334
          %v2367 = vpack.c.b16 %v2335, %v2335
          %v2368 = vpack.c.b16 %v2336, %v2336
          %v2369 = vpack.c.b16 %v2337, %v2337
          %v2370 = vpack.c.b16 %v2338, %v2338
          %v2371 = vpack.c.b16 %v2339, %v2339
          %v2372 = vpack.c.b16 %v2340, %v2340
          %v2373 = vpack.c.b16 %v2341, %v2341
          %v2374 = vpack.c.b16 %v2342, %v2342
          %v2375 = vpack.c.b16 %v2343, %v2343
          %v2376 = vpack.c.b16 %v2344, %v2344
          %v2377 = vpack.c.b16 %v2345, %v2345
          %v2378 = vpack.c.b16 %v2346, %v2346
          %v2379 = vpack.c.b16 %v2347, %v2347
          %v2380 = vpack.c.b16 %v2348, %v2348
          %2413 = vst [vmem:[#allocation4] sm:$0xf] %v2349
          %2414 = vst [vmem:[#allocation4 + $0x4] sm:$0xf] %v2350
          %2415 = vst [vmem:[#allocation4 + $0x8] sm:$0xf] %v2351
          %2416 = vst [vmem:[#allocation4 + $0xc] sm:$0xf] %v2352
          %2417 = vst [vmem:[#allocation4 + $0x10] sm:$0xf] %v2353
          %2418 = vst [vmem:[#allocation4 + $0x14] sm:$0xf] %v2354
          %2419 = vst [vmem:[#allocation4 + $0x18] sm:$0xf] %v2355
          %2420 = vst [vmem:[#allocation4 + $0x1c] sm:$0xf] %v2356
          %2421 = vst [vmem:[#allocation4 + $0x20] sm:$0xf] %v2357
          %2422 = vst [vmem:[#allocation4 + $0x24] sm:$0xf] %v2358
          %2423 = vst [vmem:[#allocation4 + $0x28] sm:$0xf] %v2359
          %2424 = vst [vmem:[#allocation4 + $0x2c] sm:$0xf] %v2360
          %2425 = vst [vmem:[#allocation4 + $0x30] sm:$0xf] %v2361
          %2426 = vst [vmem:[#allocation4 + $0x34] sm:$0xf] %v2362
          %2427 = vst [vmem:[#allocation4 + $0x38] sm:$0xf] %v2363
          %2428 = vst [vmem:[#allocation4 + $0x3c] sm:$0xf] %v2364
          %2429 = vst [vmem:[#allocation4 + $0x40] sm:$0xf] %v2365
          %2430 = vst [vmem:[#allocation4 + $0x44] sm:$0xf] %v2366
          %2431 = vst [vmem:[#allocation4 + $0x48] sm:$0xf] %v2367
          %2432 = vst [vmem:[#allocation4 + $0x4c] sm:$0xf] %v2368
          %2433 = vst [vmem:[#allocation4 + $0x50] sm:$0xf] %v2369
          %2434 = vst [vmem:[#allocation4 + $0x54] sm:$0xf] %v2370
          %2435 = vst [vmem:[#allocation4 + $0x58] sm:$0xf] %v2371
          %2436 = vst [vmem:[#allocation4 + $0x5c] sm:$0xf] %v2372
          %2437 = vst [vmem:[#allocation4 + $0x60] sm:$0xf] %v2373
          %2438 = vst [vmem:[#allocation4 + $0x64] sm:$0xf] %v2374
          %2439 = vst [vmem:[#allocation4 + $0x68] sm:$0xf] %v2375
          %2440 = vst [vmem:[#allocation4 + $0x6c] sm:$0xf] %v2376
          %2441 = vst [vmem:[#allocation4 + $0x70] sm:$0xf] %v2377
          %2442 = vst [vmem:[#allocation4 + $0x74] sm:$0xf] %v2378
          %2443 = vst [vmem:[#allocation4 + $0x78] sm:$0xf] %v2379
          %2444 = vst [vmem:[#allocation4 + $0x7c] sm:$0xf] %v2380
        $region116: #{tpu_custom_call.1} parent=79 // pred_fallthru
          _
        %s2445 = smul.u32 %s45, 128
        %s2446 = scalar_lea.vmem %s613, %s2445 [#allocation5]
        %v2447 = vld [vmem:[%s2446] sm:$0xff]
        %v2448 = vld [vmem:[%s2446 + $0x8] sm:$0xff]
        %v2449 = vld [vmem:[%s2446 + $0x10] sm:$0xff]
        %v2450 = vld [vmem:[%s2446 + $0x18] sm:$0xff]
        %v2451 = vld [vmem:[%s2446 + $0x20] sm:$0xff]
        %v2452 = vld [vmem:[%s2446 + $0x28] sm:$0xff]
        %v2453 = vld [vmem:[%s2446 + $0x30] sm:$0xff]
        %v2454 = vld [vmem:[%s2446 + $0x38] sm:$0xff]
        %v2455 = vld [vmem:[%s2446 + $0x40] sm:$0xff]
        %v2456 = vld [vmem:[%s2446 + $0x48] sm:$0xff]
        %v2457 = vld [vmem:[%s2446 + $0x50] sm:$0xff]
        %v2458 = vld [vmem:[%s2446 + $0x58] sm:$0xff]
        %v2459 = vld [vmem:[%s2446 + $0x60] sm:$0xff]
        %v2460 = vld [vmem:[%s2446 + $0x68] sm:$0xff]
        %v2461 = vld [vmem:[%s2446 + $0x70] sm:$0xff]
        %v2462 = vld [vmem:[%s2446 + $0x78] sm:$0xff]
        %v2463 = vld [vmem:[%s622] sm:$0xff]
        %v2464 = vld [vmem:[%s622 + $0x8] sm:$0xff]
        %v2465 = vld [vmem:[%s622 + $0x10] sm:$0xff]
        %v2466 = vld [vmem:[%s622 + $0x18] sm:$0xff]
        %v2467 = vld [vmem:[%s622 + $0x20] sm:$0xff]
        %v2468 = vld [vmem:[%s622 + $0x28] sm:$0xff]
        %v2469 = vld [vmem:[%s622 + $0x30] sm:$0xff]
        %v2470 = vld [vmem:[%s622 + $0x38] sm:$0xff]
        %v2471 = vld [vmem:[%s622 + $0x40] sm:$0xff]
        %v2472 = vld [vmem:[%s622 + $0x48] sm:$0xff]
        %v2473 = vld [vmem:[%s622 + $0x50] sm:$0xff]
        %v2474 = vld [vmem:[%s622 + $0x58] sm:$0xff]
        %v2475 = vld [vmem:[%s622 + $0x60] sm:$0xff]
        %v2476 = vld [vmem:[%s622 + $0x68] sm:$0xff]
        %v2477 = vld [vmem:[%s622 + $0x70] sm:$0xff]
        %v2478 = vld [vmem:[%s622 + $0x78] sm:$0xff]
        %v2479 = vld [vmem:[%s622 + $0x80] sm:$0xff]
        %v2480 = vld [vmem:[%s622 + $0x88] sm:$0xff]
        %v2481 = vld [vmem:[%s622 + $0x90] sm:$0xff]
        %v2482 = vld [vmem:[%s622 + $0x98] sm:$0xff]
        %v2483 = vld [vmem:[%s622 + $0xa0] sm:$0xff]
        %v2484 = vld [vmem:[%s622 + $0xa8] sm:$0xff]
        %v2485 = vld [vmem:[%s622 + $0xb0] sm:$0xff]
        %v2486 = vld [vmem:[%s622 + $0xb8] sm:$0xff]
        %v2487 = vld [vmem:[%s622 + $0xc0] sm:$0xff]
        %v2488 = vld [vmem:[%s622 + $0xc8] sm:$0xff]
        %v2489 = vld [vmem:[%s622 + $0xd0] sm:$0xff]
        %v2490 = vld [vmem:[%s622 + $0xd8] sm:$0xff]
        %v2491 = vld [vmem:[%s622 + $0xe0] sm:$0xff]
        %v2492 = vld [vmem:[%s622 + $0xe8] sm:$0xff]
        %v2493 = vld [vmem:[%s622 + $0xf0] sm:$0xff]
        %v2494 = vld [vmem:[%s622 + $0xf8] sm:$0xff]
        %v2495 = vld [vmem:[%s631] sm:$0x3]
        %vm2496 = vcmp.ne.f32.partialorder %v2495, 0.0
        %s2497 = sshra.s32 %s2445, 3
        %s2498 = sand.u32 %s2445, 7
        %s2499 = smul.addr %s2497, 4
        %s2500 = scalar_lea.vmem [#allocation2], %s2499
        %v2501 = vld [vmem:[%s2500] sm:$0xf]
        %v2502 = vld [vmem:[%s2500 + $0x4] sm:$0xf]
        %v2503 = vld [vmem:[%s2500 + $0x8] sm:$0xf]
        %v2504 = vld [vmem:[%s2500 + $0xc] sm:$0xf]
        %v2505 = vld [vmem:[%s2500 + $0x10] sm:$0xf]
        %v2506 = vld [vmem:[%s2500 + $0x14] sm:$0xf]
        %v2507 = vld [vmem:[%s2500 + $0x18] sm:$0xf]
        %v2508 = vld [vmem:[%s2500 + $0x1c] sm:$0xf]
        %v2509 = vld [vmem:[%s2500 + $0x20] sm:$0xf]
        %v2510 = vld [vmem:[%s2500 + $0x24] sm:$0xf]
        %v2511 = vld [vmem:[%s2500 + $0x28] sm:$0xf]
        %v2512 = vld [vmem:[%s2500 + $0x2c] sm:$0xf]
        %v2513 = vld [vmem:[%s2500 + $0x30] sm:$0xf]
        %v2514 = vld [vmem:[%s2500 + $0x34] sm:$0xf]
        %v2515 = vld [vmem:[%s2500 + $0x38] sm:$0xf]
        %v2516 = vld [vmem:[%s2500 + $0x3c] sm:$0xf]
        %v2517 = vld [vmem:[#allocation3] sm:$0xf]
        %v2518 = vld [vmem:[#allocation3 + $0x4] sm:$0xf]
        %v2519 = vld [vmem:[#allocation3 + $0x8] sm:$0xf]
        %v2520 = vld [vmem:[#allocation3 + $0xc] sm:$0xf]
        %v2521 = vld [vmem:[#allocation3 + $0x10] sm:$0xf]
        %v2522 = vld [vmem:[#allocation3 + $0x14] sm:$0xf]
        %v2523 = vld [vmem:[#allocation3 + $0x18] sm:$0xf]
        %v2524 = vld [vmem:[#allocation3 + $0x1c] sm:$0xf]
        %v2525 = vld [vmem:[#allocation3 + $0x20] sm:$0xf]
        %v2526 = vld [vmem:[#allocation3 + $0x24] sm:$0xf]
        %v2527 = vld [vmem:[#allocation3 + $0x28] sm:$0xf]
        %v2528 = vld [vmem:[#allocation3 + $0x2c] sm:$0xf]
        %v2529 = vld [vmem:[#allocation3 + $0x30] sm:$0xf]
        %v2530 = vld [vmem:[#allocation3 + $0x34] sm:$0xf]
        %v2531 = vld [vmem:[#allocation3 + $0x38] sm:$0xf]
        %v2532 = vld [vmem:[#allocation3 + $0x3c] sm:$0xf]
        %v2533 = vld [vmem:[#allocation3 + $0x40] sm:$0xf]
        %v2534 = vld [vmem:[#allocation3 + $0x44] sm:$0xf]
        %v2535 = vld [vmem:[#allocation3 + $0x48] sm:$0xf]
        %v2536 = vld [vmem:[#allocation3 + $0x4c] sm:$0xf]
        %v2537 = vld [vmem:[#allocation3 + $0x50] sm:$0xf]
        %v2538 = vld [vmem:[#allocation3 + $0x54] sm:$0xf]
        %v2539 = vld [vmem:[#allocation3 + $0x58] sm:$0xf]
        %v2540 = vld [vmem:[#allocation3 + $0x5c] sm:$0xf]
        %v2541 = vld [vmem:[#allocation3 + $0x60] sm:$0xf]
        %v2542 = vld [vmem:[#allocation3 + $0x64] sm:$0xf]
        %v2543 = vld [vmem:[#allocation3 + $0x68] sm:$0xf]
        %v2544 = vld [vmem:[#allocation3 + $0x6c] sm:$0xf]
        %v2545 = vld [vmem:[#allocation3 + $0x70] sm:$0xf]
        %v2546 = vld [vmem:[#allocation3 + $0x74] sm:$0xf]
        %v2547 = vld [vmem:[#allocation3 + $0x78] sm:$0xf]
        %v2548 = vld [vmem:[#allocation3 + $0x7c] sm:$0xf]
        %v2549 = vld [vmem:[#allocation4] sm:$0xf]
        %v2550 = vld [vmem:[#allocation4 + $0x4] sm:$0xf]
        %v2551 = vld [vmem:[#allocation4 + $0x8] sm:$0xf]
        %v2552 = vld [vmem:[#allocation4 + $0xc] sm:$0xf]
        %v2553 = vld [vmem:[#allocation4 + $0x10] sm:$0xf]
        %v2554 = vld [vmem:[#allocation4 + $0x14] sm:$0xf]
        %v2555 = vld [vmem:[#allocation4 + $0x18] sm:$0xf]
        %v2556 = vld [vmem:[#allocation4 + $0x1c] sm:$0xf]
        %v2557 = vld [vmem:[#allocation4 + $0x20] sm:$0xf]
        %v2558 = vld [vmem:[#allocation4 + $0x24] sm:$0xf]
        %v2559 = vld [vmem:[#allocation4 + $0x28] sm:$0xf]
        %v2560 = vld [vmem:[#allocation4 + $0x2c] sm:$0xf]
        %v2561 = vld [vmem:[#allocation4 + $0x30] sm:$0xf]
        %v2562 = vld [vmem:[#allocation4 + $0x34] sm:$0xf]
        %v2563 = vld [vmem:[#allocation4 + $0x38] sm:$0xf]
        %v2564 = vld [vmem:[#allocation4 + $0x3c] sm:$0xf]
        %v2565 = vld [vmem:[#allocation4 + $0x40] sm:$0xf]
        %v2566 = vld [vmem:[#allocation4 + $0x44] sm:$0xf]
        %v2567 = vld [vmem:[#allocation4 + $0x48] sm:$0xf]
        %v2568 = vld [vmem:[#allocation4 + $0x4c] sm:$0xf]
        %v2569 = vld [vmem:[#allocation4 + $0x50] sm:$0xf]
        %v2570 = vld [vmem:[#allocation4 + $0x54] sm:$0xf]
        %v2571 = vld [vmem:[#allocation4 + $0x58] sm:$0xf]
        %v2572 = vld [vmem:[#allocation4 + $0x5c] sm:$0xf]
        %v2573 = vld [vmem:[#allocation4 + $0x60] sm:$0xf]
        %v2574 = vld [vmem:[#allocation4 + $0x64] sm:$0xf]
        %v2575 = vld [vmem:[#allocation4 + $0x68] sm:$0xf]
        %v2576 = vld [vmem:[#allocation4 + $0x6c] sm:$0xf]
        %v2577 = vld [vmem:[#allocation4 + $0x70] sm:$0xf]
        %v2578 = vld [vmem:[#allocation4 + $0x74] sm:$0xf]
        %v2579 = vld [vmem:[#allocation4 + $0x78] sm:$0xf]
        %v2580 = vld [vmem:[#allocation4 + $0x7c] sm:$0xf]
        %v2597 = vunpack.c.l.b16 %v2501
        %v2598 = vunpack.c.l.b16 %v2502
        %v2599 = vunpack.c.l.b16 %v2503
        %v2600 = vunpack.c.l.b16 %v2504
        %v2601 = vunpack.c.l.b16 %v2505
        %v2602 = vunpack.c.l.b16 %v2506
        %v2603 = vunpack.c.l.b16 %v2507
        %v2604 = vunpack.c.l.b16 %v2508
        %v2605 = vunpack.c.l.b16 %v2509
        %v2606 = vunpack.c.l.b16 %v2510
        %v2607 = vunpack.c.l.b16 %v2511
        %v2608 = vunpack.c.l.b16 %v2512
        %v2609 = vunpack.c.l.b16 %v2513
        %v2610 = vunpack.c.l.b16 %v2514
        %v2611 = vunpack.c.l.b16 %v2515
        %v2612 = vunpack.c.l.b16 %v2516
        %v2613 = vpack.c.b16 %v2598, %v2597
        %v2614 = vpack.c.b16 %v2600, %v2599
        %v2615 = vpack.c.b16 %v2602, %v2601
        %v2616 = vpack.c.b16 %v2604, %v2603
        %v2617 = vpack.c.b16 %v2606, %v2605
        %v2618 = vpack.c.b16 %v2608, %v2607
        %v2619 = vpack.c.b16 %v2610, %v2609
        %v2620 = vpack.c.b16 %v2612, %v2611
        %v2653 = vunpack.c.l.b16 %v2517
        %v2654 = vunpack.c.l.b16 %v2518
        %v2655 = vunpack.c.l.b16 %v2519
        %v2656 = vunpack.c.l.b16 %v2520
        %v2657 = vunpack.c.l.b16 %v2521
        %v2658 = vunpack.c.l.b16 %v2522
        %v2659 = vunpack.c.l.b16 %v2523
        %v2660 = vunpack.c.l.b16 %v2524
        %v2661 = vunpack.c.l.b16 %v2525
        %v2662 = vunpack.c.l.b16 %v2526
        %v2663 = vunpack.c.l.b16 %v2527
        %v2664 = vunpack.c.l.b16 %v2528
        %v2665 = vunpack.c.l.b16 %v2529
        %v2666 = vunpack.c.l.b16 %v2530
        %v2667 = vunpack.c.l.b16 %v2531
        %v2668 = vunpack.c.l.b16 %v2532
        %v2669 = vunpack.c.l.b16 %v2533
        %v2670 = vunpack.c.l.b16 %v2534
        %v2671 = vunpack.c.l.b16 %v2535
        %v2672 = vunpack.c.l.b16 %v2536
        %v2673 = vunpack.c.l.b16 %v2537
        %v2674 = vunpack.c.l.b16 %v2538
        %v2675 = vunpack.c.l.b16 %v2539
        %v2676 = vunpack.c.l.b16 %v2540
        %v2677 = vunpack.c.l.b16 %v2541
        %v2678 = vunpack.c.l.b16 %v2542
        %v2679 = vunpack.c.l.b16 %v2543
        %v2680 = vunpack.c.l.b16 %v2544
        %v2681 = vunpack.c.l.b16 %v2545
        %v2682 = vunpack.c.l.b16 %v2546
        %v2683 = vunpack.c.l.b16 %v2547
        %v2684 = vunpack.c.l.b16 %v2548
        %v2685 = vpack.c.b16 %v2654, %v2653
        %v2686 = vpack.c.b16 %v2656, %v2655
        %v2687 = vpack.c.b16 %v2658, %v2657
        %v2688 = vpack.c.b16 %v2660, %v2659
        %v2689 = vpack.c.b16 %v2662, %v2661
        %v2690 = vpack.c.b16 %v2664, %v2663
        %v2691 = vpack.c.b16 %v2666, %v2665
        %v2692 = vpack.c.b16 %v2668, %v2667
        %v2693 = vpack.c.b16 %v2670, %v2669
        %v2694 = vpack.c.b16 %v2672, %v2671
        %v2695 = vpack.c.b16 %v2674, %v2673
        %v2696 = vpack.c.b16 %v2676, %v2675
        %v2697 = vpack.c.b16 %v2678, %v2677
        %v2698 = vpack.c.b16 %v2680, %v2679
        %v2699 = vpack.c.b16 %v2682, %v2681
        %v2700 = vpack.c.b16 %v2684, %v2683
        %vm2701 = vcmask 261120
        %v2703 = vsel %vm2701, %v2613, 0
        %v2706 = vsel %vm2701, %v2614, 0
        %v2709 = vsel %vm2701, %v2615, 0
        %v2712 = vsel %vm2701, %v2616, 0
        %v2715 = vsel %vm2701, %v2617, 0
        %v2718 = vsel %vm2701, %v2618, 0
        %v2721 = vsel %vm2701, %v2619, 0
        %v2724 = vsel %vm2701, %v2620, 0
        %v2727 = vsel %vm2701, %v2685, 0
        %v2730 = vsel %vm2701, %v2686, 0
        %v2733 = vsel %vm2701, %v2687, 0
        %v2736 = vsel %vm2701, %v2688, 0
        %v2739 = vsel %vm2701, %v2689, 0
        %v2742 = vsel %vm2701, %v2690, 0
        %v2745 = vsel %vm2701, %v2691, 0
        %v2748 = vsel %vm2701, %v2692, 0
        %v2751 = vsel %vm2701, %v2693, 0
        %v2754 = vsel %vm2701, %v2694, 0
        %v2757 = vsel %vm2701, %v2695, 0
        %v2760 = vsel %vm2701, %v2696, 0
        %v2763 = vsel %vm2701, %v2697, 0
        %v2766 = vsel %vm2701, %v2698, 0
        %v2769 = vsel %vm2701, %v2699, 0
        %v2772 = vsel %vm2701, %v2700, 0
        %2774 = vmatprep.subr.bf16.mxu0 0
        %2775 = vmatpush1.bf16.xpose.msra.mxu0 %v2748
        %2776 = vmatprep.subr.bf16.mxu0 0
        %2777 = vmatpush1.bf16.xpose.msra.mxu0 %v2745
        %2778 = vmatprep.subr.bf16.mxu0 0
        %2779 = vmatpush1.bf16.xpose.msra.mxu0 %v2742
        %2780 = vmatprep.subr.bf16.mxu0 0
        %2781 = vmatpush1.bf16.xpose.msra.mxu0 %v2739
        %2782 = vmatprep.subr.bf16.mxu0 0
        %2783 = vmatpush1.bf16.xpose.msra.mxu0 %v2736
        %2784 = vmatprep.subr.bf16.mxu0 0
        %2785 = vmatpush1.bf16.xpose.msra.mxu0 %v2733
        %2786 = vmatprep.subr.bf16.mxu0 0
        %2787 = vmatpush1.bf16.xpose.msra.mxu0 %v2730
        %2788 = vmatprep.subr.bf16.mxu0 0
        %2789 = vmatpush1.bf16.xpose.msra.mxu0 %v2727
        %2790 = vmatprep.subr.bf16.mxu0 0
        %2791 = vmatpush2.bf16.xpose.msra.mxu0 %v2772
        %2792 = vmatprep.subr.bf16.mxu0 0
        %2793 = vmatpush2.bf16.xpose.msra.mxu0 %v2769
        %2794 = vmatprep.subr.bf16.mxu0 0
        %2795 = vmatpush2.bf16.xpose.msra.mxu0 %v2766
        %2796 = vmatprep.subr.bf16.mxu0 0
        %2797 = vmatpush2.bf16.xpose.msra.mxu0 %v2763
        %2798 = vmatprep.subr.bf16.mxu0 0
        %2799 = vmatpush2.bf16.xpose.msra.mxu0 %v2760
        %2800 = vmatprep.subr.bf16.mxu0 0
        %2801 = vmatpush2.bf16.xpose.msra.mxu0 %v2757
        %2802 = vmatprep.subr.bf16.mxu0 0
        %2803 = vmatpush2.bf16.xpose.msra.mxu0 %v2754
        %2804 = vmatprep.subr.bf16.mxu0 0
        %2805 = vmatpush2.bf16.xpose.msra.mxu0 %v2751
        %2806 = vmatprep.mubr.bf16.mxu0 0
        %2807 = vmatmul.mubr.bf16.gmra.mxu0 %v2703
        %v2808 = vpop.f32.mrf.mxu0
        %v2809 = vadd.f32 %v2463, %v2808
        %v2810 = vpop.f32.mrf.mxu0
        %v2811 = vadd.f32 %v2464, %v2810
        %v2812 = vpop.f32.mrf.mxu0
        %v2813 = vadd.f32 %v2465, %v2812
        %v2814 = vpop.f32.mrf.mxu0
        %v2815 = vadd.f32 %v2466, %v2814
        %2816 = vmatprep.mubr.bf16.mxu0 0
        %2817 = vmatmul.mubr.bf16.gmra.mxu0 %v2706
        %v2818 = vpop.f32.mrf.mxu0
        %v2819 = vadd.f32 %v2467, %v2818
        %v2820 = vpop.f32.mrf.mxu0
        %v2821 = vadd.f32 %v2468, %v2820
        %v2822 = vpop.f32.mrf.mxu0
        %v2823 = vadd.f32 %v2469, %v2822
        %v2824 = vpop.f32.mrf.mxu0
        %v2825 = vadd.f32 %v2470, %v2824
        %2826 = vmatprep.mubr.bf16.mxu0 0
        %2827 = vmatmul.mubr.bf16.gmra.mxu0 %v2709
        %v2828 = vpop.f32.mrf.mxu0
        %v2829 = vadd.f32 %v2471, %v2828
        %v2830 = vpop.f32.mrf.mxu0
        %v2831 = vadd.f32 %v2472, %v2830
        %v2832 = vpop.f32.mrf.mxu0
        %v2833 = vadd.f32 %v2473, %v2832
        %v2834 = vpop.f32.mrf.mxu0
        %v2835 = vadd.f32 %v2474, %v2834
        %2836 = vmatprep.mubr.bf16.mxu0 0
        %2837 = vmatmul.mubr.bf16.gmra.mxu0 %v2712
        %v2838 = vpop.f32.mrf.mxu0
        %v2839 = vadd.f32 %v2475, %v2838
        %v2840 = vpop.f32.mrf.mxu0
        %v2841 = vadd.f32 %v2476, %v2840
        %v2842 = vpop.f32.mrf.mxu0
        %v2843 = vadd.f32 %v2477, %v2842
        %v2844 = vpop.f32.mrf.mxu0
        %v2845 = vadd.f32 %v2478, %v2844
        %2846 = vmatprep.mubr.bf16.mxu0 0
        %2847 = vmatmul.mubr.bf16.gmra.mxu0 %v2715
        %v2848 = vpop.f32.mrf.mxu0
        %v2849 = vadd.f32 %v2479, %v2848
        %v2850 = vpop.f32.mrf.mxu0
        %v2851 = vadd.f32 %v2480, %v2850
        %v2852 = vpop.f32.mrf.mxu0
        %v2853 = vadd.f32 %v2481, %v2852
        %v2854 = vpop.f32.mrf.mxu0
        %v2855 = vadd.f32 %v2482, %v2854
        %2856 = vmatprep.mubr.bf16.mxu0 0
        %2857 = vmatmul.mubr.bf16.gmra.mxu0 %v2718
        %v2858 = vpop.f32.mrf.mxu0
        %v2859 = vadd.f32 %v2483, %v2858
        %v2860 = vpop.f32.mrf.mxu0
        %v2861 = vadd.f32 %v2484, %v2860
        %v2862 = vpop.f32.mrf.mxu0
        %v2863 = vadd.f32 %v2485, %v2862
        %v2864 = vpop.f32.mrf.mxu0
        %v2865 = vadd.f32 %v2486, %v2864
        %2866 = vmatprep.mubr.bf16.mxu0 0
        %2867 = vmatmul.mubr.bf16.gmra.mxu0 %v2721
        %v2868 = vpop.f32.mrf.mxu0
        %v2869 = vadd.f32 %v2487, %v2868
        %v2870 = vpop.f32.mrf.mxu0
        %v2871 = vadd.f32 %v2488, %v2870
        %v2872 = vpop.f32.mrf.mxu0
        %v2873 = vadd.f32 %v2489, %v2872
        %v2874 = vpop.f32.mrf.mxu0
        %v2875 = vadd.f32 %v2490, %v2874
        %2876 = vmatprep.mubr.bf16.mxu0 0
        %2877 = vmatmul.mubr.bf16.gmra.mxu0 %v2724
        %v2878 = vpop.f32.mrf.mxu0
        %v2879 = vadd.f32 %v2491, %v2878
        %v2880 = vpop.f32.mrf.mxu0
        %v2881 = vadd.f32 %v2492, %v2880
        %v2882 = vpop.f32.mrf.mxu0
        %v2883 = vadd.f32 %v2493, %v2882
        %v2884 = vpop.f32.mrf.mxu0
        %v2885 = vadd.f32 %v2494, %v2884
        %2886 = vdwg.mxu0
        %v2887 = vsel %vm2496, 1, 0
        %v2888 = vlaneseq
        %v2889 = vshrl.u32 %v2888, 7
        %v2890 = vsub.s32 0, %v2889
        %v2891 = vrot.slane %v2887, %v2890
        %v2892 = vlaneseq
        %v2893 = vshrl.u32 %v2892, 7
        %v2894 = vsub.s32 1, %v2893
        %v2895 = vrot.slane %v2887, %v2894
        %vm2896 = vcmp.eq.s32.totalorder %v2891, 1
        %vm2897 = vcmp.eq.s32.totalorder %v2895, 1
        %v2898 = vsel %vm2896, %v2809, -1e+09
        %v2899 = vsel %vm2897, %v2811, -1e+09
        %v2900 = vsel %vm2896, %v2813, -1e+09
        %v2901 = vsel %vm2897, %v2815, -1e+09
        %v2902 = vsel %vm2896, %v2819, -1e+09
        %v2903 = vsel %vm2897, %v2821, -1e+09
        %v2904 = vsel %vm2896, %v2823, -1e+09
        %v2905 = vsel %vm2897, %v2825, -1e+09
        %v2906 = vsel %vm2896, %v2829, -1e+09
        %v2907 = vsel %vm2897, %v2831, -1e+09
        %v2908 = vsel %vm2896, %v2833, -1e+09
        %v2909 = vsel %vm2897, %v2835, -1e+09
        %v2910 = vsel %vm2896, %v2839, -1e+09
        %v2911 = vsel %vm2897, %v2841, -1e+09
        %v2912 = vsel %vm2896, %v2843, -1e+09
        %v2913 = vsel %vm2897, %v2845, -1e+09
        %v2914 = vsel %vm2896, %v2849, -1e+09
        %v2915 = vsel %vm2897, %v2851, -1e+09
        %v2916 = vsel %vm2896, %v2853, -1e+09
        %v2917 = vsel %vm2897, %v2855, -1e+09
        %v2918 = vsel %vm2896, %v2859, -1e+09
        %v2919 = vsel %vm2897, %v2861, -1e+09
        %v2920 = vsel %vm2896, %v2863, -1e+09
        %v2921 = vsel %vm2897, %v2865, -1e+09
        %v2922 = vsel %vm2896, %v2869, -1e+09
        %v2923 = vsel %vm2897, %v2871, -1e+09
        %v2924 = vsel %vm2896, %v2873, -1e+09
        %v2925 = vsel %vm2897, %v2875, -1e+09
        %v2926 = vsel %vm2896, %v2879, -1e+09
        %v2927 = vsel %vm2897, %v2881, -1e+09
        %v2928 = vsel %vm2896, %v2883, -1e+09
        %v2929 = vsel %vm2897, %v2885, -1e+09
        %v2930 = vmax.f32 %v2898, %v2899
        %2931 = vmax.xlane.f32.xlu0 %v2930
        %v2932 = vpop.xlane.xlu0 %2931
        %v2933 = vmax.f32 %v2900, %v2901
        %2934 = vmax.xlane.f32.xlu0 %v2933
        %v2935 = vpop.xlane.xlu0 %2934
        %v2936 = vmax.f32 %v2902, %v2903
        %2937 = vmax.xlane.f32.xlu0 %v2936
        %v2938 = vpop.xlane.xlu0 %2937
        %v2939 = vmax.f32 %v2904, %v2905
        %2940 = vmax.xlane.f32.xlu0 %v2939
        %v2941 = vpop.xlane.xlu0 %2940
        %v2942 = vmax.f32 %v2906, %v2907
        %2943 = vmax.xlane.f32.xlu0 %v2942
        %v2944 = vpop.xlane.xlu0 %2943
        %v2945 = vmax.f32 %v2908, %v2909
        %2946 = vmax.xlane.f32.xlu0 %v2945
        %v2947 = vpop.xlane.xlu0 %2946
        %v2948 = vmax.f32 %v2910, %v2911
        %2949 = vmax.xlane.f32.xlu0 %v2948
        %v2950 = vpop.xlane.xlu0 %2949
        %v2951 = vmax.f32 %v2912, %v2913
        %2952 = vmax.xlane.f32.xlu0 %v2951
        %v2953 = vpop.xlane.xlu0 %2952
        %v2954 = vmax.f32 %v2914, %v2915
        %2955 = vmax.xlane.f32.xlu0 %v2954
        %v2956 = vpop.xlane.xlu0 %2955
        %v2957 = vmax.f32 %v2916, %v2917
        %2958 = vmax.xlane.f32.xlu0 %v2957
        %v2959 = vpop.xlane.xlu0 %2958
        %v2960 = vmax.f32 %v2918, %v2919
        %2961 = vmax.xlane.f32.xlu0 %v2960
        %v2962 = vpop.xlane.xlu0 %2961
        %v2963 = vmax.f32 %v2920, %v2921
        %2964 = vmax.xlane.f32.xlu0 %v2963
        %v2965 = vpop.xlane.xlu0 %2964
        %v2966 = vmax.f32 %v2922, %v2923
        %2967 = vmax.xlane.f32.xlu0 %v2966
        %v2968 = vpop.xlane.xlu0 %2967
        %v2969 = vmax.f32 %v2924, %v2925
        %2970 = vmax.xlane.f32.xlu0 %v2969
        %v2971 = vpop.xlane.xlu0 %2970
        %v2972 = vmax.f32 %v2926, %v2927
        %2973 = vmax.xlane.f32.xlu0 %v2972
        %v2974 = vpop.xlane.xlu0 %2973
        %v2975 = vmax.f32 %v2928, %v2929
        %2976 = vmax.xlane.f32.xlu0 %v2975
        %v2977 = vpop.xlane.xlu0 %2976
        %v2978 = vsub.f32 %v2898, %v2932
        %v2979 = vsub.f32 %v2899, %v2932
        %v2980 = vsub.f32 %v2900, %v2935
        %v2981 = vsub.f32 %v2901, %v2935
        %v2982 = vsub.f32 %v2902, %v2938
        %v2983 = vsub.f32 %v2903, %v2938
        %v2984 = vsub.f32 %v2904, %v2941
        %v2985 = vsub.f32 %v2905, %v2941
        %v2986 = vsub.f32 %v2906, %v2944
        %v2987 = vsub.f32 %v2907, %v2944
        %v2988 = vsub.f32 %v2908, %v2947
        %v2989 = vsub.f32 %v2909, %v2947
        %v2990 = vsub.f32 %v2910, %v2950
        %v2991 = vsub.f32 %v2911, %v2950
        %v2992 = vsub.f32 %v2912, %v2953
        %v2993 = vsub.f32 %v2913, %v2953
        %v2994 = vsub.f32 %v2914, %v2956
        %v2995 = vsub.f32 %v2915, %v2956
        %v2996 = vsub.f32 %v2916, %v2959
        %v2997 = vsub.f32 %v2917, %v2959
        %v2998 = vsub.f32 %v2918, %v2962
        %v2999 = vsub.f32 %v2919, %v2962
        %v3000 = vsub.f32 %v2920, %v2965
        %v3001 = vsub.f32 %v2921, %v2965
        %v3002 = vsub.f32 %v2922, %v2968
        %v3003 = vsub.f32 %v2923, %v2968
        %v3004 = vsub.f32 %v2924, %v2971
        %v3005 = vsub.f32 %v2925, %v2971
        %v3006 = vsub.f32 %v2926, %v2974
        %v3007 = vsub.f32 %v2927, %v2974
        %v3008 = vsub.f32 %v2928, %v2977
        %v3009 = vsub.f32 %v2929, %v2977
        %v3010 = vmul.f32 %v2978, 1.442695
        %v3011 = vpow.pop %v3010
        %v3012 = vmul.f32 %v2979, 1.442695
        %v3013 = vpow.pop %v3012
        %v3014 = vmul.f32 %v2980, 1.442695
        %v3015 = vpow.pop %v3014
        %v3016 = vmul.f32 %v2981, 1.442695
        %v3017 = vpow.pop %v3016
        %v3018 = vmul.f32 %v2982, 1.442695
        %v3019 = vpow.pop %v3018
        %v3020 = vmul.f32 %v2983, 1.442695
        %v3021 = vpow.pop %v3020
        %v3022 = vmul.f32 %v2984, 1.442695
        %v3023 = vpow.pop %v3022
        %v3024 = vmul.f32 %v2985, 1.442695
        %v3025 = vpow.pop %v3024
        %v3026 = vmul.f32 %v2986, 1.442695
        %v3027 = vpow.pop %v3026
        %v3028 = vmul.f32 %v2987, 1.442695
        %v3029 = vpow.pop %v3028
        %v3030 = vmul.f32 %v2988, 1.442695
        %v3031 = vpow.pop %v3030
        %v3032 = vmul.f32 %v2989, 1.442695
        %v3033 = vpow.pop %v3032
        %v3034 = vmul.f32 %v2990, 1.442695
        %v3035 = vpow.pop %v3034
        %v3036 = vmul.f32 %v2991, 1.442695
        %v3037 = vpow.pop %v3036
        %v3038 = vmul.f32 %v2992, 1.442695
        %v3039 = vpow.pop %v3038
        %v3040 = vmul.f32 %v2993, 1.442695
        %v3041 = vpow.pop %v3040
        %v3042 = vmul.f32 %v2994, 1.442695
        %v3043 = vpow.pop %v3042
        %v3044 = vmul.f32 %v2995, 1.442695
        %v3045 = vpow.pop %v3044
        %v3046 = vmul.f32 %v2996, 1.442695
        %v3047 = vpow.pop %v3046
        %v3048 = vmul.f32 %v2997, 1.442695
        %v3049 = vpow.pop %v3048
        %v3050 = vmul.f32 %v2998, 1.442695
        %v3051 = vpow.pop %v3050
        %v3052 = vmul.f32 %v2999, 1.442695
        %v3053 = vpow.pop %v3052
        %v3054 = vmul.f32 %v3000, 1.442695
        %v3055 = vpow.pop %v3054
        %v3056 = vmul.f32 %v3001, 1.442695
        %v3057 = vpow.pop %v3056
        %v3058 = vmul.f32 %v3002, 1.442695
        %v3059 = vpow.pop %v3058
        %v3060 = vmul.f32 %v3003, 1.442695
        %v3061 = vpow.pop %v3060
        %v3062 = vmul.f32 %v3004, 1.442695
        %v3063 = vpow.pop %v3062
        %v3064 = vmul.f32 %v3005, 1.442695
        %v3065 = vpow.pop %v3064
        %v3066 = vmul.f32 %v3006, 1.442695
        %v3067 = vpow.pop %v3066
        %v3068 = vmul.f32 %v3007, 1.442695
        %v3069 = vpow.pop %v3068
        %v3070 = vmul.f32 %v3008, 1.442695
        %v3071 = vpow.pop %v3070
        %v3072 = vmul.f32 %v3009, 1.442695
        %v3073 = vpow.pop %v3072
        %v3074 = vadd.f32 %v3011, %v3013
        %3075 = vadd.xlane.f32.xlu0 %v3074
        %v3076 = vpop.xlane.xlu0 %3075
        %v3077 = vadd.f32 %v3015, %v3017
        %3078 = vadd.xlane.f32.xlu0 %v3077
        %v3079 = vpop.xlane.xlu0 %3078
        %v3080 = vadd.f32 %v3019, %v3021
        %3081 = vadd.xlane.f32.xlu0 %v3080
        %v3082 = vpop.xlane.xlu0 %3081
        %v3083 = vadd.f32 %v3023, %v3025
        %3084 = vadd.xlane.f32.xlu0 %v3083
        %v3085 = vpop.xlane.xlu0 %3084
        %v3086 = vadd.f32 %v3027, %v3029
        %3087 = vadd.xlane.f32.xlu0 %v3086
        %v3088 = vpop.xlane.xlu0 %3087
        %v3089 = vadd.f32 %v3031, %v3033
        %3090 = vadd.xlane.f32.xlu0 %v3089
        %v3091 = vpop.xlane.xlu0 %3090
        %v3092 = vadd.f32 %v3035, %v3037
        %3093 = vadd.xlane.f32.xlu0 %v3092
        %v3094 = vpop.xlane.xlu0 %3093
        %v3095 = vadd.f32 %v3039, %v3041
        %3096 = vadd.xlane.f32.xlu0 %v3095
        %v3097 = vpop.xlane.xlu0 %3096
        %v3098 = vadd.f32 %v3043, %v3045
        %3099 = vadd.xlane.f32.xlu0 %v3098
        %v3100 = vpop.xlane.xlu0 %3099
        %v3101 = vadd.f32 %v3047, %v3049
        %3102 = vadd.xlane.f32.xlu0 %v3101
        %v3103 = vpop.xlane.xlu0 %3102
        %v3104 = vadd.f32 %v3051, %v3053
        %3105 = vadd.xlane.f32.xlu0 %v3104
        %v3106 = vpop.xlane.xlu0 %3105
        %v3107 = vadd.f32 %v3055, %v3057
        %3108 = vadd.xlane.f32.xlu0 %v3107
        %v3109 = vpop.xlane.xlu0 %3108
        %v3110 = vadd.f32 %v3059, %v3061
        %3111 = vadd.xlane.f32.xlu0 %v3110
        %v3112 = vpop.xlane.xlu0 %3111
        %v3113 = vadd.f32 %v3063, %v3065
        %3114 = vadd.xlane.f32.xlu0 %v3113
        %v3115 = vpop.xlane.xlu0 %3114
        %v3116 = vadd.f32 %v3067, %v3069
        %3117 = vadd.xlane.f32.xlu0 %v3116
        %v3118 = vpop.xlane.xlu0 %3117
        %v3119 = vadd.f32 %v3071, %v3073
        %3120 = vadd.xlane.f32.xlu0 %v3119
        %v3121 = vpop.xlane.xlu0 %3120
        %v3122 = vrcp.pop %v3076
        %v3123 = vmul.f32 1.0, %v3122
        %v3124 = vrcp.pop %v3079
        %v3125 = vmul.f32 1.0, %v3124
        %v3126 = vrcp.pop %v3082
        %v3127 = vmul.f32 1.0, %v3126
        %v3128 = vrcp.pop %v3085
        %v3129 = vmul.f32 1.0, %v3128
        %v3130 = vrcp.pop %v3088
        %v3131 = vmul.f32 1.0, %v3130
        %v3132 = vrcp.pop %v3091
        %v3133 = vmul.f32 1.0, %v3132
        %v3134 = vrcp.pop %v3094
        %v3135 = vmul.f32 1.0, %v3134
        %v3136 = vrcp.pop %v3097
        %v3137 = vmul.f32 1.0, %v3136
        %v3138 = vrcp.pop %v3100
        %v3139 = vmul.f32 1.0, %v3138
        %v3140 = vrcp.pop %v3103
        %v3141 = vmul.f32 1.0, %v3140
        %v3142 = vrcp.pop %v3106
        %v3143 = vmul.f32 1.0, %v3142
        %v3144 = vrcp.pop %v3109
        %v3145 = vmul.f32 1.0, %v3144
        %v3146 = vrcp.pop %v3112
        %v3147 = vmul.f32 1.0, %v3146
        %v3148 = vrcp.pop %v3115
        %v3149 = vmul.f32 1.0, %v3148
        %v3150 = vrcp.pop %v3118
        %v3151 = vmul.f32 1.0, %v3150
        %v3152 = vrcp.pop %v3121
        %v3153 = vmul.f32 1.0, %v3152
        %v3154 = vmul.f32 %v3011, %v3123
        %v3155 = vmul.f32 %v3013, %v3123
        %v3156 = vmul.f32 %v3015, %v3125
        %v3157 = vmul.f32 %v3017, %v3125
        %v3158 = vmul.f32 %v3019, %v3127
        %v3159 = vmul.f32 %v3021, %v3127
        %v3160 = vmul.f32 %v3023, %v3129
        %v3161 = vmul.f32 %v3025, %v3129
        %v3162 = vmul.f32 %v3027, %v3131
        %v3163 = vmul.f32 %v3029, %v3131
        %v3164 = vmul.f32 %v3031, %v3133
        %v3165 = vmul.f32 %v3033, %v3133
        %v3166 = vmul.f32 %v3035, %v3135
        %v3167 = vmul.f32 %v3037, %v3135
        %v3168 = vmul.f32 %v3039, %v3137
        %v3169 = vmul.f32 %v3041, %v3137
        %v3170 = vmul.f32 %v3043, %v3139
        %v3171 = vmul.f32 %v3045, %v3139
        %v3172 = vmul.f32 %v3047, %v3141
        %v3173 = vmul.f32 %v3049, %v3141
        %v3174 = vmul.f32 %v3051, %v3143
        %v3175 = vmul.f32 %v3053, %v3143
        %v3176 = vmul.f32 %v3055, %v3145
        %v3177 = vmul.f32 %v3057, %v3145
        %v3178 = vmul.f32 %v3059, %v3147
        %v3179 = vmul.f32 %v3061, %v3147
        %v3180 = vmul.f32 %v3063, %v3149
        %v3181 = vmul.f32 %v3065, %v3149
        %v3182 = vmul.f32 %v3067, %v3151
        %v3183 = vmul.f32 %v3069, %v3151
        %v3184 = vmul.f32 %v3071, %v3153
        %v3185 = vmul.f32 %v3073, %v3153
        %v3186 = vsub.f32 %v3154, %v2463
        %v3187 = vsub.f32 %v3155, %v2464
        %v3188 = vsub.f32 %v3156, %v2465
        %v3189 = vsub.f32 %v3157, %v2466
        %v3190 = vsub.f32 %v3158, %v2467
        %v3191 = vsub.f32 %v3159, %v2468
        %v3192 = vsub.f32 %v3160, %v2469
        %v3193 = vsub.f32 %v3161, %v2470
        %v3194 = vsub.f32 %v3162, %v2471
        %v3195 = vsub.f32 %v3163, %v2472
        %v3196 = vsub.f32 %v3164, %v2473
        %v3197 = vsub.f32 %v3165, %v2474
        %v3198 = vsub.f32 %v3166, %v2475
        %v3199 = vsub.f32 %v3167, %v2476
        %v3200 = vsub.f32 %v3168, %v2477
        %v3201 = vsub.f32 %v3169, %v2478
        %v3202 = vsub.f32 %v3170, %v2479
        %v3203 = vsub.f32 %v3171, %v2480
        %v3204 = vsub.f32 %v3172, %v2481
        %v3205 = vsub.f32 %v3173, %v2482
        %v3206 = vsub.f32 %v3174, %v2483
        %v3207 = vsub.f32 %v3175, %v2484
        %v3208 = vsub.f32 %v3176, %v2485
        %v3209 = vsub.f32 %v3177, %v2486
        %v3210 = vsub.f32 %v3178, %v2487
        %v3211 = vsub.f32 %v3179, %v2488
        %v3212 = vsub.f32 %v3180, %v2489
        %v3213 = vsub.f32 %v3181, %v2490
        %v3214 = vsub.f32 %v3182, %v2491
        %v3215 = vsub.f32 %v3183, %v2492
        %v3216 = vsub.f32 %v3184, %v2493
        %v3217 = vsub.f32 %v3185, %v2494
        %v3218 = vmul.f32 %v3186, %v3186
        %v3219 = vmul.f32 %v3187, %v3187
        %v3220 = vmul.f32 %v3188, %v3188
        %v3221 = vmul.f32 %v3189, %v3189
        %v3222 = vmul.f32 %v3190, %v3190
        %v3223 = vmul.f32 %v3191, %v3191
        %v3224 = vmul.f32 %v3192, %v3192
        %v3225 = vmul.f32 %v3193, %v3193
        %v3226 = vmul.f32 %v3194, %v3194
        %v3227 = vmul.f32 %v3195, %v3195
        %v3228 = vmul.f32 %v3196, %v3196
        %v3229 = vmul.f32 %v3197, %v3197
        %v3230 = vmul.f32 %v3198, %v3198
        %v3231 = vmul.f32 %v3199, %v3199
        %v3232 = vmul.f32 %v3200, %v3200
        %v3233 = vmul.f32 %v3201, %v3201
        %v3234 = vmul.f32 %v3202, %v3202
        %v3235 = vmul.f32 %v3203, %v3203
        %v3236 = vmul.f32 %v3204, %v3204
        %v3237 = vmul.f32 %v3205, %v3205
        %v3238 = vmul.f32 %v3206, %v3206
        %v3239 = vmul.f32 %v3207, %v3207
        %v3240 = vmul.f32 %v3208, %v3208
        %v3241 = vmul.f32 %v3209, %v3209
        %v3242 = vmul.f32 %v3210, %v3210
        %v3243 = vmul.f32 %v3211, %v3211
        %v3244 = vmul.f32 %v3212, %v3212
        %v3245 = vmul.f32 %v3213, %v3213
        %v3246 = vmul.f32 %v3214, %v3214
        %v3247 = vmul.f32 %v3215, %v3215
        %v3248 = vmul.f32 %v3216, %v3216
        %v3249 = vmul.f32 %v3217, %v3217
        %v3250 = vadd.f32 %v3218, %v3219
        %v3251 = vadd.f32 %v3250, %v3220
        %v3252 = vadd.f32 %v3251, %v3221
        %v3253 = vadd.f32 %v3252, %v3222
        %v3254 = vadd.f32 %v3253, %v3223
        %v3255 = vadd.f32 %v3254, %v3224
        %v3256 = vadd.f32 %v3255, %v3225
        %v3257 = vadd.f32 %v3256, %v3226
        %v3258 = vadd.f32 %v3257, %v3227
        %v3259 = vadd.f32 %v3258, %v3228
        %v3260 = vadd.f32 %v3259, %v3229
        %v3261 = vadd.f32 %v3260, %v3230
        %v3262 = vadd.f32 %v3261, %v3231
        %v3263 = vadd.f32 %v3262, %v3232
        %v3264 = vadd.f32 %v3263, %v3233
        %v3265 = vadd.f32 %v3264, %v3234
        %v3266 = vadd.f32 %v3265, %v3235
        %v3267 = vadd.f32 %v3266, %v3236
        %v3268 = vadd.f32 %v3267, %v3237
        %v3269 = vadd.f32 %v3268, %v3238
        %v3270 = vadd.f32 %v3269, %v3239
        %v3271 = vadd.f32 %v3270, %v3240
        %v3272 = vadd.f32 %v3271, %v3241
        %v3273 = vadd.f32 %v3272, %v3242
        %v3274 = vadd.f32 %v3273, %v3243
        %v3275 = vadd.f32 %v3274, %v3244
        %v3276 = vadd.f32 %v3275, %v3245
        %v3277 = vadd.f32 %v3276, %v3246
        %v3278 = vadd.f32 %v3277, %v3247
        %v3279 = vadd.f32 %v3278, %v3248
        %v3280 = vadd.f32 %v3279, %v3249
        %3281 = vadd.xlane.f32.xlu0 %v3280
        %v3282 = vpop.xlane.xlu0 %3281
        %v3283 = vrot.slane %v3282, 4
        %v3284 = vadd.f32 %v3282, %v3283
        %v3285 = vrot.slane %v3284, 2
        %v3286 = vadd.f32 %v3284, %v3285
        %v3287 = vrot.slane %v3286, 1
        %v3288 = vadd.f32 %v3286, %v3287
        %s3289 = vtos %v3288
        %s3290 = sadd.f32 %s3289, 0.0
        %v3291 = vpack.c.bf16 %v3156, %v3154
        %v3292 = vpack.c.bf16 %v3157, %v3155
        %v3293 = vpack.c.bf16 %v3160, %v3158
        %v3294 = vpack.c.bf16 %v3161, %v3159
        %v3295 = vpack.c.bf16 %v3164, %v3162
        %v3296 = vpack.c.bf16 %v3165, %v3163
        %v3297 = vpack.c.bf16 %v3168, %v3166
        %v3298 = vpack.c.bf16 %v3169, %v3167
        %v3299 = vpack.c.bf16 %v3172, %v3170
        %v3300 = vpack.c.bf16 %v3173, %v3171
        %v3301 = vpack.c.bf16 %v3176, %v3174
        %v3302 = vpack.c.bf16 %v3177, %v3175
        %v3303 = vpack.c.bf16 %v3180, %v3178
        %v3304 = vpack.c.bf16 %v3181, %v3179
        %v3305 = vpack.c.bf16 %v3184, %v3182
        %v3306 = vpack.c.bf16 %v3185, %v3183
        %v3339 = vunpack.c.l.b16 %v2549
        %v3340 = vunpack.c.l.b16 %v2550
        %v3341 = vunpack.c.l.b16 %v2551
        %v3342 = vunpack.c.l.b16 %v2552
        %v3343 = vunpack.c.l.b16 %v2553
        %v3344 = vunpack.c.l.b16 %v2554
        %v3345 = vunpack.c.l.b16 %v2555
        %v3346 = vunpack.c.l.b16 %v2556
        %v3347 = vunpack.c.l.b16 %v2557
        %v3348 = vunpack.c.l.b16 %v2558
        %v3349 = vunpack.c.l.b16 %v2559
        %v3350 = vunpack.c.l.b16 %v2560
        %v3351 = vunpack.c.l.b16 %v2561
        %v3352 = vunpack.c.l.b16 %v2562
        %v3353 = vunpack.c.l.b16 %v2563
        %v3354 = vunpack.c.l.b16 %v2564
        %v3355 = vunpack.c.l.b16 %v2565
        %v3356 = vunpack.c.l.b16 %v2566
        %v3357 = vunpack.c.l.b16 %v2567
        %v3358 = vunpack.c.l.b16 %v2568
        %v3359 = vunpack.c.l.b16 %v2569
        %v3360 = vunpack.c.l.b16 %v2570
        %v3361 = vunpack.c.l.b16 %v2571
        %v3362 = vunpack.c.l.b16 %v2572
        %v3363 = vunpack.c.l.b16 %v2573
        %v3364 = vunpack.c.l.b16 %v2574
        %v3365 = vunpack.c.l.b16 %v2575
        %v3366 = vunpack.c.l.b16 %v2576
        %v3367 = vunpack.c.l.b16 %v2577
        %v3368 = vunpack.c.l.b16 %v2578
        %v3369 = vunpack.c.l.b16 %v2579
        %v3370 = vunpack.c.l.b16 %v2580
        %v3371 = vpack.c.b16 %v3340, %v3339
        %v3372 = vpack.c.b16 %v3342, %v3341
        %v3373 = vpack.c.b16 %v3344, %v3343
        %v3374 = vpack.c.b16 %v3346, %v3345
        %v3375 = vpack.c.b16 %v3348, %v3347
        %v3376 = vpack.c.b16 %v3350, %v3349
        %v3377 = vpack.c.b16 %v3352, %v3351
        %v3378 = vpack.c.b16 %v3354, %v3353
        %v3379 = vpack.c.b16 %v3356, %v3355
        %v3380 = vpack.c.b16 %v3358, %v3357
        %v3381 = vpack.c.b16 %v3360, %v3359
        %v3382 = vpack.c.b16 %v3362, %v3361
        %v3383 = vpack.c.b16 %v3364, %v3363
        %v3384 = vpack.c.b16 %v3366, %v3365
        %v3385 = vpack.c.b16 %v3368, %v3367
        %v3386 = vpack.c.b16 %v3370, %v3369
        %3403 = vmatprep.subr.bf16.mxu0 0
        %3404 = vmatpush1.bf16.msra.mxu0 %v3378
        %3405 = vmatprep.subr.bf16.mxu0 0
        %3406 = vmatpush1.bf16.msra.mxu0 %v3377
        %3407 = vmatprep.subr.bf16.mxu0 0
        %3408 = vmatpush1.bf16.msra.mxu0 %v3376
        %3409 = vmatprep.subr.bf16.mxu0 0
        %3410 = vmatpush1.bf16.msra.mxu0 %v3375
        %3411 = vmatprep.subr.bf16.mxu0 0
        %3412 = vmatpush1.bf16.msra.mxu0 %v3374
        %3413 = vmatprep.subr.bf16.mxu0 0
        %3414 = vmatpush1.bf16.msra.mxu0 %v3373
        %3415 = vmatprep.subr.bf16.mxu0 0
        %3416 = vmatpush1.bf16.msra.mxu0 %v3372
        %3417 = vmatprep.subr.bf16.mxu0 0
        %3418 = vmatpush1.bf16.msra.mxu0 %v3371
        %3419 = vmatprep.subr.bf16.mxu0 0
        %3420 = vmatpush2.bf16.msra.mxu0 %v3386
        %3421 = vmatprep.subr.bf16.mxu0 0
        %3422 = vmatpush2.bf16.msra.mxu0 %v3385
        %3423 = vmatprep.subr.bf16.mxu0 0
        %3424 = vmatpush2.bf16.msra.mxu0 %v3384
        %3425 = vmatprep.subr.bf16.mxu0 0
        %3426 = vmatpush2.bf16.msra.mxu0 %v3383
        %3427 = vmatprep.subr.bf16.mxu0 0
        %3428 = vmatpush2.bf16.msra.mxu0 %v3382
        %3429 = vmatprep.subr.bf16.mxu0 0
        %3430 = vmatpush2.bf16.msra.mxu0 %v3381
        %3431 = vmatprep.subr.bf16.mxu0 0
        %3432 = vmatpush2.bf16.msra.mxu0 %v3380
        %3433 = vmatprep.subr.bf16.mxu0 0
        %3434 = vmatpush2.bf16.msra.mxu0 %v3379
        %3435 = vmatprep.mubr.bf16.mxu0 %v3292
        %3436 = vmatmul.mubr.bf16.gmra.mxu0 %v3291
        %v3437 = vpop.f32.mrf.mxu0
        %v3438 = vadd.f32 0.0, %v3437
        %v3439 = vpop.f32.mrf.mxu0
        %v3440 = vpop.f32.mrf.mxu0
        %v3441 = vadd.f32 0.0, %v3440
        %v3442 = vpop.f32.mrf.mxu0
        %3443 = vmatprep.mubr.bf16.mxu0 %v3294
        %3444 = vmatmul.mubr.bf16.gmra.mxu0 %v3293
        %v3445 = vpop.f32.mrf.mxu0
        %v3446 = vadd.f32 0.0, %v3445
        %v3447 = vpop.f32.mrf.mxu0
        %v3448 = vpop.f32.mrf.mxu0
        %v3449 = vadd.f32 0.0, %v3448
        %v3450 = vpop.f32.mrf.mxu0
        %3451 = vmatprep.mubr.bf16.mxu0 %v3296
        %3452 = vmatmul.mubr.bf16.gmra.mxu0 %v3295
        %v3453 = vpop.f32.mrf.mxu0
        %v3454 = vadd.f32 0.0, %v3453
        %v3455 = vpop.f32.mrf.mxu0
        %v3456 = vpop.f32.mrf.mxu0
        %v3457 = vadd.f32 0.0, %v3456
        %v3458 = vpop.f32.mrf.mxu0
        %3459 = vmatprep.mubr.bf16.mxu0 %v3298
        %3460 = vmatmul.mubr.bf16.gmra.mxu0 %v3297
        %v3461 = vpop.f32.mrf.mxu0
        %v3462 = vadd.f32 0.0, %v3461
        %v3463 = vpop.f32.mrf.mxu0
        %v3464 = vpop.f32.mrf.mxu0
        %v3465 = vadd.f32 0.0, %v3464
        %v3466 = vpop.f32.mrf.mxu0
        %3467 = vmatprep.mubr.bf16.mxu0 %v3300
        %3468 = vmatmul.mubr.bf16.gmra.mxu0 %v3299
        %v3469 = vpop.f32.mrf.mxu0
        %v3470 = vadd.f32 0.0, %v3469
        %v3471 = vpop.f32.mrf.mxu0
        %v3472 = vpop.f32.mrf.mxu0
        %v3473 = vadd.f32 0.0, %v3472
        %v3474 = vpop.f32.mrf.mxu0
        %3475 = vmatprep.mubr.bf16.mxu0 %v3302
        %3476 = vmatmul.mubr.bf16.gmra.mxu0 %v3301
        %v3477 = vpop.f32.mrf.mxu0
        %v3478 = vadd.f32 0.0, %v3477
        %v3479 = vpop.f32.mrf.mxu0
        %v3480 = vpop.f32.mrf.mxu0
        %v3481 = vadd.f32 0.0, %v3480
        %v3482 = vpop.f32.mrf.mxu0
        %3483 = vmatprep.mubr.bf16.mxu0 %v3304
        %3484 = vmatmul.mubr.bf16.gmra.mxu0 %v3303
        %v3485 = vpop.f32.mrf.mxu0
        %v3486 = vadd.f32 0.0, %v3485
        %v3487 = vpop.f32.mrf.mxu0
        %v3488 = vpop.f32.mrf.mxu0
        %v3489 = vadd.f32 0.0, %v3488
        %v3490 = vpop.f32.mrf.mxu0
        %3491 = vmatprep.mubr.bf16.mxu0 %v3306
        %3492 = vmatmul.mubr.bf16.gmra.mxu0 %v3305
        %v3493 = vpop.f32.mrf.mxu0
        %v3494 = vadd.f32 0.0, %v3493
        %v3495 = vpop.f32.mrf.mxu0
        %v3496 = vpop.f32.mrf.mxu0
        %v3497 = vadd.f32 0.0, %v3496
        %v3498 = vpop.f32.mrf.mxu0
        %3499 = vdwg.mxu0
        %v3500 = vpack.c.bf16 %v3441, %v3438
        %v3501 = vpack.c.bf16 %v3449, %v3446
        %v3502 = vpack.c.bf16 %v3457, %v3454
        %v3503 = vpack.c.bf16 %v3465, %v3462
        %v3504 = vpack.c.bf16 %v3473, %v3470
        %v3505 = vpack.c.bf16 %v3481, %v3478
        %v3506 = vpack.c.bf16 %v3489, %v3486
        %v3507 = vpack.c.bf16 %v3497, %v3494
        %v3508 = vld [vmem:[#allocation14] sm:$0xf]
        %v3509 = vld [vmem:[#allocation14 + $0x4] sm:$0xf]
        %v3510 = vld [vmem:[#allocation14 + $0x8] sm:$0xf]
        %v3511 = vld [vmem:[#allocation14 + $0xc] sm:$0xf]
        %3512 = vrot.lane.b32.xlu0 %v2613, 96
        %v3513 = vpop.permute.xlu0 %3512
        %3514 = vrot.lane.b32.xlu0 %v2614, 96
        %v3515 = vpop.permute.xlu0 %3514
        %3516 = vrot.lane.b32.xlu0 %v2615, 96
        %v3517 = vpop.permute.xlu0 %3516
        %3518 = vrot.lane.b32.xlu0 %v2616, 96
        %v3519 = vpop.permute.xlu0 %3518
        %3520 = vrot.lane.b32.xlu0 %v2617, 96
        %v3521 = vpop.permute.xlu0 %3520
        %3522 = vrot.lane.b32.xlu0 %v2618, 96
        %v3523 = vpop.permute.xlu0 %3522
        %3524 = vrot.lane.b32.xlu0 %v2619, 96
        %v3525 = vpop.permute.xlu0 %3524
        %3526 = vrot.lane.b32.xlu0 %v2620, 96
        %v3527 = vpop.permute.xlu0 %3526
        %3528 = vrot.lane.b32.xlu0 %v2685, 96
        %v3529 = vpop.permute.xlu0 %3528
        %3530 = vrot.lane.b32.xlu0 %v2686, 96
        %v3531 = vpop.permute.xlu0 %3530
        %3532 = vrot.lane.b32.xlu0 %v2687, 96
        %v3533 = vpop.permute.xlu0 %3532
        %3534 = vrot.lane.b32.xlu0 %v2688, 96
        %v3535 = vpop.permute.xlu0 %3534
        %3536 = vrot.lane.b32.xlu0 %v2689, 96
        %v3537 = vpop.permute.xlu0 %3536
        %3538 = vrot.lane.b32.xlu0 %v2690, 96
        %v3539 = vpop.permute.xlu0 %3538
        %3540 = vrot.lane.b32.xlu0 %v2691, 96
        %v3541 = vpop.permute.xlu0 %3540
        %3542 = vrot.lane.b32.xlu0 %v2692, 96
        %v3543 = vpop.permute.xlu0 %3542
        %3544 = vrot.lane.b32.xlu0 %v2693, 96
        %v3545 = vpop.permute.xlu0 %3544
        %3546 = vrot.lane.b32.xlu0 %v2694, 96
        %v3547 = vpop.permute.xlu0 %3546
        %3548 = vrot.lane.b32.xlu0 %v2695, 96
        %v3549 = vpop.permute.xlu0 %3548
        %3550 = vrot.lane.b32.xlu0 %v2696, 96
        %v3551 = vpop.permute.xlu0 %3550
        %3552 = vrot.lane.b32.xlu0 %v2697, 96
        %v3553 = vpop.permute.xlu0 %3552
        %3554 = vrot.lane.b32.xlu0 %v2698, 96
        %v3555 = vpop.permute.xlu0 %3554
        %3556 = vrot.lane.b32.xlu0 %v2699, 96
        %v3557 = vpop.permute.xlu0 %3556
        %3558 = vrot.lane.b32.xlu0 %v2700, 96
        %v3559 = vpop.permute.xlu0 %3558
        %v3561 = vsel %vm2701, %v3513, 0
        %v3564 = vsel %vm2701, %v3515, 0
        %v3567 = vsel %vm2701, %v3517, 0
        %v3570 = vsel %vm2701, %v3519, 0
        %v3573 = vsel %vm2701, %v3521, 0
        %v3576 = vsel %vm2701, %v3523, 0
        %v3579 = vsel %vm2701, %v3525, 0
        %v3582 = vsel %vm2701, %v3527, 0
        %v3585 = vsel %vm2701, %v3529, 0
        %v3588 = vsel %vm2701, %v3531, 0
        %v3591 = vsel %vm2701, %v3533, 0
        %v3594 = vsel %vm2701, %v3535, 0
        %v3597 = vsel %vm2701, %v3537, 0
        %v3600 = vsel %vm2701, %v3539, 0
        %v3603 = vsel %vm2701, %v3541, 0
        %v3606 = vsel %vm2701, %v3543, 0
        %v3609 = vsel %vm2701, %v3545, 0
        %v3612 = vsel %vm2701, %v3547, 0
        %v3615 = vsel %vm2701, %v3549, 0
        %v3618 = vsel %vm2701, %v3551, 0
        %v3621 = vsel %vm2701, %v3553, 0
        %v3624 = vsel %vm2701, %v3555, 0
        %v3627 = vsel %vm2701, %v3557, 0
        %v3630 = vsel %vm2701, %v3559, 0
        %3632 = vmatprep.subr.bf16.mxu0 0
        %3633 = vmatpush1.bf16.xpose.msra.mxu0 %v3606
        %3634 = vmatprep.subr.bf16.mxu0 0
        %3635 = vmatpush1.bf16.xpose.msra.mxu0 %v3603
        %3636 = vmatprep.subr.bf16.mxu0 0
        %3637 = vmatpush1.bf16.xpose.msra.mxu0 %v3600
        %3638 = vmatprep.subr.bf16.mxu0 0
        %3639 = vmatpush1.bf16.xpose.msra.mxu0 %v3597
        %3640 = vmatprep.subr.bf16.mxu0 0
        %3641 = vmatpush1.bf16.xpose.msra.mxu0 %v3594
        %3642 = vmatprep.subr.bf16.mxu0 0
        %3643 = vmatpush1.bf16.xpose.msra.mxu0 %v3591
        %3644 = vmatprep.subr.bf16.mxu0 0
        %3645 = vmatpush1.bf16.xpose.msra.mxu0 %v3588
        %3646 = vmatprep.subr.bf16.mxu0 0
        %3647 = vmatpush1.bf16.xpose.msra.mxu0 %v3585
        %3648 = vmatprep.subr.bf16.mxu0 0
        %3649 = vmatpush2.bf16.xpose.msra.mxu0 %v3630
        %3650 = vmatprep.subr.bf16.mxu0 0
        %3651 = vmatpush2.bf16.xpose.msra.mxu0 %v3627
        %3652 = vmatprep.subr.bf16.mxu0 0
        %3653 = vmatpush2.bf16.xpose.msra.mxu0 %v3624
        %3654 = vmatprep.subr.bf16.mxu0 0
        %3655 = vmatpush2.bf16.xpose.msra.mxu0 %v3621
        %3656 = vmatprep.subr.bf16.mxu0 0
        %3657 = vmatpush2.bf16.xpose.msra.mxu0 %v3618
        %3658 = vmatprep.subr.bf16.mxu0 0
        %3659 = vmatpush2.bf16.xpose.msra.mxu0 %v3615
        %3660 = vmatprep.subr.bf16.mxu0 0
        %3661 = vmatpush2.bf16.xpose.msra.mxu0 %v3612
        %3662 = vmatprep.subr.bf16.mxu0 0
        %3663 = vmatpush2.bf16.xpose.msra.mxu0 %v3609
        %3664 = vmatprep.mubr.bf16.mxu0 0
        %3665 = vmatmul.mubr.bf16.gmra.mxu0 %v3561
        %v3666 = vpop.f32.mrf.mxu0
        %v3667 = vadd.f32 %v2463, %v3666
        %v3668 = vpop.f32.mrf.mxu0
        %v3669 = vadd.f32 %v2464, %v3668
        %v3670 = vpop.f32.mrf.mxu0
        %v3671 = vadd.f32 %v2465, %v3670
        %v3672 = vpop.f32.mrf.mxu0
        %v3673 = vadd.f32 %v2466, %v3672
        %3674 = vmatprep.mubr.bf16.mxu0 0
        %3675 = vmatmul.mubr.bf16.gmra.mxu0 %v3564
        %v3676 = vpop.f32.mrf.mxu0
        %v3677 = vadd.f32 %v2467, %v3676
        %v3678 = vpop.f32.mrf.mxu0
        %v3679 = vadd.f32 %v2468, %v3678
        %v3680 = vpop.f32.mrf.mxu0
        %v3681 = vadd.f32 %v2469, %v3680
        %v3682 = vpop.f32.mrf.mxu0
        %v3683 = vadd.f32 %v2470, %v3682
        %3684 = vmatprep.mubr.bf16.mxu0 0
        %3685 = vmatmul.mubr.bf16.gmra.mxu0 %v3567
        %v3686 = vpop.f32.mrf.mxu0
        %v3687 = vadd.f32 %v2471, %v3686
        %v3688 = vpop.f32.mrf.mxu0
        %v3689 = vadd.f32 %v2472, %v3688
        %v3690 = vpop.f32.mrf.mxu0
        %v3691 = vadd.f32 %v2473, %v3690
        %v3692 = vpop.f32.mrf.mxu0
        %v3693 = vadd.f32 %v2474, %v3692
        %3694 = vmatprep.mubr.bf16.mxu0 0
        %3695 = vmatmul.mubr.bf16.gmra.mxu0 %v3570
        %v3696 = vpop.f32.mrf.mxu0
        %v3697 = vadd.f32 %v2475, %v3696
        %v3698 = vpop.f32.mrf.mxu0
        %v3699 = vadd.f32 %v2476, %v3698
        %v3700 = vpop.f32.mrf.mxu0
        %v3701 = vadd.f32 %v2477, %v3700
        %v3702 = vpop.f32.mrf.mxu0
        %v3703 = vadd.f32 %v2478, %v3702
        %3704 = vmatprep.mubr.bf16.mxu0 0
        %3705 = vmatmul.mubr.bf16.gmra.mxu0 %v3573
        %v3706 = vpop.f32.mrf.mxu0
        %v3707 = vadd.f32 %v2479, %v3706
        %v3708 = vpop.f32.mrf.mxu0
        %v3709 = vadd.f32 %v2480, %v3708
        %v3710 = vpop.f32.mrf.mxu0
        %v3711 = vadd.f32 %v2481, %v3710
        %v3712 = vpop.f32.mrf.mxu0
        %v3713 = vadd.f32 %v2482, %v3712
        %3714 = vmatprep.mubr.bf16.mxu0 0
        %3715 = vmatmul.mubr.bf16.gmra.mxu0 %v3576
        %v3716 = vpop.f32.mrf.mxu0
        %v3717 = vadd.f32 %v2483, %v3716
        %v3718 = vpop.f32.mrf.mxu0
        %v3719 = vadd.f32 %v2484, %v3718
        %v3720 = vpop.f32.mrf.mxu0
        %v3721 = vadd.f32 %v2485, %v3720
        %v3722 = vpop.f32.mrf.mxu0
        %v3723 = vadd.f32 %v2486, %v3722
        %3724 = vmatprep.mubr.bf16.mxu0 0
        %3725 = vmatmul.mubr.bf16.gmra.mxu0 %v3579
        %v3726 = vpop.f32.mrf.mxu0
        %v3727 = vadd.f32 %v2487, %v3726
        %v3728 = vpop.f32.mrf.mxu0
        %v3729 = vadd.f32 %v2488, %v3728
        %v3730 = vpop.f32.mrf.mxu0
        %v3731 = vadd.f32 %v2489, %v3730
        %v3732 = vpop.f32.mrf.mxu0
        %v3733 = vadd.f32 %v2490, %v3732
        %3734 = vmatprep.mubr.bf16.mxu0 0
        %3735 = vmatmul.mubr.bf16.gmra.mxu0 %v3582
        %v3736 = vpop.f32.mrf.mxu0
        %v3737 = vadd.f32 %v2491, %v3736
        %v3738 = vpop.f32.mrf.mxu0
        %v3739 = vadd.f32 %v2492, %v3738
        %v3740 = vpop.f32.mrf.mxu0
        %v3741 = vadd.f32 %v2493, %v3740
        %v3742 = vpop.f32.mrf.mxu0
        %v3743 = vadd.f32 %v2494, %v3742
        %3744 = vdwg.mxu0
        %v3745 = vsel %vm2896, %v3667, -1e+09
        %v3746 = vsel %vm2897, %v3669, -1e+09
        %v3747 = vsel %vm2896, %v3671, -1e+09
        %v3748 = vsel %vm2897, %v3673, -1e+09
        %v3749 = vsel %vm2896, %v3677, -1e+09
        %v3750 = vsel %vm2897, %v3679, -1e+09
        %v3751 = vsel %vm2896, %v3681, -1e+09
        %v3752 = vsel %vm2897, %v3683, -1e+09
        %v3753 = vsel %vm2896, %v3687, -1e+09
        %v3754 = vsel %vm2897, %v3689, -1e+09
        %v3755 = vsel %vm2896, %v3691, -1e+09
        %v3756 = vsel %vm2897, %v3693, -1e+09
        %v3757 = vsel %vm2896, %v3697, -1e+09
        %v3758 = vsel %vm2897, %v3699, -1e+09
        %v3759 = vsel %vm2896, %v3701, -1e+09
        %v3760 = vsel %vm2897, %v3703, -1e+09
        %v3761 = vsel %vm2896, %v3707, -1e+09
        %v3762 = vsel %vm2897, %v3709, -1e+09
        %v3763 = vsel %vm2896, %v3711, -1e+09
        %v3764 = vsel %vm2897, %v3713, -1e+09
        %v3765 = vsel %vm2896, %v3717, -1e+09
        %v3766 = vsel %vm2897, %v3719, -1e+09
        %v3767 = vsel %vm2896, %v3721, -1e+09
        %v3768 = vsel %vm2897, %v3723, -1e+09
        %v3769 = vsel %vm2896, %v3727, -1e+09
        %v3770 = vsel %vm2897, %v3729, -1e+09
        %v3771 = vsel %vm2896, %v3731, -1e+09
        %v3772 = vsel %vm2897, %v3733, -1e+09
        %v3773 = vsel %vm2896, %v3737, -1e+09
        %v3774 = vsel %vm2897, %v3739, -1e+09
        %v3775 = vsel %vm2896, %v3741, -1e+09
        %v3776 = vsel %vm2897, %v3743, -1e+09
        %v3777 = vmax.f32 %v3745, %v3746
        %3778 = vmax.xlane.f32.xlu0 %v3777
        %v3779 = vpop.xlane.xlu0 %3778
        %v3780 = vmax.f32 %v3747, %v3748
        %3781 = vmax.xlane.f32.xlu0 %v3780
        %v3782 = vpop.xlane.xlu0 %3781
        %v3783 = vmax.f32 %v3749, %v3750
        %3784 = vmax.xlane.f32.xlu0 %v3783
        %v3785 = vpop.xlane.xlu0 %3784
        %v3786 = vmax.f32 %v3751, %v3752
        %3787 = vmax.xlane.f32.xlu0 %v3786
        %v3788 = vpop.xlane.xlu0 %3787
        %v3789 = vmax.f32 %v3753, %v3754
        %3790 = vmax.xlane.f32.xlu0 %v3789
        %v3791 = vpop.xlane.xlu0 %3790
        %v3792 = vmax.f32 %v3755, %v3756
        %3793 = vmax.xlane.f32.xlu0 %v3792
        %v3794 = vpop.xlane.xlu0 %3793
        %v3795 = vmax.f32 %v3757, %v3758
        %3796 = vmax.xlane.f32.xlu0 %v3795
        %v3797 = vpop.xlane.xlu0 %3796
        %v3798 = vmax.f32 %v3759, %v3760
        %3799 = vmax.xlane.f32.xlu0 %v3798
        %v3800 = vpop.xlane.xlu0 %3799
        %v3801 = vmax.f32 %v3761, %v3762
        %3802 = vmax.xlane.f32.xlu0 %v3801
        %v3803 = vpop.xlane.xlu0 %3802
        %v3804 = vmax.f32 %v3763, %v3764
        %3805 = vmax.xlane.f32.xlu0 %v3804
        %v3806 = vpop.xlane.xlu0 %3805
        %v3807 = vmax.f32 %v3765, %v3766
        %3808 = vmax.xlane.f32.xlu0 %v3807
        %v3809 = vpop.xlane.xlu0 %3808
        %v3810 = vmax.f32 %v3767, %v3768
        %3811 = vmax.xlane.f32.xlu0 %v3810
        %v3812 = vpop.xlane.xlu0 %3811
        %v3813 = vmax.f32 %v3769, %v3770
        %3814 = vmax.xlane.f32.xlu0 %v3813
        %v3815 = vpop.xlane.xlu0 %3814
        %v3816 = vmax.f32 %v3771, %v3772
        %3817 = vmax.xlane.f32.xlu0 %v3816
        %v3818 = vpop.xlane.xlu0 %3817
        %v3819 = vmax.f32 %v3773, %v3774
        %3820 = vmax.xlane.f32.xlu0 %v3819
        %v3821 = vpop.xlane.xlu0 %3820
        %v3822 = vmax.f32 %v3775, %v3776
        %3823 = vmax.xlane.f32.xlu0 %v3822
        %v3824 = vpop.xlane.xlu0 %3823
        %v3825 = vsub.f32 %v3745, %v3779
        %v3826 = vsub.f32 %v3746, %v3779
        %v3827 = vsub.f32 %v3747, %v3782
        %v3828 = vsub.f32 %v3748, %v3782
        %v3829 = vsub.f32 %v3749, %v3785
        %v3830 = vsub.f32 %v3750, %v3785
        %v3831 = vsub.f32 %v3751, %v3788
        %v3832 = vsub.f32 %v3752, %v3788
        %v3833 = vsub.f32 %v3753, %v3791
        %v3834 = vsub.f32 %v3754, %v3791
        %v3835 = vsub.f32 %v3755, %v3794
        %v3836 = vsub.f32 %v3756, %v3794
        %v3837 = vsub.f32 %v3757, %v3797
        %v3838 = vsub.f32 %v3758, %v3797
        %v3839 = vsub.f32 %v3759, %v3800
        %v3840 = vsub.f32 %v3760, %v3800
        %v3841 = vsub.f32 %v3761, %v3803
        %v3842 = vsub.f32 %v3762, %v3803
        %v3843 = vsub.f32 %v3763, %v3806
        %v3844 = vsub.f32 %v3764, %v3806
        %v3845 = vsub.f32 %v3765, %v3809
        %v3846 = vsub.f32 %v3766, %v3809
        %v3847 = vsub.f32 %v3767, %v3812
        %v3848 = vsub.f32 %v3768, %v3812
        %v3849 = vsub.f32 %v3769, %v3815
        %v3850 = vsub.f32 %v3770, %v3815
        %v3851 = vsub.f32 %v3771, %v3818
        %v3852 = vsub.f32 %v3772, %v3818
        %v3853 = vsub.f32 %v3773, %v3821
        %v3854 = vsub.f32 %v3774, %v3821
        %v3855 = vsub.f32 %v3775, %v3824
        %v3856 = vsub.f32 %v3776, %v3824
        %v3857 = vmul.f32 %v3825, 1.442695
        %v3858 = vpow.pop %v3857
        %v3859 = vmul.f32 %v3826, 1.442695
        %v3860 = vpow.pop %v3859
        %v3861 = vmul.f32 %v3827, 1.442695
        %v3862 = vpow.pop %v3861
        %v3863 = vmul.f32 %v3828, 1.442695
        %v3864 = vpow.pop %v3863
        %v3865 = vmul.f32 %v3829, 1.442695
        %v3866 = vpow.pop %v3865
        %v3867 = vmul.f32 %v3830, 1.442695
        %v3868 = vpow.pop %v3867
        %v3869 = vmul.f32 %v3831, 1.442695
        %v3870 = vpow.pop %v3869
        %v3871 = vmul.f32 %v3832, 1.442695
        %v3872 = vpow.pop %v3871
        %v3873 = vmul.f32 %v3833, 1.442695
        %v3874 = vpow.pop %v3873
        %v3875 = vmul.f32 %v3834, 1.442695
        %v3876 = vpow.pop %v3875
        %v3877 = vmul.f32 %v3835, 1.442695
        %v3878 = vpow.pop %v3877
        %v3879 = vmul.f32 %v3836, 1.442695
        %v3880 = vpow.pop %v3879
        %v3881 = vmul.f32 %v3837, 1.442695
        %v3882 = vpow.pop %v3881
        %v3883 = vmul.f32 %v3838, 1.442695
        %v3884 = vpow.pop %v3883
        %v3885 = vmul.f32 %v3839, 1.442695
        %v3886 = vpow.pop %v3885
        %v3887 = vmul.f32 %v3840, 1.442695
        %v3888 = vpow.pop %v3887
        %v3889 = vmul.f32 %v3841, 1.442695
        %v3890 = vpow.pop %v3889
        %v3891 = vmul.f32 %v3842, 1.442695
        %v3892 = vpow.pop %v3891
        %v3893 = vmul.f32 %v3843, 1.442695
        %v3894 = vpow.pop %v3893
        %v3895 = vmul.f32 %v3844, 1.442695
        %v3896 = vpow.pop %v3895
        %v3897 = vmul.f32 %v3845, 1.442695
        %v3898 = vpow.pop %v3897
        %v3899 = vmul.f32 %v3846, 1.442695
        %v3900 = vpow.pop %v3899
        %v3901 = vmul.f32 %v3847, 1.442695
        %v3902 = vpow.pop %v3901
        %v3903 = vmul.f32 %v3848, 1.442695
        %v3904 = vpow.pop %v3903
        %v3905 = vmul.f32 %v3849, 1.442695
        %v3906 = vpow.pop %v3905
        %v3907 = vmul.f32 %v3850, 1.442695
        %v3908 = vpow.pop %v3907
        %v3909 = vmul.f32 %v3851, 1.442695
        %v3910 = vpow.pop %v3909
        %v3911 = vmul.f32 %v3852, 1.442695
        %v3912 = vpow.pop %v3911
        %v3913 = vmul.f32 %v3853, 1.442695
        %v3914 = vpow.pop %v3913
        %v3915 = vmul.f32 %v3854, 1.442695
        %v3916 = vpow.pop %v3915
        %v3917 = vmul.f32 %v3855, 1.442695
        %v3918 = vpow.pop %v3917
        %v3919 = vmul.f32 %v3856, 1.442695
        %v3920 = vpow.pop %v3919
        %v3921 = vadd.f32 %v3858, %v3860
        %3922 = vadd.xlane.f32.xlu0 %v3921
        %v3923 = vpop.xlane.xlu0 %3922
        %v3924 = vadd.f32 %v3862, %v3864
        %3925 = vadd.xlane.f32.xlu0 %v3924
        %v3926 = vpop.xlane.xlu0 %3925
        %v3927 = vadd.f32 %v3866, %v3868
        %3928 = vadd.xlane.f32.xlu0 %v3927
        %v3929 = vpop.xlane.xlu0 %3928
        %v3930 = vadd.f32 %v3870, %v3872
        %3931 = vadd.xlane.f32.xlu0 %v3930
        %v3932 = vpop.xlane.xlu0 %3931
        %v3933 = vadd.f32 %v3874, %v3876
        %3934 = vadd.xlane.f32.xlu0 %v3933
        %v3935 = vpop.xlane.xlu0 %3934
        %v3936 = vadd.f32 %v3878, %v3880
        %3937 = vadd.xlane.f32.xlu0 %v3936
        %v3938 = vpop.xlane.xlu0 %3937
        %v3939 = vadd.f32 %v3882, %v3884
        %3940 = vadd.xlane.f32.xlu0 %v3939
        %v3941 = vpop.xlane.xlu0 %3940
        %v3942 = vadd.f32 %v3886, %v3888
        %3943 = vadd.xlane.f32.xlu0 %v3942
        %v3944 = vpop.xlane.xlu0 %3943
        %v3945 = vadd.f32 %v3890, %v3892
        %3946 = vadd.xlane.f32.xlu0 %v3945
        %v3947 = vpop.xlane.xlu0 %3946
        %v3948 = vadd.f32 %v3894, %v3896
        %3949 = vadd.xlane.f32.xlu0 %v3948
        %v3950 = vpop.xlane.xlu0 %3949
        %v3951 = vadd.f32 %v3898, %v3900
        %3952 = vadd.xlane.f32.xlu0 %v3951
        %v3953 = vpop.xlane.xlu0 %3952
        %v3954 = vadd.f32 %v3902, %v3904
        %3955 = vadd.xlane.f32.xlu0 %v3954
        %v3956 = vpop.xlane.xlu0 %3955
        %v3957 = vadd.f32 %v3906, %v3908
        %3958 = vadd.xlane.f32.xlu0 %v3957
        %v3959 = vpop.xlane.xlu0 %3958
        %v3960 = vadd.f32 %v3910, %v3912
        %3961 = vadd.xlane.f32.xlu0 %v3960
        %v3962 = vpop.xlane.xlu0 %3961
        %v3963 = vadd.f32 %v3914, %v3916
        %3964 = vadd.xlane.f32.xlu0 %v3963
        %v3965 = vpop.xlane.xlu0 %3964
        %v3966 = vadd.f32 %v3918, %v3920
        %3967 = vadd.xlane.f32.xlu0 %v3966
        %v3968 = vpop.xlane.xlu0 %3967
        %v3969 = vrcp.pop %v3923
        %v3970 = vmul.f32 1.0, %v3969
        %v3971 = vrcp.pop %v3926
        %v3972 = vmul.f32 1.0, %v3971
        %v3973 = vrcp.pop %v3929
        %v3974 = vmul.f32 1.0, %v3973
        %v3975 = vrcp.pop %v3932
        %v3976 = vmul.f32 1.0, %v3975
        %v3977 = vrcp.pop %v3935
        %v3978 = vmul.f32 1.0, %v3977
        %v3979 = vrcp.pop %v3938
        %v3980 = vmul.f32 1.0, %v3979
        %v3981 = vrcp.pop %v3941
        %v3982 = vmul.f32 1.0, %v3981
        %v3983 = vrcp.pop %v3944
        %v3984 = vmul.f32 1.0, %v3983
        %v3985 = vrcp.pop %v3947
        %v3986 = vmul.f32 1.0, %v3985
        %v3987 = vrcp.pop %v3950
        %v3988 = vmul.f32 1.0, %v3987
        %v3989 = vrcp.pop %v3953
        %v3990 = vmul.f32 1.0, %v3989
        %v3991 = vrcp.pop %v3956
        %v3992 = vmul.f32 1.0, %v3991
        %v3993 = vrcp.pop %v3959
        %v3994 = vmul.f32 1.0, %v3993
        %v3995 = vrcp.pop %v3962
        %v3996 = vmul.f32 1.0, %v3995
        %v3997 = vrcp.pop %v3965
        %v3998 = vmul.f32 1.0, %v3997
        %v3999 = vrcp.pop %v3968
        %v4000 = vmul.f32 1.0, %v3999
        %v4001 = vmul.f32 %v3858, %v3970
        %v4002 = vmul.f32 %v3860, %v3970
        %v4003 = vmul.f32 %v3862, %v3972
        %v4004 = vmul.f32 %v3864, %v3972
        %v4005 = vmul.f32 %v3866, %v3974
        %v4006 = vmul.f32 %v3868, %v3974
        %v4007 = vmul.f32 %v3870, %v3976
        %v4008 = vmul.f32 %v3872, %v3976
        %v4009 = vmul.f32 %v3874, %v3978
        %v4010 = vmul.f32 %v3876, %v3978
        %v4011 = vmul.f32 %v3878, %v3980
        %v4012 = vmul.f32 %v3880, %v3980
        %v4013 = vmul.f32 %v3882, %v3982
        %v4014 = vmul.f32 %v3884, %v3982
        %v4015 = vmul.f32 %v3886, %v3984
        %v4016 = vmul.f32 %v3888, %v3984
        %v4017 = vmul.f32 %v3890, %v3986
        %v4018 = vmul.f32 %v3892, %v3986
        %v4019 = vmul.f32 %v3894, %v3988
        %v4020 = vmul.f32 %v3896, %v3988
        %v4021 = vmul.f32 %v3898, %v3990
        %v4022 = vmul.f32 %v3900, %v3990
        %v4023 = vmul.f32 %v3902, %v3992
        %v4024 = vmul.f32 %v3904, %v3992
        %v4025 = vmul.f32 %v3906, %v3994
        %v4026 = vmul.f32 %v3908, %v3994
        %v4027 = vmul.f32 %v3910, %v3996
        %v4028 = vmul.f32 %v3912, %v3996
        %v4029 = vmul.f32 %v3914, %v3998
        %v4030 = vmul.f32 %v3916, %v3998
        %v4031 = vmul.f32 %v3918, %v4000
        %v4032 = vmul.f32 %v3920, %v4000
        %v4033 = vsub.f32 %v4001, %v2463
        %v4034 = vsub.f32 %v4002, %v2464
        %v4035 = vsub.f32 %v4003, %v2465
        %v4036 = vsub.f32 %v4004, %v2466
        %v4037 = vsub.f32 %v4005, %v2467
        %v4038 = vsub.f32 %v4006, %v2468
        %v4039 = vsub.f32 %v4007, %v2469
        %v4040 = vsub.f32 %v4008, %v2470
        %v4041 = vsub.f32 %v4009, %v2471
        %v4042 = vsub.f32 %v4010, %v2472
        %v4043 = vsub.f32 %v4011, %v2473
        %v4044 = vsub.f32 %v4012, %v2474
        %v4045 = vsub.f32 %v4013, %v2475
        %v4046 = vsub.f32 %v4014, %v2476
        %v4047 = vsub.f32 %v4015, %v2477
        %v4048 = vsub.f32 %v4016, %v2478
        %v4049 = vsub.f32 %v4017, %v2479
        %v4050 = vsub.f32 %v4018, %v2480
        %v4051 = vsub.f32 %v4019, %v2481
        %v4052 = vsub.f32 %v4020, %v2482
        %v4053 = vsub.f32 %v4021, %v2483
        %v4054 = vsub.f32 %v4022, %v2484
        %v4055 = vsub.f32 %v4023, %v2485
        %v4056 = vsub.f32 %v4024, %v2486
        %v4057 = vsub.f32 %v4025, %v2487
        %v4058 = vsub.f32 %v4026, %v2488
        %v4059 = vsub.f32 %v4027, %v2489
        %v4060 = vsub.f32 %v4028, %v2490
        %v4061 = vsub.f32 %v4029, %v2491
        %v4062 = vsub.f32 %v4030, %v2492
        %v4063 = vsub.f32 %v4031, %v2493
        %v4064 = vsub.f32 %v4032, %v2494
        %v4065 = vmul.f32 %v4033, %v4033
        %v4066 = vmul.f32 %v4034, %v4034
        %v4067 = vmul.f32 %v4035, %v4035
        %v4068 = vmul.f32 %v4036, %v4036
        %v4069 = vmul.f32 %v4037, %v4037
        %v4070 = vmul.f32 %v4038, %v4038
        %v4071 = vmul.f32 %v4039, %v4039
        %v4072 = vmul.f32 %v4040, %v4040
        %v4073 = vmul.f32 %v4041, %v4041
        %v4074 = vmul.f32 %v4042, %v4042
        %v4075 = vmul.f32 %v4043, %v4043
        %v4076 = vmul.f32 %v4044, %v4044
        %v4077 = vmul.f32 %v4045, %v4045
        %v4078 = vmul.f32 %v4046, %v4046
        %v4079 = vmul.f32 %v4047, %v4047
        %v4080 = vmul.f32 %v4048, %v4048
        %v4081 = vmul.f32 %v4049, %v4049
        %v4082 = vmul.f32 %v4050, %v4050
        %v4083 = vmul.f32 %v4051, %v4051
        %v4084 = vmul.f32 %v4052, %v4052
        %v4085 = vmul.f32 %v4053, %v4053
        %v4086 = vmul.f32 %v4054, %v4054
        %v4087 = vmul.f32 %v4055, %v4055
        %v4088 = vmul.f32 %v4056, %v4056
        %v4089 = vmul.f32 %v4057, %v4057
        %v4090 = vmul.f32 %v4058, %v4058
        %v4091 = vmul.f32 %v4059, %v4059
        %v4092 = vmul.f32 %v4060, %v4060
        %v4093 = vmul.f32 %v4061, %v4061
        %v4094 = vmul.f32 %v4062, %v4062
        %v4095 = vmul.f32 %v4063, %v4063
        %v4096 = vmul.f32 %v4064, %v4064
        %v4097 = vadd.f32 %v4065, %v4066
        %v4098 = vadd.f32 %v4097, %v4067
        %v4099 = vadd.f32 %v4098, %v4068
        %v4100 = vadd.f32 %v4099, %v4069
        %v4101 = vadd.f32 %v4100, %v4070
        %v4102 = vadd.f32 %v4101, %v4071
        %v4103 = vadd.f32 %v4102, %v4072
        %v4104 = vadd.f32 %v4103, %v4073
        %v4105 = vadd.f32 %v4104, %v4074
        %v4106 = vadd.f32 %v4105, %v4075
        %v4107 = vadd.f32 %v4106, %v4076
        %v4108 = vadd.f32 %v4107, %v4077
        %v4109 = vadd.f32 %v4108, %v4078
        %v4110 = vadd.f32 %v4109, %v4079
        %v4111 = vadd.f32 %v4110, %v4080
        %v4112 = vadd.f32 %v4111, %v4081
        %v4113 = vadd.f32 %v4112, %v4082
        %v4114 = vadd.f32 %v4113, %v4083
        %v4115 = vadd.f32 %v4114, %v4084
        %v4116 = vadd.f32 %v4115, %v4085
        %v4117 = vadd.f32 %v4116, %v4086
        %v4118 = vadd.f32 %v4117, %v4087
        %v4119 = vadd.f32 %v4118, %v4088
        %v4120 = vadd.f32 %v4119, %v4089
        %v4121 = vadd.f32 %v4120, %v4090
        %v4122 = vadd.f32 %v4121, %v4091
        %v4123 = vadd.f32 %v4122, %v4092
        %v4124 = vadd.f32 %v4123, %v4093
        %v4125 = vadd.f32 %v4124, %v4094
        %v4126 = vadd.f32 %v4125, %v4095
        %v4127 = vadd.f32 %v4126, %v4096
        %4128 = vadd.xlane.f32.xlu0 %v4127
        %v4129 = vpop.xlane.xlu0 %4128
        %v4130 = vrot.slane %v4129, 4
        %v4131 = vadd.f32 %v4129, %v4130
        %v4132 = vrot.slane %v4131, 2
        %v4133 = vadd.f32 %v4131, %v4132
        %v4134 = vrot.slane %v4133, 1
        %v4135 = vadd.f32 %v4133, %v4134
        %s4136 = vtos %v4135
        %s4137 = sadd.f32 %s3290, %s4136
        %v4138 = vpack.c.bf16 %v4003, %v4001
        %v4139 = vpack.c.bf16 %v4004, %v4002
        %v4140 = vpack.c.bf16 %v4007, %v4005
        %v4141 = vpack.c.bf16 %v4008, %v4006
        %v4142 = vpack.c.bf16 %v4011, %v4009
        %v4143 = vpack.c.bf16 %v4012, %v4010
        %v4144 = vpack.c.bf16 %v4015, %v4013
        %v4145 = vpack.c.bf16 %v4016, %v4014
        %v4146 = vpack.c.bf16 %v4019, %v4017
        %v4147 = vpack.c.bf16 %v4020, %v4018
        %v4148 = vpack.c.bf16 %v4023, %v4021
        %v4149 = vpack.c.bf16 %v4024, %v4022
        %v4150 = vpack.c.bf16 %v4027, %v4025
        %v4151 = vpack.c.bf16 %v4028, %v4026
        %v4152 = vpack.c.bf16 %v4031, %v4029
        %v4153 = vpack.c.bf16 %v4032, %v4030
        %4154 = vrot.lane.b32.xlu0 %v3371, 96
        %v4155 = vpop.permute.xlu0 %4154
        %4156 = vrot.lane.b32.xlu0 %v3372, 96
        %v4157 = vpop.permute.xlu0 %4156
        %4158 = vrot.lane.b32.xlu0 %v3373, 96
        %v4159 = vpop.permute.xlu0 %4158
        %4160 = vrot.lane.b32.xlu0 %v3374, 96
        %v4161 = vpop.permute.xlu0 %4160
        %4162 = vrot.lane.b32.xlu0 %v3375, 96
        %v4163 = vpop.permute.xlu0 %4162
        %4164 = vrot.lane.b32.xlu0 %v3376, 96
        %v4165 = vpop.permute.xlu0 %4164
        %4166 = vrot.lane.b32.xlu0 %v3377, 96
        %v4167 = vpop.permute.xlu0 %4166
        %4168 = vrot.lane.b32.xlu0 %v3378, 96
        %v4169 = vpop.permute.xlu0 %4168
        %4170 = vrot.lane.b32.xlu0 %v3379, 96
        %v4171 = vpop.permute.xlu0 %4170
        %4172 = vrot.lane.b32.xlu0 %v3380, 96
        %v4173 = vpop.permute.xlu0 %4172
        %4174 = vrot.lane.b32.xlu0 %v3381, 96
        %v4175 = vpop.permute.xlu0 %4174
        %4176 = vrot.lane.b32.xlu0 %v3382, 96
        %v4177 = vpop.permute.xlu0 %4176
        %4178 = vrot.lane.b32.xlu0 %v3383, 96
        %v4179 = vpop.permute.xlu0 %4178
        %4180 = vrot.lane.b32.xlu0 %v3384, 96
        %v4181 = vpop.permute.xlu0 %4180
        %4182 = vrot.lane.b32.xlu0 %v3385, 96
        %v4183 = vpop.permute.xlu0 %4182
        %4184 = vrot.lane.b32.xlu0 %v3386, 96
        %v4185 = vpop.permute.xlu0 %4184
        %4202 = vmatprep.subr.bf16.mxu0 0
        %4203 = vmatpush1.bf16.msra.mxu0 %v4169
        %4204 = vmatprep.subr.bf16.mxu0 0
        %4205 = vmatpush1.bf16.msra.mxu0 %v4167
        %4206 = vmatprep.subr.bf16.mxu0 0
        %4207 = vmatpush1.bf16.msra.mxu0 %v4165
        %4208 = vmatprep.subr.bf16.mxu0 0
        %4209 = vmatpush1.bf16.msra.mxu0 %v4163
        %4210 = vmatprep.subr.bf16.mxu0 0
        %4211 = vmatpush1.bf16.msra.mxu0 %v4161
        %4212 = vmatprep.subr.bf16.mxu0 0
        %4213 = vmatpush1.bf16.msra.mxu0 %v4159
        %4214 = vmatprep.subr.bf16.mxu0 0
        %4215 = vmatpush1.bf16.msra.mxu0 %v4157
        %4216 = vmatprep.subr.bf16.mxu0 0
        %4217 = vmatpush1.bf16.msra.mxu0 %v4155
        %4218 = vmatprep.subr.bf16.mxu0 0
        %4219 = vmatpush2.bf16.msra.mxu0 %v4185
        %4220 = vmatprep.subr.bf16.mxu0 0
        %4221 = vmatpush2.bf16.msra.mxu0 %v4183
        %4222 = vmatprep.subr.bf16.mxu0 0
        %4223 = vmatpush2.bf16.msra.mxu0 %v4181
        %4224 = vmatprep.subr.bf16.mxu0 0
        %4225 = vmatpush2.bf16.msra.mxu0 %v4179
        %4226 = vmatprep.subr.bf16.mxu0 0
        %4227 = vmatpush2.bf16.msra.mxu0 %v4177
        %4228 = vmatprep.subr.bf16.mxu0 0
        %4229 = vmatpush2.bf16.msra.mxu0 %v4175
        %4230 = vmatprep.subr.bf16.mxu0 0
        %4231 = vmatpush2.bf16.msra.mxu0 %v4173
        %4232 = vmatprep.subr.bf16.mxu0 0
        %4233 = vmatpush2.bf16.msra.mxu0 %v4171
        %4234 = vmatprep.mubr.bf16.mxu0 %v4139
        %4235 = vmatmul.mubr.bf16.gmra.mxu0 %v4138
        %v4236 = vpop.f32.mrf.mxu0
        %v4237 = vadd.f32 0.0, %v4236
        %v4238 = vpop.f32.mrf.mxu0
        %v4239 = vpop.f32.mrf.mxu0
        %v4240 = vadd.f32 0.0, %v4239
        %v4241 = vpop.f32.mrf.mxu0
        %4242 = vmatprep.mubr.bf16.mxu0 %v4141
        %4243 = vmatmul.mubr.bf16.gmra.mxu0 %v4140
        %v4244 = vpop.f32.mrf.mxu0
        %v4245 = vadd.f32 0.0, %v4244
        %v4246 = vpop.f32.mrf.mxu0
        %v4247 = vpop.f32.mrf.mxu0
        %v4248 = vadd.f32 0.0, %v4247
        %v4249 = vpop.f32.mrf.mxu0
        %4250 = vmatprep.mubr.bf16.mxu0 %v4143
        %4251 = vmatmul.mubr.bf16.gmra.mxu0 %v4142
        %v4252 = vpop.f32.mrf.mxu0
        %v4253 = vadd.f32 0.0, %v4252
        %v4254 = vpop.f32.mrf.mxu0
        %v4255 = vpop.f32.mrf.mxu0
        %v4256 = vadd.f32 0.0, %v4255
        %v4257 = vpop.f32.mrf.mxu0
        %4258 = vmatprep.mubr.bf16.mxu0 %v4145
        %4259 = vmatmul.mubr.bf16.gmra.mxu0 %v4144
        %v4260 = vpop.f32.mrf.mxu0
        %v4261 = vadd.f32 0.0, %v4260
        %v4262 = vpop.f32.mrf.mxu0
        %v4263 = vpop.f32.mrf.mxu0
        %v4264 = vadd.f32 0.0, %v4263
        %v4265 = vpop.f32.mrf.mxu0
        %4266 = vmatprep.mubr.bf16.mxu0 %v4147
        %4267 = vmatmul.mubr.bf16.gmra.mxu0 %v4146
        %v4268 = vpop.f32.mrf.mxu0
        %v4269 = vadd.f32 0.0, %v4268
        %v4270 = vpop.f32.mrf.mxu0
        %v4271 = vpop.f32.mrf.mxu0
        %v4272 = vadd.f32 0.0, %v4271
        %v4273 = vpop.f32.mrf.mxu0
        %4274 = vmatprep.mubr.bf16.mxu0 %v4149
        %4275 = vmatmul.mubr.bf16.gmra.mxu0 %v4148
        %v4276 = vpop.f32.mrf.mxu0
        %v4277 = vadd.f32 0.0, %v4276
        %v4278 = vpop.f32.mrf.mxu0
        %v4279 = vpop.f32.mrf.mxu0
        %v4280 = vadd.f32 0.0, %v4279
        %v4281 = vpop.f32.mrf.mxu0
        %4282 = vmatprep.mubr.bf16.mxu0 %v4151
        %4283 = vmatmul.mubr.bf16.gmra.mxu0 %v4150
        %v4284 = vpop.f32.mrf.mxu0
        %v4285 = vadd.f32 0.0, %v4284
        %v4286 = vpop.f32.mrf.mxu0
        %v4287 = vpop.f32.mrf.mxu0
        %v4288 = vadd.f32 0.0, %v4287
        %v4289 = vpop.f32.mrf.mxu0
        %4290 = vmatprep.mubr.bf16.mxu0 %v4153
        %4291 = vmatmul.mubr.bf16.gmra.mxu0 %v4152
        %v4292 = vpop.f32.mrf.mxu0
        %v4293 = vadd.f32 0.0, %v4292
        %v4294 = vpop.f32.mrf.mxu0
        %v4295 = vpop.f32.mrf.mxu0
        %v4296 = vadd.f32 0.0, %v4295
        %v4297 = vpop.f32.mrf.mxu0
        %4298 = vdwg.mxu0
        %v4299 = vpack.c.bf16 %v4240, %v4237
        %v4300 = vpack.c.bf16 %v4248, %v4245
        %v4301 = vpack.c.bf16 %v4256, %v4253
        %v4302 = vpack.c.bf16 %v4264, %v4261
        %v4303 = vpack.c.bf16 %v4272, %v4269
        %v4304 = vpack.c.bf16 %v4280, %v4277
        %v4305 = vpack.c.bf16 %v4288, %v4285
        %v4306 = vpack.c.bf16 %v4296, %v4293
        %v4307 = vld [vmem:[#allocation14 + $0x10] sm:$0xf]
        %v4308 = vld [vmem:[#allocation14 + $0x14] sm:$0xf]
        %v4309 = vld [vmem:[#allocation14 + $0x18] sm:$0xf]
        %v4310 = vld [vmem:[#allocation14 + $0x1c] sm:$0xf]
        %v4315 = vunpack.c.l.b16 %v4307
        %v4316 = vunpack.c.l.b16 %v4308
        %v4317 = vunpack.c.l.b16 %v4309
        %v4318 = vunpack.c.l.b16 %v4310
        %v4319 = vpack.c.b16 %v4316, %v4315
        %v4320 = vpack.c.b16 %v4318, %v4317
        %v4324 = vsel %vm2701, %v4299, 0
        %v4327 = vsel %vm2701, %v4300, 0
        %v4330 = vsel %vm2701, %v4301, 0
        %v4333 = vsel %vm2701, %v4302, 0
        %v4336 = vsel %vm2701, %v4303, 0
        %v4339 = vsel %vm2701, %v4304, 0
        %v4342 = vsel %vm2701, %v4305, 0
        %v4345 = vsel %vm2701, %v4306, 0
        %4347 = vmatprep.subr.bf16.mxu0 0
        %4348 = vmatpush1.bf16.msra.mxu0 0
        %4349 = vmatprep.subr.bf16.mxu0 0
        %4350 = vmatpush1.bf16.msra.mxu0 0
        %4351 = vmatprep.subr.bf16.mxu0 0
        %4352 = vmatpush1.bf16.msra.mxu0 0
        %4353 = vmatprep.subr.bf16.mxu0 0
        %4354 = vmatpush1.bf16.msra.mxu0 0
        %4355 = vmatprep.subr.bf16.mxu0 0
        %4356 = vmatpush1.bf16.msra.mxu0 0
        %4357 = vmatprep.subr.bf16.mxu0 0
        %4358 = vmatpush1.bf16.msra.mxu0 0
        %4359 = vmatprep.subr.bf16.mxu0 0
        %4360 = vmatpush1.bf16.msra.mxu0 %v4320
        %4361 = vmatprep.subr.bf16.mxu0 0
        %4362 = vmatpush1.bf16.msra.mxu0 %v4319
        %4363 = vmatprep.subr.bf16.mxu0 0
        %4364 = vmatpush2.bf16.msra.mxu0 0
        %4365 = vmatprep.subr.bf16.mxu0 0
        %4366 = vmatpush2.bf16.msra.mxu0 0
        %4367 = vmatprep.subr.bf16.mxu0 0
        %4368 = vmatpush2.bf16.msra.mxu0 0
        %4369 = vmatprep.subr.bf16.mxu0 0
        %4370 = vmatpush2.bf16.msra.mxu0 0
        %4371 = vmatprep.subr.bf16.mxu0 0
        %4372 = vmatpush2.bf16.msra.mxu0 0
        %4373 = vmatprep.subr.bf16.mxu0 0
        %4374 = vmatpush2.bf16.msra.mxu0 0
        %4375 = vmatprep.subr.bf16.mxu0 0
        %4376 = vmatpush2.bf16.msra.mxu0 0
        %4377 = vmatprep.subr.bf16.mxu0 0
        %4378 = vmatpush2.bf16.msra.mxu0 0
        %4379 = vmatprep.mubr.bf16.mxu0 0
        %4380 = vmatmul.mubr.bf16.gmra.mxu0 %v4324
        %v4381 = vpop.f32.mrf.mxu0
        %v4382 = vadd.f32 0.0, %v4381
        %v4383 = vpop.f32.mrf.mxu0
        %v4384 = vpop.f32.mrf.mxu0
        %v4385 = vadd.f32 0.0, %v4384
        %v4386 = vpop.f32.mrf.mxu0
        %4387 = vmatprep.mubr.bf16.mxu0 0
        %4388 = vmatmul.mubr.bf16.gmra.mxu0 %v4327
        %v4389 = vpop.f32.mrf.mxu0
        %v4390 = vadd.f32 0.0, %v4389
        %v4391 = vpop.f32.mrf.mxu0
        %v4392 = vpop.f32.mrf.mxu0
        %v4393 = vadd.f32 0.0, %v4392
        %v4394 = vpop.f32.mrf.mxu0
        %4395 = vmatprep.mubr.bf16.mxu0 0
        %4396 = vmatmul.mubr.bf16.gmra.mxu0 %v4330
        %v4397 = vpop.f32.mrf.mxu0
        %v4398 = vadd.f32 0.0, %v4397
        %v4399 = vpop.f32.mrf.mxu0
        %v4400 = vpop.f32.mrf.mxu0
        %v4401 = vadd.f32 0.0, %v4400
        %v4402 = vpop.f32.mrf.mxu0
        %4403 = vmatprep.mubr.bf16.mxu0 0
        %4404 = vmatmul.mubr.bf16.gmra.mxu0 %v4333
        %v4405 = vpop.f32.mrf.mxu0
        %v4406 = vadd.f32 0.0, %v4405
        %v4407 = vpop.f32.mrf.mxu0
        %v4408 = vpop.f32.mrf.mxu0
        %v4409 = vadd.f32 0.0, %v4408
        %v4410 = vpop.f32.mrf.mxu0
        %4411 = vmatprep.mubr.bf16.mxu0 0
        %4412 = vmatmul.mubr.bf16.gmra.mxu0 %v4336
        %v4413 = vpop.f32.mrf.mxu0
        %v4414 = vadd.f32 0.0, %v4413
        %v4415 = vpop.f32.mrf.mxu0
        %v4416 = vpop.f32.mrf.mxu0
        %v4417 = vadd.f32 0.0, %v4416
        %v4418 = vpop.f32.mrf.mxu0
        %4419 = vmatprep.mubr.bf16.mxu0 0
        %4420 = vmatmul.mubr.bf16.gmra.mxu0 %v4339
        %v4421 = vpop.f32.mrf.mxu0
        %v4422 = vadd.f32 0.0, %v4421
        %v4423 = vpop.f32.mrf.mxu0
        %v4424 = vpop.f32.mrf.mxu0
        %v4425 = vadd.f32 0.0, %v4424
        %v4426 = vpop.f32.mrf.mxu0
        %4427 = vmatprep.mubr.bf16.mxu0 0
        %4428 = vmatmul.mubr.bf16.gmra.mxu0 %v4342
        %v4429 = vpop.f32.mrf.mxu0
        %v4430 = vadd.f32 0.0, %v4429
        %v4431 = vpop.f32.mrf.mxu0
        %v4432 = vpop.f32.mrf.mxu0
        %v4433 = vadd.f32 0.0, %v4432
        %v4434 = vpop.f32.mrf.mxu0
        %4435 = vmatprep.mubr.bf16.mxu0 0
        %4436 = vmatmul.mubr.bf16.gmra.mxu0 %v4345
        %v4437 = vpop.f32.mrf.mxu0
        %v4438 = vadd.f32 0.0, %v4437
        %v4439 = vpop.f32.mrf.mxu0
        %v4440 = vpop.f32.mrf.mxu0
        %v4441 = vadd.f32 0.0, %v4440
        %v4442 = vpop.f32.mrf.mxu0
        %4443 = vdwg.mxu0
        %v4448 = vunpack.c.l.b16 %v3508
        %v4449 = vunpack.c.l.b16 %v3509
        %v4450 = vunpack.c.l.b16 %v3510
        %v4451 = vunpack.c.l.b16 %v3511
        %v4452 = vpack.c.b16 %v4449, %v4448
        %v4453 = vpack.c.b16 %v4451, %v4450
        %v4457 = vsel %vm2701, %v3500, 0
        %v4460 = vsel %vm2701, %v3501, 0
        %v4463 = vsel %vm2701, %v3502, 0
        %v4466 = vsel %vm2701, %v3503, 0
        %v4469 = vsel %vm2701, %v3504, 0
        %v4472 = vsel %vm2701, %v3505, 0
        %v4475 = vsel %vm2701, %v3506, 0
        %v4478 = vsel %vm2701, %v3507, 0
        %4480 = vmatprep.subr.bf16.mxu0 0
        %4481 = vmatpush1.bf16.msra.mxu0 0
        %4482 = vmatprep.subr.bf16.mxu0 0
        %4483 = vmatpush1.bf16.msra.mxu0 0
        %4484 = vmatprep.subr.bf16.mxu0 0
        %4485 = vmatpush1.bf16.msra.mxu0 0
        %4486 = vmatprep.subr.bf16.mxu0 0
        %4487 = vmatpush1.bf16.msra.mxu0 0
        %4488 = vmatprep.subr.bf16.mxu0 0
        %4489 = vmatpush1.bf16.msra.mxu0 0
        %4490 = vmatprep.subr.bf16.mxu0 0
        %4491 = vmatpush1.bf16.msra.mxu0 0
        %4492 = vmatprep.subr.bf16.mxu0 0
        %4493 = vmatpush1.bf16.msra.mxu0 %v4453
        %4494 = vmatprep.subr.bf16.mxu0 0
        %4495 = vmatpush1.bf16.msra.mxu0 %v4452
        %4496 = vmatprep.subr.bf16.mxu0 0
        %4497 = vmatpush2.bf16.msra.mxu0 0
        %4498 = vmatprep.subr.bf16.mxu0 0
        %4499 = vmatpush2.bf16.msra.mxu0 0
        %4500 = vmatprep.subr.bf16.mxu0 0
        %4501 = vmatpush2.bf16.msra.mxu0 0
        %4502 = vmatprep.subr.bf16.mxu0 0
        %4503 = vmatpush2.bf16.msra.mxu0 0
        %4504 = vmatprep.subr.bf16.mxu0 0
        %4505 = vmatpush2.bf16.msra.mxu0 0
        %4506 = vmatprep.subr.bf16.mxu0 0
        %4507 = vmatpush2.bf16.msra.mxu0 0
        %4508 = vmatprep.subr.bf16.mxu0 0
        %4509 = vmatpush2.bf16.msra.mxu0 0
        %4510 = vmatprep.subr.bf16.mxu0 0
        %4511 = vmatpush2.bf16.msra.mxu0 0
        %4512 = vmatprep.mubr.bf16.mxu0 0
        %4513 = vmatmul.mubr.bf16.gmra.mxu0 %v4457
        %v4514 = vpop.f32.mrf.mxu0
        %v4515 = vadd.f32 %v4382, %v4514
        %v4516 = vpop.f32.mrf.mxu0
        %v4517 = vpop.f32.mrf.mxu0
        %v4518 = vadd.f32 %v4385, %v4517
        %v4519 = vpop.f32.mrf.mxu0
        %4520 = vmatprep.mubr.bf16.mxu0 0
        %4521 = vmatmul.mubr.bf16.gmra.mxu0 %v4460
        %v4522 = vpop.f32.mrf.mxu0
        %v4523 = vadd.f32 %v4390, %v4522
        %v4524 = vpop.f32.mrf.mxu0
        %v4525 = vpop.f32.mrf.mxu0
        %v4526 = vadd.f32 %v4393, %v4525
        %v4527 = vpop.f32.mrf.mxu0
        %4528 = vmatprep.mubr.bf16.mxu0 0
        %4529 = vmatmul.mubr.bf16.gmra.mxu0 %v4463
        %v4530 = vpop.f32.mrf.mxu0
        %v4531 = vadd.f32 %v4398, %v4530
        %v4532 = vpop.f32.mrf.mxu0
        %v4533 = vpop.f32.mrf.mxu0
        %v4534 = vadd.f32 %v4401, %v4533
        %v4535 = vpop.f32.mrf.mxu0
        %4536 = vmatprep.mubr.bf16.mxu0 0
        %4537 = vmatmul.mubr.bf16.gmra.mxu0 %v4466
        %v4538 = vpop.f32.mrf.mxu0
        %v4539 = vadd.f32 %v4406, %v4538
        %v4540 = vpop.f32.mrf.mxu0
        %v4541 = vpop.f32.mrf.mxu0
        %v4542 = vadd.f32 %v4409, %v4541
        %v4543 = vpop.f32.mrf.mxu0
        %4544 = vmatprep.mubr.bf16.mxu0 0
        %4545 = vmatmul.mubr.bf16.gmra.mxu0 %v4469
        %v4546 = vpop.f32.mrf.mxu0
        %v4547 = vadd.f32 %v4414, %v4546
        %v4548 = vpop.f32.mrf.mxu0
        %v4549 = vpop.f32.mrf.mxu0
        %v4550 = vadd.f32 %v4417, %v4549
        %v4551 = vpop.f32.mrf.mxu0
        %4552 = vmatprep.mubr.bf16.mxu0 0
        %4553 = vmatmul.mubr.bf16.gmra.mxu0 %v4472
        %v4554 = vpop.f32.mrf.mxu0
        %v4555 = vadd.f32 %v4422, %v4554
        %v4556 = vpop.f32.mrf.mxu0
        %v4557 = vpop.f32.mrf.mxu0
        %v4558 = vadd.f32 %v4425, %v4557
        %v4559 = vpop.f32.mrf.mxu0
        %4560 = vmatprep.mubr.bf16.mxu0 0
        %4561 = vmatmul.mubr.bf16.gmra.mxu0 %v4475
        %v4562 = vpop.f32.mrf.mxu0
        %v4563 = vadd.f32 %v4430, %v4562
        %v4564 = vpop.f32.mrf.mxu0
        %v4565 = vpop.f32.mrf.mxu0
        %v4566 = vadd.f32 %v4433, %v4565
        %v4567 = vpop.f32.mrf.mxu0
        %4568 = vmatprep.mubr.bf16.mxu0 0
        %4569 = vmatmul.mubr.bf16.gmra.mxu0 %v4478
        %v4570 = vpop.f32.mrf.mxu0
        %v4571 = vadd.f32 %v4438, %v4570
        %v4572 = vpop.f32.mrf.mxu0
        %v4573 = vpop.f32.mrf.mxu0
        %v4574 = vadd.f32 %v4441, %v4573
        %v4575 = vpop.f32.mrf.mxu0
        %4576 = vdwg.mxu0
        %4577 = vrot.lane.b32.xlu0 %v2613, 64
        %v4578 = vpop.permute.xlu0 %4577
        %4579 = vrot.lane.b32.xlu0 %v2614, 64
        %v4580 = vpop.permute.xlu0 %4579
        %4581 = vrot.lane.b32.xlu0 %v2615, 64
        %v4582 = vpop.permute.xlu0 %4581
        %4583 = vrot.lane.b32.xlu0 %v2616, 64
        %v4584 = vpop.permute.xlu0 %4583
        %4585 = vrot.lane.b32.xlu0 %v2617, 64
        %v4586 = vpop.permute.xlu0 %4585
        %4587 = vrot.lane.b32.xlu0 %v2618, 64
        %v4588 = vpop.permute.xlu0 %4587
        %4589 = vrot.lane.b32.xlu0 %v2619, 64
        %v4590 = vpop.permute.xlu0 %4589
        %4591 = vrot.lane.b32.xlu0 %v2620, 64
        %v4592 = vpop.permute.xlu0 %4591
        %4593 = vrot.lane.b32.xlu0 %v2685, 64
        %v4594 = vpop.permute.xlu0 %4593
        %4595 = vrot.lane.b32.xlu0 %v2686, 64
        %v4596 = vpop.permute.xlu0 %4595
        %4597 = vrot.lane.b32.xlu0 %v2687, 64
        %v4598 = vpop.permute.xlu0 %4597
        %4599 = vrot.lane.b32.xlu0 %v2688, 64
        %v4600 = vpop.permute.xlu0 %4599
        %4601 = vrot.lane.b32.xlu0 %v2689, 64
        %v4602 = vpop.permute.xlu0 %4601
        %4603 = vrot.lane.b32.xlu0 %v2690, 64
        %v4604 = vpop.permute.xlu0 %4603
        %4605 = vrot.lane.b32.xlu0 %v2691, 64
        %v4606 = vpop.permute.xlu0 %4605
        %4607 = vrot.lane.b32.xlu0 %v2692, 64
        %v4608 = vpop.permute.xlu0 %4607
        %4609 = vrot.lane.b32.xlu0 %v2693, 64
        %v4610 = vpop.permute.xlu0 %4609
        %4611 = vrot.lane.b32.xlu0 %v2694, 64
        %v4612 = vpop.permute.xlu0 %4611
        %4613 = vrot.lane.b32.xlu0 %v2695, 64
        %v4614 = vpop.permute.xlu0 %4613
        %4615 = vrot.lane.b32.xlu0 %v2696, 64
        %v4616 = vpop.permute.xlu0 %4615
        %4617 = vrot.lane.b32.xlu0 %v2697, 64
        %v4618 = vpop.permute.xlu0 %4617
        %4619 = vrot.lane.b32.xlu0 %v2698, 64
        %v4620 = vpop.permute.xlu0 %4619
        %4621 = vrot.lane.b32.xlu0 %v2699, 64
        %v4622 = vpop.permute.xlu0 %4621
        %4623 = vrot.lane.b32.xlu0 %v2700, 64
        %v4624 = vpop.permute.xlu0 %4623
        %v4626 = vsel %vm2701, %v4578, 0
        %v4629 = vsel %vm2701, %v4580, 0
        %v4632 = vsel %vm2701, %v4582, 0
        %v4635 = vsel %vm2701, %v4584, 0
        %v4638 = vsel %vm2701, %v4586, 0
        %v4641 = vsel %vm2701, %v4588, 0
        %v4644 = vsel %vm2701, %v4590, 0
        %v4647 = vsel %vm2701, %v4592, 0
        %v4650 = vsel %vm2701, %v4594, 0
        %v4653 = vsel %vm2701, %v4596, 0
        %v4656 = vsel %vm2701, %v4598, 0
        %v4659 = vsel %vm2701, %v4600, 0
        %v4662 = vsel %vm2701, %v4602, 0
        %v4665 = vsel %vm2701, %v4604, 0
        %v4668 = vsel %vm2701, %v4606, 0
        %v4671 = vsel %vm2701, %v4608, 0
        %v4674 = vsel %vm2701, %v4610, 0
        %v4677 = vsel %vm2701, %v4612, 0
        %v4680 = vsel %vm2701, %v4614, 0
        %v4683 = vsel %vm2701, %v4616, 0
        %v4686 = vsel %vm2701, %v4618, 0
        %v4689 = vsel %vm2701, %v4620, 0
        %v4692 = vsel %vm2701, %v4622, 0
        %v4695 = vsel %vm2701, %v4624, 0
        %4697 = vmatprep.subr.bf16.mxu0 0
        %4698 = vmatpush1.bf16.xpose.msra.mxu0 %v4671
        %4699 = vmatprep.subr.bf16.mxu0 0
        %4700 = vmatpush1.bf16.xpose.msra.mxu0 %v4668
        %4701 = vmatprep.subr.bf16.mxu0 0
        %4702 = vmatpush1.bf16.xpose.msra.mxu0 %v4665
        %4703 = vmatprep.subr.bf16.mxu0 0
        %4704 = vmatpush1.bf16.xpose.msra.mxu0 %v4662
        %4705 = vmatprep.subr.bf16.mxu0 0
        %4706 = vmatpush1.bf16.xpose.msra.mxu0 %v4659
        %4707 = vmatprep.subr.bf16.mxu0 0
        %4708 = vmatpush1.bf16.xpose.msra.mxu0 %v4656
        %4709 = vmatprep.subr.bf16.mxu0 0
        %4710 = vmatpush1.bf16.xpose.msra.mxu0 %v4653
        %4711 = vmatprep.subr.bf16.mxu0 0
        %4712 = vmatpush1.bf16.xpose.msra.mxu0 %v4650
        %4713 = vmatprep.subr.bf16.mxu0 0
        %4714 = vmatpush2.bf16.xpose.msra.mxu0 %v4695
        %4715 = vmatprep.subr.bf16.mxu0 0
        %4716 = vmatpush2.bf16.xpose.msra.mxu0 %v4692
        %4717 = vmatprep.subr.bf16.mxu0 0
        %4718 = vmatpush2.bf16.xpose.msra.mxu0 %v4689
        %4719 = vmatprep.subr.bf16.mxu0 0
        %4720 = vmatpush2.bf16.xpose.msra.mxu0 %v4686
        %4721 = vmatprep.subr.bf16.mxu0 0
        %4722 = vmatpush2.bf16.xpose.msra.mxu0 %v4683
        %4723 = vmatprep.subr.bf16.mxu0 0
        %4724 = vmatpush2.bf16.xpose.msra.mxu0 %v4680
        %4725 = vmatprep.subr.bf16.mxu0 0
        %4726 = vmatpush2.bf16.xpose.msra.mxu0 %v4677
        %4727 = vmatprep.subr.bf16.mxu0 0
        %4728 = vmatpush2.bf16.xpose.msra.mxu0 %v4674
        %4729 = vmatprep.mubr.bf16.mxu0 0
        %4730 = vmatmul.mubr.bf16.gmra.mxu0 %v4626
        %v4731 = vpop.f32.mrf.mxu0
        %v4732 = vadd.f32 %v2463, %v4731
        %v4733 = vpop.f32.mrf.mxu0
        %v4734 = vadd.f32 %v2464, %v4733
        %v4735 = vpop.f32.mrf.mxu0
        %v4736 = vadd.f32 %v2465, %v4735
        %v4737 = vpop.f32.mrf.mxu0
        %v4738 = vadd.f32 %v2466, %v4737
        %4739 = vmatprep.mubr.bf16.mxu0 0
        %4740 = vmatmul.mubr.bf16.gmra.mxu0 %v4629
        %v4741 = vpop.f32.mrf.mxu0
        %v4742 = vadd.f32 %v2467, %v4741
        %v4743 = vpop.f32.mrf.mxu0
        %v4744 = vadd.f32 %v2468, %v4743
        %v4745 = vpop.f32.mrf.mxu0
        %v4746 = vadd.f32 %v2469, %v4745
        %v4747 = vpop.f32.mrf.mxu0
        %v4748 = vadd.f32 %v2470, %v4747
        %4749 = vmatprep.mubr.bf16.mxu0 0
        %4750 = vmatmul.mubr.bf16.gmra.mxu0 %v4632
        %v4751 = vpop.f32.mrf.mxu0
        %v4752 = vadd.f32 %v2471, %v4751
        %v4753 = vpop.f32.mrf.mxu0
        %v4754 = vadd.f32 %v2472, %v4753
        %v4755 = vpop.f32.mrf.mxu0
        %v4756 = vadd.f32 %v2473, %v4755
        %v4757 = vpop.f32.mrf.mxu0
        %v4758 = vadd.f32 %v2474, %v4757
        %4759 = vmatprep.mubr.bf16.mxu0 0
        %4760 = vmatmul.mubr.bf16.gmra.mxu0 %v4635
        %v4761 = vpop.f32.mrf.mxu0
        %v4762 = vadd.f32 %v2475, %v4761
        %v4763 = vpop.f32.mrf.mxu0
        %v4764 = vadd.f32 %v2476, %v4763
        %v4765 = vpop.f32.mrf.mxu0
        %v4766 = vadd.f32 %v2477, %v4765
        %v4767 = vpop.f32.mrf.mxu0
        %v4768 = vadd.f32 %v2478, %v4767
        %4769 = vmatprep.mubr.bf16.mxu0 0
        %4770 = vmatmul.mubr.bf16.gmra.mxu0 %v4638
        %v4771 = vpop.f32.mrf.mxu0
        %v4772 = vadd.f32 %v2479, %v4771
        %v4773 = vpop.f32.mrf.mxu0
        %v4774 = vadd.f32 %v2480, %v4773
        %v4775 = vpop.f32.mrf.mxu0
        %v4776 = vadd.f32 %v2481, %v4775
        %v4777 = vpop.f32.mrf.mxu0
        %v4778 = vadd.f32 %v2482, %v4777
        %4779 = vmatprep.mubr.bf16.mxu0 0
        %4780 = vmatmul.mubr.bf16.gmra.mxu0 %v4641
        %v4781 = vpop.f32.mrf.mxu0
        %v4782 = vadd.f32 %v2483, %v4781
        %v4783 = vpop.f32.mrf.mxu0
        %v4784 = vadd.f32 %v2484, %v4783
        %v4785 = vpop.f32.mrf.mxu0
        %v4786 = vadd.f32 %v2485, %v4785
        %v4787 = vpop.f32.mrf.mxu0
        %v4788 = vadd.f32 %v2486, %v4787
        %4789 = vmatprep.mubr.bf16.mxu0 0
        %4790 = vmatmul.mubr.bf16.gmra.mxu0 %v4644
        %v4791 = vpop.f32.mrf.mxu0
        %v4792 = vadd.f32 %v2487, %v4791
        %v4793 = vpop.f32.mrf.mxu0
        %v4794 = vadd.f32 %v2488, %v4793
        %v4795 = vpop.f32.mrf.mxu0
        %v4796 = vadd.f32 %v2489, %v4795
        %v4797 = vpop.f32.mrf.mxu0
        %v4798 = vadd.f32 %v2490, %v4797
        %4799 = vmatprep.mubr.bf16.mxu0 0
        %4800 = vmatmul.mubr.bf16.gmra.mxu0 %v4647
        %v4801 = vpop.f32.mrf.mxu0
        %v4802 = vadd.f32 %v2491, %v4801
        %v4803 = vpop.f32.mrf.mxu0
        %v4804 = vadd.f32 %v2492, %v4803
        %v4805 = vpop.f32.mrf.mxu0
        %v4806 = vadd.f32 %v2493, %v4805
        %v4807 = vpop.f32.mrf.mxu0
        %v4808 = vadd.f32 %v2494, %v4807
        %4809 = vdwg.mxu0
        %v4810 = vsel %vm2896, %v4732, -1e+09
        %v4811 = vsel %vm2897, %v4734, -1e+09
        %v4812 = vsel %vm2896, %v4736, -1e+09
        %v4813 = vsel %vm2897, %v4738, -1e+09
        %v4814 = vsel %vm2896, %v4742, -1e+09
        %v4815 = vsel %vm2897, %v4744, -1e+09
        %v4816 = vsel %vm2896, %v4746, -1e+09
        %v4817 = vsel %vm2897, %v4748, -1e+09
        %v4818 = vsel %vm2896, %v4752, -1e+09
        %v4819 = vsel %vm2897, %v4754, -1e+09
        %v4820 = vsel %vm2896, %v4756, -1e+09
        %v4821 = vsel %vm2897, %v4758, -1e+09
        %v4822 = vsel %vm2896, %v4762, -1e+09
        %v4823 = vsel %vm2897, %v4764, -1e+09
        %v4824 = vsel %vm2896, %v4766, -1e+09
        %v4825 = vsel %vm2897, %v4768, -1e+09
        %v4826 = vsel %vm2896, %v4772, -1e+09
        %v4827 = vsel %vm2897, %v4774, -1e+09
        %v4828 = vsel %vm2896, %v4776, -1e+09
        %v4829 = vsel %vm2897, %v4778, -1e+09
        %v4830 = vsel %vm2896, %v4782, -1e+09
        %v4831 = vsel %vm2897, %v4784, -1e+09
        %v4832 = vsel %vm2896, %v4786, -1e+09
        %v4833 = vsel %vm2897, %v4788, -1e+09
        %v4834 = vsel %vm2896, %v4792, -1e+09
        %v4835 = vsel %vm2897, %v4794, -1e+09
        %v4836 = vsel %vm2896, %v4796, -1e+09
        %v4837 = vsel %vm2897, %v4798, -1e+09
        %v4838 = vsel %vm2896, %v4802, -1e+09
        %v4839 = vsel %vm2897, %v4804, -1e+09
        %v4840 = vsel %vm2896, %v4806, -1e+09
        %v4841 = vsel %vm2897, %v4808, -1e+09
        %v4842 = vmax.f32 %v4810, %v4811
        %4843 = vmax.xlane.f32.xlu0 %v4842
        %v4844 = vpop.xlane.xlu0 %4843
        %v4845 = vmax.f32 %v4812, %v4813
        %4846 = vmax.xlane.f32.xlu0 %v4845
        %v4847 = vpop.xlane.xlu0 %4846
        %v4848 = vmax.f32 %v4814, %v4815
        %4849 = vmax.xlane.f32.xlu0 %v4848
        %v4850 = vpop.xlane.xlu0 %4849
        %v4851 = vmax.f32 %v4816, %v4817
        %4852 = vmax.xlane.f32.xlu0 %v4851
        %v4853 = vpop.xlane.xlu0 %4852
        %v4854 = vmax.f32 %v4818, %v4819
        %4855 = vmax.xlane.f32.xlu0 %v4854
        %v4856 = vpop.xlane.xlu0 %4855
        %v4857 = vmax.f32 %v4820, %v4821
        %4858 = vmax.xlane.f32.xlu0 %v4857
        %v4859 = vpop.xlane.xlu0 %4858
        %v4860 = vmax.f32 %v4822, %v4823
        %4861 = vmax.xlane.f32.xlu0 %v4860
        %v4862 = vpop.xlane.xlu0 %4861
        %v4863 = vmax.f32 %v4824, %v4825
        %4864 = vmax.xlane.f32.xlu0 %v4863
        %v4865 = vpop.xlane.xlu0 %4864
        %v4866 = vmax.f32 %v4826, %v4827
        %4867 = vmax.xlane.f32.xlu0 %v4866
        %v4868 = vpop.xlane.xlu0 %4867
        %v4869 = vmax.f32 %v4828, %v4829
        %4870 = vmax.xlane.f32.xlu0 %v4869
        %v4871 = vpop.xlane.xlu0 %4870
        %v4872 = vmax.f32 %v4830, %v4831
        %4873 = vmax.xlane.f32.xlu0 %v4872
        %v4874 = vpop.xlane.xlu0 %4873
        %v4875 = vmax.f32 %v4832, %v4833
        %4876 = vmax.xlane.f32.xlu0 %v4875
        %v4877 = vpop.xlane.xlu0 %4876
        %v4878 = vmax.f32 %v4834, %v4835
        %4879 = vmax.xlane.f32.xlu0 %v4878
        %v4880 = vpop.xlane.xlu0 %4879
        %v4881 = vmax.f32 %v4836, %v4837
        %4882 = vmax.xlane.f32.xlu0 %v4881
        %v4883 = vpop.xlane.xlu0 %4882
        %v4884 = vmax.f32 %v4838, %v4839
        %4885 = vmax.xlane.f32.xlu0 %v4884
        %v4886 = vpop.xlane.xlu0 %4885
        %v4887 = vmax.f32 %v4840, %v4841
        %4888 = vmax.xlane.f32.xlu0 %v4887
        %v4889 = vpop.xlane.xlu0 %4888
        %v4890 = vsub.f32 %v4810, %v4844
        %v4891 = vsub.f32 %v4811, %v4844
        %v4892 = vsub.f32 %v4812, %v4847
        %v4893 = vsub.f32 %v4813, %v4847
        %v4894 = vsub.f32 %v4814, %v4850
        %v4895 = vsub.f32 %v4815, %v4850
        %v4896 = vsub.f32 %v4816, %v4853
        %v4897 = vsub.f32 %v4817, %v4853
        %v4898 = vsub.f32 %v4818, %v4856
        %v4899 = vsub.f32 %v4819, %v4856
        %v4900 = vsub.f32 %v4820, %v4859
        %v4901 = vsub.f32 %v4821, %v4859
        %v4902 = vsub.f32 %v4822, %v4862
        %v4903 = vsub.f32 %v4823, %v4862
        %v4904 = vsub.f32 %v4824, %v4865
        %v4905 = vsub.f32 %v4825, %v4865
        %v4906 = vsub.f32 %v4826, %v4868
        %v4907 = vsub.f32 %v4827, %v4868
        %v4908 = vsub.f32 %v4828, %v4871
        %v4909 = vsub.f32 %v4829, %v4871
        %v4910 = vsub.f32 %v4830, %v4874
        %v4911 = vsub.f32 %v4831, %v4874
        %v4912 = vsub.f32 %v4832, %v4877
        %v4913 = vsub.f32 %v4833, %v4877
        %v4914 = vsub.f32 %v4834, %v4880
        %v4915 = vsub.f32 %v4835, %v4880
        %v4916 = vsub.f32 %v4836, %v4883
        %v4917 = vsub.f32 %v4837, %v4883
        %v4918 = vsub.f32 %v4838, %v4886
        %v4919 = vsub.f32 %v4839, %v4886
        %v4920 = vsub.f32 %v4840, %v4889
        %v4921 = vsub.f32 %v4841, %v4889
        %v4922 = vmul.f32 %v4890, 1.442695
        %v4923 = vpow.pop %v4922
        %v4924 = vmul.f32 %v4891, 1.442695
        %v4925 = vpow.pop %v4924
        %v4926 = vmul.f32 %v4892, 1.442695
        %v4927 = vpow.pop %v4926
        %v4928 = vmul.f32 %v4893, 1.442695
        %v4929 = vpow.pop %v4928
        %v4930 = vmul.f32 %v4894, 1.442695
        %v4931 = vpow.pop %v4930
        %v4932 = vmul.f32 %v4895, 1.442695
        %v4933 = vpow.pop %v4932
        %v4934 = vmul.f32 %v4896, 1.442695
        %v4935 = vpow.pop %v4934
        %v4936 = vmul.f32 %v4897, 1.442695
        %v4937 = vpow.pop %v4936
        %v4938 = vmul.f32 %v4898, 1.442695
        %v4939 = vpow.pop %v4938
        %v4940 = vmul.f32 %v4899, 1.442695
        %v4941 = vpow.pop %v4940
        %v4942 = vmul.f32 %v4900, 1.442695
        %v4943 = vpow.pop %v4942
        %v4944 = vmul.f32 %v4901, 1.442695
        %v4945 = vpow.pop %v4944
        %v4946 = vmul.f32 %v4902, 1.442695
        %v4947 = vpow.pop %v4946
        %v4948 = vmul.f32 %v4903, 1.442695
        %v4949 = vpow.pop %v4948
        %v4950 = vmul.f32 %v4904, 1.442695
        %v4951 = vpow.pop %v4950
        %v4952 = vmul.f32 %v4905, 1.442695
        %v4953 = vpow.pop %v4952
        %v4954 = vmul.f32 %v4906, 1.442695
        %v4955 = vpow.pop %v4954
        %v4956 = vmul.f32 %v4907, 1.442695
        %v4957 = vpow.pop %v4956
        %v4958 = vmul.f32 %v4908, 1.442695
        %v4959 = vpow.pop %v4958
        %v4960 = vmul.f32 %v4909, 1.442695
        %v4961 = vpow.pop %v4960
        %v4962 = vmul.f32 %v4910, 1.442695
        %v4963 = vpow.pop %v4962
        %v4964 = vmul.f32 %v4911, 1.442695
        %v4965 = vpow.pop %v4964
        %v4966 = vmul.f32 %v4912, 1.442695
        %v4967 = vpow.pop %v4966
        %v4968 = vmul.f32 %v4913, 1.442695
        %v4969 = vpow.pop %v4968
        %v4970 = vmul.f32 %v4914, 1.442695
        %v4971 = vpow.pop %v4970
        %v4972 = vmul.f32 %v4915, 1.442695
        %v4973 = vpow.pop %v4972
        %v4974 = vmul.f32 %v4916, 1.442695
        %v4975 = vpow.pop %v4974
        %v4976 = vmul.f32 %v4917, 1.442695
        %v4977 = vpow.pop %v4976
        %v4978 = vmul.f32 %v4918, 1.442695
        %v4979 = vpow.pop %v4978
        %v4980 = vmul.f32 %v4919, 1.442695
        %v4981 = vpow.pop %v4980
        %v4982 = vmul.f32 %v4920, 1.442695
        %v4983 = vpow.pop %v4982
        %v4984 = vmul.f32 %v4921, 1.442695
        %v4985 = vpow.pop %v4984
        %v4986 = vadd.f32 %v4923, %v4925
        %4987 = vadd.xlane.f32.xlu0 %v4986
        %v4988 = vpop.xlane.xlu0 %4987
        %v4989 = vadd.f32 %v4927, %v4929
        %4990 = vadd.xlane.f32.xlu0 %v4989
        %v4991 = vpop.xlane.xlu0 %4990
        %v4992 = vadd.f32 %v4931, %v4933
        %4993 = vadd.xlane.f32.xlu0 %v4992
        %v4994 = vpop.xlane.xlu0 %4993
        %v4995 = vadd.f32 %v4935, %v4937
        %4996 = vadd.xlane.f32.xlu0 %v4995
        %v4997 = vpop.xlane.xlu0 %4996
        %v4998 = vadd.f32 %v4939, %v4941
        %4999 = vadd.xlane.f32.xlu0 %v4998
        %v5000 = vpop.xlane.xlu0 %4999
        %v5001 = vadd.f32 %v4943, %v4945
        %5002 = vadd.xlane.f32.xlu0 %v5001
        %v5003 = vpop.xlane.xlu0 %5002
        %v5004 = vadd.f32 %v4947, %v4949
        %5005 = vadd.xlane.f32.xlu0 %v5004
        %v5006 = vpop.xlane.xlu0 %5005
        %v5007 = vadd.f32 %v4951, %v4953
        %5008 = vadd.xlane.f32.xlu0 %v5007
        %v5009 = vpop.xlane.xlu0 %5008
        %v5010 = vadd.f32 %v4955, %v4957
        %5011 = vadd.xlane.f32.xlu0 %v5010
        %v5012 = vpop.xlane.xlu0 %5011
        %v5013 = vadd.f32 %v4959, %v4961
        %5014 = vadd.xlane.f32.xlu0 %v5013
        %v5015 = vpop.xlane.xlu0 %5014
        %v5016 = vadd.f32 %v4963, %v4965
        %5017 = vadd.xlane.f32.xlu0 %v5016
        %v5018 = vpop.xlane.xlu0 %5017
        %v5019 = vadd.f32 %v4967, %v4969
        %5020 = vadd.xlane.f32.xlu0 %v5019
        %v5021 = vpop.xlane.xlu0 %5020
        %v5022 = vadd.f32 %v4971, %v4973
        %5023 = vadd.xlane.f32.xlu0 %v5022
        %v5024 = vpop.xlane.xlu0 %5023
        %v5025 = vadd.f32 %v4975, %v4977
        %5026 = vadd.xlane.f32.xlu0 %v5025
        %v5027 = vpop.xlane.xlu0 %5026
        %v5028 = vadd.f32 %v4979, %v4981
        %5029 = vadd.xlane.f32.xlu0 %v5028
        %v5030 = vpop.xlane.xlu0 %5029
        %v5031 = vadd.f32 %v4983, %v4985
        %5032 = vadd.xlane.f32.xlu0 %v5031
        %v5033 = vpop.xlane.xlu0 %5032
        %v5034 = vrcp.pop %v4988
        %v5035 = vmul.f32 1.0, %v5034
        %v5036 = vrcp.pop %v4991
        %v5037 = vmul.f32 1.0, %v5036
        %v5038 = vrcp.pop %v4994
        %v5039 = vmul.f32 1.0, %v5038
        %v5040 = vrcp.pop %v4997
        %v5041 = vmul.f32 1.0, %v5040
        %v5042 = vrcp.pop %v5000
        %v5043 = vmul.f32 1.0, %v5042
        %v5044 = vrcp.pop %v5003
        %v5045 = vmul.f32 1.0, %v5044
        %v5046 = vrcp.pop %v5006
        %v5047 = vmul.f32 1.0, %v5046
        %v5048 = vrcp.pop %v5009
        %v5049 = vmul.f32 1.0, %v5048
        %v5050 = vrcp.pop %v5012
        %v5051 = vmul.f32 1.0, %v5050
        %v5052 = vrcp.pop %v5015
        %v5053 = vmul.f32 1.0, %v5052
        %v5054 = vrcp.pop %v5018
        %v5055 = vmul.f32 1.0, %v5054
        %v5056 = vrcp.pop %v5021
        %v5057 = vmul.f32 1.0, %v5056
        %v5058 = vrcp.pop %v5024
        %v5059 = vmul.f32 1.0, %v5058
        %v5060 = vrcp.pop %v5027
        %v5061 = vmul.f32 1.0, %v5060
        %v5062 = vrcp.pop %v5030
        %v5063 = vmul.f32 1.0, %v5062
        %v5064 = vrcp.pop %v5033
        %v5065 = vmul.f32 1.0, %v5064
        %v5066 = vmul.f32 %v4923, %v5035
        %v5067 = vmul.f32 %v4925, %v5035
        %v5068 = vmul.f32 %v4927, %v5037
        %v5069 = vmul.f32 %v4929, %v5037
        %v5070 = vmul.f32 %v4931, %v5039
        %v5071 = vmul.f32 %v4933, %v5039
        %v5072 = vmul.f32 %v4935, %v5041
        %v5073 = vmul.f32 %v4937, %v5041
        %v5074 = vmul.f32 %v4939, %v5043
        %v5075 = vmul.f32 %v4941, %v5043
        %v5076 = vmul.f32 %v4943, %v5045
        %v5077 = vmul.f32 %v4945, %v5045
        %v5078 = vmul.f32 %v4947, %v5047
        %v5079 = vmul.f32 %v4949, %v5047
        %v5080 = vmul.f32 %v4951, %v5049
        %v5081 = vmul.f32 %v4953, %v5049
        %v5082 = vmul.f32 %v4955, %v5051
        %v5083 = vmul.f32 %v4957, %v5051
        %v5084 = vmul.f32 %v4959, %v5053
        %v5085 = vmul.f32 %v4961, %v5053
        %v5086 = vmul.f32 %v4963, %v5055
        %v5087 = vmul.f32 %v4965, %v5055
        %v5088 = vmul.f32 %v4967, %v5057
        %v5089 = vmul.f32 %v4969, %v5057
        %v5090 = vmul.f32 %v4971, %v5059
        %v5091 = vmul.f32 %v4973, %v5059
        %v5092 = vmul.f32 %v4975, %v5061
        %v5093 = vmul.f32 %v4977, %v5061
        %v5094 = vmul.f32 %v4979, %v5063
        %v5095 = vmul.f32 %v4981, %v5063
        %v5096 = vmul.f32 %v4983, %v5065
        %v5097 = vmul.f32 %v4985, %v5065
        %v5098 = vsub.f32 %v5066, %v2463
        %v5099 = vsub.f32 %v5067, %v2464
        %v5100 = vsub.f32 %v5068, %v2465
        %v5101 = vsub.f32 %v5069, %v2466
        %v5102 = vsub.f32 %v5070, %v2467
        %v5103 = vsub.f32 %v5071, %v2468
        %v5104 = vsub.f32 %v5072, %v2469
        %v5105 = vsub.f32 %v5073, %v2470
        %v5106 = vsub.f32 %v5074, %v2471
        %v5107 = vsub.f32 %v5075, %v2472
        %v5108 = vsub.f32 %v5076, %v2473
        %v5109 = vsub.f32 %v5077, %v2474
        %v5110 = vsub.f32 %v5078, %v2475
        %v5111 = vsub.f32 %v5079, %v2476
        %v5112 = vsub.f32 %v5080, %v2477
        %v5113 = vsub.f32 %v5081, %v2478
        %v5114 = vsub.f32 %v5082, %v2479
        %v5115 = vsub.f32 %v5083, %v2480
        %v5116 = vsub.f32 %v5084, %v2481
        %v5117 = vsub.f32 %v5085, %v2482
        %v5118 = vsub.f32 %v5086, %v2483
        %v5119 = vsub.f32 %v5087, %v2484
        %v5120 = vsub.f32 %v5088, %v2485
        %v5121 = vsub.f32 %v5089, %v2486
        %v5122 = vsub.f32 %v5090, %v2487
        %v5123 = vsub.f32 %v5091, %v2488
        %v5124 = vsub.f32 %v5092, %v2489
        %v5125 = vsub.f32 %v5093, %v2490
        %v5126 = vsub.f32 %v5094, %v2491
        %v5127 = vsub.f32 %v5095, %v2492
        %v5128 = vsub.f32 %v5096, %v2493
        %v5129 = vsub.f32 %v5097, %v2494
        %v5130 = vmul.f32 %v5098, %v5098
        %v5131 = vmul.f32 %v5099, %v5099
        %v5132 = vmul.f32 %v5100, %v5100
        %v5133 = vmul.f32 %v5101, %v5101
        %v5134 = vmul.f32 %v5102, %v5102
        %v5135 = vmul.f32 %v5103, %v5103
        %v5136 = vmul.f32 %v5104, %v5104
        %v5137 = vmul.f32 %v5105, %v5105
        %v5138 = vmul.f32 %v5106, %v5106
        %v5139 = vmul.f32 %v5107, %v5107
        %v5140 = vmul.f32 %v5108, %v5108
        %v5141 = vmul.f32 %v5109, %v5109
        %v5142 = vmul.f32 %v5110, %v5110
        %v5143 = vmul.f32 %v5111, %v5111
        %v5144 = vmul.f32 %v5112, %v5112
        %v5145 = vmul.f32 %v5113, %v5113
        %v5146 = vmul.f32 %v5114, %v5114
        %v5147 = vmul.f32 %v5115, %v5115
        %v5148 = vmul.f32 %v5116, %v5116
        %v5149 = vmul.f32 %v5117, %v5117
        %v5150 = vmul.f32 %v5118, %v5118
        %v5151 = vmul.f32 %v5119, %v5119
        %v5152 = vmul.f32 %v5120, %v5120
        %v5153 = vmul.f32 %v5121, %v5121
        %v5154 = vmul.f32 %v5122, %v5122
        %v5155 = vmul.f32 %v5123, %v5123
        %v5156 = vmul.f32 %v5124, %v5124
        %v5157 = vmul.f32 %v5125, %v5125
        %v5158 = vmul.f32 %v5126, %v5126
        %v5159 = vmul.f32 %v5127, %v5127
        %v5160 = vmul.f32 %v5128, %v5128
        %v5161 = vmul.f32 %v5129, %v5129
        %v5162 = vadd.f32 %v5130, %v5131
        %v5163 = vadd.f32 %v5162, %v5132
        %v5164 = vadd.f32 %v5163, %v5133
        %v5165 = vadd.f32 %v5164, %v5134
        %v5166 = vadd.f32 %v5165, %v5135
        %v5167 = vadd.f32 %v5166, %v5136
        %v5168 = vadd.f32 %v5167, %v5137
        %v5169 = vadd.f32 %v5168, %v5138
        %v5170 = vadd.f32 %v5169, %v5139
        %v5171 = vadd.f32 %v5170, %v5140
        %v5172 = vadd.f32 %v5171, %v5141
        %v5173 = vadd.f32 %v5172, %v5142
        %v5174 = vadd.f32 %v5173, %v5143
        %v5175 = vadd.f32 %v5174, %v5144
        %v5176 = vadd.f32 %v5175, %v5145
        %v5177 = vadd.f32 %v5176, %v5146
        %v5178 = vadd.f32 %v5177, %v5147
        %v5179 = vadd.f32 %v5178, %v5148
        %v5180 = vadd.f32 %v5179, %v5149
        %v5181 = vadd.f32 %v5180, %v5150
        %v5182 = vadd.f32 %v5181, %v5151
        %v5183 = vadd.f32 %v5182, %v5152
        %v5184 = vadd.f32 %v5183, %v5153
        %v5185 = vadd.f32 %v5184, %v5154
        %v5186 = vadd.f32 %v5185, %v5155
        %v5187 = vadd.f32 %v5186, %v5156
        %v5188 = vadd.f32 %v5187, %v5157
        %v5189 = vadd.f32 %v5188, %v5158
        %v5190 = vadd.f32 %v5189, %v5159
        %v5191 = vadd.f32 %v5190, %v5160
        %v5192 = vadd.f32 %v5191, %v5161
        %5193 = vadd.xlane.f32.xlu0 %v5192
        %v5194 = vpop.xlane.xlu0 %5193
        %v5195 = vrot.slane %v5194, 4
        %v5196 = vadd.f32 %v5194, %v5195
        %v5197 = vrot.slane %v5196, 2
        %v5198 = vadd.f32 %v5196, %v5197
        %v5199 = vrot.slane %v5198, 1
        %v5200 = vadd.f32 %v5198, %v5199
        %s5201 = vtos %v5200
        %s5202 = sadd.f32 %s4137, %s5201
        %v5203 = vpack.c.bf16 %v5068, %v5066
        %v5204 = vpack.c.bf16 %v5069, %v5067
        %v5205 = vpack.c.bf16 %v5072, %v5070
        %v5206 = vpack.c.bf16 %v5073, %v5071
        %v5207 = vpack.c.bf16 %v5076, %v5074
        %v5208 = vpack.c.bf16 %v5077, %v5075
        %v5209 = vpack.c.bf16 %v5080, %v5078
        %v5210 = vpack.c.bf16 %v5081, %v5079
        %v5211 = vpack.c.bf16 %v5084, %v5082
        %v5212 = vpack.c.bf16 %v5085, %v5083
        %v5213 = vpack.c.bf16 %v5088, %v5086
        %v5214 = vpack.c.bf16 %v5089, %v5087
        %v5215 = vpack.c.bf16 %v5092, %v5090
        %v5216 = vpack.c.bf16 %v5093, %v5091
        %v5217 = vpack.c.bf16 %v5096, %v5094
        %v5218 = vpack.c.bf16 %v5097, %v5095
        %5219 = vrot.lane.b32.xlu0 %v3371, 64
        %v5220 = vpop.permute.xlu0 %5219
        %5221 = vrot.lane.b32.xlu0 %v3372, 64
        %v5222 = vpop.permute.xlu0 %5221
        %5223 = vrot.lane.b32.xlu0 %v3373, 64
        %v5224 = vpop.permute.xlu0 %5223
        %5225 = vrot.lane.b32.xlu0 %v3374, 64
        %v5226 = vpop.permute.xlu0 %5225
        %5227 = vrot.lane.b32.xlu0 %v3375, 64
        %v5228 = vpop.permute.xlu0 %5227
        %5229 = vrot.lane.b32.xlu0 %v3376, 64
        %v5230 = vpop.permute.xlu0 %5229
        %5231 = vrot.lane.b32.xlu0 %v3377, 64
        %v5232 = vpop.permute.xlu0 %5231
        %5233 = vrot.lane.b32.xlu0 %v3378, 64
        %v5234 = vpop.permute.xlu0 %5233
        %5235 = vrot.lane.b32.xlu0 %v3379, 64
        %v5236 = vpop.permute.xlu0 %5235
        %5237 = vrot.lane.b32.xlu0 %v3380, 64
        %v5238 = vpop.permute.xlu0 %5237
        %5239 = vrot.lane.b32.xlu0 %v3381, 64
        %v5240 = vpop.permute.xlu0 %5239
        %5241 = vrot.lane.b32.xlu0 %v3382, 64
        %v5242 = vpop.permute.xlu0 %5241
        %5243 = vrot.lane.b32.xlu0 %v3383, 64
        %v5244 = vpop.permute.xlu0 %5243
        %5245 = vrot.lane.b32.xlu0 %v3384, 64
        %v5246 = vpop.permute.xlu0 %5245
        %5247 = vrot.lane.b32.xlu0 %v3385, 64
        %v5248 = vpop.permute.xlu0 %5247
        %5249 = vrot.lane.b32.xlu0 %v3386, 64
        %v5250 = vpop.permute.xlu0 %5249
        %5267 = vmatprep.subr.bf16.mxu0 0
        %5268 = vmatpush1.bf16.msra.mxu0 %v5234
        %5269 = vmatprep.subr.bf16.mxu0 0
        %5270 = vmatpush1.bf16.msra.mxu0 %v5232
        %5271 = vmatprep.subr.bf16.mxu0 0
        %5272 = vmatpush1.bf16.msra.mxu0 %v5230
        %5273 = vmatprep.subr.bf16.mxu0 0
        %5274 = vmatpush1.bf16.msra.mxu0 %v5228
        %5275 = vmatprep.subr.bf16.mxu0 0
        %5276 = vmatpush1.bf16.msra.mxu0 %v5226
        %5277 = vmatprep.subr.bf16.mxu0 0
        %5278 = vmatpush1.bf16.msra.mxu0 %v5224
        %5279 = vmatprep.subr.bf16.mxu0 0
        %5280 = vmatpush1.bf16.msra.mxu0 %v5222
        %5281 = vmatprep.subr.bf16.mxu0 0
        %5282 = vmatpush1.bf16.msra.mxu0 %v5220
        %5283 = vmatprep.subr.bf16.mxu0 0
        %5284 = vmatpush2.bf16.msra.mxu0 %v5250
        %5285 = vmatprep.subr.bf16.mxu0 0
        %5286 = vmatpush2.bf16.msra.mxu0 %v5248
        %5287 = vmatprep.subr.bf16.mxu0 0
        %5288 = vmatpush2.bf16.msra.mxu0 %v5246
        %5289 = vmatprep.subr.bf16.mxu0 0
        %5290 = vmatpush2.bf16.msra.mxu0 %v5244
        %5291 = vmatprep.subr.bf16.mxu0 0
        %5292 = vmatpush2.bf16.msra.mxu0 %v5242
        %5293 = vmatprep.subr.bf16.mxu0 0
        %5294 = vmatpush2.bf16.msra.mxu0 %v5240
        %5295 = vmatprep.subr.bf16.mxu0 0
        %5296 = vmatpush2.bf16.msra.mxu0 %v5238
        %5297 = vmatprep.subr.bf16.mxu0 0
        %5298 = vmatpush2.bf16.msra.mxu0 %v5236
        %5299 = vmatprep.mubr.bf16.mxu0 %v5204
        %5300 = vmatmul.mubr.bf16.gmra.mxu0 %v5203
        %v5301 = vpop.f32.mrf.mxu0
        %v5302 = vadd.f32 0.0, %v5301
        %v5303 = vpop.f32.mrf.mxu0
        %v5304 = vpop.f32.mrf.mxu0
        %v5305 = vadd.f32 0.0, %v5304
        %v5306 = vpop.f32.mrf.mxu0
        %5307 = vmatprep.mubr.bf16.mxu0 %v5206
        %5308 = vmatmul.mubr.bf16.gmra.mxu0 %v5205
        %v5309 = vpop.f32.mrf.mxu0
        %v5310 = vadd.f32 0.0, %v5309
        %v5311 = vpop.f32.mrf.mxu0
        %v5312 = vpop.f32.mrf.mxu0
        %v5313 = vadd.f32 0.0, %v5312
        %v5314 = vpop.f32.mrf.mxu0
        %5315 = vmatprep.mubr.bf16.mxu0 %v5208
        %5316 = vmatmul.mubr.bf16.gmra.mxu0 %v5207
        %v5317 = vpop.f32.mrf.mxu0
        %v5318 = vadd.f32 0.0, %v5317
        %v5319 = vpop.f32.mrf.mxu0
        %v5320 = vpop.f32.mrf.mxu0
        %v5321 = vadd.f32 0.0, %v5320
        %v5322 = vpop.f32.mrf.mxu0
        %5323 = vmatprep.mubr.bf16.mxu0 %v5210
        %5324 = vmatmul.mubr.bf16.gmra.mxu0 %v5209
        %v5325 = vpop.f32.mrf.mxu0
        %v5326 = vadd.f32 0.0, %v5325
        %v5327 = vpop.f32.mrf.mxu0
        %v5328 = vpop.f32.mrf.mxu0
        %v5329 = vadd.f32 0.0, %v5328
        %v5330 = vpop.f32.mrf.mxu0
        %5331 = vmatprep.mubr.bf16.mxu0 %v5212
        %5332 = vmatmul.mubr.bf16.gmra.mxu0 %v5211
        %v5333 = vpop.f32.mrf.mxu0
        %v5334 = vadd.f32 0.0, %v5333
        %v5335 = vpop.f32.mrf.mxu0
        %v5336 = vpop.f32.mrf.mxu0
        %v5337 = vadd.f32 0.0, %v5336
        %v5338 = vpop.f32.mrf.mxu0
        %5339 = vmatprep.mubr.bf16.mxu0 %v5214
        %5340 = vmatmul.mubr.bf16.gmra.mxu0 %v5213
        %v5341 = vpop.f32.mrf.mxu0
        %v5342 = vadd.f32 0.0, %v5341
        %v5343 = vpop.f32.mrf.mxu0
        %v5344 = vpop.f32.mrf.mxu0
        %v5345 = vadd.f32 0.0, %v5344
        %v5346 = vpop.f32.mrf.mxu0
        %5347 = vmatprep.mubr.bf16.mxu0 %v5216
        %5348 = vmatmul.mubr.bf16.gmra.mxu0 %v5215
        %v5349 = vpop.f32.mrf.mxu0
        %v5350 = vadd.f32 0.0, %v5349
        %v5351 = vpop.f32.mrf.mxu0
        %v5352 = vpop.f32.mrf.mxu0
        %v5353 = vadd.f32 0.0, %v5352
        %v5354 = vpop.f32.mrf.mxu0
        %5355 = vmatprep.mubr.bf16.mxu0 %v5218
        %5356 = vmatmul.mubr.bf16.gmra.mxu0 %v5217
        %v5357 = vpop.f32.mrf.mxu0
        %v5358 = vadd.f32 0.0, %v5357
        %v5359 = vpop.f32.mrf.mxu0
        %v5360 = vpop.f32.mrf.mxu0
        %v5361 = vadd.f32 0.0, %v5360
        %v5362 = vpop.f32.mrf.mxu0
        %5363 = vdwg.mxu0
        %v5364 = vpack.c.bf16 %v5305, %v5302
        %v5365 = vpack.c.bf16 %v5313, %v5310
        %v5366 = vpack.c.bf16 %v5321, %v5318
        %v5367 = vpack.c.bf16 %v5329, %v5326
        %v5368 = vpack.c.bf16 %v5337, %v5334
        %v5369 = vpack.c.bf16 %v5345, %v5342
        %v5370 = vpack.c.bf16 %v5353, %v5350
        %v5371 = vpack.c.bf16 %v5361, %v5358
        %v5372 = vld [vmem:[#allocation14 + $0x20] sm:$0xf]
        %v5373 = vld [vmem:[#allocation14 + $0x24] sm:$0xf]
        %v5374 = vld [vmem:[#allocation14 + $0x28] sm:$0xf]
        %v5375 = vld [vmem:[#allocation14 + $0x2c] sm:$0xf]
        %v5380 = vunpack.c.l.b16 %v5372
        %v5381 = vunpack.c.l.b16 %v5373
        %v5382 = vunpack.c.l.b16 %v5374
        %v5383 = vunpack.c.l.b16 %v5375
        %v5384 = vpack.c.b16 %v5381, %v5380
        %v5385 = vpack.c.b16 %v5383, %v5382
        %v5389 = vsel %vm2701, %v5364, 0
        %v5392 = vsel %vm2701, %v5365, 0
        %v5395 = vsel %vm2701, %v5366, 0
        %v5398 = vsel %vm2701, %v5367, 0
        %v5401 = vsel %vm2701, %v5368, 0
        %v5404 = vsel %vm2701, %v5369, 0
        %v5407 = vsel %vm2701, %v5370, 0
        %v5410 = vsel %vm2701, %v5371, 0
        %5412 = vmatprep.subr.bf16.mxu0 0
        %5413 = vmatpush1.bf16.msra.mxu0 0
        %5414 = vmatprep.subr.bf16.mxu0 0
        %5415 = vmatpush1.bf16.msra.mxu0 0
        %5416 = vmatprep.subr.bf16.mxu0 0
        %5417 = vmatpush1.bf16.msra.mxu0 0
        %5418 = vmatprep.subr.bf16.mxu0 0
        %5419 = vmatpush1.bf16.msra.mxu0 0
        %5420 = vmatprep.subr.bf16.mxu0 0
        %5421 = vmatpush1.bf16.msra.mxu0 0
        %5422 = vmatprep.subr.bf16.mxu0 0
        %5423 = vmatpush1.bf16.msra.mxu0 0
        %5424 = vmatprep.subr.bf16.mxu0 0
        %5425 = vmatpush1.bf16.msra.mxu0 %v5385
        %5426 = vmatprep.subr.bf16.mxu0 0
        %5427 = vmatpush1.bf16.msra.mxu0 %v5384
        %5428 = vmatprep.subr.bf16.mxu0 0
        %5429 = vmatpush2.bf16.msra.mxu0 0
        %5430 = vmatprep.subr.bf16.mxu0 0
        %5431 = vmatpush2.bf16.msra.mxu0 0
        %5432 = vmatprep.subr.bf16.mxu0 0
        %5433 = vmatpush2.bf16.msra.mxu0 0
        %5434 = vmatprep.subr.bf16.mxu0 0
        %5435 = vmatpush2.bf16.msra.mxu0 0
        %5436 = vmatprep.subr.bf16.mxu0 0
        %5437 = vmatpush2.bf16.msra.mxu0 0
        %5438 = vmatprep.subr.bf16.mxu0 0
        %5439 = vmatpush2.bf16.msra.mxu0 0
        %5440 = vmatprep.subr.bf16.mxu0 0
        %5441 = vmatpush2.bf16.msra.mxu0 0
        %5442 = vmatprep.subr.bf16.mxu0 0
        %5443 = vmatpush2.bf16.msra.mxu0 0
        %5444 = vmatprep.mubr.bf16.mxu0 0
        %5445 = vmatmul.mubr.bf16.gmra.mxu0 %v5389
        %v5446 = vpop.f32.mrf.mxu0
        %v5447 = vadd.f32 0.0, %v5446
        %v5448 = vpop.f32.mrf.mxu0
        %v5449 = vpop.f32.mrf.mxu0
        %v5450 = vadd.f32 0.0, %v5449
        %v5451 = vpop.f32.mrf.mxu0
        %5452 = vmatprep.mubr.bf16.mxu0 0
        %5453 = vmatmul.mubr.bf16.gmra.mxu0 %v5392
        %v5454 = vpop.f32.mrf.mxu0
        %v5455 = vadd.f32 0.0, %v5454
        %v5456 = vpop.f32.mrf.mxu0
        %v5457 = vpop.f32.mrf.mxu0
        %v5458 = vadd.f32 0.0, %v5457
        %v5459 = vpop.f32.mrf.mxu0
        %5460 = vmatprep.mubr.bf16.mxu0 0
        %5461 = vmatmul.mubr.bf16.gmra.mxu0 %v5395
        %v5462 = vpop.f32.mrf.mxu0
        %v5463 = vadd.f32 0.0, %v5462
        %v5464 = vpop.f32.mrf.mxu0
        %v5465 = vpop.f32.mrf.mxu0
        %v5466 = vadd.f32 0.0, %v5465
        %v5467 = vpop.f32.mrf.mxu0
        %5468 = vmatprep.mubr.bf16.mxu0 0
        %5469 = vmatmul.mubr.bf16.gmra.mxu0 %v5398
        %v5470 = vpop.f32.mrf.mxu0
        %v5471 = vadd.f32 0.0, %v5470
        %v5472 = vpop.f32.mrf.mxu0
        %v5473 = vpop.f32.mrf.mxu0
        %v5474 = vadd.f32 0.0, %v5473
        %v5475 = vpop.f32.mrf.mxu0
        %5476 = vmatprep.mubr.bf16.mxu0 0
        %5477 = vmatmul.mubr.bf16.gmra.mxu0 %v5401
        %v5478 = vpop.f32.mrf.mxu0
        %v5479 = vadd.f32 0.0, %v5478
        %v5480 = vpop.f32.mrf.mxu0
        %v5481 = vpop.f32.mrf.mxu0
        %v5482 = vadd.f32 0.0, %v5481
        %v5483 = vpop.f32.mrf.mxu0
        %5484 = vmatprep.mubr.bf16.mxu0 0
        %5485 = vmatmul.mubr.bf16.gmra.mxu0 %v5404
        %v5486 = vpop.f32.mrf.mxu0
        %v5487 = vadd.f32 0.0, %v5486
        %v5488 = vpop.f32.mrf.mxu0
        %v5489 = vpop.f32.mrf.mxu0
        %v5490 = vadd.f32 0.0, %v5489
        %v5491 = vpop.f32.mrf.mxu0
        %5492 = vmatprep.mubr.bf16.mxu0 0
        %5493 = vmatmul.mubr.bf16.gmra.mxu0 %v5407
        %v5494 = vpop.f32.mrf.mxu0
        %v5495 = vadd.f32 0.0, %v5494
        %v5496 = vpop.f32.mrf.mxu0
        %v5497 = vpop.f32.mrf.mxu0
        %v5498 = vadd.f32 0.0, %v5497
        %v5499 = vpop.f32.mrf.mxu0
        %5500 = vmatprep.mubr.bf16.mxu0 0
        %5501 = vmatmul.mubr.bf16.gmra.mxu0 %v5410
        %v5502 = vpop.f32.mrf.mxu0
        %v5503 = vadd.f32 0.0, %v5502
        %v5504 = vpop.f32.mrf.mxu0
        %v5505 = vpop.f32.mrf.mxu0
        %v5506 = vadd.f32 0.0, %v5505
        %v5507 = vpop.f32.mrf.mxu0
        %5508 = vdwg.mxu0
        %v5509 = vadd.f32 %v4515, %v5447
        %v5510 = vadd.f32 %v4518, %v5450
        %v5511 = vadd.f32 %v4523, %v5455
        %v5512 = vadd.f32 %v4526, %v5458
        %v5513 = vadd.f32 %v4531, %v5463
        %v5514 = vadd.f32 %v4534, %v5466
        %v5515 = vadd.f32 %v4539, %v5471
        %v5516 = vadd.f32 %v4542, %v5474
        %v5517 = vadd.f32 %v4547, %v5479
        %v5518 = vadd.f32 %v4550, %v5482
        %v5519 = vadd.f32 %v4555, %v5487
        %v5520 = vadd.f32 %v4558, %v5490
        %v5521 = vadd.f32 %v4563, %v5495
        %v5522 = vadd.f32 %v4566, %v5498
        %v5523 = vadd.f32 %v4571, %v5503
        %v5524 = vadd.f32 %v4574, %v5506
        %5525 = vrot.lane.b32.xlu0 %v2613, 32
        %v5526 = vpop.permute.xlu0 %5525
        %5527 = vrot.lane.b32.xlu0 %v2614, 32
        %v5528 = vpop.permute.xlu0 %5527
        %5529 = vrot.lane.b32.xlu0 %v2615, 32
        %v5530 = vpop.permute.xlu0 %5529
        %5531 = vrot.lane.b32.xlu0 %v2616, 32
        %v5532 = vpop.permute.xlu0 %5531
        %5533 = vrot.lane.b32.xlu0 %v2617, 32
        %v5534 = vpop.permute.xlu0 %5533
        %5535 = vrot.lane.b32.xlu0 %v2618, 32
        %v5536 = vpop.permute.xlu0 %5535
        %5537 = vrot.lane.b32.xlu0 %v2619, 32
        %v5538 = vpop.permute.xlu0 %5537
        %5539 = vrot.lane.b32.xlu0 %v2620, 32
        %v5540 = vpop.permute.xlu0 %5539
        %5541 = vrot.lane.b32.xlu0 %v2685, 32
        %v5542 = vpop.permute.xlu0 %5541
        %5543 = vrot.lane.b32.xlu0 %v2686, 32
        %v5544 = vpop.permute.xlu0 %5543
        %5545 = vrot.lane.b32.xlu0 %v2687, 32
        %v5546 = vpop.permute.xlu0 %5545
        %5547 = vrot.lane.b32.xlu0 %v2688, 32
        %v5548 = vpop.permute.xlu0 %5547
        %5549 = vrot.lane.b32.xlu0 %v2689, 32
        %v5550 = vpop.permute.xlu0 %5549
        %5551 = vrot.lane.b32.xlu0 %v2690, 32
        %v5552 = vpop.permute.xlu0 %5551
        %5553 = vrot.lane.b32.xlu0 %v2691, 32
        %v5554 = vpop.permute.xlu0 %5553
        %5555 = vrot.lane.b32.xlu0 %v2692, 32
        %v5556 = vpop.permute.xlu0 %5555
        %5557 = vrot.lane.b32.xlu0 %v2693, 32
        %v5558 = vpop.permute.xlu0 %5557
        %5559 = vrot.lane.b32.xlu0 %v2694, 32
        %v5560 = vpop.permute.xlu0 %5559
        %5561 = vrot.lane.b32.xlu0 %v2695, 32
        %v5562 = vpop.permute.xlu0 %5561
        %5563 = vrot.lane.b32.xlu0 %v2696, 32
        %v5564 = vpop.permute.xlu0 %5563
        %5565 = vrot.lane.b32.xlu0 %v2697, 32
        %v5566 = vpop.permute.xlu0 %5565
        %5567 = vrot.lane.b32.xlu0 %v2698, 32
        %v5568 = vpop.permute.xlu0 %5567
        %5569 = vrot.lane.b32.xlu0 %v2699, 32
        %v5570 = vpop.permute.xlu0 %5569
        %5571 = vrot.lane.b32.xlu0 %v2700, 32
        %v5572 = vpop.permute.xlu0 %5571
        %v5574 = vsel %vm2701, %v5526, 0
        %v5577 = vsel %vm2701, %v5528, 0
        %v5580 = vsel %vm2701, %v5530, 0
        %v5583 = vsel %vm2701, %v5532, 0
        %v5586 = vsel %vm2701, %v5534, 0
        %v5589 = vsel %vm2701, %v5536, 0
        %v5592 = vsel %vm2701, %v5538, 0
        %v5595 = vsel %vm2701, %v5540, 0
        %v5598 = vsel %vm2701, %v5542, 0
        %v5601 = vsel %vm2701, %v5544, 0
        %v5604 = vsel %vm2701, %v5546, 0
        %v5607 = vsel %vm2701, %v5548, 0
        %v5610 = vsel %vm2701, %v5550, 0
        %v5613 = vsel %vm2701, %v5552, 0
        %v5616 = vsel %vm2701, %v5554, 0
        %v5619 = vsel %vm2701, %v5556, 0
        %v5622 = vsel %vm2701, %v5558, 0
        %v5625 = vsel %vm2701, %v5560, 0
        %v5628 = vsel %vm2701, %v5562, 0
        %v5631 = vsel %vm2701, %v5564, 0
        %v5634 = vsel %vm2701, %v5566, 0
        %v5637 = vsel %vm2701, %v5568, 0
        %v5640 = vsel %vm2701, %v5570, 0
        %v5643 = vsel %vm2701, %v5572, 0
        %5645 = vmatprep.subr.bf16.mxu0 0
        %5646 = vmatpush1.bf16.xpose.msra.mxu0 %v5619
        %5647 = vmatprep.subr.bf16.mxu0 0
        %5648 = vmatpush1.bf16.xpose.msra.mxu0 %v5616
        %5649 = vmatprep.subr.bf16.mxu0 0
        %5650 = vmatpush1.bf16.xpose.msra.mxu0 %v5613
        %5651 = vmatprep.subr.bf16.mxu0 0
        %5652 = vmatpush1.bf16.xpose.msra.mxu0 %v5610
        %5653 = vmatprep.subr.bf16.mxu0 0
        %5654 = vmatpush1.bf16.xpose.msra.mxu0 %v5607
        %5655 = vmatprep.subr.bf16.mxu0 0
        %5656 = vmatpush1.bf16.xpose.msra.mxu0 %v5604
        %5657 = vmatprep.subr.bf16.mxu0 0
        %5658 = vmatpush1.bf16.xpose.msra.mxu0 %v5601
        %5659 = vmatprep.subr.bf16.mxu0 0
        %5660 = vmatpush1.bf16.xpose.msra.mxu0 %v5598
        %5661 = vmatprep.subr.bf16.mxu0 0
        %5662 = vmatpush2.bf16.xpose.msra.mxu0 %v5643
        %5663 = vmatprep.subr.bf16.mxu0 0
        %5664 = vmatpush2.bf16.xpose.msra.mxu0 %v5640
        %5665 = vmatprep.subr.bf16.mxu0 0
        %5666 = vmatpush2.bf16.xpose.msra.mxu0 %v5637
        %5667 = vmatprep.subr.bf16.mxu0 0
        %5668 = vmatpush2.bf16.xpose.msra.mxu0 %v5634
        %5669 = vmatprep.subr.bf16.mxu0 0
        %5670 = vmatpush2.bf16.xpose.msra.mxu0 %v5631
        %5671 = vmatprep.subr.bf16.mxu0 0
        %5672 = vmatpush2.bf16.xpose.msra.mxu0 %v5628
        %5673 = vmatprep.subr.bf16.mxu0 0
        %5674 = vmatpush2.bf16.xpose.msra.mxu0 %v5625
        %5675 = vmatprep.subr.bf16.mxu0 0
        %5676 = vmatpush2.bf16.xpose.msra.mxu0 %v5622
        %5677 = vmatprep.mubr.bf16.mxu0 0
        %5678 = vmatmul.mubr.bf16.gmra.mxu0 %v5574
        %v5679 = vpop.f32.mrf.mxu0
        %v5680 = vadd.f32 %v2463, %v5679
        %v5681 = vpop.f32.mrf.mxu0
        %v5682 = vadd.f32 %v2464, %v5681
        %v5683 = vpop.f32.mrf.mxu0
        %v5684 = vadd.f32 %v2465, %v5683
        %v5685 = vpop.f32.mrf.mxu0
        %v5686 = vadd.f32 %v2466, %v5685
        %5687 = vmatprep.mubr.bf16.mxu0 0
        %5688 = vmatmul.mubr.bf16.gmra.mxu0 %v5577
        %v5689 = vpop.f32.mrf.mxu0
        %v5690 = vadd.f32 %v2467, %v5689
        %v5691 = vpop.f32.mrf.mxu0
        %v5692 = vadd.f32 %v2468, %v5691
        %v5693 = vpop.f32.mrf.mxu0
        %v5694 = vadd.f32 %v2469, %v5693
        %v5695 = vpop.f32.mrf.mxu0
        %v5696 = vadd.f32 %v2470, %v5695
        %5697 = vmatprep.mubr.bf16.mxu0 0
        %5698 = vmatmul.mubr.bf16.gmra.mxu0 %v5580
        %v5699 = vpop.f32.mrf.mxu0
        %v5700 = vadd.f32 %v2471, %v5699
        %v5701 = vpop.f32.mrf.mxu0
        %v5702 = vadd.f32 %v2472, %v5701
        %v5703 = vpop.f32.mrf.mxu0
        %v5704 = vadd.f32 %v2473, %v5703
        %v5705 = vpop.f32.mrf.mxu0
        %v5706 = vadd.f32 %v2474, %v5705
        %5707 = vmatprep.mubr.bf16.mxu0 0
        %5708 = vmatmul.mubr.bf16.gmra.mxu0 %v5583
        %v5709 = vpop.f32.mrf.mxu0
        %v5710 = vadd.f32 %v2475, %v5709
        %v5711 = vpop.f32.mrf.mxu0
        %v5712 = vadd.f32 %v2476, %v5711
        %v5713 = vpop.f32.mrf.mxu0
        %v5714 = vadd.f32 %v2477, %v5713
        %v5715 = vpop.f32.mrf.mxu0
        %v5716 = vadd.f32 %v2478, %v5715
        %5717 = vmatprep.mubr.bf16.mxu0 0
        %5718 = vmatmul.mubr.bf16.gmra.mxu0 %v5586
        %v5719 = vpop.f32.mrf.mxu0
        %v5720 = vadd.f32 %v2479, %v5719
        %v5721 = vpop.f32.mrf.mxu0
        %v5722 = vadd.f32 %v2480, %v5721
        %v5723 = vpop.f32.mrf.mxu0
        %v5724 = vadd.f32 %v2481, %v5723
        %v5725 = vpop.f32.mrf.mxu0
        %v5726 = vadd.f32 %v2482, %v5725
        %5727 = vmatprep.mubr.bf16.mxu0 0
        %5728 = vmatmul.mubr.bf16.gmra.mxu0 %v5589
        %v5729 = vpop.f32.mrf.mxu0
        %v5730 = vadd.f32 %v2483, %v5729
        %v5731 = vpop.f32.mrf.mxu0
        %v5732 = vadd.f32 %v2484, %v5731
        %v5733 = vpop.f32.mrf.mxu0
        %v5734 = vadd.f32 %v2485, %v5733
        %v5735 = vpop.f32.mrf.mxu0
        %v5736 = vadd.f32 %v2486, %v5735
        %5737 = vmatprep.mubr.bf16.mxu0 0
        %5738 = vmatmul.mubr.bf16.gmra.mxu0 %v5592
        %v5739 = vpop.f32.mrf.mxu0
        %v5740 = vadd.f32 %v2487, %v5739
        %v5741 = vpop.f32.mrf.mxu0
        %v5742 = vadd.f32 %v2488, %v5741
        %v5743 = vpop.f32.mrf.mxu0
        %v5744 = vadd.f32 %v2489, %v5743
        %v5745 = vpop.f32.mrf.mxu0
        %v5746 = vadd.f32 %v2490, %v5745
        %5747 = vmatprep.mubr.bf16.mxu0 0
        %5748 = vmatmul.mubr.bf16.gmra.mxu0 %v5595
        %v5749 = vpop.f32.mrf.mxu0
        %v5750 = vadd.f32 %v2491, %v5749
        %v5751 = vpop.f32.mrf.mxu0
        %v5752 = vadd.f32 %v2492, %v5751
        %v5753 = vpop.f32.mrf.mxu0
        %v5754 = vadd.f32 %v2493, %v5753
        %v5755 = vpop.f32.mrf.mxu0
        %v5756 = vadd.f32 %v2494, %v5755
        %5757 = vdwg.mxu0
        %v5758 = vsel %vm2896, %v5680, -1e+09
        %v5759 = vsel %vm2897, %v5682, -1e+09
        %v5760 = vsel %vm2896, %v5684, -1e+09
        %v5761 = vsel %vm2897, %v5686, -1e+09
        %v5762 = vsel %vm2896, %v5690, -1e+09
        %v5763 = vsel %vm2897, %v5692, -1e+09
        %v5764 = vsel %vm2896, %v5694, -1e+09
        %v5765 = vsel %vm2897, %v5696, -1e+09
        %v5766 = vsel %vm2896, %v5700, -1e+09
        %v5767 = vsel %vm2897, %v5702, -1e+09
        %v5768 = vsel %vm2896, %v5704, -1e+09
        %v5769 = vsel %vm2897, %v5706, -1e+09
        %v5770 = vsel %vm2896, %v5710, -1e+09
        %v5771 = vsel %vm2897, %v5712, -1e+09
        %v5772 = vsel %vm2896, %v5714, -1e+09
        %v5773 = vsel %vm2897, %v5716, -1e+09
        %v5774 = vsel %vm2896, %v5720, -1e+09
        %v5775 = vsel %vm2897, %v5722, -1e+09
        %v5776 = vsel %vm2896, %v5724, -1e+09
        %v5777 = vsel %vm2897, %v5726, -1e+09
        %v5778 = vsel %vm2896, %v5730, -1e+09
        %v5779 = vsel %vm2897, %v5732, -1e+09
        %v5780 = vsel %vm2896, %v5734, -1e+09
        %v5781 = vsel %vm2897, %v5736, -1e+09
        %v5782 = vsel %vm2896, %v5740, -1e+09
        %v5783 = vsel %vm2897, %v5742, -1e+09
        %v5784 = vsel %vm2896, %v5744, -1e+09
        %v5785 = vsel %vm2897, %v5746, -1e+09
        %v5786 = vsel %vm2896, %v5750, -1e+09
        %v5787 = vsel %vm2897, %v5752, -1e+09
        %v5788 = vsel %vm2896, %v5754, -1e+09
        %v5789 = vsel %vm2897, %v5756, -1e+09
        %v5790 = vmax.f32 %v5758, %v5759
        %5791 = vmax.xlane.f32.xlu0 %v5790
        %v5792 = vpop.xlane.xlu0 %5791
        %v5793 = vmax.f32 %v5760, %v5761
        %5794 = vmax.xlane.f32.xlu0 %v5793
        %v5795 = vpop.xlane.xlu0 %5794
        %v5796 = vmax.f32 %v5762, %v5763
        %5797 = vmax.xlane.f32.xlu0 %v5796
        %v5798 = vpop.xlane.xlu0 %5797
        %v5799 = vmax.f32 %v5764, %v5765
        %5800 = vmax.xlane.f32.xlu0 %v5799
        %v5801 = vpop.xlane.xlu0 %5800
        %v5802 = vmax.f32 %v5766, %v5767
        %5803 = vmax.xlane.f32.xlu0 %v5802
        %v5804 = vpop.xlane.xlu0 %5803
        %v5805 = vmax.f32 %v5768, %v5769
        %5806 = vmax.xlane.f32.xlu0 %v5805
        %v5807 = vpop.xlane.xlu0 %5806
        %v5808 = vmax.f32 %v5770, %v5771
        %5809 = vmax.xlane.f32.xlu0 %v5808
        %v5810 = vpop.xlane.xlu0 %5809
        %v5811 = vmax.f32 %v5772, %v5773
        %5812 = vmax.xlane.f32.xlu0 %v5811
        %v5813 = vpop.xlane.xlu0 %5812
        %v5814 = vmax.f32 %v5774, %v5775
        %5815 = vmax.xlane.f32.xlu0 %v5814
        %v5816 = vpop.xlane.xlu0 %5815
        %v5817 = vmax.f32 %v5776, %v5777
        %5818 = vmax.xlane.f32.xlu0 %v5817
        %v5819 = vpop.xlane.xlu0 %5818
        %v5820 = vmax.f32 %v5778, %v5779
        %5821 = vmax.xlane.f32.xlu0 %v5820
        %v5822 = vpop.xlane.xlu0 %5821
        %v5823 = vmax.f32 %v5780, %v5781
        %5824 = vmax.xlane.f32.xlu0 %v5823
        %v5825 = vpop.xlane.xlu0 %5824
        %v5826 = vmax.f32 %v5782, %v5783
        %5827 = vmax.xlane.f32.xlu0 %v5826
        %v5828 = vpop.xlane.xlu0 %5827
        %v5829 = vmax.f32 %v5784, %v5785
        %5830 = vmax.xlane.f32.xlu0 %v5829
        %v5831 = vpop.xlane.xlu0 %5830
        %v5832 = vmax.f32 %v5786, %v5787
        %5833 = vmax.xlane.f32.xlu0 %v5832
        %v5834 = vpop.xlane.xlu0 %5833
        %v5835 = vmax.f32 %v5788, %v5789
        %5836 = vmax.xlane.f32.xlu0 %v5835
        %v5837 = vpop.xlane.xlu0 %5836
        %v5838 = vsub.f32 %v5758, %v5792
        %v5839 = vsub.f32 %v5759, %v5792
        %v5840 = vsub.f32 %v5760, %v5795
        %v5841 = vsub.f32 %v5761, %v5795
        %v5842 = vsub.f32 %v5762, %v5798
        %v5843 = vsub.f32 %v5763, %v5798
        %v5844 = vsub.f32 %v5764, %v5801
        %v5845 = vsub.f32 %v5765, %v5801
        %v5846 = vsub.f32 %v5766, %v5804
        %v5847 = vsub.f32 %v5767, %v5804
        %v5848 = vsub.f32 %v5768, %v5807
        %v5849 = vsub.f32 %v5769, %v5807
        %v5850 = vsub.f32 %v5770, %v5810
        %v5851 = vsub.f32 %v5771, %v5810
        %v5852 = vsub.f32 %v5772, %v5813
        %v5853 = vsub.f32 %v5773, %v5813
        %v5854 = vsub.f32 %v5774, %v5816
        %v5855 = vsub.f32 %v5775, %v5816
        %v5856 = vsub.f32 %v5776, %v5819
        %v5857 = vsub.f32 %v5777, %v5819
        %v5858 = vsub.f32 %v5778, %v5822
        %v5859 = vsub.f32 %v5779, %v5822
        %v5860 = vsub.f32 %v5780, %v5825
        %v5861 = vsub.f32 %v5781, %v5825
        %v5862 = vsub.f32 %v5782, %v5828
        %v5863 = vsub.f32 %v5783, %v5828
        %v5864 = vsub.f32 %v5784, %v5831
        %v5865 = vsub.f32 %v5785, %v5831
        %v5866 = vsub.f32 %v5786, %v5834
        %v5867 = vsub.f32 %v5787, %v5834
        %v5868 = vsub.f32 %v5788, %v5837
        %v5869 = vsub.f32 %v5789, %v5837
        %v5870 = vmul.f32 %v5838, 1.442695
        %v5871 = vpow.pop %v5870
        %v5872 = vmul.f32 %v5839, 1.442695
        %v5873 = vpow.pop %v5872
        %v5874 = vmul.f32 %v5840, 1.442695
        %v5875 = vpow.pop %v5874
        %v5876 = vmul.f32 %v5841, 1.442695
        %v5877 = vpow.pop %v5876
        %v5878 = vmul.f32 %v5842, 1.442695
        %v5879 = vpow.pop %v5878
        %v5880 = vmul.f32 %v5843, 1.442695
        %v5881 = vpow.pop %v5880
        %v5882 = vmul.f32 %v5844, 1.442695
        %v5883 = vpow.pop %v5882
        %v5884 = vmul.f32 %v5845, 1.442695
        %v5885 = vpow.pop %v5884
        %v5886 = vmul.f32 %v5846, 1.442695
        %v5887 = vpow.pop %v5886
        %v5888 = vmul.f32 %v5847, 1.442695
        %v5889 = vpow.pop %v5888
        %v5890 = vmul.f32 %v5848, 1.442695
        %v5891 = vpow.pop %v5890
        %v5892 = vmul.f32 %v5849, 1.442695
        %v5893 = vpow.pop %v5892
        %v5894 = vmul.f32 %v5850, 1.442695
        %v5895 = vpow.pop %v5894
        %v5896 = vmul.f32 %v5851, 1.442695
        %v5897 = vpow.pop %v5896
        %v5898 = vmul.f32 %v5852, 1.442695
        %v5899 = vpow.pop %v5898
        %v5900 = vmul.f32 %v5853, 1.442695
        %v5901 = vpow.pop %v5900
        %v5902 = vmul.f32 %v5854, 1.442695
        %v5903 = vpow.pop %v5902
        %v5904 = vmul.f32 %v5855, 1.442695
        %v5905 = vpow.pop %v5904
        %v5906 = vmul.f32 %v5856, 1.442695
        %v5907 = vpow.pop %v5906
        %v5908 = vmul.f32 %v5857, 1.442695
        %v5909 = vpow.pop %v5908
        %v5910 = vmul.f32 %v5858, 1.442695
        %v5911 = vpow.pop %v5910
        %v5912 = vmul.f32 %v5859, 1.442695
        %v5913 = vpow.pop %v5912
        %v5914 = vmul.f32 %v5860, 1.442695
        %v5915 = vpow.pop %v5914
        %v5916 = vmul.f32 %v5861, 1.442695
        %v5917 = vpow.pop %v5916
        %v5918 = vmul.f32 %v5862, 1.442695
        %v5919 = vpow.pop %v5918
        %v5920 = vmul.f32 %v5863, 1.442695
        %v5921 = vpow.pop %v5920
        %v5922 = vmul.f32 %v5864, 1.442695
        %v5923 = vpow.pop %v5922
        %v5924 = vmul.f32 %v5865, 1.442695
        %v5925 = vpow.pop %v5924
        %v5926 = vmul.f32 %v5866, 1.442695
        %v5927 = vpow.pop %v5926
        %v5928 = vmul.f32 %v5867, 1.442695
        %v5929 = vpow.pop %v5928
        %v5930 = vmul.f32 %v5868, 1.442695
        %v5931 = vpow.pop %v5930
        %v5932 = vmul.f32 %v5869, 1.442695
        %v5933 = vpow.pop %v5932
        %v5934 = vadd.f32 %v5871, %v5873
        %5935 = vadd.xlane.f32.xlu0 %v5934
        %v5936 = vpop.xlane.xlu0 %5935
        %v5937 = vadd.f32 %v5875, %v5877
        %5938 = vadd.xlane.f32.xlu0 %v5937
        %v5939 = vpop.xlane.xlu0 %5938
        %v5940 = vadd.f32 %v5879, %v5881
        %5941 = vadd.xlane.f32.xlu0 %v5940
        %v5942 = vpop.xlane.xlu0 %5941
        %v5943 = vadd.f32 %v5883, %v5885
        %5944 = vadd.xlane.f32.xlu0 %v5943
        %v5945 = vpop.xlane.xlu0 %5944
        %v5946 = vadd.f32 %v5887, %v5889
        %5947 = vadd.xlane.f32.xlu0 %v5946
        %v5948 = vpop.xlane.xlu0 %5947
        %v5949 = vadd.f32 %v5891, %v5893
        %5950 = vadd.xlane.f32.xlu0 %v5949
        %v5951 = vpop.xlane.xlu0 %5950
        %v5952 = vadd.f32 %v5895, %v5897
        %5953 = vadd.xlane.f32.xlu0 %v5952
        %v5954 = vpop.xlane.xlu0 %5953
        %v5955 = vadd.f32 %v5899, %v5901
        %5956 = vadd.xlane.f32.xlu0 %v5955
        %v5957 = vpop.xlane.xlu0 %5956
        %v5958 = vadd.f32 %v5903, %v5905
        %5959 = vadd.xlane.f32.xlu0 %v5958
        %v5960 = vpop.xlane.xlu0 %5959
        %v5961 = vadd.f32 %v5907, %v5909
        %5962 = vadd.xlane.f32.xlu0 %v5961
        %v5963 = vpop.xlane.xlu0 %5962
        %v5964 = vadd.f32 %v5911, %v5913
        %5965 = vadd.xlane.f32.xlu0 %v5964
        %v5966 = vpop.xlane.xlu0 %5965
        %v5967 = vadd.f32 %v5915, %v5917
        %5968 = vadd.xlane.f32.xlu0 %v5967
        %v5969 = vpop.xlane.xlu0 %5968
        %v5970 = vadd.f32 %v5919, %v5921
        %5971 = vadd.xlane.f32.xlu0 %v5970
        %v5972 = vpop.xlane.xlu0 %5971
        %v5973 = vadd.f32 %v5923, %v5925
        %5974 = vadd.xlane.f32.xlu0 %v5973
        %v5975 = vpop.xlane.xlu0 %5974
        %v5976 = vadd.f32 %v5927, %v5929
        %5977 = vadd.xlane.f32.xlu0 %v5976
        %v5978 = vpop.xlane.xlu0 %5977
        %v5979 = vadd.f32 %v5931, %v5933
        %5980 = vadd.xlane.f32.xlu0 %v5979
        %v5981 = vpop.xlane.xlu0 %5980
        %v5982 = vrcp.pop %v5936
        %v5983 = vmul.f32 1.0, %v5982
        %v5984 = vrcp.pop %v5939
        %v5985 = vmul.f32 1.0, %v5984
        %v5986 = vrcp.pop %v5942
        %v5987 = vmul.f32 1.0, %v5986
        %v5988 = vrcp.pop %v5945
        %v5989 = vmul.f32 1.0, %v5988
        %v5990 = vrcp.pop %v5948
        %v5991 = vmul.f32 1.0, %v5990
        %v5992 = vrcp.pop %v5951
        %v5993 = vmul.f32 1.0, %v5992
        %v5994 = vrcp.pop %v5954
        %v5995 = vmul.f32 1.0, %v5994
        %v5996 = vrcp.pop %v5957
        %v5997 = vmul.f32 1.0, %v5996
        %v5998 = vrcp.pop %v5960
        %v5999 = vmul.f32 1.0, %v5998
        %v6000 = vrcp.pop %v5963
        %v6001 = vmul.f32 1.0, %v6000
        %v6002 = vrcp.pop %v5966
        %v6003 = vmul.f32 1.0, %v6002
        %v6004 = vrcp.pop %v5969
        %v6005 = vmul.f32 1.0, %v6004
        %v6006 = vrcp.pop %v5972
        %v6007 = vmul.f32 1.0, %v6006
        %v6008 = vrcp.pop %v5975
        %v6009 = vmul.f32 1.0, %v6008
        %v6010 = vrcp.pop %v5978
        %v6011 = vmul.f32 1.0, %v6010
        %v6012 = vrcp.pop %v5981
        %v6013 = vmul.f32 1.0, %v6012
        %v6014 = vmul.f32 %v5871, %v5983
        %v6015 = vmul.f32 %v5873, %v5983
        %v6016 = vmul.f32 %v5875, %v5985
        %v6017 = vmul.f32 %v5877, %v5985
        %v6018 = vmul.f32 %v5879, %v5987
        %v6019 = vmul.f32 %v5881, %v5987
        %v6020 = vmul.f32 %v5883, %v5989
        %v6021 = vmul.f32 %v5885, %v5989
        %v6022 = vmul.f32 %v5887, %v5991
        %v6023 = vmul.f32 %v5889, %v5991
        %v6024 = vmul.f32 %v5891, %v5993
        %v6025 = vmul.f32 %v5893, %v5993
        %v6026 = vmul.f32 %v5895, %v5995
        %v6027 = vmul.f32 %v5897, %v5995
        %v6028 = vmul.f32 %v5899, %v5997
        %v6029 = vmul.f32 %v5901, %v5997
        %v6030 = vmul.f32 %v5903, %v5999
        %v6031 = vmul.f32 %v5905, %v5999
        %v6032 = vmul.f32 %v5907, %v6001
        %v6033 = vmul.f32 %v5909, %v6001
        %v6034 = vmul.f32 %v5911, %v6003
        %v6035 = vmul.f32 %v5913, %v6003
        %v6036 = vmul.f32 %v5915, %v6005
        %v6037 = vmul.f32 %v5917, %v6005
        %v6038 = vmul.f32 %v5919, %v6007
        %v6039 = vmul.f32 %v5921, %v6007
        %v6040 = vmul.f32 %v5923, %v6009
        %v6041 = vmul.f32 %v5925, %v6009
        %v6042 = vmul.f32 %v5927, %v6011
        %v6043 = vmul.f32 %v5929, %v6011
        %v6044 = vmul.f32 %v5931, %v6013
        %v6045 = vmul.f32 %v5933, %v6013
        %v6046 = vsub.f32 %v6014, %v2463
        %v6047 = vsub.f32 %v6015, %v2464
        %v6048 = vsub.f32 %v6016, %v2465
        %v6049 = vsub.f32 %v6017, %v2466
        %v6050 = vsub.f32 %v6018, %v2467
        %v6051 = vsub.f32 %v6019, %v2468
        %v6052 = vsub.f32 %v6020, %v2469
        %v6053 = vsub.f32 %v6021, %v2470
        %v6054 = vsub.f32 %v6022, %v2471
        %v6055 = vsub.f32 %v6023, %v2472
        %v6056 = vsub.f32 %v6024, %v2473
        %v6057 = vsub.f32 %v6025, %v2474
        %v6058 = vsub.f32 %v6026, %v2475
        %v6059 = vsub.f32 %v6027, %v2476
        %v6060 = vsub.f32 %v6028, %v2477
        %v6061 = vsub.f32 %v6029, %v2478
        %v6062 = vsub.f32 %v6030, %v2479
        %v6063 = vsub.f32 %v6031, %v2480
        %v6064 = vsub.f32 %v6032, %v2481
        %v6065 = vsub.f32 %v6033, %v2482
        %v6066 = vsub.f32 %v6034, %v2483
        %v6067 = vsub.f32 %v6035, %v2484
        %v6068 = vsub.f32 %v6036, %v2485
        %v6069 = vsub.f32 %v6037, %v2486
        %v6070 = vsub.f32 %v6038, %v2487
        %v6071 = vsub.f32 %v6039, %v2488
        %v6072 = vsub.f32 %v6040, %v2489
        %v6073 = vsub.f32 %v6041, %v2490
        %v6074 = vsub.f32 %v6042, %v2491
        %v6075 = vsub.f32 %v6043, %v2492
        %v6076 = vsub.f32 %v6044, %v2493
        %v6077 = vsub.f32 %v6045, %v2494
        %v6078 = vmul.f32 %v6046, %v6046
        %v6079 = vmul.f32 %v6047, %v6047
        %v6080 = vmul.f32 %v6048, %v6048
        %v6081 = vmul.f32 %v6049, %v6049
        %v6082 = vmul.f32 %v6050, %v6050
        %v6083 = vmul.f32 %v6051, %v6051
        %v6084 = vmul.f32 %v6052, %v6052
        %v6085 = vmul.f32 %v6053, %v6053
        %v6086 = vmul.f32 %v6054, %v6054
        %v6087 = vmul.f32 %v6055, %v6055
        %v6088 = vmul.f32 %v6056, %v6056
        %v6089 = vmul.f32 %v6057, %v6057
        %v6090 = vmul.f32 %v6058, %v6058
        %v6091 = vmul.f32 %v6059, %v6059
        %v6092 = vmul.f32 %v6060, %v6060
        %v6093 = vmul.f32 %v6061, %v6061
        %v6094 = vmul.f32 %v6062, %v6062
        %v6095 = vmul.f32 %v6063, %v6063
        %v6096 = vmul.f32 %v6064, %v6064
        %v6097 = vmul.f32 %v6065, %v6065
        %v6098 = vmul.f32 %v6066, %v6066
        %v6099 = vmul.f32 %v6067, %v6067
        %v6100 = vmul.f32 %v6068, %v6068
        %v6101 = vmul.f32 %v6069, %v6069
        %v6102 = vmul.f32 %v6070, %v6070
        %v6103 = vmul.f32 %v6071, %v6071
        %v6104 = vmul.f32 %v6072, %v6072
        %v6105 = vmul.f32 %v6073, %v6073
        %v6106 = vmul.f32 %v6074, %v6074
        %v6107 = vmul.f32 %v6075, %v6075
        %v6108 = vmul.f32 %v6076, %v6076
        %v6109 = vmul.f32 %v6077, %v6077
        %v6110 = vadd.f32 %v6078, %v6079
        %v6111 = vadd.f32 %v6110, %v6080
        %v6112 = vadd.f32 %v6111, %v6081
        %v6113 = vadd.f32 %v6112, %v6082
        %v6114 = vadd.f32 %v6113, %v6083
        %v6115 = vadd.f32 %v6114, %v6084
        %v6116 = vadd.f32 %v6115, %v6085
        %v6117 = vadd.f32 %v6116, %v6086
        %v6118 = vadd.f32 %v6117, %v6087
        %v6119 = vadd.f32 %v6118, %v6088
        %v6120 = vadd.f32 %v6119, %v6089
        %v6121 = vadd.f32 %v6120, %v6090
        %v6122 = vadd.f32 %v6121, %v6091
        %v6123 = vadd.f32 %v6122, %v6092
        %v6124 = vadd.f32 %v6123, %v6093
        %v6125 = vadd.f32 %v6124, %v6094
        %v6126 = vadd.f32 %v6125, %v6095
        %v6127 = vadd.f32 %v6126, %v6096
        %v6128 = vadd.f32 %v6127, %v6097
        %v6129 = vadd.f32 %v6128, %v6098
        %v6130 = vadd.f32 %v6129, %v6099
        %v6131 = vadd.f32 %v6130, %v6100
        %v6132 = vadd.f32 %v6131, %v6101
        %v6133 = vadd.f32 %v6132, %v6102
        %v6134 = vadd.f32 %v6133, %v6103
        %v6135 = vadd.f32 %v6134, %v6104
        %v6136 = vadd.f32 %v6135, %v6105
        %v6137 = vadd.f32 %v6136, %v6106
        %v6138 = vadd.f32 %v6137, %v6107
        %v6139 = vadd.f32 %v6138, %v6108
        %v6140 = vadd.f32 %v6139, %v6109
        %6141 = vadd.xlane.f32.xlu0 %v6140
        %v6142 = vpop.xlane.xlu0 %6141
        %v6143 = vrot.slane %v6142, 4
        %v6144 = vadd.f32 %v6142, %v6143
        %v6145 = vrot.slane %v6144, 2
        %v6146 = vadd.f32 %v6144, %v6145
        %v6147 = vrot.slane %v6146, 1
        %v6148 = vadd.f32 %v6146, %v6147
        %s6149 = vtos %v6148
        %s6150 = sadd.f32 %s5202, %s6149
        %v6151 = vpack.c.bf16 %v6016, %v6014
        %v6152 = vpack.c.bf16 %v6017, %v6015
        %v6153 = vpack.c.bf16 %v6020, %v6018
        %v6154 = vpack.c.bf16 %v6021, %v6019
        %v6155 = vpack.c.bf16 %v6024, %v6022
        %v6156 = vpack.c.bf16 %v6025, %v6023
        %v6157 = vpack.c.bf16 %v6028, %v6026
        %v6158 = vpack.c.bf16 %v6029, %v6027
        %v6159 = vpack.c.bf16 %v6032, %v6030
        %v6160 = vpack.c.bf16 %v6033, %v6031
        %v6161 = vpack.c.bf16 %v6036, %v6034
        %v6162 = vpack.c.bf16 %v6037, %v6035
        %v6163 = vpack.c.bf16 %v6040, %v6038
        %v6164 = vpack.c.bf16 %v6041, %v6039
        %v6165 = vpack.c.bf16 %v6044, %v6042
        %v6166 = vpack.c.bf16 %v6045, %v6043
        %6167 = vrot.lane.b32.xlu0 %v3371, 32
        %v6168 = vpop.permute.xlu0 %6167
        %6169 = vrot.lane.b32.xlu0 %v3372, 32
        %v6170 = vpop.permute.xlu0 %6169
        %6171 = vrot.lane.b32.xlu0 %v3373, 32
        %v6172 = vpop.permute.xlu0 %6171
        %6173 = vrot.lane.b32.xlu0 %v3374, 32
        %v6174 = vpop.permute.xlu0 %6173
        %6175 = vrot.lane.b32.xlu0 %v3375, 32
        %v6176 = vpop.permute.xlu0 %6175
        %6177 = vrot.lane.b32.xlu0 %v3376, 32
        %v6178 = vpop.permute.xlu0 %6177
        %6179 = vrot.lane.b32.xlu0 %v3377, 32
        %v6180 = vpop.permute.xlu0 %6179
        %6181 = vrot.lane.b32.xlu0 %v3378, 32
        %v6182 = vpop.permute.xlu0 %6181
        %6183 = vrot.lane.b32.xlu0 %v3379, 32
        %v6184 = vpop.permute.xlu0 %6183
        %6185 = vrot.lane.b32.xlu0 %v3380, 32
        %v6186 = vpop.permute.xlu0 %6185
        %6187 = vrot.lane.b32.xlu0 %v3381, 32
        %v6188 = vpop.permute.xlu0 %6187
        %6189 = vrot.lane.b32.xlu0 %v3382, 32
        %v6190 = vpop.permute.xlu0 %6189
        %6191 = vrot.lane.b32.xlu0 %v3383, 32
        %v6192 = vpop.permute.xlu0 %6191
        %6193 = vrot.lane.b32.xlu0 %v3384, 32
        %v6194 = vpop.permute.xlu0 %6193
        %6195 = vrot.lane.b32.xlu0 %v3385, 32
        %v6196 = vpop.permute.xlu0 %6195
        %6197 = vrot.lane.b32.xlu0 %v3386, 32
        %v6198 = vpop.permute.xlu0 %6197
        %6215 = vmatprep.subr.bf16.mxu0 0
        %6216 = vmatpush1.bf16.msra.mxu0 %v6182
        %6217 = vmatprep.subr.bf16.mxu0 0
        %6218 = vmatpush1.bf16.msra.mxu0 %v6180
        %6219 = vmatprep.subr.bf16.mxu0 0
        %6220 = vmatpush1.bf16.msra.mxu0 %v6178
        %6221 = vmatprep.subr.bf16.mxu0 0
        %6222 = vmatpush1.bf16.msra.mxu0 %v6176
        %6223 = vmatprep.subr.bf16.mxu0 0
        %6224 = vmatpush1.bf16.msra.mxu0 %v6174
        %6225 = vmatprep.subr.bf16.mxu0 0
        %6226 = vmatpush1.bf16.msra.mxu0 %v6172
        %6227 = vmatprep.subr.bf16.mxu0 0
        %6228 = vmatpush1.bf16.msra.mxu0 %v6170
        %6229 = vmatprep.subr.bf16.mxu0 0
        %6230 = vmatpush1.bf16.msra.mxu0 %v6168
        %6231 = vmatprep.subr.bf16.mxu0 0
        %6232 = vmatpush2.bf16.msra.mxu0 %v6198
        %6233 = vmatprep.subr.bf16.mxu0 0
        %6234 = vmatpush2.bf16.msra.mxu0 %v6196
        %6235 = vmatprep.subr.bf16.mxu0 0
        %6236 = vmatpush2.bf16.msra.mxu0 %v6194
        %6237 = vmatprep.subr.bf16.mxu0 0
        %6238 = vmatpush2.bf16.msra.mxu0 %v6192
        %6239 = vmatprep.subr.bf16.mxu0 0
        %6240 = vmatpush2.bf16.msra.mxu0 %v6190
        %6241 = vmatprep.subr.bf16.mxu0 0
        %6242 = vmatpush2.bf16.msra.mxu0 %v6188
        %6243 = vmatprep.subr.bf16.mxu0 0
        %6244 = vmatpush2.bf16.msra.mxu0 %v6186
        %6245 = vmatprep.subr.bf16.mxu0 0
        %6246 = vmatpush2.bf16.msra.mxu0 %v6184
        %6247 = vmatprep.mubr.bf16.mxu0 %v6152
        %6248 = vmatmul.mubr.bf16.gmra.mxu0 %v6151
        %v6249 = vpop.f32.mrf.mxu0
        %v6250 = vadd.f32 0.0, %v6249
        %v6251 = vpop.f32.mrf.mxu0
        %v6252 = vpop.f32.mrf.mxu0
        %v6253 = vadd.f32 0.0, %v6252
        %v6254 = vpop.f32.mrf.mxu0
        %6255 = vmatprep.mubr.bf16.mxu0 %v6154
        %6256 = vmatmul.mubr.bf16.gmra.mxu0 %v6153
        %v6257 = vpop.f32.mrf.mxu0
        %v6258 = vadd.f32 0.0, %v6257
        %v6259 = vpop.f32.mrf.mxu0
        %v6260 = vpop.f32.mrf.mxu0
        %v6261 = vadd.f32 0.0, %v6260
        %v6262 = vpop.f32.mrf.mxu0
        %6263 = vmatprep.mubr.bf16.mxu0 %v6156
        %6264 = vmatmul.mubr.bf16.gmra.mxu0 %v6155
        %v6265 = vpop.f32.mrf.mxu0
        %v6266 = vadd.f32 0.0, %v6265
        %v6267 = vpop.f32.mrf.mxu0
        %v6268 = vpop.f32.mrf.mxu0
        %v6269 = vadd.f32 0.0, %v6268
        %v6270 = vpop.f32.mrf.mxu0
        %6271 = vmatprep.mubr.bf16.mxu0 %v6158
        %6272 = vmatmul.mubr.bf16.gmra.mxu0 %v6157
        %v6273 = vpop.f32.mrf.mxu0
        %v6274 = vadd.f32 0.0, %v6273
        %v6275 = vpop.f32.mrf.mxu0
        %v6276 = vpop.f32.mrf.mxu0
        %v6277 = vadd.f32 0.0, %v6276
        %v6278 = vpop.f32.mrf.mxu0
        %6279 = vmatprep.mubr.bf16.mxu0 %v6160
        %6280 = vmatmul.mubr.bf16.gmra.mxu0 %v6159
        %v6281 = vpop.f32.mrf.mxu0
        %v6282 = vadd.f32 0.0, %v6281
        %v6283 = vpop.f32.mrf.mxu0
        %v6284 = vpop.f32.mrf.mxu0
        %v6285 = vadd.f32 0.0, %v6284
        %v6286 = vpop.f32.mrf.mxu0
        %6287 = vmatprep.mubr.bf16.mxu0 %v6162
        %6288 = vmatmul.mubr.bf16.gmra.mxu0 %v6161
        %v6289 = vpop.f32.mrf.mxu0
        %v6290 = vadd.f32 0.0, %v6289
        %v6291 = vpop.f32.mrf.mxu0
        %v6292 = vpop.f32.mrf.mxu0
        %v6293 = vadd.f32 0.0, %v6292
        %v6294 = vpop.f32.mrf.mxu0
        %6295 = vmatprep.mubr.bf16.mxu0 %v6164
        %6296 = vmatmul.mubr.bf16.gmra.mxu0 %v6163
        %v6297 = vpop.f32.mrf.mxu0
        %v6298 = vadd.f32 0.0, %v6297
        %v6299 = vpop.f32.mrf.mxu0
        %v6300 = vpop.f32.mrf.mxu0
        %v6301 = vadd.f32 0.0, %v6300
        %v6302 = vpop.f32.mrf.mxu0
        %6303 = vmatprep.mubr.bf16.mxu0 %v6166
        %6304 = vmatmul.mubr.bf16.gmra.mxu0 %v6165
        %v6305 = vpop.f32.mrf.mxu0
        %v6306 = vadd.f32 0.0, %v6305
        %v6307 = vpop.f32.mrf.mxu0
        %v6308 = vpop.f32.mrf.mxu0
        %v6309 = vadd.f32 0.0, %v6308
        %v6310 = vpop.f32.mrf.mxu0
        %6311 = vdwg.mxu0
        %v6312 = vpack.c.bf16 %v6253, %v6250
        %v6313 = vpack.c.bf16 %v6261, %v6258
        %v6314 = vpack.c.bf16 %v6269, %v6266
        %v6315 = vpack.c.bf16 %v6277, %v6274
        %v6316 = vpack.c.bf16 %v6285, %v6282
        %v6317 = vpack.c.bf16 %v6293, %v6290
        %v6318 = vpack.c.bf16 %v6301, %v6298
        %v6319 = vpack.c.bf16 %v6309, %v6306
        %v6320 = vld [vmem:[#allocation14 + $0x30] sm:$0xf]
        %v6321 = vld [vmem:[#allocation14 + $0x34] sm:$0xf]
        %v6322 = vld [vmem:[#allocation14 + $0x38] sm:$0xf]
        %v6323 = vld [vmem:[#allocation14 + $0x3c] sm:$0xf]
        %v6328 = vunpack.c.l.b16 %v6320
        %v6329 = vunpack.c.l.b16 %v6321
        %v6330 = vunpack.c.l.b16 %v6322
        %v6331 = vunpack.c.l.b16 %v6323
        %v6332 = vpack.c.b16 %v6329, %v6328
        %v6333 = vpack.c.b16 %v6331, %v6330
        %v6337 = vsel %vm2701, %v6312, 0
        %v6340 = vsel %vm2701, %v6313, 0
        %v6343 = vsel %vm2701, %v6314, 0
        %v6346 = vsel %vm2701, %v6315, 0
        %v6349 = vsel %vm2701, %v6316, 0
        %v6352 = vsel %vm2701, %v6317, 0
        %v6355 = vsel %vm2701, %v6318, 0
        %v6358 = vsel %vm2701, %v6319, 0
        %6360 = vmatprep.subr.bf16.mxu0 0
        %6361 = vmatpush1.bf16.msra.mxu0 0
        %6362 = vmatprep.subr.bf16.mxu0 0
        %6363 = vmatpush1.bf16.msra.mxu0 0
        %6364 = vmatprep.subr.bf16.mxu0 0
        %6365 = vmatpush1.bf16.msra.mxu0 0
        %6366 = vmatprep.subr.bf16.mxu0 0
        %6367 = vmatpush1.bf16.msra.mxu0 0
        %6368 = vmatprep.subr.bf16.mxu0 0
        %6369 = vmatpush1.bf16.msra.mxu0 0
        %6370 = vmatprep.subr.bf16.mxu0 0
        %6371 = vmatpush1.bf16.msra.mxu0 0
        %6372 = vmatprep.subr.bf16.mxu0 0
        %6373 = vmatpush1.bf16.msra.mxu0 %v6333
        %6374 = vmatprep.subr.bf16.mxu0 0
        %6375 = vmatpush1.bf16.msra.mxu0 %v6332
        %6376 = vmatprep.subr.bf16.mxu0 0
        %6377 = vmatpush2.bf16.msra.mxu0 0
        %6378 = vmatprep.subr.bf16.mxu0 0
        %6379 = vmatpush2.bf16.msra.mxu0 0
        %6380 = vmatprep.subr.bf16.mxu0 0
        %6381 = vmatpush2.bf16.msra.mxu0 0
        %6382 = vmatprep.subr.bf16.mxu0 0
        %6383 = vmatpush2.bf16.msra.mxu0 0
        %6384 = vmatprep.subr.bf16.mxu0 0
        %6385 = vmatpush2.bf16.msra.mxu0 0
        %6386 = vmatprep.subr.bf16.mxu0 0
        %6387 = vmatpush2.bf16.msra.mxu0 0
        %6388 = vmatprep.subr.bf16.mxu0 0
        %6389 = vmatpush2.bf16.msra.mxu0 0
        %6390 = vmatprep.subr.bf16.mxu0 0
        %6391 = vmatpush2.bf16.msra.mxu0 0
        %6392 = vmatprep.mubr.bf16.mxu0 0
        %6393 = vmatmul.mubr.bf16.gmra.mxu0 %v6337
        %v6394 = vpop.f32.mrf.mxu0
        %v6395 = vadd.f32 0.0, %v6394
        %v6396 = vpop.f32.mrf.mxu0
        %v6397 = vpop.f32.mrf.mxu0
        %v6398 = vadd.f32 0.0, %v6397
        %v6399 = vpop.f32.mrf.mxu0
        %6400 = vmatprep.mubr.bf16.mxu0 0
        %6401 = vmatmul.mubr.bf16.gmra.mxu0 %v6340
        %v6402 = vpop.f32.mrf.mxu0
        %v6403 = vadd.f32 0.0, %v6402
        %v6404 = vpop.f32.mrf.mxu0
        %v6405 = vpop.f32.mrf.mxu0
        %v6406 = vadd.f32 0.0, %v6405
        %v6407 = vpop.f32.mrf.mxu0
        %6408 = vmatprep.mubr.bf16.mxu0 0
        %6409 = vmatmul.mubr.bf16.gmra.mxu0 %v6343
        %v6410 = vpop.f32.mrf.mxu0
        %v6411 = vadd.f32 0.0, %v6410
        %v6412 = vpop.f32.mrf.mxu0
        %v6413 = vpop.f32.mrf.mxu0
        %v6414 = vadd.f32 0.0, %v6413
        %v6415 = vpop.f32.mrf.mxu0
        %6416 = vmatprep.mubr.bf16.mxu0 0
        %6417 = vmatmul.mubr.bf16.gmra.mxu0 %v6346
        %v6418 = vpop.f32.mrf.mxu0
        %v6419 = vadd.f32 0.0, %v6418
        %v6420 = vpop.f32.mrf.mxu0
        %v6421 = vpop.f32.mrf.mxu0
        %v6422 = vadd.f32 0.0, %v6421
        %v6423 = vpop.f32.mrf.mxu0
        %6424 = vmatprep.mubr.bf16.mxu0 0
        %6425 = vmatmul.mubr.bf16.gmra.mxu0 %v6349
        %v6426 = vpop.f32.mrf.mxu0
        %v6427 = vadd.f32 0.0, %v6426
        %v6428 = vpop.f32.mrf.mxu0
        %v6429 = vpop.f32.mrf.mxu0
        %v6430 = vadd.f32 0.0, %v6429
        %v6431 = vpop.f32.mrf.mxu0
        %6432 = vmatprep.mubr.bf16.mxu0 0
        %6433 = vmatmul.mubr.bf16.gmra.mxu0 %v6352
        %v6434 = vpop.f32.mrf.mxu0
        %v6435 = vadd.f32 0.0, %v6434
        %v6436 = vpop.f32.mrf.mxu0
        %v6437 = vpop.f32.mrf.mxu0
        %v6438 = vadd.f32 0.0, %v6437
        %v6439 = vpop.f32.mrf.mxu0
        %6440 = vmatprep.mubr.bf16.mxu0 0
        %6441 = vmatmul.mubr.bf16.gmra.mxu0 %v6355
        %v6442 = vpop.f32.mrf.mxu0
        %v6443 = vadd.f32 0.0, %v6442
        %v6444 = vpop.f32.mrf.mxu0
        %v6445 = vpop.f32.mrf.mxu0
        %v6446 = vadd.f32 0.0, %v6445
        %v6447 = vpop.f32.mrf.mxu0
        %6448 = vmatprep.mubr.bf16.mxu0 0
        %6449 = vmatmul.mubr.bf16.gmra.mxu0 %v6358
        %v6450 = vpop.f32.mrf.mxu0
        %v6451 = vadd.f32 0.0, %v6450
        %v6452 = vpop.f32.mrf.mxu0
        %v6453 = vpop.f32.mrf.mxu0
        %v6454 = vadd.f32 0.0, %v6453
        %v6455 = vpop.f32.mrf.mxu0
        %6456 = vdwg.mxu0
        %v6457 = vadd.f32 %v5509, %v6395
        %v6458 = vadd.f32 %v5510, %v6398
        %v6459 = vadd.f32 %v5511, %v6403
        %v6460 = vadd.f32 %v5512, %v6406
        %v6461 = vadd.f32 %v5513, %v6411
        %v6462 = vadd.f32 %v5514, %v6414
        %v6463 = vadd.f32 %v5515, %v6419
        %v6464 = vadd.f32 %v5516, %v6422
        %v6465 = vadd.f32 %v5517, %v6427
        %v6466 = vadd.f32 %v5518, %v6430
        %v6467 = vadd.f32 %v5519, %v6435
        %v6468 = vadd.f32 %v5520, %v6438
        %v6469 = vadd.f32 %v5521, %v6443
        %v6470 = vadd.f32 %v5522, %v6446
        %v6471 = vadd.f32 %v5523, %v6451
        %v6472 = vadd.f32 %v5524, %v6454
        %v6473 = vadd.f32 %v2447, %v6457
        %v6474 = vadd.f32 %v2448, %v6458
        %v6475 = vadd.f32 %v2449, %v6459
        %v6476 = vadd.f32 %v2450, %v6460
        %v6477 = vadd.f32 %v2451, %v6461
        %v6478 = vadd.f32 %v2452, %v6462
        %v6479 = vadd.f32 %v2453, %v6463
        %v6480 = vadd.f32 %v2454, %v6464
        %v6481 = vadd.f32 %v2455, %v6465
        %v6482 = vadd.f32 %v2456, %v6466
        %v6483 = vadd.f32 %v2457, %v6467
        %v6484 = vadd.f32 %v2458, %v6468
        %v6485 = vadd.f32 %v2459, %v6469
        %v6486 = vadd.f32 %v2460, %v6470
        %v6487 = vadd.f32 %v2461, %v6471
        %v6488 = vadd.f32 %v2462, %v6472
        %v6489 = vld [vmem:[%s8] sm:$0x1]
        %v6491 = vlaneseq
        %v6492 = vshrl.u32 %v6491, 7
        %v6493 = vsub.s32 0, %v6492
        %v6494 = vrot.slane %v6489, %v6493
        %v6496 = vadd.f32 %v6473, %v6494
        %v6497 = vadd.f32 %v6474, %v6494
        %v6498 = vadd.f32 %v6475, %v6494
        %v6499 = vadd.f32 %v6476, %v6494
        %v6500 = vadd.f32 %v6477, %v6494
        %v6501 = vadd.f32 %v6478, %v6494
        %v6502 = vadd.f32 %v6479, %v6494
        %v6503 = vadd.f32 %v6480, %v6494
        %v6504 = vadd.f32 %v6481, %v6494
        %v6505 = vadd.f32 %v6482, %v6494
        %v6506 = vadd.f32 %v6483, %v6494
        %v6507 = vadd.f32 %v6484, %v6494
        %v6508 = vadd.f32 %v6485, %v6494
        %v6509 = vadd.f32 %v6486, %v6494
        %v6510 = vadd.f32 %v6487, %v6494
        %v6511 = vadd.f32 %v6488, %v6494
        %v6512 = vld [vmem:[%s9] sm:$0x1]
        %v6513 = vld [vmem:[%s10] sm:$0x1]
        %6514 = vadd.xlane.f32.xlu0 %v6496
        %v6515 = vpop.xlane.xlu0 %6514
        %6516 = vadd.xlane.f32.xlu0 %v6497
        %v6517 = vpop.xlane.xlu0 %6516
        %6518 = vadd.xlane.f32.xlu0 %v6498
        %v6519 = vpop.xlane.xlu0 %6518
        %6520 = vadd.xlane.f32.xlu0 %v6499
        %v6521 = vpop.xlane.xlu0 %6520
        %6522 = vadd.xlane.f32.xlu0 %v6500
        %v6523 = vpop.xlane.xlu0 %6522
        %6524 = vadd.xlane.f32.xlu0 %v6501
        %v6525 = vpop.xlane.xlu0 %6524
        %6526 = vadd.xlane.f32.xlu0 %v6502
        %v6527 = vpop.xlane.xlu0 %6526
        %6528 = vadd.xlane.f32.xlu0 %v6503
        %v6529 = vpop.xlane.xlu0 %6528
        %6530 = vadd.xlane.f32.xlu0 %v6504
        %v6531 = vpop.xlane.xlu0 %6530
        %6532 = vadd.xlane.f32.xlu0 %v6505
        %v6533 = vpop.xlane.xlu0 %6532
        %6534 = vadd.xlane.f32.xlu0 %v6506
        %v6535 = vpop.xlane.xlu0 %6534
        %6536 = vadd.xlane.f32.xlu0 %v6507
        %v6537 = vpop.xlane.xlu0 %6536
        %6538 = vadd.xlane.f32.xlu0 %v6508
        %v6539 = vpop.xlane.xlu0 %6538
        %6540 = vadd.xlane.f32.xlu0 %v6509
        %v6541 = vpop.xlane.xlu0 %6540
        %6542 = vadd.xlane.f32.xlu0 %v6510
        %v6543 = vpop.xlane.xlu0 %6542
        %6544 = vadd.xlane.f32.xlu0 %v6511
        %v6545 = vpop.xlane.xlu0 %6544
        %v6546 = vrcp.pop 128.0
        %v6547 = vmul.f32 %v6515, %v6546
        %v6548 = vmul.f32 %v6517, %v6546
        %v6549 = vmul.f32 %v6519, %v6546
        %v6550 = vmul.f32 %v6521, %v6546
        %v6551 = vmul.f32 %v6523, %v6546
        %v6552 = vmul.f32 %v6525, %v6546
        %v6553 = vmul.f32 %v6527, %v6546
        %v6554 = vmul.f32 %v6529, %v6546
        %v6555 = vmul.f32 %v6531, %v6546
        %v6556 = vmul.f32 %v6533, %v6546
        %v6557 = vmul.f32 %v6535, %v6546
        %v6558 = vmul.f32 %v6537, %v6546
        %v6559 = vmul.f32 %v6539, %v6546
        %v6560 = vmul.f32 %v6541, %v6546
        %v6561 = vmul.f32 %v6543, %v6546
        %v6562 = vmul.f32 %v6545, %v6546
        %v6563 = vsub.f32 %v6496, %v6547
        %v6564 = vsub.f32 %v6497, %v6548
        %v6565 = vsub.f32 %v6498, %v6549
        %v6566 = vsub.f32 %v6499, %v6550
        %v6567 = vsub.f32 %v6500, %v6551
        %v6568 = vsub.f32 %v6501, %v6552
        %v6569 = vsub.f32 %v6502, %v6553
        %v6570 = vsub.f32 %v6503, %v6554
        %v6571 = vsub.f32 %v6504, %v6555
        %v6572 = vsub.f32 %v6505, %v6556
        %v6573 = vsub.f32 %v6506, %v6557
        %v6574 = vsub.f32 %v6507, %v6558
        %v6575 = vsub.f32 %v6508, %v6559
        %v6576 = vsub.f32 %v6509, %v6560
        %v6577 = vsub.f32 %v6510, %v6561
        %v6578 = vsub.f32 %v6511, %v6562
        %v6579 = vmul.f32 %v6563, %v6563
        %v6580 = vmul.f32 %v6564, %v6564
        %v6581 = vmul.f32 %v6565, %v6565
        %v6582 = vmul.f32 %v6566, %v6566
        %v6583 = vmul.f32 %v6567, %v6567
        %v6584 = vmul.f32 %v6568, %v6568
        %v6585 = vmul.f32 %v6569, %v6569
        %v6586 = vmul.f32 %v6570, %v6570
        %v6587 = vmul.f32 %v6571, %v6571
        %v6588 = vmul.f32 %v6572, %v6572
        %v6589 = vmul.f32 %v6573, %v6573
        %v6590 = vmul.f32 %v6574, %v6574
        %v6591 = vmul.f32 %v6575, %v6575
        %v6592 = vmul.f32 %v6576, %v6576
        %v6593 = vmul.f32 %v6577, %v6577
        %v6594 = vmul.f32 %v6578, %v6578
        %6595 = vadd.xlane.f32.xlu0 %v6579
        %v6596 = vpop.xlane.xlu0 %6595
        %6597 = vadd.xlane.f32.xlu0 %v6580
        %v6598 = vpop.xlane.xlu0 %6597
        %6599 = vadd.xlane.f32.xlu0 %v6581
        %v6600 = vpop.xlane.xlu0 %6599
        %6601 = vadd.xlane.f32.xlu0 %v6582
        %v6602 = vpop.xlane.xlu0 %6601
        %6603 = vadd.xlane.f32.xlu0 %v6583
        %v6604 = vpop.xlane.xlu0 %6603
        %6605 = vadd.xlane.f32.xlu0 %v6584
        %v6606 = vpop.xlane.xlu0 %6605
        %6607 = vadd.xlane.f32.xlu0 %v6585
        %v6608 = vpop.xlane.xlu0 %6607
        %6609 = vadd.xlane.f32.xlu0 %v6586
        %v6610 = vpop.xlane.xlu0 %6609
        %6611 = vadd.xlane.f32.xlu0 %v6587
        %v6612 = vpop.xlane.xlu0 %6611
        %6613 = vadd.xlane.f32.xlu0 %v6588
        %v6614 = vpop.xlane.xlu0 %6613
        %6615 = vadd.xlane.f32.xlu0 %v6589
        %v6616 = vpop.xlane.xlu0 %6615
        %6617 = vadd.xlane.f32.xlu0 %v6590
        %v6618 = vpop.xlane.xlu0 %6617
        %6619 = vadd.xlane.f32.xlu0 %v6591
        %v6620 = vpop.xlane.xlu0 %6619
        %6621 = vadd.xlane.f32.xlu0 %v6592
        %v6622 = vpop.xlane.xlu0 %6621
        %6623 = vadd.xlane.f32.xlu0 %v6593
        %v6624 = vpop.xlane.xlu0 %6623
        %6625 = vadd.xlane.f32.xlu0 %v6594
        %v6626 = vpop.xlane.xlu0 %6625
        %v6627 = vmul.f32 %v6596, 0.007874016
        %v6628 = vmul.f32 %v6598, 0.007874016
        %v6629 = vmul.f32 %v6600, 0.007874016
        %v6630 = vmul.f32 %v6602, 0.007874016
        %v6631 = vmul.f32 %v6604, 0.007874016
        %v6632 = vmul.f32 %v6606, 0.007874016
        %v6633 = vmul.f32 %v6608, 0.007874016
        %v6634 = vmul.f32 %v6610, 0.007874016
        %v6635 = vmul.f32 %v6612, 0.007874016
        %v6636 = vmul.f32 %v6614, 0.007874016
        %v6637 = vmul.f32 %v6616, 0.007874016
        %v6638 = vmul.f32 %v6618, 0.007874016
        %v6639 = vmul.f32 %v6620, 0.007874016
        %v6640 = vmul.f32 %v6622, 0.007874016
        %v6641 = vmul.f32 %v6624, 0.007874016
        %v6642 = vmul.f32 %v6626, 0.007874016
        %v6643 = vrsqrt.pop %v6627
        %v6644 = vmul.f32 %v6627, %v6643
        %vm6645 = vcmp.eq.f32.partialorder %v6627, inf
        %v6646 = vsel %vm6645, %v6627, %v6644
        %vm6647 = vcmp.eq.f32.partialorder %v6627, 0.0
        %v6648 = vand.u32 %v6627, 2147483648
        %v6649 = vsel %vm6647, %v6648, %v6646
        %v6650 = vrsqrt.pop %v6628
        %v6651 = vmul.f32 %v6628, %v6650
        %vm6652 = vcmp.eq.f32.partialorder %v6628, inf
        %v6653 = vsel %vm6652, %v6628, %v6651
        %vm6654 = vcmp.eq.f32.partialorder %v6628, 0.0
        %v6655 = vand.u32 %v6628, 2147483648
        %v6656 = vsel %vm6654, %v6655, %v6653
        %v6657 = vrsqrt.pop %v6629
        %v6658 = vmul.f32 %v6629, %v6657
        %vm6659 = vcmp.eq.f32.partialorder %v6629, inf
        %v6660 = vsel %vm6659, %v6629, %v6658
        %vm6661 = vcmp.eq.f32.partialorder %v6629, 0.0
        %v6662 = vand.u32 %v6629, 2147483648
        %v6663 = vsel %vm6661, %v6662, %v6660
        %v6664 = vrsqrt.pop %v6630
        %v6665 = vmul.f32 %v6630, %v6664
        %vm6666 = vcmp.eq.f32.partialorder %v6630, inf
        %v6667 = vsel %vm6666, %v6630, %v6665
        %vm6668 = vcmp.eq.f32.partialorder %v6630, 0.0
        %v6669 = vand.u32 %v6630, 2147483648
        %v6670 = vsel %vm6668, %v6669, %v6667
        %v6671 = vrsqrt.pop %v6631
        %v6672 = vmul.f32 %v6631, %v6671
        %vm6673 = vcmp.eq.f32.partialorder %v6631, inf
        %v6674 = vsel %vm6673, %v6631, %v6672
        %vm6675 = vcmp.eq.f32.partialorder %v6631, 0.0
        %v6676 = vand.u32 %v6631, 2147483648
        %v6677 = vsel %vm6675, %v6676, %v6674
        %v6678 = vrsqrt.pop %v6632
        %v6679 = vmul.f32 %v6632, %v6678
        %vm6680 = vcmp.eq.f32.partialorder %v6632, inf
        %v6681 = vsel %vm6680, %v6632, %v6679
        %vm6682 = vcmp.eq.f32.partialorder %v6632, 0.0
        %v6683 = vand.u32 %v6632, 2147483648
        %v6684 = vsel %vm6682, %v6683, %v6681
        %v6685 = vrsqrt.pop %v6633
        %v6686 = vmul.f32 %v6633, %v6685
        %vm6687 = vcmp.eq.f32.partialorder %v6633, inf
        %v6688 = vsel %vm6687, %v6633, %v6686
        %vm6689 = vcmp.eq.f32.partialorder %v6633, 0.0
        %v6690 = vand.u32 %v6633, 2147483648
        %v6691 = vsel %vm6689, %v6690, %v6688
        %v6692 = vrsqrt.pop %v6634
        %v6693 = vmul.f32 %v6634, %v6692
        %vm6694 = vcmp.eq.f32.partialorder %v6634, inf
        %v6695 = vsel %vm6694, %v6634, %v6693
        %vm6696 = vcmp.eq.f32.partialorder %v6634, 0.0
        %v6697 = vand.u32 %v6634, 2147483648
        %v6698 = vsel %vm6696, %v6697, %v6695
        %v6699 = vrsqrt.pop %v6635
        %v6700 = vmul.f32 %v6635, %v6699
        %vm6701 = vcmp.eq.f32.partialorder %v6635, inf
        %v6702 = vsel %vm6701, %v6635, %v6700
        %vm6703 = vcmp.eq.f32.partialorder %v6635, 0.0
        %v6704 = vand.u32 %v6635, 2147483648
        %v6705 = vsel %vm6703, %v6704, %v6702
        %v6706 = vrsqrt.pop %v6636
        %v6707 = vmul.f32 %v6636, %v6706
        %vm6708 = vcmp.eq.f32.partialorder %v6636, inf
        %v6709 = vsel %vm6708, %v6636, %v6707
        %vm6710 = vcmp.eq.f32.partialorder %v6636, 0.0
        %v6711 = vand.u32 %v6636, 2147483648
        %v6712 = vsel %vm6710, %v6711, %v6709
        %v6713 = vrsqrt.pop %v6637
        %v6714 = vmul.f32 %v6637, %v6713
        %vm6715 = vcmp.eq.f32.partialorder %v6637, inf
        %v6716 = vsel %vm6715, %v6637, %v6714
        %vm6717 = vcmp.eq.f32.partialorder %v6637, 0.0
        %v6718 = vand.u32 %v6637, 2147483648
        %v6719 = vsel %vm6717, %v6718, %v6716
        %v6720 = vrsqrt.pop %v6638
        %v6721 = vmul.f32 %v6638, %v6720
        %vm6722 = vcmp.eq.f32.partialorder %v6638, inf
        %v6723 = vsel %vm6722, %v6638, %v6721
        %vm6724 = vcmp.eq.f32.partialorder %v6638, 0.0
        %v6725 = vand.u32 %v6638, 2147483648
        %v6726 = vsel %vm6724, %v6725, %v6723
        %v6727 = vrsqrt.pop %v6639
        %v6728 = vmul.f32 %v6639, %v6727
        %vm6729 = vcmp.eq.f32.partialorder %v6639, inf
        %v6730 = vsel %vm6729, %v6639, %v6728
        %vm6731 = vcmp.eq.f32.partialorder %v6639, 0.0
        %v6732 = vand.u32 %v6639, 2147483648
        %v6733 = vsel %vm6731, %v6732, %v6730
        %v6734 = vrsqrt.pop %v6640
        %v6735 = vmul.f32 %v6640, %v6734
        %vm6736 = vcmp.eq.f32.partialorder %v6640, inf
        %v6737 = vsel %vm6736, %v6640, %v6735
        %vm6738 = vcmp.eq.f32.partialorder %v6640, 0.0
        %v6739 = vand.u32 %v6640, 2147483648
        %v6740 = vsel %vm6738, %v6739, %v6737
        %v6741 = vrsqrt.pop %v6641
        %v6742 = vmul.f32 %v6641, %v6741
        %vm6743 = vcmp.eq.f32.partialorder %v6641, inf
        %v6744 = vsel %vm6743, %v6641, %v6742
        %vm6745 = vcmp.eq.f32.partialorder %v6641, 0.0
        %v6746 = vand.u32 %v6641, 2147483648
        %v6747 = vsel %vm6745, %v6746, %v6744
        %v6748 = vrsqrt.pop %v6642
        %v6749 = vmul.f32 %v6642, %v6748
        %vm6750 = vcmp.eq.f32.partialorder %v6642, inf
        %v6751 = vsel %vm6750, %v6642, %v6749
        %vm6752 = vcmp.eq.f32.partialorder %v6642, 0.0
        %v6753 = vand.u32 %v6642, 2147483648
        %v6754 = vsel %vm6752, %v6753, %v6751
        %v6755 = vadd.f32 %v6649, 1e-06
        %v6756 = vadd.f32 %v6656, 1e-06
        %v6757 = vadd.f32 %v6663, 1e-06
        %v6758 = vadd.f32 %v6670, 1e-06
        %v6759 = vadd.f32 %v6677, 1e-06
        %v6760 = vadd.f32 %v6684, 1e-06
        %v6761 = vadd.f32 %v6691, 1e-06
        %v6762 = vadd.f32 %v6698, 1e-06
        %v6763 = vadd.f32 %v6705, 1e-06
        %v6764 = vadd.f32 %v6712, 1e-06
        %v6765 = vadd.f32 %v6719, 1e-06
        %v6766 = vadd.f32 %v6726, 1e-06
        %v6767 = vadd.f32 %v6733, 1e-06
        %v6768 = vadd.f32 %v6740, 1e-06
        %v6769 = vadd.f32 %v6747, 1e-06
        %v6770 = vadd.f32 %v6754, 1e-06
        %v6771 = vrcp.pop %v6755
        %v6772 = vrcp.pop %v6756
        %v6773 = vrcp.pop %v6757
        %v6774 = vrcp.pop %v6758
        %v6775 = vrcp.pop %v6759
        %v6776 = vrcp.pop %v6760
        %v6777 = vrcp.pop %v6761
        %v6778 = vrcp.pop %v6762
        %v6779 = vrcp.pop %v6763
        %v6780 = vrcp.pop %v6764
        %v6781 = vrcp.pop %v6765
        %v6782 = vrcp.pop %v6766
        %v6783 = vrcp.pop %v6767
        %v6784 = vrcp.pop %v6768
        %v6785 = vrcp.pop %v6769
        %v6786 = vrcp.pop %v6770
        %v6788 = vlaneseq
        %v6789 = vshrl.u32 %v6788, 7
        %v6790 = vsub.s32 0, %v6789
        %v6791 = vrot.slane %v6512, %v6790
        %v6793 = vmul.f32 %v6791, %v6563
        %v6794 = vmul.f32 %v6791, %v6564
        %v6795 = vmul.f32 %v6791, %v6565
        %v6796 = vmul.f32 %v6791, %v6566
        %v6797 = vmul.f32 %v6791, %v6567
        %v6798 = vmul.f32 %v6791, %v6568
        %v6799 = vmul.f32 %v6791, %v6569
        %v6800 = vmul.f32 %v6791, %v6570
        %v6801 = vmul.f32 %v6791, %v6571
        %v6802 = vmul.f32 %v6791, %v6572
        %v6803 = vmul.f32 %v6791, %v6573
        %v6804 = vmul.f32 %v6791, %v6574
        %v6805 = vmul.f32 %v6791, %v6575
        %v6806 = vmul.f32 %v6791, %v6576
        %v6807 = vmul.f32 %v6791, %v6577
        %v6808 = vmul.f32 %v6791, %v6578
        %v6809 = vmul.f32 %v6793, %v6771
        %v6810 = vmul.f32 %v6794, %v6772
        %v6811 = vmul.f32 %v6795, %v6773
        %v6812 = vmul.f32 %v6796, %v6774
        %v6813 = vmul.f32 %v6797, %v6775
        %v6814 = vmul.f32 %v6798, %v6776
        %v6815 = vmul.f32 %v6799, %v6777
        %v6816 = vmul.f32 %v6800, %v6778
        %v6817 = vmul.f32 %v6801, %v6779
        %v6818 = vmul.f32 %v6802, %v6780
        %v6819 = vmul.f32 %v6803, %v6781
        %v6820 = vmul.f32 %v6804, %v6782
        %v6821 = vmul.f32 %v6805, %v6783
        %v6822 = vmul.f32 %v6806, %v6784
        %v6823 = vmul.f32 %v6807, %v6785
        %v6824 = vmul.f32 %v6808, %v6786
        %v6826 = vlaneseq
        %v6827 = vshrl.u32 %v6826, 7
        %v6828 = vsub.s32 0, %v6827
        %v6829 = vrot.slane %v6513, %v6828
        %v6831 = vadd.f32 %v6809, %v6829
        %v6832 = vadd.f32 %v6810, %v6829
        %v6833 = vadd.f32 %v6811, %v6829
        %v6834 = vadd.f32 %v6812, %v6829
        %v6835 = vadd.f32 %v6813, %v6829
        %v6836 = vadd.f32 %v6814, %v6829
        %v6837 = vadd.f32 %v6815, %v6829
        %v6838 = vadd.f32 %v6816, %v6829
        %v6839 = vadd.f32 %v6817, %v6829
        %v6840 = vadd.f32 %v6818, %v6829
        %v6841 = vadd.f32 %v6819, %v6829
        %v6842 = vadd.f32 %v6820, %v6829
        %v6843 = vadd.f32 %v6821, %v6829
        %v6844 = vadd.f32 %v6822, %v6829
        %v6845 = vadd.f32 %v6823, %v6829
        %v6846 = vadd.f32 %v6824, %v6829
        %v6847 = vpack.c.bf16 %v6832, %v6831
        %v6848 = vpack.c.bf16 %v6834, %v6833
        %v6849 = vpack.c.bf16 %v6836, %v6835
        %v6850 = vpack.c.bf16 %v6838, %v6837
        %v6851 = vpack.c.bf16 %v6840, %v6839
        %v6852 = vpack.c.bf16 %v6842, %v6841
        %v6853 = vpack.c.bf16 %v6844, %v6843
        %v6854 = vpack.c.bf16 %v6846, %v6845
        %v6855 = vld [vmem:[#allocation16] sm:$0xff]
        %v6856 = vld [vmem:[#allocation16 + $0x8] sm:$0xff]
        %v6857 = vld [vmem:[#allocation16 + $0x10] sm:$0xff]
        %v6858 = vld [vmem:[#allocation16 + $0x18] sm:$0xff]
        %v6859 = vld [vmem:[#allocation16 + $0x20] sm:$0xff]
        %v6860 = vld [vmem:[#allocation16 + $0x28] sm:$0xff]
        %v6861 = vld [vmem:[#allocation16 + $0x30] sm:$0xff]
        %v6862 = vld [vmem:[#allocation16 + $0x38] sm:$0xff]
        %v6863 = vld [vmem:[#allocation16 + $0x40] sm:$0xff]
        %v6864 = vld [vmem:[#allocation16 + $0x48] sm:$0xff]
        %v6865 = vld [vmem:[#allocation16 + $0x50] sm:$0xff]
        %v6866 = vld [vmem:[#allocation16 + $0x58] sm:$0xff]
        %v6867 = vld [vmem:[#allocation16 + $0x60] sm:$0xff]
        %v6868 = vld [vmem:[#allocation16 + $0x68] sm:$0xff]
        %v6869 = vld [vmem:[#allocation16 + $0x70] sm:$0xff]
        %v6870 = vld [vmem:[#allocation16 + $0x78] sm:$0xff]
        %v6871 = vld [vmem:[%s12] sm:$0x3]
        %v6873 = vlaneseq
        %v6874 = vshrl.u32 %v6873, 7
        %v6875 = vsub.s32 0, %v6874
        %v6876 = vrot.slane %v6871, %v6875
        %v6877 = vlaneseq
        %v6878 = vshrl.u32 %v6877, 7
        %v6879 = vsub.s32 1, %v6878
        %v6880 = vrot.slane %v6871, %v6879
        %v6899 = vunpack.c.l.b16 %v6855
        %v6900 = vunpack.c.h.b16 %v6855
        %v6901 = vunpack.c.l.b16 %v6856
        %v6902 = vunpack.c.h.b16 %v6856
        %v6903 = vunpack.c.l.b16 %v6857
        %v6904 = vunpack.c.h.b16 %v6857
        %v6905 = vunpack.c.l.b16 %v6858
        %v6906 = vunpack.c.h.b16 %v6858
        %v6907 = vunpack.c.l.b16 %v6859
        %v6908 = vunpack.c.h.b16 %v6859
        %v6909 = vunpack.c.l.b16 %v6860
        %v6910 = vunpack.c.h.b16 %v6860
        %v6911 = vunpack.c.l.b16 %v6861
        %v6912 = vunpack.c.h.b16 %v6861
        %v6913 = vunpack.c.l.b16 %v6862
        %v6914 = vunpack.c.h.b16 %v6862
        %v6915 = vunpack.c.l.b16 %v6863
        %v6916 = vunpack.c.h.b16 %v6863
        %v6917 = vunpack.c.l.b16 %v6864
        %v6918 = vunpack.c.h.b16 %v6864
        %v6919 = vunpack.c.l.b16 %v6865
        %v6920 = vunpack.c.h.b16 %v6865
        %v6921 = vunpack.c.l.b16 %v6866
        %v6922 = vunpack.c.h.b16 %v6866
        %v6923 = vunpack.c.l.b16 %v6867
        %v6924 = vunpack.c.h.b16 %v6867
        %v6925 = vunpack.c.l.b16 %v6868
        %v6926 = vunpack.c.h.b16 %v6868
        %v6927 = vunpack.c.l.b16 %v6869
        %v6928 = vunpack.c.h.b16 %v6869
        %v6929 = vunpack.c.l.b16 %v6870
        %v6930 = vunpack.c.h.b16 %v6870
        %v6931 = vpack.c.b16 %v6901, %v6899
        %v6932 = vpack.c.b16 %v6902, %v6900
        %v6933 = vpack.c.b16 %v6905, %v6903
        %v6934 = vpack.c.b16 %v6906, %v6904
        %v6935 = vpack.c.b16 %v6909, %v6907
        %v6936 = vpack.c.b16 %v6910, %v6908
        %v6937 = vpack.c.b16 %v6913, %v6911
        %v6938 = vpack.c.b16 %v6914, %v6912
        %v6939 = vpack.c.b16 %v6917, %v6915
        %v6940 = vpack.c.b16 %v6918, %v6916
        %v6941 = vpack.c.b16 %v6921, %v6919
        %v6942 = vpack.c.b16 %v6922, %v6920
        %v6943 = vpack.c.b16 %v6925, %v6923
        %v6944 = vpack.c.b16 %v6926, %v6924
        %v6945 = vpack.c.b16 %v6929, %v6927
        %v6946 = vpack.c.b16 %v6930, %v6928
        %6963 = vmatprep.subr.bf16.mxu0 %v6946
        %6964 = vmatpush1.bf16.msra.mxu0 %v6945
        %6965 = vmatprep.subr.bf16.mxu0 %v6944
        %6966 = vmatpush1.bf16.msra.mxu0 %v6943
        %6967 = vmatprep.subr.bf16.mxu0 %v6942
        %6968 = vmatpush1.bf16.msra.mxu0 %v6941
        %6969 = vmatprep.subr.bf16.mxu0 %v6940
        %6970 = vmatpush1.bf16.msra.mxu0 %v6939
        %6971 = vmatprep.subr.bf16.mxu0 %v6938
        %6972 = vmatpush1.bf16.msra.mxu0 %v6937
        %6973 = vmatprep.subr.bf16.mxu0 %v6936
        %6974 = vmatpush1.bf16.msra.mxu0 %v6935
        %6975 = vmatprep.subr.bf16.mxu0 %v6934
        %6976 = vmatpush1.bf16.msra.mxu0 %v6933
        %6977 = vmatprep.subr.bf16.mxu0 %v6932
        %6978 = vmatpush1.bf16.msra.mxu0 %v6931
        %6979 = vmatprep.subr.bf16.mxu0 0
        %6980 = vmatpush2.bf16.msra.mxu0 0
        %6981 = vmatprep.subr.bf16.mxu0 0
        %6982 = vmatpush2.bf16.msra.mxu0 0
        %6983 = vmatprep.subr.bf16.mxu0 0
        %6984 = vmatpush2.bf16.msra.mxu0 0
        %6985 = vmatprep.subr.bf16.mxu0 0
        %6986 = vmatpush2.bf16.msra.mxu0 0
        %6987 = vmatprep.subr.bf16.mxu0 0
        %6988 = vmatpush2.bf16.msra.mxu0 0
        %6989 = vmatprep.subr.bf16.mxu0 0
        %6990 = vmatpush2.bf16.msra.mxu0 0
        %6991 = vmatprep.subr.bf16.mxu0 0
        %6992 = vmatpush2.bf16.msra.mxu0 0
        %6993 = vmatprep.subr.bf16.mxu0 0
        %6994 = vmatpush2.bf16.msra.mxu0 0
        %6995 = vmatprep.mubr.bf16.mxu0 0
        %6996 = vmatmul.mubr.bf16.gmra.mxu0 %v6847
        %v6997 = vpop.f32.mrf.mxu0
        %v6998 = vadd.f32 %v6876, %v6997
        %v6999 = vpop.f32.mrf.mxu0
        %v7000 = vadd.f32 %v6880, %v6999
        %v7001 = vpop.f32.mrf.mxu0
        %v7002 = vadd.f32 %v6876, %v7001
        %v7003 = vpop.f32.mrf.mxu0
        %v7004 = vadd.f32 %v6880, %v7003
        %7005 = vmatprep.mubr.bf16.mxu0 0
        %7006 = vmatmul.mubr.bf16.gmra.mxu0 %v6848
        %v7007 = vpop.f32.mrf.mxu0
        %v7008 = vadd.f32 %v6876, %v7007
        %v7009 = vpop.f32.mrf.mxu0
        %v7010 = vadd.f32 %v6880, %v7009
        %v7011 = vpop.f32.mrf.mxu0
        %v7012 = vadd.f32 %v6876, %v7011
        %v7013 = vpop.f32.mrf.mxu0
        %v7014 = vadd.f32 %v6880, %v7013
        %7015 = vmatprep.mubr.bf16.mxu0 0
        %7016 = vmatmul.mubr.bf16.gmra.mxu0 %v6849
        %v7017 = vpop.f32.mrf.mxu0
        %v7018 = vadd.f32 %v6876, %v7017
        %v7019 = vpop.f32.mrf.mxu0
        %v7020 = vadd.f32 %v6880, %v7019
        %v7021 = vpop.f32.mrf.mxu0
        %v7022 = vadd.f32 %v6876, %v7021
        %v7023 = vpop.f32.mrf.mxu0
        %v7024 = vadd.f32 %v6880, %v7023
        %7025 = vmatprep.mubr.bf16.mxu0 0
        %7026 = vmatmul.mubr.bf16.gmra.mxu0 %v6850
        %v7027 = vpop.f32.mrf.mxu0
        %v7028 = vadd.f32 %v6876, %v7027
        %v7029 = vpop.f32.mrf.mxu0
        %v7030 = vadd.f32 %v6880, %v7029
        %v7031 = vpop.f32.mrf.mxu0
        %v7032 = vadd.f32 %v6876, %v7031
        %v7033 = vpop.f32.mrf.mxu0
        %v7034 = vadd.f32 %v6880, %v7033
        %7035 = vmatprep.mubr.bf16.mxu0 0
        %7036 = vmatmul.mubr.bf16.gmra.mxu0 %v6851
        %v7037 = vpop.f32.mrf.mxu0
        %v7038 = vadd.f32 %v6876, %v7037
        %v7039 = vpop.f32.mrf.mxu0
        %v7040 = vadd.f32 %v6880, %v7039
        %v7041 = vpop.f32.mrf.mxu0
        %v7042 = vadd.f32 %v6876, %v7041
        %v7043 = vpop.f32.mrf.mxu0
        %v7044 = vadd.f32 %v6880, %v7043
        %7045 = vmatprep.mubr.bf16.mxu0 0
        %7046 = vmatmul.mubr.bf16.gmra.mxu0 %v6852
        %v7047 = vpop.f32.mrf.mxu0
        %v7048 = vadd.f32 %v6876, %v7047
        %v7049 = vpop.f32.mrf.mxu0
        %v7050 = vadd.f32 %v6880, %v7049
        %v7051 = vpop.f32.mrf.mxu0
        %v7052 = vadd.f32 %v6876, %v7051
        %v7053 = vpop.f32.mrf.mxu0
        %v7054 = vadd.f32 %v6880, %v7053
        %7055 = vmatprep.mubr.bf16.mxu0 0
        %7056 = vmatmul.mubr.bf16.gmra.mxu0 %v6853
        %v7057 = vpop.f32.mrf.mxu0
        %v7058 = vadd.f32 %v6876, %v7057
        %v7059 = vpop.f32.mrf.mxu0
        %v7060 = vadd.f32 %v6880, %v7059
        %v7061 = vpop.f32.mrf.mxu0
        %v7062 = vadd.f32 %v6876, %v7061
        %v7063 = vpop.f32.mrf.mxu0
        %v7064 = vadd.f32 %v6880, %v7063
        %7065 = vmatprep.mubr.bf16.mxu0 0
        %7066 = vmatmul.mubr.bf16.gmra.mxu0 %v6854
        %v7067 = vpop.f32.mrf.mxu0
        %v7068 = vadd.f32 %v6876, %v7067
        %v7069 = vpop.f32.mrf.mxu0
        %v7070 = vadd.f32 %v6880, %v7069
        %v7071 = vpop.f32.mrf.mxu0
        %v7072 = vadd.f32 %v6876, %v7071
        %v7073 = vpop.f32.mrf.mxu0
        %v7074 = vadd.f32 %v6880, %v7073
        %7075 = vdwg.mxu0
        %v7076 = vmax.f32 %v6998, 0.0
        %v7077 = vmax.f32 %v7000, 0.0
        %v7078 = vmax.f32 %v7002, 0.0
        %v7079 = vmax.f32 %v7004, 0.0
        %v7080 = vmax.f32 %v7008, 0.0
        %v7081 = vmax.f32 %v7010, 0.0
        %v7082 = vmax.f32 %v7012, 0.0
        %v7083 = vmax.f32 %v7014, 0.0
        %v7084 = vmax.f32 %v7018, 0.0
        %v7085 = vmax.f32 %v7020, 0.0
        %v7086 = vmax.f32 %v7022, 0.0
        %v7087 = vmax.f32 %v7024, 0.0
        %v7088 = vmax.f32 %v7028, 0.0
        %v7089 = vmax.f32 %v7030, 0.0
        %v7090 = vmax.f32 %v7032, 0.0
        %v7091 = vmax.f32 %v7034, 0.0
        %v7092 = vmax.f32 %v7038, 0.0
        %v7093 = vmax.f32 %v7040, 0.0
        %v7094 = vmax.f32 %v7042, 0.0
        %v7095 = vmax.f32 %v7044, 0.0
        %v7096 = vmax.f32 %v7048, 0.0
        %v7097 = vmax.f32 %v7050, 0.0
        %v7098 = vmax.f32 %v7052, 0.0
        %v7099 = vmax.f32 %v7054, 0.0
        %v7100 = vmax.f32 %v7058, 0.0
        %v7101 = vmax.f32 %v7060, 0.0
        %v7102 = vmax.f32 %v7062, 0.0
        %v7103 = vmax.f32 %v7064, 0.0
        %v7104 = vmax.f32 %v7068, 0.0
        %v7105 = vmax.f32 %v7070, 0.0
        %v7106 = vmax.f32 %v7072, 0.0
        %v7107 = vmax.f32 %v7074, 0.0
        %v7108 = vpack.c.bf16 %v7078, %v7076
        %v7109 = vpack.c.bf16 %v7079, %v7077
        %v7110 = vpack.c.bf16 %v7082, %v7080
        %v7111 = vpack.c.bf16 %v7083, %v7081
        %v7112 = vpack.c.bf16 %v7086, %v7084
        %v7113 = vpack.c.bf16 %v7087, %v7085
        %v7114 = vpack.c.bf16 %v7090, %v7088
        %v7115 = vpack.c.bf16 %v7091, %v7089
        %v7116 = vpack.c.bf16 %v7094, %v7092
        %v7117 = vpack.c.bf16 %v7095, %v7093
        %v7118 = vpack.c.bf16 %v7098, %v7096
        %v7119 = vpack.c.bf16 %v7099, %v7097
        %v7120 = vpack.c.bf16 %v7102, %v7100
        %v7121 = vpack.c.bf16 %v7103, %v7101
        %v7122 = vpack.c.bf16 %v7106, %v7104
        %v7123 = vpack.c.bf16 %v7107, %v7105
        %v7124 = vld [vmem:[#allocation17] sm:$0xf]
        %v7125 = vld [vmem:[#allocation17 + $0x4] sm:$0xf]
        %v7126 = vld [vmem:[#allocation17 + $0x8] sm:$0xf]
        %v7127 = vld [vmem:[#allocation17 + $0xc] sm:$0xf]
        %v7128 = vld [vmem:[#allocation17 + $0x10] sm:$0xf]
        %v7129 = vld [vmem:[#allocation17 + $0x14] sm:$0xf]
        %v7130 = vld [vmem:[#allocation17 + $0x18] sm:$0xf]
        %v7131 = vld [vmem:[#allocation17 + $0x1c] sm:$0xf]
        %v7132 = vld [vmem:[#allocation17 + $0x20] sm:$0xf]
        %v7133 = vld [vmem:[#allocation17 + $0x24] sm:$0xf]
        %v7134 = vld [vmem:[#allocation17 + $0x28] sm:$0xf]
        %v7135 = vld [vmem:[#allocation17 + $0x2c] sm:$0xf]
        %v7136 = vld [vmem:[#allocation17 + $0x30] sm:$0xf]
        %v7137 = vld [vmem:[#allocation17 + $0x34] sm:$0xf]
        %v7138 = vld [vmem:[#allocation17 + $0x38] sm:$0xf]
        %v7139 = vld [vmem:[#allocation17 + $0x3c] sm:$0xf]
        %v7140 = vld [vmem:[#allocation17 + $0x40] sm:$0xf]
        %v7141 = vld [vmem:[#allocation17 + $0x44] sm:$0xf]
        %v7142 = vld [vmem:[#allocation17 + $0x48] sm:$0xf]
        %v7143 = vld [vmem:[#allocation17 + $0x4c] sm:$0xf]
        %v7144 = vld [vmem:[#allocation17 + $0x50] sm:$0xf]
        %v7145 = vld [vmem:[#allocation17 + $0x54] sm:$0xf]
        %v7146 = vld [vmem:[#allocation17 + $0x58] sm:$0xf]
        %v7147 = vld [vmem:[#allocation17 + $0x5c] sm:$0xf]
        %v7148 = vld [vmem:[#allocation17 + $0x60] sm:$0xf]
        %v7149 = vld [vmem:[#allocation17 + $0x64] sm:$0xf]
        %v7150 = vld [vmem:[#allocation17 + $0x68] sm:$0xf]
        %v7151 = vld [vmem:[#allocation17 + $0x6c] sm:$0xf]
        %v7152 = vld [vmem:[#allocation17 + $0x70] sm:$0xf]
        %v7153 = vld [vmem:[#allocation17 + $0x74] sm:$0xf]
        %v7154 = vld [vmem:[#allocation17 + $0x78] sm:$0xf]
        %v7155 = vld [vmem:[#allocation17 + $0x7c] sm:$0xf]
        %v7156 = vld [vmem:[%s14] sm:$0x1]
        %v7158 = vlaneseq
        %v7159 = vshrl.u32 %v7158, 7
        %v7160 = vsub.s32 0, %v7159
        %v7161 = vrot.slane %v7156, %v7160
        %v7195 = vunpack.c.l.b16 %v7124
        %v7196 = vunpack.c.l.b16 %v7125
        %v7197 = vunpack.c.l.b16 %v7126
        %v7198 = vunpack.c.l.b16 %v7127
        %v7199 = vunpack.c.l.b16 %v7128
        %v7200 = vunpack.c.l.b16 %v7129
        %v7201 = vunpack.c.l.b16 %v7130
        %v7202 = vunpack.c.l.b16 %v7131
        %v7203 = vunpack.c.l.b16 %v7132
        %v7204 = vunpack.c.l.b16 %v7133
        %v7205 = vunpack.c.l.b16 %v7134
        %v7206 = vunpack.c.l.b16 %v7135
        %v7207 = vunpack.c.l.b16 %v7136
        %v7208 = vunpack.c.l.b16 %v7137
        %v7209 = vunpack.c.l.b16 %v7138
        %v7210 = vunpack.c.l.b16 %v7139
        %v7211 = vunpack.c.l.b16 %v7140
        %v7212 = vunpack.c.l.b16 %v7141
        %v7213 = vunpack.c.l.b16 %v7142
        %v7214 = vunpack.c.l.b16 %v7143
        %v7215 = vunpack.c.l.b16 %v7144
        %v7216 = vunpack.c.l.b16 %v7145
        %v7217 = vunpack.c.l.b16 %v7146
        %v7218 = vunpack.c.l.b16 %v7147
        %v7219 = vunpack.c.l.b16 %v7148
        %v7220 = vunpack.c.l.b16 %v7149
        %v7221 = vunpack.c.l.b16 %v7150
        %v7222 = vunpack.c.l.b16 %v7151
        %v7223 = vunpack.c.l.b16 %v7152
        %v7224 = vunpack.c.l.b16 %v7153
        %v7225 = vunpack.c.l.b16 %v7154
        %v7226 = vunpack.c.l.b16 %v7155
        %v7227 = vpack.c.b16 %v7196, %v7195
        %v7228 = vpack.c.b16 %v7198, %v7197
        %v7229 = vpack.c.b16 %v7200, %v7199
        %v7230 = vpack.c.b16 %v7202, %v7201
        %v7231 = vpack.c.b16 %v7204, %v7203
        %v7232 = vpack.c.b16 %v7206, %v7205
        %v7233 = vpack.c.b16 %v7208, %v7207
        %v7234 = vpack.c.b16 %v7210, %v7209
        %v7235 = vpack.c.b16 %v7212, %v7211
        %v7236 = vpack.c.b16 %v7214, %v7213
        %v7237 = vpack.c.b16 %v7216, %v7215
        %v7238 = vpack.c.b16 %v7218, %v7217
        %v7239 = vpack.c.b16 %v7220, %v7219
        %v7240 = vpack.c.b16 %v7222, %v7221
        %v7241 = vpack.c.b16 %v7224, %v7223
        %v7242 = vpack.c.b16 %v7226, %v7225
        %7259 = vmatprep.subr.bf16.mxu0 0
        %7260 = vmatpush1.bf16.msra.mxu0 %v7234
        %7261 = vmatprep.subr.bf16.mxu0 0
        %7262 = vmatpush1.bf16.msra.mxu0 %v7233
        %7263 = vmatprep.subr.bf16.mxu0 0
        %7264 = vmatpush1.bf16.msra.mxu0 %v7232
        %7265 = vmatprep.subr.bf16.mxu0 0
        %7266 = vmatpush1.bf16.msra.mxu0 %v7231
        %7267 = vmatprep.subr.bf16.mxu0 0
        %7268 = vmatpush1.bf16.msra.mxu0 %v7230
        %7269 = vmatprep.subr.bf16.mxu0 0
        %7270 = vmatpush1.bf16.msra.mxu0 %v7229
        %7271 = vmatprep.subr.bf16.mxu0 0
        %7272 = vmatpush1.bf16.msra.mxu0 %v7228
        %7273 = vmatprep.subr.bf16.mxu0 0
        %7274 = vmatpush1.bf16.msra.mxu0 %v7227
        %7275 = vmatprep.subr.bf16.mxu0 0
        %7276 = vmatpush2.bf16.msra.mxu0 %v7242
        %7277 = vmatprep.subr.bf16.mxu0 0
        %7278 = vmatpush2.bf16.msra.mxu0 %v7241
        %7279 = vmatprep.subr.bf16.mxu0 0
        %7280 = vmatpush2.bf16.msra.mxu0 %v7240
        %7281 = vmatprep.subr.bf16.mxu0 0
        %7282 = vmatpush2.bf16.msra.mxu0 %v7239
        %7283 = vmatprep.subr.bf16.mxu0 0
        %7284 = vmatpush2.bf16.msra.mxu0 %v7238
        %7285 = vmatprep.subr.bf16.mxu0 0
        %7286 = vmatpush2.bf16.msra.mxu0 %v7237
        %7287 = vmatprep.subr.bf16.mxu0 0
        %7288 = vmatpush2.bf16.msra.mxu0 %v7236
        %7289 = vmatprep.subr.bf16.mxu0 0
        %7290 = vmatpush2.bf16.msra.mxu0 %v7235
        %7291 = vmatprep.mubr.bf16.mxu0 %v7109
        %7292 = vmatmul.mubr.bf16.gmra.mxu0 %v7108
        %v7293 = vpop.f32.mrf.mxu0
        %v7294 = vadd.f32 %v7161, %v7293
        %v7295 = vpop.f32.mrf.mxu0
        %v7296 = vpop.f32.mrf.mxu0
        %v7297 = vadd.f32 %v7161, %v7296
        %v7298 = vpop.f32.mrf.mxu0
        %7299 = vmatprep.mubr.bf16.mxu0 %v7111
        %7300 = vmatmul.mubr.bf16.gmra.mxu0 %v7110
        %v7301 = vpop.f32.mrf.mxu0
        %v7302 = vadd.f32 %v7161, %v7301
        %v7303 = vpop.f32.mrf.mxu0
        %v7304 = vpop.f32.mrf.mxu0
        %v7305 = vadd.f32 %v7161, %v7304
        %v7306 = vpop.f32.mrf.mxu0
        %7307 = vmatprep.mubr.bf16.mxu0 %v7113
        %7308 = vmatmul.mubr.bf16.gmra.mxu0 %v7112
        %v7309 = vpop.f32.mrf.mxu0
        %v7310 = vadd.f32 %v7161, %v7309
        %v7311 = vpop.f32.mrf.mxu0
        %v7312 = vpop.f32.mrf.mxu0
        %v7313 = vadd.f32 %v7161, %v7312
        %v7314 = vpop.f32.mrf.mxu0
        %7315 = vmatprep.mubr.bf16.mxu0 %v7115
        %7316 = vmatmul.mubr.bf16.gmra.mxu0 %v7114
        %v7317 = vpop.f32.mrf.mxu0
        %v7318 = vadd.f32 %v7161, %v7317
        %v7319 = vpop.f32.mrf.mxu0
        %v7320 = vpop.f32.mrf.mxu0
        %v7321 = vadd.f32 %v7161, %v7320
        %v7322 = vpop.f32.mrf.mxu0
        %7323 = vmatprep.mubr.bf16.mxu0 %v7117
        %7324 = vmatmul.mubr.bf16.gmra.mxu0 %v7116
        %v7325 = vpop.f32.mrf.mxu0
        %v7326 = vadd.f32 %v7161, %v7325
        %v7327 = vpop.f32.mrf.mxu0
        %v7328 = vpop.f32.mrf.mxu0
        %v7329 = vadd.f32 %v7161, %v7328
        %v7330 = vpop.f32.mrf.mxu0
        %7331 = vmatprep.mubr.bf16.mxu0 %v7119
        %7332 = vmatmul.mubr.bf16.gmra.mxu0 %v7118
        %v7333 = vpop.f32.mrf.mxu0
        %v7334 = vadd.f32 %v7161, %v7333
        %v7335 = vpop.f32.mrf.mxu0
        %v7336 = vpop.f32.mrf.mxu0
        %v7337 = vadd.f32 %v7161, %v7336
        %v7338 = vpop.f32.mrf.mxu0
        %7339 = vmatprep.mubr.bf16.mxu0 %v7121
        %7340 = vmatmul.mubr.bf16.gmra.mxu0 %v7120
        %v7341 = vpop.f32.mrf.mxu0
        %v7342 = vadd.f32 %v7161, %v7341
        %v7343 = vpop.f32.mrf.mxu0
        %v7344 = vpop.f32.mrf.mxu0
        %v7345 = vadd.f32 %v7161, %v7344
        %v7346 = vpop.f32.mrf.mxu0
        %7347 = vmatprep.mubr.bf16.mxu0 %v7123
        %7348 = vmatmul.mubr.bf16.gmra.mxu0 %v7122
        %v7349 = vpop.f32.mrf.mxu0
        %v7350 = vadd.f32 %v7161, %v7349
        %v7351 = vpop.f32.mrf.mxu0
        %v7352 = vpop.f32.mrf.mxu0
        %v7353 = vadd.f32 %v7161, %v7352
        %v7354 = vpop.f32.mrf.mxu0
        %7355 = vdwg.mxu0
        %v7356 = vadd.f32 %v6496, %v7294
        %v7357 = vadd.f32 %v6497, %v7297
        %v7358 = vadd.f32 %v6498, %v7302
        %v7359 = vadd.f32 %v6499, %v7305
        %v7360 = vadd.f32 %v6500, %v7310
        %v7361 = vadd.f32 %v6501, %v7313
        %v7362 = vadd.f32 %v6502, %v7318
        %v7363 = vadd.f32 %v6503, %v7321
        %v7364 = vadd.f32 %v6504, %v7326
        %v7365 = vadd.f32 %v6505, %v7329
        %v7366 = vadd.f32 %v6506, %v7334
        %v7367 = vadd.f32 %v6507, %v7337
        %v7368 = vadd.f32 %v6508, %v7342
        %v7369 = vadd.f32 %v6509, %v7345
        %v7370 = vadd.f32 %v6510, %v7350
        %v7371 = vadd.f32 %v6511, %v7353
        %7372 = vst [vmem:[%s707] sm:$0xff] %v7356
        %7373 = vst [vmem:[%s707 + $0x8] sm:$0xff] %v7357
        %7374 = vst [vmem:[%s707 + $0x10] sm:$0xff] %v7358
        %7375 = vst [vmem:[%s707 + $0x18] sm:$0xff] %v7359
        %7376 = vst [vmem:[%s707 + $0x20] sm:$0xff] %v7360
        %7377 = vst [vmem:[%s707 + $0x28] sm:$0xff] %v7361
        %7378 = vst [vmem:[%s707 + $0x30] sm:$0xff] %v7362
        %7379 = vst [vmem:[%s707 + $0x38] sm:$0xff] %v7363
        %7380 = vst [vmem:[%s707 + $0x40] sm:$0xff] %v7364
        %7381 = vst [vmem:[%s707 + $0x48] sm:$0xff] %v7365
        %7382 = vst [vmem:[%s707 + $0x50] sm:$0xff] %v7366
        %7383 = vst [vmem:[%s707 + $0x58] sm:$0xff] %v7367
        %7384 = vst [vmem:[%s707 + $0x60] sm:$0xff] %v7368
        %7385 = vst [vmem:[%s707 + $0x68] sm:$0xff] %v7369
        %7386 = vst [vmem:[%s707 + $0x70] sm:$0xff] %v7370
        %7387 = vst [vmem:[%s707 + $0x78] sm:$0xff] %v7371
        %v7388 = vstv %s6150
        %vm7389 = vcmask 0
        %7390 = vst.msk [vmem:[%s725] sm:$0x1] %vm7389, %v7388
        %s7391 = sand.u32 %s394, 1
        %s7392 = scalar_lea.sflag [#allocation7], %s7391
        %s7393 = sand.u32 %s394, 1
        %s7394 = smul.addr %s7393, 128
        %s7395 = scalar_lea.vmem [#allocation19], %s7394
        %p7396 = scmp.lt.s32.totalorder %s44, 1
        %s7397 = scalar_select %p7396, %s44, 1
        %p7398 = scmp.lt.s32.totalorder %s45, 1
        %s7399 = scalar_select %p7398, %s45, 1
        %s7400 = smul.addr %s7397, 2
        %s7401 = sadd.s32 %s7399, %s7400
        %s7402 = scalar_lea.vmem %s16, %s7401
        // Predicated region
        $region117: #{tpu_custom_call.1} parent=79 // pred_check
          %p7403 = pneg %p404
        $region118: #{tpu_custom_call.1} parent=79 // pred_check_branch
          %7405 = sbr.rel (%p7403) target = $region120
        $region119: #{tpu_custom_call.1} parent=79 // pred_region
          %s7406 = smul.u32 16, %s45
          %s7408 = ssub.s32 2048, 2048
          %7409 = vsyncadd %s7392, %s7408
          %s7410 = smul.addr %s44, 32
          %s7411 = sadd.s32 %s7406, %s7410
          %s7412 = smul.addr %s7411, 128
          %s7413 = scalar_lea.hbm %s15, %s7412
          %s7414 = sshll.u32 %s7395, 4
          %s7415 = int_to_ptr.vmem [resolvable:$true] %s7414
          %7420 = dma.vmem_to_hbm [thread:$0]  %s7415, 2048, %s7413, %s7392, 128, 128, 8
        $region120: #{tpu_custom_call.1} parent=79 // pred_fallthru
          _
        // Predicated region
        $region121: #{tpu_custom_call.1} parent=79 // pred_check
          %p7421 = pneg %p432
        $region122: #{tpu_custom_call.1} parent=79 // pred_check_branch
          %7423 = sbr.rel (%p7421) target = $region124
        $region123: #{tpu_custom_call.1} parent=79 // pred_region
          _
        $region124: #{tpu_custom_call.1} parent=79 // pred_fallthru
          _
      $region80: #{tpu_custom_call.1} parent=5 // pred_fallthru
        _
      %p7424 = scmp.le.s32.totalorder 2, %s35
      // Predicated region
      $region125: #{tpu_custom_call.1} parent=5 // pred_check
        %p7425 = pneg %p7424
      $region126: #{tpu_custom_call.1} parent=5 // pred_check_branch
        %7427 = sbr.rel (%p7425) target = $region128
      $region127: #{tpu_custom_call.1} parent=5 // pred_region
        %s7428 = ssub.s32 %s35, 2
        // Predicated region
        $region129: #{tpu_custom_call.1} parent=127 // pred_check
          %p7429 = pneg %p410
        $region130: #{tpu_custom_call.1} parent=127 // pred_check_branch
          %7431 = sbr.rel (%p7429) target = $region132
        $region131: #{tpu_custom_call.1} parent=127 // pred_region
          %s7432 = sand.u32 %s395, 1
          %s7433 = scalar_lea.sflag [#allocation7], %s7432
          %s7434 = sand.u32 %s395, 1
          %s7435 = smul.addr %s7434, 128
          %s7436 = scalar_lea.vmem [#allocation19], %s7435
          %7437 = dma.done %s7433, 2048
        $region132: #{tpu_custom_call.1} parent=127 // pred_fallthru
          _
        // Predicated region
        $region133: #{tpu_custom_call.1} parent=127 // pred_check
          %p7438 = pneg %p438
        $region134: #{tpu_custom_call.1} parent=127 // pred_check_branch
          %7440 = sbr.rel (%p7438) target = $region136
        $region135: #{tpu_custom_call.1} parent=127 // pred_region
          %p7441 = scmp.lt.s32.totalorder %s46, 1
          %s7442 = scalar_select %p7441, %s46, 1
          %p7443 = scmp.lt.s32.totalorder %s47, 1
          %s7444 = scalar_select %p7443, %s47, 1
          %s7445 = smul.addr %s7442, 2
          %s7446 = sadd.s32 %s7444, %s7445
          %s7447 = scalar_lea.vmem %s16, %s7446
        $region136: #{tpu_custom_call.1} parent=127 // pred_fallthru
          _
      $region128: #{tpu_custom_call.1} parent=5 // pred_fallthru
        _
    $region6: #{tpu_custom_call.1} parent=1 // loop_footer
      %s39 = sadd.s32 1, %s35
    $region7: #{tpu_custom_call.1} parent=1 // loop_footer_branch
      %34 = sbr.rel target = $region3
    $region8: #{tpu_custom_call.1} parent=1 // loop_exit
      _
    %7448 = vsyncpa [#allocation6], 1
    %s7449 = scalar_lea.sflag [#allocation6], 1
    %7450 = vsyncpa %s7449, 1
    %7451 = vsyncpa [#allocation9], 1
    %s7452 = scalar_lea.sflag [#allocation9], 1
    %7453 = vsyncpa %s7452, 1
    %7454 = vsyncpa [#allocation12], 1
    %7455 = vsyncpa [#allocation15], 1
    %7456 = vsyncpa [#allocation18], 1
    %7457 = vsyncpa [#allocation7], 1
    %s7458 = scalar_lea.sflag [#allocation7], 1
    %7459 = vsyncpa %s7458, 1

</llo_original>
